<compile_context>
chip_gen: v7x
topology: tpu7x:2x2x1
jax: 0.10.0
libtpu: 0.0.40
codegen_flags: <defaults>
</compile_context>

<pallas_src>
import functools

import jax
import jax.numpy as jnp
from jax.experimental import pallas as pl
from jax.experimental.pallas import tpu as pltpu

LN_EPS = 1e-5  # PyTorch nn.LayerNorm default


# ----------------------------- kernel helpers -----------------------------

def _layernorm(x, g, b):
    mu = jnp.mean(x, axis=-1, keepdims=True)
    var = jnp.mean((x - mu) ** 2, axis=-1, keepdims=True)
    return (x - mu) * jax.lax.rsqrt(var + LN_EPS) * g + b


def _mm(a, w):
    # Cast the activation operand to the weight dtype (bf16 weights -> native
    # bf16 MXU path on v6e/v7x); accumulation stays f32. No-op for f32 weights.
    return jnp.dot(a.astype(w.dtype), w, preferred_element_type=jnp.float32)


def _softmax_axis(z, axis):
    z = z - jnp.max(z, axis=axis, keepdims=True)
    e = jnp.exp(z)
    return e * pl.reciprocal(jnp.sum(e, axis=axis, keepdims=True), approx=True)


# --------------------------------- kernel ---------------------------------

def slot_attention_kernel(
    # per-batch-tile tensors
    inputs_ref, mem_ref, slots_ref,
    # merged parameter stacks (resident in VMEM, same block every grid step)
    w_dd_ref,   # (12, D, D)  A1,Wv1,A2,Wv2,Am,Wvm,Wir,Wiz,Win,Whr,Whz,Whn
    w_dh_ref,   # (4, D, MLP) Wi1a, Wi1b, Wm1, Wmm1
    w_hd_ref,   # (3, MLP, D) Wi2, Wm2, Wmm2
    b_d_ref,    # (17, 1, D)  LN g/b (8) + GRU biases (6) + bi2,bm2,bmm2
    b_h_ref,    # (3, 1, MLP) bi1, bm1, bmm1
    # outputs
    mem_out_ref, slots_out_ref,
    *, num_iters, epsilon,
):
    f32 = jnp.float32
    Bt, N, D = inputs_ref.shape
    _, M, _ = mem_ref.shape
    _, S, _ = slots_ref.shape

    # ---- hoist every parameter read out of the unrolled refinement loop ----
    g_in, b_in = b_d_ref[0].astype(f32), b_d_ref[1].astype(f32)
    g_mem, b_mem = b_d_ref[2].astype(f32), b_d_ref[3].astype(f32)
    g_sl, b_sl = b_d_ref[4].astype(f32), b_d_ref[5].astype(f32)
    g_mlpn, b_mlpn = b_d_ref[6].astype(f32), b_d_ref[7].astype(f32)
    b_ir, b_iz, b_in_ = (b_d_ref[8].astype(f32), b_d_ref[9].astype(f32),
                         b_d_ref[10].astype(f32))
    b_hr, b_hz, b_hn = (b_d_ref[11].astype(f32), b_d_ref[12].astype(f32),
                        b_d_ref[13].astype(f32))
    bi2, bm2, bmm2 = (b_d_ref[14].astype(f32), b_d_ref[15].astype(f32),
                      b_d_ref[16].astype(f32))

    a1_w, v1_w = w_dd_ref[0], w_dd_ref[1]
    a2_w, v2_w = w_dd_ref[2], w_dd_ref[3]
    am_w, vm_w = w_dd_ref[4], w_dd_ref[5]
    w_ir, w_iz, w_in = w_dd_ref[6], w_dd_ref[7], w_dd_ref[8]
    w_hr, w_hz, w_hn = w_dd_ref[9], w_dd_ref[10], w_dd_ref[11]

    wi1a, wi1b, wm1, wmm1 = (w_dh_ref[0], w_dh_ref[1],
                             w_dh_ref[2], w_dh_ref[3])
    wi2, wm2, wmm2 = w_hd_ref[0], w_hd_ref[1], w_hd_ref[2]
    bi1 = b_h_ref[0].astype(f32)
    bm1 = b_h_ref[1].astype(f32)
    bmm1 = b_h_ref[2].astype(f32)

    # ---- batch rows folded into the sublane dim for all row-wise math ------
    x = inputs_ref[...].astype(f32).reshape(Bt * N, D)
    ms = mem_ref[...].astype(f32).reshape(Bt * M, D)
    s = slots_ref[...].astype(f32).reshape(Bt * S, D)

    x = _layernorm(x, g_in, b_in)            # (Bt*N, D)
    ms_n = _layernorm(ms, g_mem, b_mem)      # (Bt*M, D)

    # loop-invariant products (q/k projections folded into A1/A2/Am)
    xa1 = _mm(x, a1_w).reshape(Bt, N, D)     # x_hat @ (scale*Wk1@Wq^T)
    v1 = _mm(x, v1_w).reshape(Bt, N, D)
    ma2 = _mm(ms_n, a2_w).reshape(Bt, M, D)  # ms_hat @ (scale*Wk2@Wq^T)
    v2 = _mm(ms_n, v2_w).reshape(Bt, M, D)
    mam = _mm(ms_n, am_w).reshape(Bt, M, D)  # ms_hat @ (scale*Wqm@Wkm^T)

    # ---- iterative slot refinement (static unroll: num_iters is small) -----
    for _ in range(num_iters):
        slots_prev = s                                       # (Bt*S, D)
        sn = _layernorm(s, g_sl, b_sl).reshape(Bt, S, D)

        # attention over inputs, computed transposed: att1[b,s,n] = logits1^T
        att1 = jnp.einsum('bsd,bnd->bsn', sn, xa1,
                          preferred_element_type=f32)
        att1 = _softmax_axis(att1, axis=1) + epsilon         # softmax over S
        att1 = att1 * pl.reciprocal(                         # renorm over N
            jnp.sum(att1, axis=2, keepdims=True), approx=True)
        u1 = jnp.einsum('bsn,bnd->bsd', att1, v1,
                        preferred_element_type=f32).reshape(Bt * S, D)

        # attention over memory slots
        att2 = jnp.einsum('bsd,bmd->bsm', sn, ma2,
                          preferred_element_type=f32)
        att2 = _softmax_axis(att2, axis=1) + epsilon         # softmax over S
        att2 = att2 * pl.reciprocal(                         # renorm over M
            jnp.sum(att2, axis=2, keepdims=True), approx=True)
        u2 = jnp.einsum('bsm,bmd->bsd', att2, v2,
                        preferred_element_type=f32).reshape(Bt * S, D)

        # mlp_i on concat(u1, u2)  (concat folded into split first weight)
        h = jnp.maximum(_mm(u1, wi1a) + _mm(u2, wi1b) + bi1, 0.0)
        upd = _mm(h, wi2) + bi2                              # (Bt*S, D)

        # GRUCell(upd, slots_prev)
        r = jax.nn.sigmoid(_mm(upd, w_ir) + b_ir
                           + _mm(slots_prev, w_hr) + b_hr)
        z = jax.nn.sigmoid(_mm(upd, w_iz) + b_iz
                           + _mm(slots_prev, w_hz) + b_hz)
        n = jnp.tanh(_mm(upd, w_in) + b_in_
                     + r * (_mm(slots_prev, w_hn) + b_hn))
        s = (1.0 - z) * n + z * slots_prev

        # residual MLP on normalized slots
        sn2 = _layernorm(s, g_mlpn, b_mlpn)
        hm = jnp.maximum(_mm(sn2, wm1) + bm1, 0.0)
        s = s + _mm(hm, wm2) + bm2

    # ---- memory update ------------------------------------------------------
    s3 = s.reshape(Bt, S, D)
    vm = _mm(s, vm_w).reshape(Bt, S, D)
    logitsm = jnp.einsum('bmd,bsd->bms', mam, s3, preferred_element_type=f32)
    am = _softmax_axis(logitsm, axis=-1) + epsilon           # softmax over S
    am = am * pl.reciprocal(                                 # renorm over M
        jnp.sum(am, axis=1, keepdims=True), approx=True)
    um = jnp.einsum('bms,bsd->bmd', am, vm,
                    preferred_element_type=f32).reshape(Bt * M, D)
    hmem = jnp.maximum(_mm(um, wmm1) + bmm1, 0.0)
    mem_out = ms_n + _mm(hmem, wmm2) + bmm2                  # (Bt*M, D)

    mem_out_ref[...] = mem_out.reshape(Bt, M, D).astype(mem_out_ref.dtype)
    slots_out_ref[...] = s.reshape(Bt, S, D).astype(slots_out_ref.dtype)


# --------------------------- host-side packing ------------------------------

PACKED_ORDER = ("w_dd", "w_dh", "w_hd", "b_d", "b_h")


def pack_params(p, *, weight_dtype=None):
    """Fold + stack the ~40 per-module tensors into 5 arrays (host side).

    weight_dtype: set to jnp.bfloat16 on v6e/v7x to halve weight DMA bytes and
    use the native bf16 MXU path (biases / LN params stay f32; all elementwise
    math in the kernel stays f32, which also keeps v5e happy).
    """
    D = p["wq"].shape[0]
    scale = float(D) ** -0.5
    wc = (lambda w: w.astype(weight_dtype)) if weight_dtype is not None \
        else (lambda w: w)
    # Fold q/k projections:  scale*(x Wk)(s Wq)^T == x (scale Wk Wq^T) s^T
    a1 = scale * (p["wk1"] @ p["wq"].T)
    a2 = scale * (p["wk2"] @ p["wq"].T)
    am = scale * (p["wqm"] @ p["wkm"].T)
    return {
        # all (D, D) matmul weights in one stack
        "w_dd": wc(jnp.stack([a1, p["wv1"], a2, p["wv2"], am, p["wvm"],
                              p["wir"], p["wiz"], p["win"],
                              p["whr"], p["whz"], p["whn"]], axis=0)),
        # all (D, MLP) weights
        "w_dh": wc(jnp.stack([p["wi1a"], p["wi1b"], p["wm1"], p["wmm1"]],
                             axis=0)),
        # all (MLP, D) weights
        "w_hd": wc(jnp.stack([p["wi2"], p["wm2"], p["wmm2"]], axis=0)),
        # all (1, D) LayerNorm params & biases (kept f32)
        "b_d": jnp.stack([p["g_in"], p["b_in"], p["g_mem"], p["b_mem"],
                          p["g_sl"], p["b_sl"], p["g_mlpn"], p["b_mlpn"],
                          p["bir"], p["biz"], p["bin"],
                          p["bhr"], p["bhz"], p["bhn"],
                          p["bi2"], p["bm2"], p["bmm2"]], axis=0),
        # all (1, MLP) biases (kept f32)
        "b_h": jnp.stack([p["bi1"], p["bm1"], p["bmm1"]], axis=0),
    }


# ------------------------------ host wrapper -------------------------------

def _auto_batch_tile(B, N, M, S):
    # Merge batches per grid step to amortize per-step overhead, but
    #  (a) keep >= 2 grid steps so both v7x TensorCores get work, and
    #  (b) only fold batches into sublanes when every row count is a multiple
    #      of the 8-sublane tile (keeps in-kernel reshapes layout-trivial).
    if B < 4 or any(r % 8 for r in (N, M, S)):
        return 1
    for bt in range(B // 2, 0, -1):
        if B % bt == 0:
            return bt
    return 1


def slot_attention(inputs, memory_slots, instant_slots, packed_params,
                   *, num_iters, epsilon=1e-8, batch_tile=None):
    B, N, D = inputs.shape
    _, M, _ = memory_slots.shape
    _, S, _ = instant_slots.shape

    bt = batch_tile if batch_tile is not None else _auto_batch_tile(B, N, M, S)
    assert B % bt == 0, "batch_tile must divide batch"

    weights = [packed_params[k] for k in PACKED_ORDER]

    def full_spec(a):
        nd = a.ndim
        return pl.BlockSpec(a.shape, lambda b, _nd=nd: (0,) * _nd)

    in_specs = [
        pl.BlockSpec((bt, N, D), lambda b: (b, 0, 0)),
        pl.BlockSpec((bt, M, D), lambda b: (b, 0, 0)),
        pl.BlockSpec((bt, S, D), lambda b: (b, 0, 0)),
    ] + [full_spec(w) for w in weights]

    out_specs = [
        pl.BlockSpec((bt, M, D), lambda b: (b, 0, 0)),
        pl.BlockSpec((bt, S, D), lambda b: (b, 0, 0)),
    ]
    out_shape = [
        jax.ShapeDtypeStruct((B, M, D), inputs.dtype),
        jax.ShapeDtypeStruct((B, S, D), inputs.dtype),
    ]

    kernel = functools.partial(slot_attention_kernel,
                               num_iters=num_iters, epsilon=epsilon)

    return pl.pallas_call(
        kernel,
        grid=(B // bt,),
        in_specs=in_specs,
        out_specs=out_specs,
        out_shape=out_shape,
        compiler_params=pltpu.CompilerParams(
            dimension_semantics=("parallel",)),
    )(inputs, memory_slots, instant_slots, *weights)


# ------------------------- deterministic init ------------------------------

def init_params(key, D, mlp_size, dtype=jnp.float32):
    keys = iter(jax.random.split(key, 64))

    def uni(shape, fan_in):
        bound = 1.0 / (fan_in ** 0.5)
        return jax.random.uniform(next(keys), shape, dtype, -bound, bound)

    p = {}
    # LayerNorms (PyTorch default init: gamma=1, beta=0)
    for nm in ("in", "mem", "sl", "mlpn"):
        p[f"g_{nm}"] = jnp.ones((1, D), dtype)
        p[f"b_{nm}"] = jnp.zeros((1, D), dtype)
    # bias-free projections, stored as (in, out) for x @ W
    for nm in ("q", "k1", "v1", "k2", "v2", "qm", "km", "vm"):
        p[f"w{nm}"] = uni((D, D), D)
    # mlp_i: Linear(2D -> mlp), ReLU, Linear(mlp -> D); first weight split
    p["wi1a"] = uni((D, mlp_size), 2 * D)
    p["wi1b"] = uni((D, mlp_size), 2 * D)
    p["bi1"] = uni((1, mlp_size), 2 * D)
    p["wi2"] = uni((mlp_size, D), mlp_size)
    p["bi2"] = uni((1, D), mlp_size)
    # GRUCell(D, D): gates r, z, n
    for g in ("r", "z", "n"):
        p[f"wi{g}"] = uni((D, D), D)
        p[f"wh{g}"] = uni((D, D), D)
        p[f"bi{g}"] = uni((1, D), D)
        p[f"bh{g}"] = uni((1, D), D)
    # slot residual mlp
    p["wm1"] = uni((D, mlp_size), D)
    p["bm1"] = uni((1, mlp_size), D)
    p["wm2"] = uni((mlp_size, D), mlp_size)
    p["bm2"] = uni((1, D), mlp_size)
    # memory mlp (mlp_m)
    p["wmm1"] = uni((D, mlp_size), D)
    p["bmm1"] = uni((1, mlp_size), D)
    p["wmm2"] = uni((mlp_size, D), mlp_size)
    p["bmm2"] = uni((1, D), mlp_size)
    return p


# --------------------------- pure-JAX reference -----------------------------

def _ref_single(x, ms, s, p, num_iters, epsilon):
    D = x.shape[-1]
    scale = float(D) ** -0.5
    ln = _layernorm
    x = ln(x, p["g_in"], p["b_in"])
    ms_n = ln(ms, p["g_mem"], p["b_mem"])
    k1, v1 = x @ p["wk1"], x @ p["wv1"]
    k2, v2 = ms_n @ p["wk2"], ms_n @ p["wv2"]
    for _ in range(num_iters):
        sp = s
        sn = ln(s, p["g_sl"], p["b_sl"])
        q = sn @ p["wq"]
        a1 = jax.nn.softmax(scale * (k1 @ q.T), axis=-1) + epsilon
        a1 = a1 / jnp.sum(a1, axis=0, keepdims=True)
        u1 = a1.T @ v1
        a2 = jax.nn.softmax(scale * (k2 @ q.T), axis=-1) + epsilon
        a2 = a2 / jnp.sum(a2, axis=0, keepdims=True)
        u2 = a2.T @ v2
        h = jnp.maximum(u1 @ p["wi1a"] + u2 @ p["wi1b"] + p["bi1"], 0.0)
        upd = h @ p["wi2"] + p["bi2"]
        r = jax.nn.sigmoid(upd @ p["wir"] + p["bir"] + sp @ p["whr"] + p["bhr"])
        z = jax.nn.sigmoid(upd @ p["wiz"] + p["biz"] + sp @ p["whz"] + p["bhz"])
        n = jnp.tanh(upd @ p["win"] + p["bin"] + r * (sp @ p["whn"] + p["bhn"]))
        s = (1.0 - z) * n + z * sp
        sn2 = ln(s, p["g_mlpn"], p["b_mlpn"])
        s = s + jnp.maximum(sn2 @ p["wm1"] + p["bm1"], 0.0) @ p["wm2"] + p["bm2"]
    km, vm, qm = s @ p["wkm"], s @ p["wvm"], ms_n @ p["wqm"]
    am = jax.nn.softmax(scale * (qm @ km.T), axis=-1) + epsilon
    am = am / jnp.sum(am, axis=0, keepdims=True)
    um = am @ vm
    mem_out = ms_n + jnp.maximum(um @ p["wmm1"] + p["bmm1"], 0.0) @ p["wmm2"] \
        + p["bmm2"]
    return mem_out, s


# ----------------------------------- main -----------------------------------

if __name__ == "__main__":
    B, N, M, S = 2, 16, 4, 4         # batch, num_inputs, mem slots, slots
    D, MLP = 32, 64                  # slot_size (== in_features), mlp_size
    NUM_ITERS = 3
    EPS = 1e-8

    key = jax.random.PRNGKey(0)
    k_in, k_mem, k_sl, k_par = jax.random.split(key, 4)
    inputs = jax.random.normal(k_in, (B, N, D), jnp.float32)
    memory_slots = jax.random.normal(k_mem, (B, M, D), jnp.float32)
    instant_slots = jax.random.normal(k_sl, (B, S, D), jnp.float32)
    params = init_params(k_par, D, MLP)

    # On v6e/v7x pass weight_dtype=jnp.bfloat16 here to halve weight traffic.
    packed = pack_params(params)

    mem_out, slots_out = slot_attention(
        inputs, memory_slots, instant_slots, packed,
        num_iters=NUM_ITERS, epsilon=EPS)
    jax.block_until_ready((mem_out, slots_out))

    # correctness check against a pure-JAX reference
    ref_mem, ref_slots = jax.vmap(
        lambda x, m, s: _ref_single(x, m, s, params, NUM_ITERS, EPS)
    )(inputs, memory_slots, instant_slots)
    assert mem_out.shape == (B, M, D) and slots_out.shape == (B, S, D)
    assert jnp.allclose(mem_out, ref_mem, atol=1e-2, rtol=1e-2)
    assert jnp.allclose(slots_out, ref_slots, atol=1e-2, rtol=1e-2)

    print("KERNEL_OK")
</pallas_src>

<mosaic_0001>
module attributes {stable_mosaic.version = 11 : i64} {
  func.func @slot_attention_kernel(%arg0: i32, %arg1: memref<1x16x32xf32, #tpu.memory_space<vmem>>, %arg2: memref<1x4x32xf32, #tpu.memory_space<vmem>>, %arg3: memref<1x4x32xf32, #tpu.memory_space<vmem>>, %arg4: memref<12x32x32xf32, #tpu.memory_space<vmem>>, %arg5: memref<4x32x64xf32, #tpu.memory_space<vmem>>, %arg6: memref<3x64x32xf32, #tpu.memory_space<vmem>>, %arg7: memref<17x1x32xf32, #tpu.memory_space<vmem>>, %arg8: memref<3x1x64xf32, #tpu.memory_space<vmem>>, %arg9: memref<1x4x32xf32, #tpu.memory_space<vmem>>, %arg10: memref<1x4x32xf32, #tpu.memory_space<vmem>>) attributes {dimension_semantics = [#tpu.dimension_semantics<parallel>], iteration_bounds = array<i64: 2>, scalar_prefetch = 0 : i64, scratch_operands = 0 : i64, tpu.core_type = #tpu.core_type<tc>, window_params = [{transform_indices = @transform_0, window_bounds = array<i64: 1, 16, 32>}, {transform_indices = @transform_1, window_bounds = array<i64: 1, 4, 32>}, {transform_indices = @transform_2, window_bounds = array<i64: 1, 4, 32>}, {pipeline_mode = #tpu.pipeline_mode<synchronous>, transform_indices = @transform_3, window_bounds = array<i64: 12, 32, 32>}, {pipeline_mode = #tpu.pipeline_mode<synchronous>, transform_indices = @transform_4, window_bounds = array<i64: 4, 32, 64>}, {pipeline_mode = #tpu.pipeline_mode<synchronous>, transform_indices = @transform_5, window_bounds = array<i64: 3, 64, 32>}, {pipeline_mode = #tpu.pipeline_mode<synchronous>, transform_indices = @transform_6, window_bounds = array<i64: 17, 1, 32>}, {pipeline_mode = #tpu.pipeline_mode<synchronous>, transform_indices = @transform_7, window_bounds = array<i64: 3, 1, 64>}, {transform_indices = @transform_8, window_bounds = array<i64: 1, 4, 32>}, {transform_indices = @transform_9, window_bounds = array<i64: 1, 4, 32>}]} {
    %c0 = arith.constant 0 : index
    %c0_0 = arith.constant 0 : index
    %c0_1 = arith.constant 0 : index
    %0 = vector.load %arg7[%c0, %c0_0, %c0_1] : memref<17x1x32xf32, #tpu.memory_space<vmem>>, vector<1x1x32xf32>
    %1 = vector.shape_cast %0 : vector<1x1x32xf32> to vector<1x32xf32>
    %c1 = arith.constant 1 : index
    %c0_2 = arith.constant 0 : index
    %c0_3 = arith.constant 0 : index
    %2 = vector.load %arg7[%c1, %c0_2, %c0_3] : memref<17x1x32xf32, #tpu.memory_space<vmem>>, vector<1x1x32xf32>
    %3 = vector.shape_cast %2 : vector<1x1x32xf32> to vector<1x32xf32>
    %c2 = arith.constant 2 : index
    %c0_4 = arith.constant 0 : index
    %c0_5 = arith.constant 0 : index
    %4 = vector.load %arg7[%c2, %c0_4, %c0_5] : memref<17x1x32xf32, #tpu.memory_space<vmem>>, vector<1x1x32xf32>
    %5 = vector.shape_cast %4 : vector<1x1x32xf32> to vector<1x32xf32>
    %c3 = arith.constant 3 : index
    %c0_6 = arith.constant 0 : index
    %c0_7 = arith.constant 0 : index
    %6 = vector.load %arg7[%c3, %c0_6, %c0_7] : memref<17x1x32xf32, #tpu.memory_space<vmem>>, vector<1x1x32xf32>
    %7 = vector.shape_cast %6 : vector<1x1x32xf32> to vector<1x32xf32>
    %c4 = arith.constant 4 : index
    %c0_8 = arith.constant 0 : index
    %c0_9 = arith.constant 0 : index
    %8 = vector.load %arg7[%c4, %c0_8, %c0_9] : memref<17x1x32xf32, #tpu.memory_space<vmem>>, vector<1x1x32xf32>
    %9 = vector.shape_cast %8 : vector<1x1x32xf32> to vector<1x32xf32>
    %c5 = arith.constant 5 : index
    %c0_10 = arith.constant 0 : index
    %c0_11 = arith.constant 0 : index
    %10 = vector.load %arg7[%c5, %c0_10, %c0_11] : memref<17x1x32xf32, #tpu.memory_space<vmem>>, vector<1x1x32xf32>
    %11 = vector.shape_cast %10 : vector<1x1x32xf32> to vector<1x32xf32>
    %c6 = arith.constant 6 : index
    %c0_12 = arith.constant 0 : index
    %c0_13 = arith.constant 0 : index
    %12 = vector.load %arg7[%c6, %c0_12, %c0_13] : memref<17x1x32xf32, #tpu.memory_space<vmem>>, vector<1x1x32xf32>
    %13 = vector.shape_cast %12 : vector<1x1x32xf32> to vector<1x32xf32>
    %c7 = arith.constant 7 : index
    %c0_14 = arith.constant 0 : index
    %c0_15 = arith.constant 0 : index
    %14 = vector.load %arg7[%c7, %c0_14, %c0_15] : memref<17x1x32xf32, #tpu.memory_space<vmem>>, vector<1x1x32xf32>
    %15 = vector.shape_cast %14 : vector<1x1x32xf32> to vector<1x32xf32>
    %c8 = arith.constant 8 : index
    %c0_16 = arith.constant 0 : index
    %c0_17 = arith.constant 0 : index
    %16 = vector.load %arg7[%c8, %c0_16, %c0_17] : memref<17x1x32xf32, #tpu.memory_space<vmem>>, vector<1x1x32xf32>
    %17 = vector.shape_cast %16 : vector<1x1x32xf32> to vector<1x32xf32>
    %c9 = arith.constant 9 : index
    %c0_18 = arith.constant 0 : index
    %c0_19 = arith.constant 0 : index
    %18 = vector.load %arg7[%c9, %c0_18, %c0_19] : memref<17x1x32xf32, #tpu.memory_space<vmem>>, vector<1x1x32xf32>
    %19 = vector.shape_cast %18 : vector<1x1x32xf32> to vector<1x32xf32>
    %c10 = arith.constant 10 : index
    %c0_20 = arith.constant 0 : index
    %c0_21 = arith.constant 0 : index
    %20 = vector.load %arg7[%c10, %c0_20, %c0_21] : memref<17x1x32xf32, #tpu.memory_space<vmem>>, vector<1x1x32xf32>
    %21 = vector.shape_cast %20 : vector<1x1x32xf32> to vector<1x32xf32>
    %c11 = arith.constant 11 : index
    %c0_22 = arith.constant 0 : index
    %c0_23 = arith.constant 0 : index
    %22 = vector.load %arg7[%c11, %c0_22, %c0_23] : memref<17x1x32xf32, #tpu.memory_space<vmem>>, vector<1x1x32xf32>
    %23 = vector.shape_cast %22 : vector<1x1x32xf32> to vector<1x32xf32>
    %c12 = arith.constant 12 : index
    %c0_24 = arith.constant 0 : index
    %c0_25 = arith.constant 0 : index
    %24 = vector.load %arg7[%c12, %c0_24, %c0_25] : memref<17x1x32xf32, #tpu.memory_space<vmem>>, vector<1x1x32xf32>
    %25 = vector.shape_cast %24 : vector<1x1x32xf32> to vector<1x32xf32>
    %c13 = arith.constant 13 : index
    %c0_26 = arith.constant 0 : index
    %c0_27 = arith.constant 0 : index
    %26 = vector.load %arg7[%c13, %c0_26, %c0_27] : memref<17x1x32xf32, #tpu.memory_space<vmem>>, vector<1x1x32xf32>
    %27 = vector.shape_cast %26 : vector<1x1x32xf32> to vector<1x32xf32>
    %c14 = arith.constant 14 : index
    %c0_28 = arith.constant 0 : index
    %c0_29 = arith.constant 0 : index
    %28 = vector.load %arg7[%c14, %c0_28, %c0_29] : memref<17x1x32xf32, #tpu.memory_space<vmem>>, vector<1x1x32xf32>
    %29 = vector.shape_cast %28 : vector<1x1x32xf32> to vector<1x32xf32>
    %c15 = arith.constant 15 : index
    %c0_30 = arith.constant 0 : index
    %c0_31 = arith.constant 0 : index
    %30 = vector.load %arg7[%c15, %c0_30, %c0_31] : memref<17x1x32xf32, #tpu.memory_space<vmem>>, vector<1x1x32xf32>
    %31 = vector.shape_cast %30 : vector<1x1x32xf32> to vector<1x32xf32>
    %c16 = arith.constant 16 : index
    %c0_32 = arith.constant 0 : index
    %c0_33 = arith.constant 0 : index
    %32 = vector.load %arg7[%c16, %c0_32, %c0_33] : memref<17x1x32xf32, #tpu.memory_space<vmem>>, vector<1x1x32xf32>
    %33 = vector.shape_cast %32 : vector<1x1x32xf32> to vector<1x32xf32>
    %c0_34 = arith.constant 0 : index
    %c0_35 = arith.constant 0 : index
    %c0_36 = arith.constant 0 : index
    %34 = vector.load %arg4[%c0_34, %c0_35, %c0_36] : memref<12x32x32xf32, #tpu.memory_space<vmem>>, vector<1x32x32xf32>
    %35 = vector.shape_cast %34 : vector<1x32x32xf32> to vector<32x32xf32>
    %c1_37 = arith.constant 1 : index
    %c0_38 = arith.constant 0 : index
    %c0_39 = arith.constant 0 : index
    %36 = vector.load %arg4[%c1_37, %c0_38, %c0_39] : memref<12x32x32xf32, #tpu.memory_space<vmem>>, vector<1x32x32xf32>
    %37 = vector.shape_cast %36 : vector<1x32x32xf32> to vector<32x32xf32>
    %c2_40 = arith.constant 2 : index
    %c0_41 = arith.constant 0 : index
    %c0_42 = arith.constant 0 : index
    %38 = vector.load %arg4[%c2_40, %c0_41, %c0_42] : memref<12x32x32xf32, #tpu.memory_space<vmem>>, vector<1x32x32xf32>
    %39 = vector.shape_cast %38 : vector<1x32x32xf32> to vector<32x32xf32>
    %c3_43 = arith.constant 3 : index
    %c0_44 = arith.constant 0 : index
    %c0_45 = arith.constant 0 : index
    %40 = vector.load %arg4[%c3_43, %c0_44, %c0_45] : memref<12x32x32xf32, #tpu.memory_space<vmem>>, vector<1x32x32xf32>
    %41 = vector.shape_cast %40 : vector<1x32x32xf32> to vector<32x32xf32>
    %c4_46 = arith.constant 4 : index
    %c0_47 = arith.constant 0 : index
    %c0_48 = arith.constant 0 : index
    %42 = vector.load %arg4[%c4_46, %c0_47, %c0_48] : memref<12x32x32xf32, #tpu.memory_space<vmem>>, vector<1x32x32xf32>
    %43 = vector.shape_cast %42 : vector<1x32x32xf32> to vector<32x32xf32>
    %c5_49 = arith.constant 5 : index
    %c0_50 = arith.constant 0 : index
    %c0_51 = arith.constant 0 : index
    %44 = vector.load %arg4[%c5_49, %c0_50, %c0_51] : memref<12x32x32xf32, #tpu.memory_space<vmem>>, vector<1x32x32xf32>
    %45 = vector.shape_cast %44 : vector<1x32x32xf32> to vector<32x32xf32>
    %c6_52 = arith.constant 6 : index
    %c0_53 = arith.constant 0 : index
    %c0_54 = arith.constant 0 : index
    %46 = vector.load %arg4[%c6_52, %c0_53, %c0_54] : memref<12x32x32xf32, #tpu.memory_space<vmem>>, vector<1x32x32xf32>
    %47 = vector.shape_cast %46 : vector<1x32x32xf32> to vector<32x32xf32>
    %c7_55 = arith.constant 7 : index
    %c0_56 = arith.constant 0 : index
    %c0_57 = arith.constant 0 : index
    %48 = vector.load %arg4[%c7_55, %c0_56, %c0_57] : memref<12x32x32xf32, #tpu.memory_space<vmem>>, vector<1x32x32xf32>
    %49 = vector.shape_cast %48 : vector<1x32x32xf32> to vector<32x32xf32>
    %c8_58 = arith.constant 8 : index
    %c0_59 = arith.constant 0 : index
    %c0_60 = arith.constant 0 : index
    %50 = vector.load %arg4[%c8_58, %c0_59, %c0_60] : memref<12x32x32xf32, #tpu.memory_space<vmem>>, vector<1x32x32xf32>
    %51 = vector.shape_cast %50 : vector<1x32x32xf32> to vector<32x32xf32>
    %c9_61 = arith.constant 9 : index
    %c0_62 = arith.constant 0 : index
    %c0_63 = arith.constant 0 : index
    %52 = vector.load %arg4[%c9_61, %c0_62, %c0_63] : memref<12x32x32xf32, #tpu.memory_space<vmem>>, vector<1x32x32xf32>
    %53 = vector.shape_cast %52 : vector<1x32x32xf32> to vector<32x32xf32>
    %c10_64 = arith.constant 10 : index
    %c0_65 = arith.constant 0 : index
    %c0_66 = arith.constant 0 : index
    %54 = vector.load %arg4[%c10_64, %c0_65, %c0_66] : memref<12x32x32xf32, #tpu.memory_space<vmem>>, vector<1x32x32xf32>
    %55 = vector.shape_cast %54 : vector<1x32x32xf32> to vector<32x32xf32>
    %c11_67 = arith.constant 11 : index
    %c0_68 = arith.constant 0 : index
    %c0_69 = arith.constant 0 : index
    %56 = vector.load %arg4[%c11_67, %c0_68, %c0_69] : memref<12x32x32xf32, #tpu.memory_space<vmem>>, vector<1x32x32xf32>
    %57 = vector.shape_cast %56 : vector<1x32x32xf32> to vector<32x32xf32>
    %c0_70 = arith.constant 0 : index
    %c0_71 = arith.constant 0 : index
    %c0_72 = arith.constant 0 : index
    %58 = vector.load %arg5[%c0_70, %c0_71, %c0_72] : memref<4x32x64xf32, #tpu.memory_space<vmem>>, vector<1x32x64xf32>
    %59 = vector.shape_cast %58 : vector<1x32x64xf32> to vector<32x64xf32>
    %c1_73 = arith.constant 1 : index
    %c0_74 = arith.constant 0 : index
    %c0_75 = arith.constant 0 : index
    %60 = vector.load %arg5[%c1_73, %c0_74, %c0_75] : memref<4x32x64xf32, #tpu.memory_space<vmem>>, vector<1x32x64xf32>
    %61 = vector.shape_cast %60 : vector<1x32x64xf32> to vector<32x64xf32>
    %c2_76 = arith.constant 2 : index
    %c0_77 = arith.constant 0 : index
    %c0_78 = arith.constant 0 : index
    %62 = vector.load %arg5[%c2_76, %c0_77, %c0_78] : memref<4x32x64xf32, #tpu.memory_space<vmem>>, vector<1x32x64xf32>
    %63 = vector.shape_cast %62 : vector<1x32x64xf32> to vector<32x64xf32>
    %c3_79 = arith.constant 3 : index
    %c0_80 = arith.constant 0 : index
    %c0_81 = arith.constant 0 : index
    %64 = vector.load %arg5[%c3_79, %c0_80, %c0_81] : memref<4x32x64xf32, #tpu.memory_space<vmem>>, vector<1x32x64xf32>
    %65 = vector.shape_cast %64 : vector<1x32x64xf32> to vector<32x64xf32>
    %c0_82 = arith.constant 0 : index
    %c0_83 = arith.constant 0 : index
    %c0_84 = arith.constant 0 : index
    %66 = vector.load %arg6[%c0_82, %c0_83, %c0_84] : memref<3x64x32xf32, #tpu.memory_space<vmem>>, vector<1x64x32xf32>
    %67 = vector.shape_cast %66 : vector<1x64x32xf32> to vector<64x32xf32>
    %c1_85 = arith.constant 1 : index
    %c0_86 = arith.constant 0 : index
    %c0_87 = arith.constant 0 : index
    %68 = vector.load %arg6[%c1_85, %c0_86, %c0_87] : memref<3x64x32xf32, #tpu.memory_space<vmem>>, vector<1x64x32xf32>
    %69 = vector.shape_cast %68 : vector<1x64x32xf32> to vector<64x32xf32>
    %c2_88 = arith.constant 2 : index
    %c0_89 = arith.constant 0 : index
    %c0_90 = arith.constant 0 : index
    %70 = vector.load %arg6[%c2_88, %c0_89, %c0_90] : memref<3x64x32xf32, #tpu.memory_space<vmem>>, vector<1x64x32xf32>
    %71 = vector.shape_cast %70 : vector<1x64x32xf32> to vector<64x32xf32>
    %c0_91 = arith.constant 0 : index
    %c0_92 = arith.constant 0 : index
    %c0_93 = arith.constant 0 : index
    %72 = vector.load %arg8[%c0_91, %c0_92, %c0_93] : memref<3x1x64xf32, #tpu.memory_space<vmem>>, vector<1x1x64xf32>
    %73 = vector.shape_cast %72 : vector<1x1x64xf32> to vector<1x64xf32>
    %c1_94 = arith.constant 1 : index
    %c0_95 = arith.constant 0 : index
    %c0_96 = arith.constant 0 : index
    %74 = vector.load %arg8[%c1_94, %c0_95, %c0_96] : memref<3x1x64xf32, #tpu.memory_space<vmem>>, vector<1x1x64xf32>
    %75 = vector.shape_cast %74 : vector<1x1x64xf32> to vector<1x64xf32>
    %c2_97 = arith.constant 2 : index
    %c0_98 = arith.constant 0 : index
    %c0_99 = arith.constant 0 : index
    %76 = vector.load %arg8[%c2_97, %c0_98, %c0_99] : memref<3x1x64xf32, #tpu.memory_space<vmem>>, vector<1x1x64xf32>
    %77 = vector.shape_cast %76 : vector<1x1x64xf32> to vector<1x64xf32>
    %c0_100 = arith.constant 0 : index
    %c0_101 = arith.constant 0 : index
    %c0_102 = arith.constant 0 : index
    %78 = vector.load %arg1[%c0_100, %c0_101, %c0_102] : memref<1x16x32xf32, #tpu.memory_space<vmem>>, vector<1x16x32xf32>
    %79 = vector.shape_cast %78 : vector<1x16x32xf32> to vector<16x32xf32>
    %c0_103 = arith.constant 0 : index
    %c0_104 = arith.constant 0 : index
    %c0_105 = arith.constant 0 : index
    %80 = vector.load %arg2[%c0_103, %c0_104, %c0_105] : memref<1x4x32xf32, #tpu.memory_space<vmem>>, vector<1x4x32xf32>
    %81 = vector.shape_cast %80 : vector<1x4x32xf32> to vector<4x32xf32>
    %c0_106 = arith.constant 0 : index
    %c0_107 = arith.constant 0 : index
    %c0_108 = arith.constant 0 : index
    %82 = vector.load %arg3[%c0_106, %c0_107, %c0_108] : memref<1x4x32xf32, #tpu.memory_space<vmem>>, vector<1x4x32xf32>
    %83 = vector.shape_cast %82 : vector<1x4x32xf32> to vector<4x32xf32>
    %cst = arith.constant dense<0.000000e+00> : vector<16xf32>
    %84 = vector.multi_reduction <add>, %79, %cst [1] : vector<16x32xf32> to vector<16xf32>
    %85 = vector.shape_cast %84 : vector<16xf32> to vector<16x1xf32>
    %cst_109 = arith.constant 3.200000e+01 : f32
    %86 = vector.broadcast %cst_109 : f32 to vector<16x1xf32>
    %87 = arith.divf %85, %86 : vector<16x1xf32>
    %88 = vector.broadcast %87 : vector<16x1xf32> to vector<16x32xf32>
    %89 = arith.subf %79, %88 : vector<16x32xf32>
    %90 = arith.mulf %89, %89 : vector<16x32xf32>
    %cst_110 = arith.constant dense<0.000000e+00> : vector<16xf32>
    %91 = vector.multi_reduction <add>, %90, %cst_110 [1] : vector<16x32xf32> to vector<16xf32>
    %92 = vector.shape_cast %91 : vector<16xf32> to vector<16x1xf32>
    %cst_111 = arith.constant 3.200000e+01 : f32
    %93 = vector.broadcast %cst_111 : f32 to vector<16x1xf32>
    %94 = arith.divf %92, %93 : vector<16x1xf32>
    %95 = vector.broadcast %87 : vector<16x1xf32> to vector<16x32xf32>
    %96 = arith.subf %79, %95 : vector<16x32xf32>
    %cst_112 = arith.constant 9.99999974E-6 : f32
    %97 = vector.broadcast %cst_112 : f32 to vector<16x1xf32>
    %98 = arith.addf %94, %97 : vector<16x1xf32>
    %99 = math.rsqrt %98 : vector<16x1xf32>
    %100 = vector.broadcast %99 : vector<16x1xf32> to vector<16x32xf32>
    %101 = arith.mulf %96, %100 : vector<16x32xf32>
    %102 = vector.broadcast %1 : vector<1x32xf32> to vector<16x32xf32>
    %103 = arith.mulf %101, %102 : vector<16x32xf32>
    %104 = vector.broadcast %3 : vector<1x32xf32> to vector<16x32xf32>
    %105 = arith.addf %103, %104 : vector<16x32xf32>
    %cst_113 = arith.constant dense<0.000000e+00> : vector<4xf32>
    %106 = vector.multi_reduction <add>, %81, %cst_113 [1] : vector<4x32xf32> to vector<4xf32>
    %107 = vector.shape_cast %106 : vector<4xf32> to vector<4x1xf32>
    %cst_114 = arith.constant 3.200000e+01 : f32
    %108 = vector.broadcast %cst_114 : f32 to vector<4x1xf32>
    %109 = arith.divf %107, %108 : vector<4x1xf32>
    %110 = vector.broadcast %109 : vector<4x1xf32> to vector<4x32xf32>
    %111 = arith.subf %81, %110 : vector<4x32xf32>
    %112 = arith.mulf %111, %111 : vector<4x32xf32>
    %cst_115 = arith.constant dense<0.000000e+00> : vector<4xf32>
    %113 = vector.multi_reduction <add>, %112, %cst_115 [1] : vector<4x32xf32> to vector<4xf32>
    %114 = vector.shape_cast %113 : vector<4xf32> to vector<4x1xf32>
    %cst_116 = arith.constant 3.200000e+01 : f32
    %115 = vector.broadcast %cst_116 : f32 to vector<4x1xf32>
    %116 = arith.divf %114, %115 : vector<4x1xf32>
    %117 = vector.broadcast %109 : vector<4x1xf32> to vector<4x32xf32>
    %118 = arith.subf %81, %117 : vector<4x32xf32>
    %cst_117 = arith.constant 9.99999974E-6 : f32
    %119 = vector.broadcast %cst_117 : f32 to vector<4x1xf32>
    %120 = arith.addf %116, %119 : vector<4x1xf32>
    %121 = math.rsqrt %120 : vector<4x1xf32>
    %122 = vector.broadcast %121 : vector<4x1xf32> to vector<4x32xf32>
    %123 = arith.mulf %118, %122 : vector<4x32xf32>
    %124 = vector.broadcast %5 : vector<1x32xf32> to vector<4x32xf32>
    %125 = arith.mulf %123, %124 : vector<4x32xf32>
    %126 = vector.broadcast %7 : vector<1x32xf32> to vector<4x32xf32>
    %127 = arith.addf %125, %126 : vector<4x32xf32>
    %cst_118 = arith.constant dense<0.000000e+00> : vector<16x32xf32>
    %128 = tpu.matmul %105, %35, %cst_118 {dimension_numbers = #tpu.dot_dimension_numbers<[1], [0], [0], [1], [0, 0, 1, 1], [], []>} : vector<16x32xf32>, vector<32x32xf32>, vector<16x32xf32> -> vector<16x32xf32>
    %129 = vector.shape_cast %128 : vector<16x32xf32> to vector<1x16x32xf32>
    %cst_119 = arith.constant dense<0.000000e+00> : vector<16x32xf32>
    %130 = tpu.matmul %105, %37, %cst_119 {dimension_numbers = #tpu.dot_dimension_numbers<[1], [0], [0], [1], [0, 0, 1, 1], [], []>} : vector<16x32xf32>, vector<32x32xf32>, vector<16x32xf32> -> vector<16x32xf32>
    %131 = vector.shape_cast %130 : vector<16x32xf32> to vector<1x16x32xf32>
    %cst_120 = arith.constant dense<0.000000e+00> : vector<4x32xf32>
    %132 = tpu.matmul %127, %39, %cst_120 {dimension_numbers = #tpu.dot_dimension_numbers<[1], [0], [0], [1], [0, 0, 1, 1], [], []>} : vector<4x32xf32>, vector<32x32xf32>, vector<4x32xf32> -> vector<4x32xf32>
    %133 = vector.shape_cast %132 : vector<4x32xf32> to vector<1x4x32xf32>
    %cst_121 = arith.constant dense<0.000000e+00> : vector<4x32xf32>
    %134 = tpu.matmul %127, %41, %cst_121 {dimension_numbers = #tpu.dot_dimension_numbers<[1], [0], [0], [1], [0, 0, 1, 1], [], []>} : vector<4x32xf32>, vector<32x32xf32>, vector<4x32xf32> -> vector<4x32xf32>
    %135 = vector.shape_cast %134 : vector<4x32xf32> to vector<1x4x32xf32>
    %cst_122 = arith.constant dense<0.000000e+00> : vector<4x32xf32>
    %136 = tpu.matmul %127, %43, %cst_122 {dimension_numbers = #tpu.dot_dimension_numbers<[1], [0], [0], [1], [0, 0, 1, 1], [], []>} : vector<4x32xf32>, vector<32x32xf32>, vector<4x32xf32> -> vector<4x32xf32>
    %137 = vector.shape_cast %136 : vector<4x32xf32> to vector<1x4x32xf32>
    %cst_123 = arith.constant dense<0.000000e+00> : vector<4xf32>
    %138 = vector.multi_reduction <add>, %83, %cst_123 [1] : vector<4x32xf32> to vector<4xf32>
    %139 = vector.shape_cast %138 : vector<4xf32> to vector<4x1xf32>
    %cst_124 = arith.constant 3.200000e+01 : f32
    %140 = vector.broadcast %cst_124 : f32 to vector<4x1xf32>
    %141 = arith.divf %139, %140 : vector<4x1xf32>
    %142 = vector.broadcast %141 : vector<4x1xf32> to vector<4x32xf32>
    %143 = arith.subf %83, %142 : vector<4x32xf32>
    %144 = arith.mulf %143, %143 : vector<4x32xf32>
    %cst_125 = arith.constant dense<0.000000e+00> : vector<4xf32>
    %145 = vector.multi_reduction <add>, %144, %cst_125 [1] : vector<4x32xf32> to vector<4xf32>
    %146 = vector.shape_cast %145 : vector<4xf32> to vector<4x1xf32>
    %cst_126 = arith.constant 3.200000e+01 : f32
    %147 = vector.broadcast %cst_126 : f32 to vector<4x1xf32>
    %148 = arith.divf %146, %147 : vector<4x1xf32>
    %149 = vector.broadcast %141 : vector<4x1xf32> to vector<4x32xf32>
    %150 = arith.subf %83, %149 : vector<4x32xf32>
    %cst_127 = arith.constant 9.99999974E-6 : f32
    %151 = vector.broadcast %cst_127 : f32 to vector<4x1xf32>
    %152 = arith.addf %148, %151 : vector<4x1xf32>
    %153 = math.rsqrt %152 : vector<4x1xf32>
    %154 = vector.broadcast %153 : vector<4x1xf32> to vector<4x32xf32>
    %155 = arith.mulf %150, %154 : vector<4x32xf32>
    %156 = vector.broadcast %9 : vector<1x32xf32> to vector<4x32xf32>
    %157 = arith.mulf %155, %156 : vector<4x32xf32>
    %158 = vector.broadcast %11 : vector<1x32xf32> to vector<4x32xf32>
    %159 = arith.addf %157, %158 : vector<4x32xf32>
    %160 = vector.shape_cast %159 : vector<4x32xf32> to vector<1x4x32xf32>
    "tpu.trace_start"() <{level = 10 : i32, message = "bsd,bnd->bsn"}> : () -> ()
    %cst_128 = arith.constant dense<0.000000e+00> : vector<1x4x16xf32>
    %161 = tpu.matmul %160, %129, %cst_128 {dimension_numbers = #tpu.dot_dimension_numbers<[2], [2], [1], [1], [0, 0, 0, 1, 1, 1], [0], [0]>} : vector<1x4x32xf32>, vector<1x16x32xf32>, vector<1x4x16xf32> -> vector<1x4x16xf32>
    "tpu.trace_stop"() : () -> ()
    %cst_129 = arith.constant dense<0xFF800000> : vector<1x16xf32>
    %162 = vector.multi_reduction <maximumf>, %161, %cst_129 [1] : vector<1x4x16xf32> to vector<1x16xf32>
    %163 = vector.shape_cast %162 : vector<1x16xf32> to vector<1x1x16xf32>
    %164 = vector.broadcast %163 : vector<1x1x16xf32> to vector<1x4x16xf32>
    %165 = arith.subf %161, %164 : vector<1x4x16xf32>
    %166 = math.exp %165 : vector<1x4x16xf32>
    %cst_130 = arith.constant dense<0.000000e+00> : vector<1x16xf32>
    %167 = vector.multi_reduction <add>, %166, %cst_130 [1] : vector<1x4x16xf32> to vector<1x16xf32>
    %168 = vector.shape_cast %167 : vector<1x16xf32> to vector<1x1x16xf32>
    %169 = tpu.reciprocal %168 {approx = true} : vector<1x1x16xf32> -> vector<1x1x16xf32>
    %170 = vector.broadcast %169 : vector<1x1x16xf32> to vector<1x4x16xf32>
    %171 = arith.mulf %166, %170 : vector<1x4x16xf32>
    %cst_131 = arith.constant 9.99999993E-9 : f32
    %172 = vector.broadcast %cst_131 : f32 to vector<1x4x16xf32>
    %173 = arith.addf %171, %172 : vector<1x4x16xf32>
    %cst_132 = arith.constant dense<0.000000e+00> : vector<1x4xf32>
    %174 = vector.multi_reduction <add>, %173, %cst_132 [2] : vector<1x4x16xf32> to vector<1x4xf32>
    %175 = vector.shape_cast %174 : vector<1x4xf32> to vector<1x4x1xf32>
    %176 = tpu.reciprocal %175 {approx = true} : vector<1x4x1xf32> -> vector<1x4x1xf32>
    %177 = vector.broadcast %176 : vector<1x4x1xf32> to vector<1x4x16xf32>
    %178 = arith.mulf %173, %177 : vector<1x4x16xf32>
    "tpu.trace_start"() <{level = 10 : i32, message = "bsn,bnd->bsd"}> : () -> ()
    %cst_133 = arith.constant dense<0.000000e+00> : vector<1x4x32xf32>
    %179 = tpu.matmul %178, %131, %cst_133 {dimension_numbers = #tpu.dot_dimension_numbers<[2], [1], [1], [2], [0, 0, 0, 1, 1, 2], [0], [0]>} : vector<1x4x16xf32>, vector<1x16x32xf32>, vector<1x4x32xf32> -> vector<1x4x32xf32>
    "tpu.trace_stop"() : () -> ()
    %180 = vector.shape_cast %179 : vector<1x4x32xf32> to vector<4x32xf32>
    "tpu.trace_start"() <{level = 10 : i32, message = "bsd,bmd->bsm"}> : () -> ()
    %cst_134 = arith.constant dense<0.000000e+00> : vector<1x4x4xf32>
    %181 = tpu.matmul %160, %133, %cst_134 {dimension_numbers = #tpu.dot_dimension_numbers<[2], [2], [1], [1], [0, 0, 0, 1, 1, 1], [0], [0]>} : vector<1x4x32xf32>, vector<1x4x32xf32>, vector<1x4x4xf32> -> vector<1x4x4xf32>
    "tpu.trace_stop"() : () -> ()
    %cst_135 = arith.constant dense<0xFF800000> : vector<1x4xf32>
    %182 = vector.multi_reduction <maximumf>, %181, %cst_135 [1] : vector<1x4x4xf32> to vector<1x4xf32>
    %183 = vector.shape_cast %182 : vector<1x4xf32> to vector<1x1x4xf32>
    %184 = vector.broadcast %183 : vector<1x1x4xf32> to vector<1x4x4xf32>
    %185 = arith.subf %181, %184 : vector<1x4x4xf32>
    %186 = math.exp %185 : vector<1x4x4xf32>
    %cst_136 = arith.constant dense<0.000000e+00> : vector<1x4xf32>
    %187 = vector.multi_reduction <add>, %186, %cst_136 [1] : vector<1x4x4xf32> to vector<1x4xf32>
    %188 = vector.shape_cast %187 : vector<1x4xf32> to vector<1x1x4xf32>
    %189 = tpu.reciprocal %188 {approx = true} : vector<1x1x4xf32> -> vector<1x1x4xf32>
    %190 = vector.broadcast %189 : vector<1x1x4xf32> to vector<1x4x4xf32>
    %191 = arith.mulf %186, %190 : vector<1x4x4xf32>
    %cst_137 = arith.constant 9.99999993E-9 : f32
    %192 = vector.broadcast %cst_137 : f32 to vector<1x4x4xf32>
    %193 = arith.addf %191, %192 : vector<1x4x4xf32>
    %cst_138 = arith.constant dense<0.000000e+00> : vector<1x4xf32>
    %194 = vector.multi_reduction <add>, %193, %cst_138 [2] : vector<1x4x4xf32> to vector<1x4xf32>
    %195 = vector.shape_cast %194 : vector<1x4xf32> to vector<1x4x1xf32>
    %196 = tpu.reciprocal %195 {approx = true} : vector<1x4x1xf32> -> vector<1x4x1xf32>
    %197 = vector.broadcast %196 : vector<1x4x1xf32> to vector<1x4x4xf32>
    %198 = arith.mulf %193, %197 : vector<1x4x4xf32>
    "tpu.trace_start"() <{level = 10 : i32, message = "bsm,bmd->bsd"}> : () -> ()
    %cst_139 = arith.constant dense<0.000000e+00> : vector<1x4x32xf32>
    %199 = tpu.matmul %198, %135, %cst_139 {dimension_numbers = #tpu.dot_dimension_numbers<[2], [1], [1], [2], [0, 0, 0, 1, 1, 2], [0], [0]>} : vector<1x4x4xf32>, vector<1x4x32xf32>, vector<1x4x32xf32> -> vector<1x4x32xf32>
    "tpu.trace_stop"() : () -> ()
    %200 = vector.shape_cast %199 : vector<1x4x32xf32> to vector<4x32xf32>
    %cst_140 = arith.constant dense<0.000000e+00> : vector<4x64xf32>
    %201 = tpu.matmul %180, %59, %cst_140 {dimension_numbers = #tpu.dot_dimension_numbers<[1], [0], [0], [1], [0, 0, 1, 1], [], []>} : vector<4x32xf32>, vector<32x64xf32>, vector<4x64xf32> -> vector<4x64xf32>
    %cst_141 = arith.constant dense<0.000000e+00> : vector<4x64xf32>
    %202 = tpu.matmul %200, %61, %cst_141 {dimension_numbers = #tpu.dot_dimension_numbers<[1], [0], [0], [1], [0, 0, 1, 1], [], []>} : vector<4x32xf32>, vector<32x64xf32>, vector<4x64xf32> -> vector<4x64xf32>
    %203 = arith.addf %201, %202 : vector<4x64xf32>
    %204 = vector.broadcast %73 : vector<1x64xf32> to vector<4x64xf32>
    %205 = arith.addf %203, %204 : vector<4x64xf32>
    %cst_142 = arith.constant 0.000000e+00 : f32
    %206 = vector.broadcast %cst_142 : f32 to vector<4x64xf32>
    %207 = arith.maximumf %205, %206 : vector<4x64xf32>
    %cst_143 = arith.constant dense<0.000000e+00> : vector<4x32xf32>
    %208 = tpu.matmul %207, %67, %cst_143 {dimension_numbers = #tpu.dot_dimension_numbers<[1], [0], [0], [1], [0, 0, 1, 1], [], []>} : vector<4x64xf32>, vector<64x32xf32>, vector<4x32xf32> -> vector<4x32xf32>
    %209 = vector.broadcast %29 : vector<1x32xf32> to vector<4x32xf32>
    %210 = arith.addf %208, %209 : vector<4x32xf32>
    %cst_144 = arith.constant dense<0.000000e+00> : vector<4x32xf32>
    %211 = tpu.matmul %210, %47, %cst_144 {dimension_numbers = #tpu.dot_dimension_numbers<[1], [0], [0], [1], [0, 0, 1, 1], [], []>} : vector<4x32xf32>, vector<32x32xf32>, vector<4x32xf32> -> vector<4x32xf32>
    %212 = vector.broadcast %17 : vector<1x32xf32> to vector<4x32xf32>
    %213 = arith.addf %211, %212 : vector<4x32xf32>
    %cst_145 = arith.constant dense<0.000000e+00> : vector<4x32xf32>
    %214 = tpu.matmul %83, %53, %cst_145 {dimension_numbers = #tpu.dot_dimension_numbers<[1], [0], [0], [1], [0, 0, 1, 1], [], []>} : vector<4x32xf32>, vector<32x32xf32>, vector<4x32xf32> -> vector<4x32xf32>
    %215 = arith.addf %213, %214 : vector<4x32xf32>
    %216 = vector.broadcast %23 : vector<1x32xf32> to vector<4x32xf32>
    %217 = arith.addf %215, %216 : vector<4x32xf32>
    %218 = arith.negf %217 : vector<4x32xf32>
    %219 = math.exp %218 : vector<4x32xf32>
    %cst_146 = arith.constant 1.000000e+00 : f32
    %220 = vector.broadcast %cst_146 : f32 to vector<4x32xf32>
    %221 = arith.addf %220, %219 : vector<4x32xf32>
    %222 = arith.divf %220, %221 : vector<4x32xf32>
    %cst_147 = arith.constant dense<0.000000e+00> : vector<4x32xf32>
    %223 = tpu.matmul %210, %49, %cst_147 {dimension_numbers = #tpu.dot_dimension_numbers<[1], [0], [0], [1], [0, 0, 1, 1], [], []>} : vector<4x32xf32>, vector<32x32xf32>, vector<4x32xf32> -> vector<4x32xf32>
    %224 = vector.broadcast %19 : vector<1x32xf32> to vector<4x32xf32>
    %225 = arith.addf %223, %224 : vector<4x32xf32>
    %cst_148 = arith.constant dense<0.000000e+00> : vector<4x32xf32>
    %226 = tpu.matmul %83, %55, %cst_148 {dimension_numbers = #tpu.dot_dimension_numbers<[1], [0], [0], [1], [0, 0, 1, 1], [], []>} : vector<4x32xf32>, vector<32x32xf32>, vector<4x32xf32> -> vector<4x32xf32>
    %227 = arith.addf %225, %226 : vector<4x32xf32>
    %228 = vector.broadcast %25 : vector<1x32xf32> to vector<4x32xf32>
    %229 = arith.addf %227, %228 : vector<4x32xf32>
    %230 = arith.negf %229 : vector<4x32xf32>
    %231 = math.exp %230 : vector<4x32xf32>
    %cst_149 = arith.constant 1.000000e+00 : f32
    %232 = vector.broadcast %cst_149 : f32 to vector<4x32xf32>
    %233 = arith.addf %232, %231 : vector<4x32xf32>
    %234 = arith.divf %232, %233 : vector<4x32xf32>
    %cst_150 = arith.constant dense<0.000000e+00> : vector<4x32xf32>
    %235 = tpu.matmul %210, %51, %cst_150 {dimension_numbers = #tpu.dot_dimension_numbers<[1], [0], [0], [1], [0, 0, 1, 1], [], []>} : vector<4x32xf32>, vector<32x32xf32>, vector<4x32xf32> -> vector<4x32xf32>
    %236 = vector.broadcast %21 : vector<1x32xf32> to vector<4x32xf32>
    %237 = arith.addf %235, %236 : vector<4x32xf32>
    %cst_151 = arith.constant dense<0.000000e+00> : vector<4x32xf32>
    %238 = tpu.matmul %83, %57, %cst_151 {dimension_numbers = #tpu.dot_dimension_numbers<[1], [0], [0], [1], [0, 0, 1, 1], [], []>} : vector<4x32xf32>, vector<32x32xf32>, vector<4x32xf32> -> vector<4x32xf32>
    %239 = vector.broadcast %27 : vector<1x32xf32> to vector<4x32xf32>
    %240 = arith.addf %238, %239 : vector<4x32xf32>
    %241 = arith.mulf %222, %240 : vector<4x32xf32>
    %242 = arith.addf %237, %241 : vector<4x32xf32>
    %243 = math.tanh %242 : vector<4x32xf32>
    %cst_152 = arith.constant 1.000000e+00 : f32
    %244 = vector.broadcast %cst_152 : f32 to vector<4x32xf32>
    %245 = arith.subf %244, %234 : vector<4x32xf32>
    %246 = arith.mulf %245, %243 : vector<4x32xf32>
    %247 = arith.mulf %234, %83 : vector<4x32xf32>
    %248 = arith.addf %246, %247 : vector<4x32xf32>
    %cst_153 = arith.constant dense<0.000000e+00> : vector<4xf32>
    %249 = vector.multi_reduction <add>, %248, %cst_153 [1] : vector<4x32xf32> to vector<4xf32>
    %250 = vector.shape_cast %249 : vector<4xf32> to vector<4x1xf32>
    %cst_154 = arith.constant 3.200000e+01 : f32
    %251 = vector.broadcast %cst_154 : f32 to vector<4x1xf32>
    %252 = arith.divf %250, %251 : vector<4x1xf32>
    %253 = vector.broadcast %252 : vector<4x1xf32> to vector<4x32xf32>
    %254 = arith.subf %248, %253 : vector<4x32xf32>
    %255 = arith.mulf %254, %254 : vector<4x32xf32>
    %cst_155 = arith.constant dense<0.000000e+00> : vector<4xf32>
    %256 = vector.multi_reduction <add>, %255, %cst_155 [1] : vector<4x32xf32> to vector<4xf32>
    %257 = vector.shape_cast %256 : vector<4xf32> to vector<4x1xf32>
    %cst_156 = arith.constant 3.200000e+01 : f32
    %258 = vector.broadcast %cst_156 : f32 to vector<4x1xf32>
    %259 = arith.divf %257, %258 : vector<4x1xf32>
    %260 = vector.broadcast %252 : vector<4x1xf32> to vector<4x32xf32>
    %261 = arith.subf %248, %260 : vector<4x32xf32>
    %cst_157 = arith.constant 9.99999974E-6 : f32
    %262 = vector.broadcast %cst_157 : f32 to vector<4x1xf32>
    %263 = arith.addf %259, %262 : vector<4x1xf32>
    %264 = math.rsqrt %263 : vector<4x1xf32>
    %265 = vector.broadcast %264 : vector<4x1xf32> to vector<4x32xf32>
    %266 = arith.mulf %261, %265 : vector<4x32xf32>
    %267 = vector.broadcast %13 : vector<1x32xf32> to vector<4x32xf32>
    %268 = arith.mulf %266, %267 : vector<4x32xf32>
    %269 = vector.broadcast %15 : vector<1x32xf32> to vector<4x32xf32>
    %270 = arith.addf %268, %269 : vector<4x32xf32>
    %cst_158 = arith.constant dense<0.000000e+00> : vector<4x64xf32>
    %271 = tpu.matmul %270, %63, %cst_158 {dimension_numbers = #tpu.dot_dimension_numbers<[1], [0], [0], [1], [0, 0, 1, 1], [], []>} : vector<4x32xf32>, vector<32x64xf32>, vector<4x64xf32> -> vector<4x64xf32>
    %272 = vector.broadcast %75 : vector<1x64xf32> to vector<4x64xf32>
    %273 = arith.addf %271, %272 : vector<4x64xf32>
    %cst_159 = arith.constant 0.000000e+00 : f32
    %274 = vector.broadcast %cst_159 : f32 to vector<4x64xf32>
    %275 = arith.maximumf %273, %274 : vector<4x64xf32>
    %cst_160 = arith.constant dense<0.000000e+00> : vector<4x32xf32>
    %276 = tpu.matmul %275, %69, %cst_160 {dimension_numbers = #tpu.dot_dimension_numbers<[1], [0], [0], [1], [0, 0, 1, 1], [], []>} : vector<4x64xf32>, vector<64x32xf32>, vector<4x32xf32> -> vector<4x32xf32>
    %277 = arith.addf %248, %276 : vector<4x32xf32>
    %278 = vector.broadcast %31 : vector<1x32xf32> to vector<4x32xf32>
    %279 = arith.addf %277, %278 : vector<4x32xf32>
    %cst_161 = arith.constant dense<0.000000e+00> : vector<4xf32>
    %280 = vector.multi_reduction <add>, %279, %cst_161 [1] : vector<4x32xf32> to vector<4xf32>
    %281 = vector.shape_cast %280 : vector<4xf32> to vector<4x1xf32>
    %cst_162 = arith.constant 3.200000e+01 : f32
    %282 = vector.broadcast %cst_162 : f32 to vector<4x1xf32>
    %283 = arith.divf %281, %282 : vector<4x1xf32>
    %284 = vector.broadcast %283 : vector<4x1xf32> to vector<4x32xf32>
    %285 = arith.subf %279, %284 : vector<4x32xf32>
    %286 = arith.mulf %285, %285 : vector<4x32xf32>
    %cst_163 = arith.constant dense<0.000000e+00> : vector<4xf32>
    %287 = vector.multi_reduction <add>, %286, %cst_163 [1] : vector<4x32xf32> to vector<4xf32>
    %288 = vector.shape_cast %287 : vector<4xf32> to vector<4x1xf32>
    %cst_164 = arith.constant 3.200000e+01 : f32
    %289 = vector.broadcast %cst_164 : f32 to vector<4x1xf32>
    %290 = arith.divf %288, %289 : vector<4x1xf32>
    %291 = vector.broadcast %283 : vector<4x1xf32> to vector<4x32xf32>
    %292 = arith.subf %279, %291 : vector<4x32xf32>
    %cst_165 = arith.constant 9.99999974E-6 : f32
    %293 = vector.broadcast %cst_165 : f32 to vector<4x1xf32>
    %294 = arith.addf %290, %293 : vector<4x1xf32>
    %295 = math.rsqrt %294 : vector<4x1xf32>
    %296 = vector.broadcast %295 : vector<4x1xf32> to vector<4x32xf32>
    %297 = arith.mulf %292, %296 : vector<4x32xf32>
    %298 = vector.broadcast %9 : vector<1x32xf32> to vector<4x32xf32>
    %299 = arith.mulf %297, %298 : vector<4x32xf32>
    %300 = vector.broadcast %11 : vector<1x32xf32> to vector<4x32xf32>
    %301 = arith.addf %299, %300 : vector<4x32xf32>
    %302 = vector.shape_cast %301 : vector<4x32xf32> to vector<1x4x32xf32>
    "tpu.trace_start"() <{level = 10 : i32, message = "bsd,bnd->bsn"}> : () -> ()
    %cst_166 = arith.constant dense<0.000000e+00> : vector<1x4x16xf32>
    %303 = tpu.matmul %302, %129, %cst_166 {dimension_numbers = #tpu.dot_dimension_numbers<[2], [2], [1], [1], [0, 0, 0, 1, 1, 1], [0], [0]>} : vector<1x4x32xf32>, vector<1x16x32xf32>, vector<1x4x16xf32> -> vector<1x4x16xf32>
    "tpu.trace_stop"() : () -> ()
    %cst_167 = arith.constant dense<0xFF800000> : vector<1x16xf32>
    %304 = vector.multi_reduction <maximumf>, %303, %cst_167 [1] : vector<1x4x16xf32> to vector<1x16xf32>
    %305 = vector.shape_cast %304 : vector<1x16xf32> to vector<1x1x16xf32>
    %306 = vector.broadcast %305 : vector<1x1x16xf32> to vector<1x4x16xf32>
    %307 = arith.subf %303, %306 : vector<1x4x16xf32>
    %308 = math.exp %307 : vector<1x4x16xf32>
    %cst_168 = arith.constant dense<0.000000e+00> : vector<1x16xf32>
    %309 = vector.multi_reduction <add>, %308, %cst_168 [1] : vector<1x4x16xf32> to vector<1x16xf32>
    %310 = vector.shape_cast %309 : vector<1x16xf32> to vector<1x1x16xf32>
    %311 = tpu.reciprocal %310 {approx = true} : vector<1x1x16xf32> -> vector<1x1x16xf32>
    %312 = vector.broadcast %311 : vector<1x1x16xf32> to vector<1x4x16xf32>
    %313 = arith.mulf %308, %312 : vector<1x4x16xf32>
    %cst_169 = arith.constant 9.99999993E-9 : f32
    %314 = vector.broadcast %cst_169 : f32 to vector<1x4x16xf32>
    %315 = arith.addf %313, %314 : vector<1x4x16xf32>
    %cst_170 = arith.constant dense<0.000000e+00> : vector<1x4xf32>
    %316 = vector.multi_reduction <add>, %315, %cst_170 [2] : vector<1x4x16xf32> to vector<1x4xf32>
    %317 = vector.shape_cast %316 : vector<1x4xf32> to vector<1x4x1xf32>
    %318 = tpu.reciprocal %317 {approx = true} : vector<1x4x1xf32> -> vector<1x4x1xf32>
    %319 = vector.broadcast %318 : vector<1x4x1xf32> to vector<1x4x16xf32>
    %320 = arith.mulf %315, %319 : vector<1x4x16xf32>
    "tpu.trace_start"() <{level = 10 : i32, message = "bsn,bnd->bsd"}> : () -> ()
    %cst_171 = arith.constant dense<0.000000e+00> : vector<1x4x32xf32>
    %321 = tpu.matmul %320, %131, %cst_171 {dimension_numbers = #tpu.dot_dimension_numbers<[2], [1], [1], [2], [0, 0, 0, 1, 1, 2], [0], [0]>} : vector<1x4x16xf32>, vector<1x16x32xf32>, vector<1x4x32xf32> -> vector<1x4x32xf32>
    "tpu.trace_stop"() : () -> ()
    %322 = vector.shape_cast %321 : vector<1x4x32xf32> to vector<4x32xf32>
    "tpu.trace_start"() <{level = 10 : i32, message = "bsd,bmd->bsm"}> : () -> ()
    %cst_172 = arith.constant dense<0.000000e+00> : vector<1x4x4xf32>
    %323 = tpu.matmul %302, %133, %cst_172 {dimension_numbers = #tpu.dot_dimension_numbers<[2], [2], [1], [1], [0, 0, 0, 1, 1, 1], [0], [0]>} : vector<1x4x32xf32>, vector<1x4x32xf32>, vector<1x4x4xf32> -> vector<1x4x4xf32>
    "tpu.trace_stop"() : () -> ()
    %cst_173 = arith.constant dense<0xFF800000> : vector<1x4xf32>
    %324 = vector.multi_reduction <maximumf>, %323, %cst_173 [1] : vector<1x4x4xf32> to vector<1x4xf32>
    %325 = vector.shape_cast %324 : vector<1x4xf32> to vector<1x1x4xf32>
    %326 = vector.broadcast %325 : vector<1x1x4xf32> to vector<1x4x4xf32>
    %327 = arith.subf %323, %326 : vector<1x4x4xf32>
    %328 = math.exp %327 : vector<1x4x4xf32>
    %cst_174 = arith.constant dense<0.000000e+00> : vector<1x4xf32>
    %329 = vector.multi_reduction <add>, %328, %cst_174 [1] : vector<1x4x4xf32> to vector<1x4xf32>
    %330 = vector.shape_cast %329 : vector<1x4xf32> to vector<1x1x4xf32>
    %331 = tpu.reciprocal %330 {approx = true} : vector<1x1x4xf32> -> vector<1x1x4xf32>
    %332 = vector.broadcast %331 : vector<1x1x4xf32> to vector<1x4x4xf32>
    %333 = arith.mulf %328, %332 : vector<1x4x4xf32>
    %cst_175 = arith.constant 9.99999993E-9 : f32
    %334 = vector.broadcast %cst_175 : f32 to vector<1x4x4xf32>
    %335 = arith.addf %333, %334 : vector<1x4x4xf32>
    %cst_176 = arith.constant dense<0.000000e+00> : vector<1x4xf32>
    %336 = vector.multi_reduction <add>, %335, %cst_176 [2] : vector<1x4x4xf32> to vector<1x4xf32>
    %337 = vector.shape_cast %336 : vector<1x4xf32> to vector<1x4x1xf32>
    %338 = tpu.reciprocal %337 {approx = true} : vector<1x4x1xf32> -> vector<1x4x1xf32>
    %339 = vector.broadcast %338 : vector<1x4x1xf32> to vector<1x4x4xf32>
    %340 = arith.mulf %335, %339 : vector<1x4x4xf32>
    "tpu.trace_start"() <{level = 10 : i32, message = "bsm,bmd->bsd"}> : () -> ()
    %cst_177 = arith.constant dense<0.000000e+00> : vector<1x4x32xf32>
    %341 = tpu.matmul %340, %135, %cst_177 {dimension_numbers = #tpu.dot_dimension_numbers<[2], [1], [1], [2], [0, 0, 0, 1, 1, 2], [0], [0]>} : vector<1x4x4xf32>, vector<1x4x32xf32>, vector<1x4x32xf32> -> vector<1x4x32xf32>
    "tpu.trace_stop"() : () -> ()
    %342 = vector.shape_cast %341 : vector<1x4x32xf32> to vector<4x32xf32>
    %cst_178 = arith.constant dense<0.000000e+00> : vector<4x64xf32>
    %343 = tpu.matmul %322, %59, %cst_178 {dimension_numbers = #tpu.dot_dimension_numbers<[1], [0], [0], [1], [0, 0, 1, 1], [], []>} : vector<4x32xf32>, vector<32x64xf32>, vector<4x64xf32> -> vector<4x64xf32>
    %cst_179 = arith.constant dense<0.000000e+00> : vector<4x64xf32>
    %344 = tpu.matmul %342, %61, %cst_179 {dimension_numbers = #tpu.dot_dimension_numbers<[1], [0], [0], [1], [0, 0, 1, 1], [], []>} : vector<4x32xf32>, vector<32x64xf32>, vector<4x64xf32> -> vector<4x64xf32>
    %345 = arith.addf %343, %344 : vector<4x64xf32>
    %346 = vector.broadcast %73 : vector<1x64xf32> to vector<4x64xf32>
    %347 = arith.addf %345, %346 : vector<4x64xf32>
    %cst_180 = arith.constant 0.000000e+00 : f32
    %348 = vector.broadcast %cst_180 : f32 to vector<4x64xf32>
    %349 = arith.maximumf %347, %348 : vector<4x64xf32>
    %cst_181 = arith.constant dense<0.000000e+00> : vector<4x32xf32>
    %350 = tpu.matmul %349, %67, %cst_181 {dimension_numbers = #tpu.dot_dimension_numbers<[1], [0], [0], [1], [0, 0, 1, 1], [], []>} : vector<4x64xf32>, vector<64x32xf32>, vector<4x32xf32> -> vector<4x32xf32>
    %351 = vector.broadcast %29 : vector<1x32xf32> to vector<4x32xf32>
    %352 = arith.addf %350, %351 : vector<4x32xf32>
    %cst_182 = arith.constant dense<0.000000e+00> : vector<4x32xf32>
    %353 = tpu.matmul %352, %47, %cst_182 {dimension_numbers = #tpu.dot_dimension_numbers<[1], [0], [0], [1], [0, 0, 1, 1], [], []>} : vector<4x32xf32>, vector<32x32xf32>, vector<4x32xf32> -> vector<4x32xf32>
    %354 = vector.broadcast %17 : vector<1x32xf32> to vector<4x32xf32>
    %355 = arith.addf %353, %354 : vector<4x32xf32>
    %cst_183 = arith.constant dense<0.000000e+00> : vector<4x32xf32>
    %356 = tpu.matmul %279, %53, %cst_183 {dimension_numbers = #tpu.dot_dimension_numbers<[1], [0], [0], [1], [0, 0, 1, 1], [], []>} : vector<4x32xf32>, vector<32x32xf32>, vector<4x32xf32> -> vector<4x32xf32>
    %357 = arith.addf %355, %356 : vector<4x32xf32>
    %358 = vector.broadcast %23 : vector<1x32xf32> to vector<4x32xf32>
    %359 = arith.addf %357, %358 : vector<4x32xf32>
    %360 = arith.negf %359 : vector<4x32xf32>
    %361 = math.exp %360 : vector<4x32xf32>
    %cst_184 = arith.constant 1.000000e+00 : f32
    %362 = vector.broadcast %cst_184 : f32 to vector<4x32xf32>
    %363 = arith.addf %362, %361 : vector<4x32xf32>
    %364 = arith.divf %362, %363 : vector<4x32xf32>
    %cst_185 = arith.constant dense<0.000000e+00> : vector<4x32xf32>
    %365 = tpu.matmul %352, %49, %cst_185 {dimension_numbers = #tpu.dot_dimension_numbers<[1], [0], [0], [1], [0, 0, 1, 1], [], []>} : vector<4x32xf32>, vector<32x32xf32>, vector<4x32xf32> -> vector<4x32xf32>
    %366 = vector.broadcast %19 : vector<1x32xf32> to vector<4x32xf32>
    %367 = arith.addf %365, %366 : vector<4x32xf32>
    %cst_186 = arith.constant dense<0.000000e+00> : vector<4x32xf32>
    %368 = tpu.matmul %279, %55, %cst_186 {dimension_numbers = #tpu.dot_dimension_numbers<[1], [0], [0], [1], [0, 0, 1, 1], [], []>} : vector<4x32xf32>, vector<32x32xf32>, vector<4x32xf32> -> vector<4x32xf32>
    %369 = arith.addf %367, %368 : vector<4x32xf32>
    %370 = vector.broadcast %25 : vector<1x32xf32> to vector<4x32xf32>
    %371 = arith.addf %369, %370 : vector<4x32xf32>
    %372 = arith.negf %371 : vector<4x32xf32>
    %373 = math.exp %372 : vector<4x32xf32>
    %cst_187 = arith.constant 1.000000e+00 : f32
    %374 = vector.broadcast %cst_187 : f32 to vector<4x32xf32>
    %375 = arith.addf %374, %373 : vector<4x32xf32>
    %376 = arith.divf %374, %375 : vector<4x32xf32>
    %cst_188 = arith.constant dense<0.000000e+00> : vector<4x32xf32>
    %377 = tpu.matmul %352, %51, %cst_188 {dimension_numbers = #tpu.dot_dimension_numbers<[1], [0], [0], [1], [0, 0, 1, 1], [], []>} : vector<4x32xf32>, vector<32x32xf32>, vector<4x32xf32> -> vector<4x32xf32>
    %378 = vector.broadcast %21 : vector<1x32xf32> to vector<4x32xf32>
    %379 = arith.addf %377, %378 : vector<4x32xf32>
    %cst_189 = arith.constant dense<0.000000e+00> : vector<4x32xf32>
    %380 = tpu.matmul %279, %57, %cst_189 {dimension_numbers = #tpu.dot_dimension_numbers<[1], [0], [0], [1], [0, 0, 1, 1], [], []>} : vector<4x32xf32>, vector<32x32xf32>, vector<4x32xf32> -> vector<4x32xf32>
    %381 = vector.broadcast %27 : vector<1x32xf32> to vector<4x32xf32>
    %382 = arith.addf %380, %381 : vector<4x32xf32>
    %383 = arith.mulf %364, %382 : vector<4x32xf32>
    %384 = arith.addf %379, %383 : vector<4x32xf32>
    %385 = math.tanh %384 : vector<4x32xf32>
    %cst_190 = arith.constant 1.000000e+00 : f32
    %386 = vector.broadcast %cst_190 : f32 to vector<4x32xf32>
    %387 = arith.subf %386, %376 : vector<4x32xf32>
    %388 = arith.mulf %387, %385 : vector<4x32xf32>
    %389 = arith.mulf %376, %279 : vector<4x32xf32>
    %390 = arith.addf %388, %389 : vector<4x32xf32>
    %cst_191 = arith.constant dense<0.000000e+00> : vector<4xf32>
    %391 = vector.multi_reduction <add>, %390, %cst_191 [1] : vector<4x32xf32> to vector<4xf32>
    %392 = vector.shape_cast %391 : vector<4xf32> to vector<4x1xf32>
    %cst_192 = arith.constant 3.200000e+01 : f32
    %393 = vector.broadcast %cst_192 : f32 to vector<4x1xf32>
    %394 = arith.divf %392, %393 : vector<4x1xf32>
    %395 = vector.broadcast %394 : vector<4x1xf32> to vector<4x32xf32>
    %396 = arith.subf %390, %395 : vector<4x32xf32>
    %397 = arith.mulf %396, %396 : vector<4x32xf32>
    %cst_193 = arith.constant dense<0.000000e+00> : vector<4xf32>
    %398 = vector.multi_reduction <add>, %397, %cst_193 [1] : vector<4x32xf32> to vector<4xf32>
    %399 = vector.shape_cast %398 : vector<4xf32> to vector<4x1xf32>
    %cst_194 = arith.constant 3.200000e+01 : f32
    %400 = vector.broadcast %cst_194 : f32 to vector<4x1xf32>
    %401 = arith.divf %399, %400 : vector<4x1xf32>
    %402 = vector.broadcast %394 : vector<4x1xf32> to vector<4x32xf32>
    %403 = arith.subf %390, %402 : vector<4x32xf32>
    %cst_195 = arith.constant 9.99999974E-6 : f32
    %404 = vector.broadcast %cst_195 : f32 to vector<4x1xf32>
    %405 = arith.addf %401, %404 : vector<4x1xf32>
    %406 = math.rsqrt %405 : vector<4x1xf32>
    %407 = vector.broadcast %406 : vector<4x1xf32> to vector<4x32xf32>
    %408 = arith.mulf %403, %407 : vector<4x32xf32>
    %409 = vector.broadcast %13 : vector<1x32xf32> to vector<4x32xf32>
    %410 = arith.mulf %408, %409 : vector<4x32xf32>
    %411 = vector.broadcast %15 : vector<1x32xf32> to vector<4x32xf32>
    %412 = arith.addf %410, %411 : vector<4x32xf32>
    %cst_196 = arith.constant dense<0.000000e+00> : vector<4x64xf32>
    %413 = tpu.matmul %412, %63, %cst_196 {dimension_numbers = #tpu.dot_dimension_numbers<[1], [0], [0], [1], [0, 0, 1, 1], [], []>} : vector<4x32xf32>, vector<32x64xf32>, vector<4x64xf32> -> vector<4x64xf32>
    %414 = vector.broadcast %75 : vector<1x64xf32> to vector<4x64xf32>
    %415 = arith.addf %413, %414 : vector<4x64xf32>
    %cst_197 = arith.constant 0.000000e+00 : f32
    %416 = vector.broadcast %cst_197 : f32 to vector<4x64xf32>
    %417 = arith.maximumf %415, %416 : vector<4x64xf32>
    %cst_198 = arith.constant dense<0.000000e+00> : vector<4x32xf32>
    %418 = tpu.matmul %417, %69, %cst_198 {dimension_numbers = #tpu.dot_dimension_numbers<[1], [0], [0], [1], [0, 0, 1, 1], [], []>} : vector<4x64xf32>, vector<64x32xf32>, vector<4x32xf32> -> vector<4x32xf32>
    %419 = arith.addf %390, %418 : vector<4x32xf32>
    %420 = vector.broadcast %31 : vector<1x32xf32> to vector<4x32xf32>
    %421 = arith.addf %419, %420 : vector<4x32xf32>
    %cst_199 = arith.constant dense<0.000000e+00> : vector<4xf32>
    %422 = vector.multi_reduction <add>, %421, %cst_199 [1] : vector<4x32xf32> to vector<4xf32>
    %423 = vector.shape_cast %422 : vector<4xf32> to vector<4x1xf32>
    %cst_200 = arith.constant 3.200000e+01 : f32
    %424 = vector.broadcast %cst_200 : f32 to vector<4x1xf32>
    %425 = arith.divf %423, %424 : vector<4x1xf32>
    %426 = vector.broadcast %425 : vector<4x1xf32> to vector<4x32xf32>
    %427 = arith.subf %421, %426 : vector<4x32xf32>
    %428 = arith.mulf %427, %427 : vector<4x32xf32>
    %cst_201 = arith.constant dense<0.000000e+00> : vector<4xf32>
    %429 = vector.multi_reduction <add>, %428, %cst_201 [1] : vector<4x32xf32> to vector<4xf32>
    %430 = vector.shape_cast %429 : vector<4xf32> to vector<4x1xf32>
    %cst_202 = arith.constant 3.200000e+01 : f32
    %431 = vector.broadcast %cst_202 : f32 to vector<4x1xf32>
    %432 = arith.divf %430, %431 : vector<4x1xf32>
    %433 = vector.broadcast %425 : vector<4x1xf32> to vector<4x32xf32>
    %434 = arith.subf %421, %433 : vector<4x32xf32>
    %cst_203 = arith.constant 9.99999974E-6 : f32
    %435 = vector.broadcast %cst_203 : f32 to vector<4x1xf32>
    %436 = arith.addf %432, %435 : vector<4x1xf32>
    %437 = math.rsqrt %436 : vector<4x1xf32>
    %438 = vector.broadcast %437 : vector<4x1xf32> to vector<4x32xf32>
    %439 = arith.mulf %434, %438 : vector<4x32xf32>
    %440 = vector.broadcast %9 : vector<1x32xf32> to vector<4x32xf32>
    %441 = arith.mulf %439, %440 : vector<4x32xf32>
    %442 = vector.broadcast %11 : vector<1x32xf32> to vector<4x32xf32>
    %443 = arith.addf %441, %442 : vector<4x32xf32>
    %444 = vector.shape_cast %443 : vector<4x32xf32> to vector<1x4x32xf32>
    "tpu.trace_start"() <{level = 10 : i32, message = "bsd,bnd->bsn"}> : () -> ()
    %cst_204 = arith.constant dense<0.000000e+00> : vector<1x4x16xf32>
    %445 = tpu.matmul %444, %129, %cst_204 {dimension_numbers = #tpu.dot_dimension_numbers<[2], [2], [1], [1], [0, 0, 0, 1, 1, 1], [0], [0]>} : vector<1x4x32xf32>, vector<1x16x32xf32>, vector<1x4x16xf32> -> vector<1x4x16xf32>
    "tpu.trace_stop"() : () -> ()
    %cst_205 = arith.constant dense<0xFF800000> : vector<1x16xf32>
    %446 = vector.multi_reduction <maximumf>, %445, %cst_205 [1] : vector<1x4x16xf32> to vector<1x16xf32>
    %447 = vector.shape_cast %446 : vector<1x16xf32> to vector<1x1x16xf32>
    %448 = vector.broadcast %447 : vector<1x1x16xf32> to vector<1x4x16xf32>
    %449 = arith.subf %445, %448 : vector<1x4x16xf32>
    %450 = math.exp %449 : vector<1x4x16xf32>
    %cst_206 = arith.constant dense<0.000000e+00> : vector<1x16xf32>
    %451 = vector.multi_reduction <add>, %450, %cst_206 [1] : vector<1x4x16xf32> to vector<1x16xf32>
    %452 = vector.shape_cast %451 : vector<1x16xf32> to vector<1x1x16xf32>
    %453 = tpu.reciprocal %452 {approx = true} : vector<1x1x16xf32> -> vector<1x1x16xf32>
    %454 = vector.broadcast %453 : vector<1x1x16xf32> to vector<1x4x16xf32>
    %455 = arith.mulf %450, %454 : vector<1x4x16xf32>
    %cst_207 = arith.constant 9.99999993E-9 : f32
    %456 = vector.broadcast %cst_207 : f32 to vector<1x4x16xf32>
    %457 = arith.addf %455, %456 : vector<1x4x16xf32>
    %cst_208 = arith.constant dense<0.000000e+00> : vector<1x4xf32>
    %458 = vector.multi_reduction <add>, %457, %cst_208 [2] : vector<1x4x16xf32> to vector<1x4xf32>
    %459 = vector.shape_cast %458 : vector<1x4xf32> to vector<1x4x1xf32>
    %460 = tpu.reciprocal %459 {approx = true} : vector<1x4x1xf32> -> vector<1x4x1xf32>
    %461 = vector.broadcast %460 : vector<1x4x1xf32> to vector<1x4x16xf32>
    %462 = arith.mulf %457, %461 : vector<1x4x16xf32>
    "tpu.trace_start"() <{level = 10 : i32, message = "bsn,bnd->bsd"}> : () -> ()
    %cst_209 = arith.constant dense<0.000000e+00> : vector<1x4x32xf32>
    %463 = tpu.matmul %462, %131, %cst_209 {dimension_numbers = #tpu.dot_dimension_numbers<[2], [1], [1], [2], [0, 0, 0, 1, 1, 2], [0], [0]>} : vector<1x4x16xf32>, vector<1x16x32xf32>, vector<1x4x32xf32> -> vector<1x4x32xf32>
    "tpu.trace_stop"() : () -> ()
    %464 = vector.shape_cast %463 : vector<1x4x32xf32> to vector<4x32xf32>
    "tpu.trace_start"() <{level = 10 : i32, message = "bsd,bmd->bsm"}> : () -> ()
    %cst_210 = arith.constant dense<0.000000e+00> : vector<1x4x4xf32>
    %465 = tpu.matmul %444, %133, %cst_210 {dimension_numbers = #tpu.dot_dimension_numbers<[2], [2], [1], [1], [0, 0, 0, 1, 1, 1], [0], [0]>} : vector<1x4x32xf32>, vector<1x4x32xf32>, vector<1x4x4xf32> -> vector<1x4x4xf32>
    "tpu.trace_stop"() : () -> ()
    %cst_211 = arith.constant dense<0xFF800000> : vector<1x4xf32>
    %466 = vector.multi_reduction <maximumf>, %465, %cst_211 [1] : vector<1x4x4xf32> to vector<1x4xf32>
    %467 = vector.shape_cast %466 : vector<1x4xf32> to vector<1x1x4xf32>
    %468 = vector.broadcast %467 : vector<1x1x4xf32> to vector<1x4x4xf32>
    %469 = arith.subf %465, %468 : vector<1x4x4xf32>
    %470 = math.exp %469 : vector<1x4x4xf32>
    %cst_212 = arith.constant dense<0.000000e+00> : vector<1x4xf32>
    %471 = vector.multi_reduction <add>, %470, %cst_212 [1] : vector<1x4x4xf32> to vector<1x4xf32>
    %472 = vector.shape_cast %471 : vector<1x4xf32> to vector<1x1x4xf32>
    %473 = tpu.reciprocal %472 {approx = true} : vector<1x1x4xf32> -> vector<1x1x4xf32>
    %474 = vector.broadcast %473 : vector<1x1x4xf32> to vector<1x4x4xf32>
    %475 = arith.mulf %470, %474 : vector<1x4x4xf32>
    %cst_213 = arith.constant 9.99999993E-9 : f32
    %476 = vector.broadcast %cst_213 : f32 to vector<1x4x4xf32>
    %477 = arith.addf %475, %476 : vector<1x4x4xf32>
    %cst_214 = arith.constant dense<0.000000e+00> : vector<1x4xf32>
    %478 = vector.multi_reduction <add>, %477, %cst_214 [2] : vector<1x4x4xf32> to vector<1x4xf32>
    %479 = vector.shape_cast %478 : vector<1x4xf32> to vector<1x4x1xf32>
    %480 = tpu.reciprocal %479 {approx = true} : vector<1x4x1xf32> -> vector<1x4x1xf32>
    %481 = vector.broadcast %480 : vector<1x4x1xf32> to vector<1x4x4xf32>
    %482 = arith.mulf %477, %481 : vector<1x4x4xf32>
    "tpu.trace_start"() <{level = 10 : i32, message = "bsm,bmd->bsd"}> : () -> ()
    %cst_215 = arith.constant dense<0.000000e+00> : vector<1x4x32xf32>
    %483 = tpu.matmul %482, %135, %cst_215 {dimension_numbers = #tpu.dot_dimension_numbers<[2], [1], [1], [2], [0, 0, 0, 1, 1, 2], [0], [0]>} : vector<1x4x4xf32>, vector<1x4x32xf32>, vector<1x4x32xf32> -> vector<1x4x32xf32>
    "tpu.trace_stop"() : () -> ()
    %484 = vector.shape_cast %483 : vector<1x4x32xf32> to vector<4x32xf32>
    %cst_216 = arith.constant dense<0.000000e+00> : vector<4x64xf32>
    %485 = tpu.matmul %464, %59, %cst_216 {dimension_numbers = #tpu.dot_dimension_numbers<[1], [0], [0], [1], [0, 0, 1, 1], [], []>} : vector<4x32xf32>, vector<32x64xf32>, vector<4x64xf32> -> vector<4x64xf32>
    %cst_217 = arith.constant dense<0.000000e+00> : vector<4x64xf32>
    %486 = tpu.matmul %484, %61, %cst_217 {dimension_numbers = #tpu.dot_dimension_numbers<[1], [0], [0], [1], [0, 0, 1, 1], [], []>} : vector<4x32xf32>, vector<32x64xf32>, vector<4x64xf32> -> vector<4x64xf32>
    %487 = arith.addf %485, %486 : vector<4x64xf32>
    %488 = vector.broadcast %73 : vector<1x64xf32> to vector<4x64xf32>
    %489 = arith.addf %487, %488 : vector<4x64xf32>
    %cst_218 = arith.constant 0.000000e+00 : f32
    %490 = vector.broadcast %cst_218 : f32 to vector<4x64xf32>
    %491 = arith.maximumf %489, %490 : vector<4x64xf32>
    %cst_219 = arith.constant dense<0.000000e+00> : vector<4x32xf32>
    %492 = tpu.matmul %491, %67, %cst_219 {dimension_numbers = #tpu.dot_dimension_numbers<[1], [0], [0], [1], [0, 0, 1, 1], [], []>} : vector<4x64xf32>, vector<64x32xf32>, vector<4x32xf32> -> vector<4x32xf32>
    %493 = vector.broadcast %29 : vector<1x32xf32> to vector<4x32xf32>
    %494 = arith.addf %492, %493 : vector<4x32xf32>
    %cst_220 = arith.constant dense<0.000000e+00> : vector<4x32xf32>
    %495 = tpu.matmul %494, %47, %cst_220 {dimension_numbers = #tpu.dot_dimension_numbers<[1], [0], [0], [1], [0, 0, 1, 1], [], []>} : vector<4x32xf32>, vector<32x32xf32>, vector<4x32xf32> -> vector<4x32xf32>
    %496 = vector.broadcast %17 : vector<1x32xf32> to vector<4x32xf32>
    %497 = arith.addf %495, %496 : vector<4x32xf32>
    %cst_221 = arith.constant dense<0.000000e+00> : vector<4x32xf32>
    %498 = tpu.matmul %421, %53, %cst_221 {dimension_numbers = #tpu.dot_dimension_numbers<[1], [0], [0], [1], [0, 0, 1, 1], [], []>} : vector<4x32xf32>, vector<32x32xf32>, vector<4x32xf32> -> vector<4x32xf32>
    %499 = arith.addf %497, %498 : vector<4x32xf32>
    %500 = vector.broadcast %23 : vector<1x32xf32> to vector<4x32xf32>
    %501 = arith.addf %499, %500 : vector<4x32xf32>
    %502 = arith.negf %501 : vector<4x32xf32>
    %503 = math.exp %502 : vector<4x32xf32>
    %cst_222 = arith.constant 1.000000e+00 : f32
    %504 = vector.broadcast %cst_222 : f32 to vector<4x32xf32>
    %505 = arith.addf %504, %503 : vector<4x32xf32>
    %506 = arith.divf %504, %505 : vector<4x32xf32>
    %cst_223 = arith.constant dense<0.000000e+00> : vector<4x32xf32>
    %507 = tpu.matmul %494, %49, %cst_223 {dimension_numbers = #tpu.dot_dimension_numbers<[1], [0], [0], [1], [0, 0, 1, 1], [], []>} : vector<4x32xf32>, vector<32x32xf32>, vector<4x32xf32> -> vector<4x32xf32>
    %508 = vector.broadcast %19 : vector<1x32xf32> to vector<4x32xf32>
    %509 = arith.addf %507, %508 : vector<4x32xf32>
    %cst_224 = arith.constant dense<0.000000e+00> : vector<4x32xf32>
    %510 = tpu.matmul %421, %55, %cst_224 {dimension_numbers = #tpu.dot_dimension_numbers<[1], [0], [0], [1], [0, 0, 1, 1], [], []>} : vector<4x32xf32>, vector<32x32xf32>, vector<4x32xf32> -> vector<4x32xf32>
    %511 = arith.addf %509, %510 : vector<4x32xf32>
    %512 = vector.broadcast %25 : vector<1x32xf32> to vector<4x32xf32>
    %513 = arith.addf %511, %512 : vector<4x32xf32>
    %514 = arith.negf %513 : vector<4x32xf32>
    %515 = math.exp %514 : vector<4x32xf32>
    %cst_225 = arith.constant 1.000000e+00 : f32
    %516 = vector.broadcast %cst_225 : f32 to vector<4x32xf32>
    %517 = arith.addf %516, %515 : vector<4x32xf32>
    %518 = arith.divf %516, %517 : vector<4x32xf32>
    %cst_226 = arith.constant dense<0.000000e+00> : vector<4x32xf32>
    %519 = tpu.matmul %494, %51, %cst_226 {dimension_numbers = #tpu.dot_dimension_numbers<[1], [0], [0], [1], [0, 0, 1, 1], [], []>} : vector<4x32xf32>, vector<32x32xf32>, vector<4x32xf32> -> vector<4x32xf32>
    %520 = vector.broadcast %21 : vector<1x32xf32> to vector<4x32xf32>
    %521 = arith.addf %519, %520 : vector<4x32xf32>
    %cst_227 = arith.constant dense<0.000000e+00> : vector<4x32xf32>
    %522 = tpu.matmul %421, %57, %cst_227 {dimension_numbers = #tpu.dot_dimension_numbers<[1], [0], [0], [1], [0, 0, 1, 1], [], []>} : vector<4x32xf32>, vector<32x32xf32>, vector<4x32xf32> -> vector<4x32xf32>
    %523 = vector.broadcast %27 : vector<1x32xf32> to vector<4x32xf32>
    %524 = arith.addf %522, %523 : vector<4x32xf32>
    %525 = arith.mulf %506, %524 : vector<4x32xf32>
    %526 = arith.addf %521, %525 : vector<4x32xf32>
    %527 = math.tanh %526 : vector<4x32xf32>
    %cst_228 = arith.constant 1.000000e+00 : f32
    %528 = vector.broadcast %cst_228 : f32 to vector<4x32xf32>
    %529 = arith.subf %528, %518 : vector<4x32xf32>
    %530 = arith.mulf %529, %527 : vector<4x32xf32>
    %531 = arith.mulf %518, %421 : vector<4x32xf32>
    %532 = arith.addf %530, %531 : vector<4x32xf32>
    %cst_229 = arith.constant dense<0.000000e+00> : vector<4xf32>
    %533 = vector.multi_reduction <add>, %532, %cst_229 [1] : vector<4x32xf32> to vector<4xf32>
    %534 = vector.shape_cast %533 : vector<4xf32> to vector<4x1xf32>
    %cst_230 = arith.constant 3.200000e+01 : f32
    %535 = vector.broadcast %cst_230 : f32 to vector<4x1xf32>
    %536 = arith.divf %534, %535 : vector<4x1xf32>
    %537 = vector.broadcast %536 : vector<4x1xf32> to vector<4x32xf32>
    %538 = arith.subf %532, %537 : vector<4x32xf32>
    %539 = arith.mulf %538, %538 : vector<4x32xf32>
    %cst_231 = arith.constant dense<0.000000e+00> : vector<4xf32>
    %540 = vector.multi_reduction <add>, %539, %cst_231 [1] : vector<4x32xf32> to vector<4xf32>
    %541 = vector.shape_cast %540 : vector<4xf32> to vector<4x1xf32>
    %cst_232 = arith.constant 3.200000e+01 : f32
    %542 = vector.broadcast %cst_232 : f32 to vector<4x1xf32>
    %543 = arith.divf %541, %542 : vector<4x1xf32>
    %544 = vector.broadcast %536 : vector<4x1xf32> to vector<4x32xf32>
    %545 = arith.subf %532, %544 : vector<4x32xf32>
    %cst_233 = arith.constant 9.99999974E-6 : f32
    %546 = vector.broadcast %cst_233 : f32 to vector<4x1xf32>
    %547 = arith.addf %543, %546 : vector<4x1xf32>
    %548 = math.rsqrt %547 : vector<4x1xf32>
    %549 = vector.broadcast %548 : vector<4x1xf32> to vector<4x32xf32>
    %550 = arith.mulf %545, %549 : vector<4x32xf32>
    %551 = vector.broadcast %13 : vector<1x32xf32> to vector<4x32xf32>
    %552 = arith.mulf %550, %551 : vector<4x32xf32>
    %553 = vector.broadcast %15 : vector<1x32xf32> to vector<4x32xf32>
    %554 = arith.addf %552, %553 : vector<4x32xf32>
    %cst_234 = arith.constant dense<0.000000e+00> : vector<4x64xf32>
    %555 = tpu.matmul %554, %63, %cst_234 {dimension_numbers = #tpu.dot_dimension_numbers<[1], [0], [0], [1], [0, 0, 1, 1], [], []>} : vector<4x32xf32>, vector<32x64xf32>, vector<4x64xf32> -> vector<4x64xf32>
    %556 = vector.broadcast %75 : vector<1x64xf32> to vector<4x64xf32>
    %557 = arith.addf %555, %556 : vector<4x64xf32>
    %cst_235 = arith.constant 0.000000e+00 : f32
    %558 = vector.broadcast %cst_235 : f32 to vector<4x64xf32>
    %559 = arith.maximumf %557, %558 : vector<4x64xf32>
    %cst_236 = arith.constant dense<0.000000e+00> : vector<4x32xf32>
    %560 = tpu.matmul %559, %69, %cst_236 {dimension_numbers = #tpu.dot_dimension_numbers<[1], [0], [0], [1], [0, 0, 1, 1], [], []>} : vector<4x64xf32>, vector<64x32xf32>, vector<4x32xf32> -> vector<4x32xf32>
    %561 = arith.addf %532, %560 : vector<4x32xf32>
    %562 = vector.broadcast %31 : vector<1x32xf32> to vector<4x32xf32>
    %563 = arith.addf %561, %562 : vector<4x32xf32>
    %564 = vector.shape_cast %563 : vector<4x32xf32> to vector<1x4x32xf32>
    %cst_237 = arith.constant dense<0.000000e+00> : vector<4x32xf32>
    %565 = tpu.matmul %563, %45, %cst_237 {dimension_numbers = #tpu.dot_dimension_numbers<[1], [0], [0], [1], [0, 0, 1, 1], [], []>} : vector<4x32xf32>, vector<32x32xf32>, vector<4x32xf32> -> vector<4x32xf32>
    %566 = vector.shape_cast %565 : vector<4x32xf32> to vector<1x4x32xf32>
    "tpu.trace_start"() <{level = 10 : i32, message = "bmd,bsd->bms"}> : () -> ()
    %cst_238 = arith.constant dense<0.000000e+00> : vector<1x4x4xf32>
    %567 = tpu.matmul %137, %564, %cst_238 {dimension_numbers = #tpu.dot_dimension_numbers<[2], [2], [1], [1], [0, 0, 0, 1, 1, 1], [0], [0]>} : vector<1x4x32xf32>, vector<1x4x32xf32>, vector<1x4x4xf32> -> vector<1x4x4xf32>
    "tpu.trace_stop"() : () -> ()
    %cst_239 = arith.constant dense<0xFF800000> : vector<1x4xf32>
    %568 = vector.multi_reduction <maximumf>, %567, %cst_239 [2] : vector<1x4x4xf32> to vector<1x4xf32>
    %569 = vector.shape_cast %568 : vector<1x4xf32> to vector<1x4x1xf32>
    %570 = vector.broadcast %569 : vector<1x4x1xf32> to vector<1x4x4xf32>
    %571 = arith.subf %567, %570 : vector<1x4x4xf32>
    %572 = math.exp %571 : vector<1x4x4xf32>
    %cst_240 = arith.constant dense<0.000000e+00> : vector<1x4xf32>
    %573 = vector.multi_reduction <add>, %572, %cst_240 [2] : vector<1x4x4xf32> to vector<1x4xf32>
    %574 = vector.shape_cast %573 : vector<1x4xf32> to vector<1x4x1xf32>
    %575 = tpu.reciprocal %574 {approx = true} : vector<1x4x1xf32> -> vector<1x4x1xf32>
    %576 = vector.broadcast %575 : vector<1x4x1xf32> to vector<1x4x4xf32>
    %577 = arith.mulf %572, %576 : vector<1x4x4xf32>
    %cst_241 = arith.constant 9.99999993E-9 : f32
    %578 = vector.broadcast %cst_241 : f32 to vector<1x4x4xf32>
    %579 = arith.addf %577, %578 : vector<1x4x4xf32>
    %cst_242 = arith.constant dense<0.000000e+00> : vector<1x4xf32>
    %580 = vector.multi_reduction <add>, %579, %cst_242 [1] : vector<1x4x4xf32> to vector<1x4xf32>
    %581 = vector.shape_cast %580 : vector<1x4xf32> to vector<1x1x4xf32>
    %582 = tpu.reciprocal %581 {approx = true} : vector<1x1x4xf32> -> vector<1x1x4xf32>
    %583 = vector.broadcast %582 : vector<1x1x4xf32> to vector<1x4x4xf32>
    %584 = arith.mulf %579, %583 : vector<1x4x4xf32>
    "tpu.trace_start"() <{level = 10 : i32, message = "bms,bsd->bmd"}> : () -> ()
    %cst_243 = arith.constant dense<0.000000e+00> : vector<1x4x32xf32>
    %585 = tpu.matmul %584, %566, %cst_243 {dimension_numbers = #tpu.dot_dimension_numbers<[2], [1], [1], [2], [0, 0, 0, 1, 1, 2], [0], [0]>} : vector<1x4x4xf32>, vector<1x4x32xf32>, vector<1x4x32xf32> -> vector<1x4x32xf32>
    "tpu.trace_stop"() : () -> ()
    %586 = vector.shape_cast %585 : vector<1x4x32xf32> to vector<4x32xf32>
    %cst_244 = arith.constant dense<0.000000e+00> : vector<4x64xf32>
    %587 = tpu.matmul %586, %65, %cst_244 {dimension_numbers = #tpu.dot_dimension_numbers<[1], [0], [0], [1], [0, 0, 1, 1], [], []>} : vector<4x32xf32>, vector<32x64xf32>, vector<4x64xf32> -> vector<4x64xf32>
    %588 = vector.broadcast %77 : vector<1x64xf32> to vector<4x64xf32>
    %589 = arith.addf %587, %588 : vector<4x64xf32>
    %cst_245 = arith.constant 0.000000e+00 : f32
    %590 = vector.broadcast %cst_245 : f32 to vector<4x64xf32>
    %591 = arith.maximumf %589, %590 : vector<4x64xf32>
    %cst_246 = arith.constant dense<0.000000e+00> : vector<4x32xf32>
    %592 = tpu.matmul %591, %71, %cst_246 {dimension_numbers = #tpu.dot_dimension_numbers<[1], [0], [0], [1], [0, 0, 1, 1], [], []>} : vector<4x64xf32>, vector<64x32xf32>, vector<4x32xf32> -> vector<4x32xf32>
    %593 = arith.addf %127, %592 : vector<4x32xf32>
    %594 = vector.broadcast %33 : vector<1x32xf32> to vector<4x32xf32>
    %595 = arith.addf %593, %594 : vector<4x32xf32>
    %596 = vector.shape_cast %595 : vector<4x32xf32> to vector<1x4x32xf32>
    %c0_247 = arith.constant 0 : index
    %c0_248 = arith.constant 0 : index
    %c0_249 = arith.constant 0 : index
    %597 = vector.load %arg9[%c0_247, %c0_248, %c0_249] : memref<1x4x32xf32, #tpu.memory_space<vmem>>, vector<1x4x32xf32>
    tpu.vector_store %arg9[%c0_247, %c0_248, %c0_249], %596 {strides = array<i32>} : memref<1x4x32xf32, #tpu.memory_space<vmem>>, vector<1x4x32xf32>,
    %598 = vector.shape_cast %563 : vector<4x32xf32> to vector<1x4x32xf32>
    %c0_250 = arith.constant 0 : index
    %c0_251 = arith.constant 0 : index
    %c0_252 = arith.constant 0 : index
    %599 = vector.load %arg10[%c0_250, %c0_251, %c0_252] : memref<1x4x32xf32, #tpu.memory_space<vmem>>, vector<1x4x32xf32>
    tpu.vector_store %arg10[%c0_250, %c0_251, %c0_252], %598 {strides = array<i32>} : memref<1x4x32xf32, #tpu.memory_space<vmem>>, vector<1x4x32xf32>,
    return
  }
  func.func @transform_0(%arg0: i32) -> (i32, i32, i32) {
    %c0_i32 = arith.constant 0 : i32
    %c0_i32_0 = arith.constant 0 : i32
    %c0_i32_1 = arith.constant 0 : i32
    return %arg0, %c0_i32, %c0_i32_0 : i32, i32, i32
  }
  func.func @transform_1(%arg0: i32) -> (i32, i32, i32) {
    %c0_i32 = arith.constant 0 : i32
    %c0_i32_0 = arith.constant 0 : i32
    %c0_i32_1 = arith.constant 0 : i32
    return %arg0, %c0_i32, %c0_i32_0 : i32, i32, i32
  }
  func.func @transform_2(%arg0: i32) -> (i32, i32, i32) {
    %c0_i32 = arith.constant 0 : i32
    %c0_i32_0 = arith.constant 0 : i32
    %c0_i32_1 = arith.constant 0 : i32
    return %arg0, %c0_i32, %c0_i32_0 : i32, i32, i32
  }
  func.func @transform_3(%arg0: i32) -> (i32, i32, i32) {
    %c0_i32 = arith.constant 0 : i32
    %c0_i32_0 = arith.constant 0 : i32
    %c0_i32_1 = arith.constant 0 : i32
    %c0_i32_2 = arith.constant 0 : i32
    return %c0_i32, %c0_i32_0, %c0_i32_1 : i32, i32, i32
  }
  func.func @transform_4(%arg0: i32) -> (i32, i32, i32) {
    %c0_i32 = arith.constant 0 : i32
    %c0_i32_0 = arith.constant 0 : i32
    %c0_i32_1 = arith.constant 0 : i32
    %c0_i32_2 = arith.constant 0 : i32
    return %c0_i32, %c0_i32_0, %c0_i32_1 : i32, i32, i32
  }
  func.func @transform_5(%arg0: i32) -> (i32, i32, i32) {
    %c0_i32 = arith.constant 0 : i32
    %c0_i32_0 = arith.constant 0 : i32
    %c0_i32_1 = arith.constant 0 : i32
    %c0_i32_2 = arith.constant 0 : i32
    return %c0_i32, %c0_i32_0, %c0_i32_1 : i32, i32, i32
  }
  func.func @transform_6(%arg0: i32) -> (i32, i32, i32) {
    %c0_i32 = arith.constant 0 : i32
    %c0_i32_0 = arith.constant 0 : i32
    %c0_i32_1 = arith.constant 0 : i32
    %c0_i32_2 = arith.constant 0 : i32
    return %c0_i32, %c0_i32_0, %c0_i32_1 : i32, i32, i32
  }
  func.func @transform_7(%arg0: i32) -> (i32, i32, i32) {
    %c0_i32 = arith.constant 0 : i32
    %c0_i32_0 = arith.constant 0 : i32
    %c0_i32_1 = arith.constant 0 : i32
    %c0_i32_2 = arith.constant 0 : i32
    return %c0_i32, %c0_i32_0, %c0_i32_1 : i32, i32, i32
  }
  func.func @transform_8(%arg0: i32) -> (i32, i32, i32) {
    %c0_i32 = arith.constant 0 : i32
    %c0_i32_0 = arith.constant 0 : i32
    %c0_i32_1 = arith.constant 0 : i32
    return %arg0, %c0_i32, %c0_i32_0 : i32, i32, i32
  }
  func.func @transform_9(%arg0: i32) -> (i32, i32, i32) {
    %c0_i32 = arith.constant 0 : i32
    %c0_i32_0 = arith.constant 0 : i32
    %c0_i32_1 = arith.constant 0 : i32
    return %arg0, %c0_i32, %c0_i32_0 : i32, i32, i32
  }
}

</mosaic_0001>

<llo_original>
// kernel: tpu_custom_call.1
$region0: #{tpu_custom_call.1}
  #allocation0 [shape = 'u32[]', space=smem, size = 0x4, offset = 0x4, fixed_abs, tag = 'smem constant byte address 0x4 - core index']
  #allocation1 [shape = 'u32[144,128]{1,0:T(1,128)}', space=vmem, size = 0x12000, scoped, tag = 'internal scratch']
  %s0 = inlined_call_operand.vmem [shape: f32[2,16,32], index: 0, kind: input, shape index: {}]
  %s1 = inlined_call_operand.vmem [shape: f32[2,4,32], index: 1, kind: input, shape index: {}]
  %s2 = inlined_call_operand.vmem [shape: f32[2,4,32], index: 2, kind: input, shape index: {}]
  %s3 = inlined_call_operand.hbm [shape: f32[12,32,32], index: 3, kind: input, shape index: {}]
  %s4 = inlined_call_operand.vmem [shape: f32[4,32,64], index: 4, kind: input, shape index: {}]
  %s5 = inlined_call_operand.vmem [shape: f32[3,64,32], index: 5, kind: input, shape index: {}]
  %s6 = inlined_call_operand.vmem [shape: f32[17,1,32], index: 6, kind: input, shape index: {}]
  %s7 = inlined_call_operand.vmem [shape: f32[3,1,64], index: 7, kind: input, shape index: {}]
  %s8 = inlined_call_operand.hbm [shape: f32[2,4,32], index: 8, kind: output, shape index: {0}]
  %s9 = inlined_call_operand.hbm [shape: f32[2,4,32], index: 9, kind: output, shape index: {1}]
  %10 = xla_tuple %s8, %s9
  %s11 = sld [smem:[#allocation0]]
  $region77: #{tpu_custom_call.1} parent=0
    _
  %s13 = ssub.s32 1, %s11
  %s14 = scalar_select 0, %s13, %s11
  $region1: #{tpu_custom_call.1} parent=0
    #allocation2 [shape = 'u8[196608]{0}', space=vmem, size = 0x30000, scoped, tag = 'input window, operand 3, single buffered']
    #allocation3 [shape = 's32[2]{0}', space=sflag, size = 0x8, scoped, tag = 'scoped memory for tpu_custom_call.1']
    #allocation4 [shape = 's32[2]{0}', space=sflag, size = 0x8, scoped, tag = 'scoped memory for tpu_custom_call.1']
    #allocation5 [shape = 'u8[4096]{0}', space=vmem, size = 0x1000, scoped, tag = 'output window, operand 0']
    #allocation6 [shape = 'u8[4096]{0}', space=vmem, size = 0x1000, scoped, tag = 'output window, operand 1']
    #allocation7 [shape = 's32[2]{0}', space=sflag, size = 0x8, scoped, tag = 'scoped memory for tpu_custom_call.1']
    %15 = vsyncpa [#allocation3], 0
    %16 = vsyncpa [#allocation4], 0
    %s17 = scalar_lea.sflag [#allocation4], 1
    %18 = vsyncpa %s17, 0
    %19 = vsyncpa [#allocation7], 0
    %s20 = scalar_lea.sflag [#allocation7], 1
    %21 = vsyncpa %s20, 0
    loop: start=0, step=1, limit=4
    $region2: #{tpu_custom_call.1} parent=1 // loop_pre_header
      _
    $region3: #{tpu_custom_call.1} parent=1 // loop_header
      %s23 = sphi 0, %s27
      %p24 = scmp.ge.s32.totalorder %s23, 4
      %s33 = sphi 0, %s35
      %s36 = sphi 0, %s33
      %s37 = sphi 0, %s36
      %s53 = sphi 0, %s37
      %s59 = sphi 0, %s61
      %s62 = sphi 0, %s59
      %s63 = sphi 0, %s62
      %s79 = sphi 0, %s63
      %s85 = sphi 0, %s87
      %s88 = sphi 0, %s85
      %s89 = sphi 0, %s88
      %s105 = sphi 0, %s89
      %s109 = sphi 0, %s109
      %s111 = sphi 0, %s109
      %s112 = sphi 0, %s111
      %s126 = sphi 0, %s112
      %s130 = sphi 0, %s130
      %s132 = sphi 0, %s130
      %s133 = sphi 0, %s132
      %s147 = sphi 0, %s133
      %s151 = sphi 0, %s151
      %s153 = sphi 0, %s151
      %s154 = sphi 0, %s153
      %s168 = sphi 0, %s154
      %s172 = sphi 0, %s172
      %s174 = sphi 0, %s172
      %s175 = sphi 0, %s174
      %s189 = sphi 0, %s175
      %s193 = sphi 0, %s193
      %s195 = sphi 0, %s193
      %s196 = sphi 0, %s195
      %s210 = sphi 0, %s196
      %s216 = sphi 0, %s218
      %s219 = sphi 0, %s216
      %s220 = sphi 0, %s219
      %s236 = sphi 0, %s220
      %s242 = sphi 0, %s244
      %s245 = sphi 0, %s242
      %s246 = sphi 0, %s245
      %s262 = sphi 0, %s246
    $region4: #{tpu_custom_call.1} parent=1 // loop_header_branch
      %26 = sbr.rel (%p24) target = $region8
    $region5: #{tpu_custom_call.1} parent=1 // loop_body
      %s28 = ssub.s32 %s23, 1
      %s29 = ssub.s32 %s23, 2
      %s30 = sadd.s32 %s23, 1
      %s31 = ssub.s32 %s23, %s30
      %p32 = scmp.eq.s32.totalorder %s31, 0
      %s34 = sadd.s32 %s33, 1
      %s35 = scalar_select %p32, %s33, %s34
      %p38 = pneg %p32
      %p39 = scmp.eq.s32.totalorder %s23, 1
      %p40 = por %p38, %p39
      %p41 = scmp.ne.s32.totalorder %s33, %s36
      %p42 = scmp.eq.s32.totalorder %s23, 0
      %p43 = por %p41, %p42
      %p44 = scmp.ne.s32.totalorder %s33, %s36
      %p45 = scmp.eq.s32.totalorder %s28, 1
      %p46 = por %p44, %p45
      %p47 = scmp.ne.s32.totalorder %s36, %s37
      %p48 = scmp.eq.s32.totalorder %s28, 0
      %p49 = por %p47, %p48
      %p50 = scmp.ne.s32.totalorder %s36, %s37
      %p51 = scmp.eq.s32.totalorder %s29, 1
      %p52 = por %p50, %p51
      %p54 = scmp.ne.s32.totalorder %s37, %s53
      %p55 = scmp.eq.s32.totalorder %s29, 0
      %p56 = por %p54, %p55
      %s57 = ssub.s32 %s23, %s30
      %p58 = scmp.eq.s32.totalorder %s57, 0
      %s60 = sadd.s32 %s59, 1
      %s61 = scalar_select %p58, %s59, %s60
      %p64 = pneg %p58
      %p65 = scmp.eq.s32.totalorder %s23, 1
      %p66 = por %p64, %p65
      %p67 = scmp.ne.s32.totalorder %s59, %s62
      %p68 = scmp.eq.s32.totalorder %s23, 0
      %p69 = por %p67, %p68
      %p70 = scmp.ne.s32.totalorder %s59, %s62
      %p71 = scmp.eq.s32.totalorder %s28, 1
      %p72 = por %p70, %p71
      %p73 = scmp.ne.s32.totalorder %s62, %s63
      %p74 = scmp.eq.s32.totalorder %s28, 0
      %p75 = por %p73, %p74
      %p76 = scmp.ne.s32.totalorder %s62, %s63
      %p77 = scmp.eq.s32.totalorder %s29, 1
      %p78 = por %p76, %p77
      %p80 = scmp.ne.s32.totalorder %s63, %s79
      %p81 = scmp.eq.s32.totalorder %s29, 0
      %p82 = por %p80, %p81
      %s83 = ssub.s32 %s23, %s30
      %p84 = scmp.eq.s32.totalorder %s83, 0
      %s86 = sadd.s32 %s85, 1
      %s87 = scalar_select %p84, %s85, %s86
      %p90 = pneg %p84
      %p91 = scmp.eq.s32.totalorder %s23, 1
      %p92 = por %p90, %p91
      %p93 = scmp.ne.s32.totalorder %s85, %s88
      %p94 = scmp.eq.s32.totalorder %s23, 0
      %p95 = por %p93, %p94
      %p96 = scmp.ne.s32.totalorder %s85, %s88
      %p97 = scmp.eq.s32.totalorder %s28, 1
      %p98 = por %p96, %p97
      %p99 = scmp.ne.s32.totalorder %s88, %s89
      %p100 = scmp.eq.s32.totalorder %s28, 0
      %p101 = por %p99, %p100
      %p102 = scmp.ne.s32.totalorder %s88, %s89
      %p103 = scmp.eq.s32.totalorder %s29, 1
      %p104 = por %p102, %p103
      %p106 = scmp.ne.s32.totalorder %s89, %s105
      %p107 = scmp.eq.s32.totalorder %s29, 0
      %p108 = por %p106, %p107
      %s110 = sadd.s32 %s109, 1
      %p113 = scmp.eq.s32.totalorder %s23, 1
      %p114 = scmp.ne.s32.totalorder %s109, %s111
      %p115 = scmp.eq.s32.totalorder %s23, 0
      %p116 = por %p114, %p115
      %p117 = scmp.ne.s32.totalorder %s109, %s111
      %p118 = scmp.eq.s32.totalorder %s28, 1
      %p119 = por %p117, %p118
      %p120 = scmp.ne.s32.totalorder %s111, %s112
      %p121 = scmp.eq.s32.totalorder %s28, 0
      %p122 = por %p120, %p121
      %p123 = scmp.ne.s32.totalorder %s111, %s112
      %p124 = scmp.eq.s32.totalorder %s29, 1
      %p125 = por %p123, %p124
      %p127 = scmp.ne.s32.totalorder %s112, %s126
      %p128 = scmp.eq.s32.totalorder %s29, 0
      %p129 = por %p127, %p128
      %s131 = sadd.s32 %s130, 1
      %p134 = scmp.eq.s32.totalorder %s23, 1
      %p135 = scmp.ne.s32.totalorder %s130, %s132
      %p136 = scmp.eq.s32.totalorder %s23, 0
      %p137 = por %p135, %p136
      %p138 = scmp.ne.s32.totalorder %s130, %s132
      %p139 = scmp.eq.s32.totalorder %s28, 1
      %p140 = por %p138, %p139
      %p141 = scmp.ne.s32.totalorder %s132, %s133
      %p142 = scmp.eq.s32.totalorder %s28, 0
      %p143 = por %p141, %p142
      %p144 = scmp.ne.s32.totalorder %s132, %s133
      %p145 = scmp.eq.s32.totalorder %s29, 1
      %p146 = por %p144, %p145
      %p148 = scmp.ne.s32.totalorder %s133, %s147
      %p149 = scmp.eq.s32.totalorder %s29, 0
      %p150 = por %p148, %p149
      %s152 = sadd.s32 %s151, 1
      %p155 = scmp.eq.s32.totalorder %s23, 1
      %p156 = scmp.ne.s32.totalorder %s151, %s153
      %p157 = scmp.eq.s32.totalorder %s23, 0
      %p158 = por %p156, %p157
      %p159 = scmp.ne.s32.totalorder %s151, %s153
      %p160 = scmp.eq.s32.totalorder %s28, 1
      %p161 = por %p159, %p160
      %p162 = scmp.ne.s32.totalorder %s153, %s154
      %p163 = scmp.eq.s32.totalorder %s28, 0
      %p164 = por %p162, %p163
      %p165 = scmp.ne.s32.totalorder %s153, %s154
      %p166 = scmp.eq.s32.totalorder %s29, 1
      %p167 = por %p165, %p166
      %p169 = scmp.ne.s32.totalorder %s154, %s168
      %p170 = scmp.eq.s32.totalorder %s29, 0
      %p171 = por %p169, %p170
      %s173 = sadd.s32 %s172, 1
      %p176 = scmp.eq.s32.totalorder %s23, 1
      %p177 = scmp.ne.s32.totalorder %s172, %s174
      %p178 = scmp.eq.s32.totalorder %s23, 0
      %p179 = por %p177, %p178
      %p180 = scmp.ne.s32.totalorder %s172, %s174
      %p181 = scmp.eq.s32.totalorder %s28, 1
      %p182 = por %p180, %p181
      %p183 = scmp.ne.s32.totalorder %s174, %s175
      %p184 = scmp.eq.s32.totalorder %s28, 0
      %p185 = por %p183, %p184
      %p186 = scmp.ne.s32.totalorder %s174, %s175
      %p187 = scmp.eq.s32.totalorder %s29, 1
      %p188 = por %p186, %p187
      %p190 = scmp.ne.s32.totalorder %s175, %s189
      %p191 = scmp.eq.s32.totalorder %s29, 0
      %p192 = por %p190, %p191
      %s194 = sadd.s32 %s193, 1
      %p197 = scmp.eq.s32.totalorder %s23, 1
      %p198 = scmp.ne.s32.totalorder %s193, %s195
      %p199 = scmp.eq.s32.totalorder %s23, 0
      %p200 = por %p198, %p199
      %p201 = scmp.ne.s32.totalorder %s193, %s195
      %p202 = scmp.eq.s32.totalorder %s28, 1
      %p203 = por %p201, %p202
      %p204 = scmp.ne.s32.totalorder %s195, %s196
      %p205 = scmp.eq.s32.totalorder %s28, 0
      %p206 = por %p204, %p205
      %p207 = scmp.ne.s32.totalorder %s195, %s196
      %p208 = scmp.eq.s32.totalorder %s29, 1
      %p209 = por %p207, %p208
      %p211 = scmp.ne.s32.totalorder %s196, %s210
      %p212 = scmp.eq.s32.totalorder %s29, 0
      %p213 = por %p211, %p212
      %s214 = ssub.s32 %s23, %s30
      %p215 = scmp.eq.s32.totalorder %s214, 0
      %s217 = sadd.s32 %s216, 1
      %s218 = scalar_select %p215, %s216, %s217
      %p221 = pneg %p215
      %p222 = scmp.eq.s32.totalorder %s23, 1
      %p223 = por %p221, %p222
      %p224 = scmp.ne.s32.totalorder %s216, %s219
      %p225 = scmp.eq.s32.totalorder %s23, 0
      %p226 = por %p224, %p225
      %p227 = scmp.ne.s32.totalorder %s216, %s219
      %p228 = scmp.eq.s32.totalorder %s28, 1
      %p229 = por %p227, %p228
      %p230 = scmp.ne.s32.totalorder %s219, %s220
      %p231 = scmp.eq.s32.totalorder %s28, 0
      %p232 = por %p230, %p231
      %p233 = scmp.ne.s32.totalorder %s219, %s220
      %p234 = scmp.eq.s32.totalorder %s29, 1
      %p235 = por %p233, %p234
      %p237 = scmp.ne.s32.totalorder %s220, %s236
      %p238 = scmp.eq.s32.totalorder %s29, 0
      %p239 = por %p237, %p238
      %s240 = ssub.s32 %s23, %s30
      %p241 = scmp.eq.s32.totalorder %s240, 0
      %s243 = sadd.s32 %s242, 1
      %s244 = scalar_select %p241, %s242, %s243
      %p247 = pneg %p241
      %p248 = scmp.eq.s32.totalorder %s23, 1
      %p249 = por %p247, %p248
      %p250 = scmp.ne.s32.totalorder %s242, %s245
      %p251 = scmp.eq.s32.totalorder %s23, 0
      %p252 = por %p250, %p251
      %p253 = scmp.ne.s32.totalorder %s242, %s245
      %p254 = scmp.eq.s32.totalorder %s28, 1
      %p255 = por %p253, %p254
      %p256 = scmp.ne.s32.totalorder %s245, %s246
      %p257 = scmp.eq.s32.totalorder %s28, 0
      %p258 = por %p256, %p257
      %p259 = scmp.ne.s32.totalorder %s245, %s246
      %p260 = scmp.eq.s32.totalorder %s29, 1
      %p261 = por %p259, %p260
      %p263 = scmp.ne.s32.totalorder %s246, %s262
      %p264 = scmp.eq.s32.totalorder %s29, 0
      %p265 = por %p263, %p264
      %p266 = scmp.le.s32.totalorder 1, %s23
      %p267 = scmp.lt.s32.totalorder %s23, 3
      %p268 = pnand %p266, %p267
      %p269 = pneg %p268
      // Predicated region
      $region9: #{tpu_custom_call.1} parent=5 // pred_check
        _
      $region10: #{tpu_custom_call.1} parent=5 // pred_check_branch
        %271 = sbr.rel (%p268) target = $region12
      $region11: #{tpu_custom_call.1} parent=5 // pred_region
        %s272 = ssub.s32 %s23, 1
        // Predicated region
        $region13: #{tpu_custom_call.1} parent=11 // pred_check
          %p273 = pneg %p122
        $region14: #{tpu_custom_call.1} parent=11 // pred_check_branch
          %275 = sbr.rel (%p273) target = $region16
        $region15: #{tpu_custom_call.1} parent=11 // pred_region
          %s277 = ssub.s32 6144, 6144
          %278 = vsyncadd [#allocation3], %s277
          %s279 = sshll.u32 [#allocation2], 4
          %s280 = int_to_ptr.vmem [resolvable:$true] %s279
          %285 = dma.hbm_to_vmem [thread:$0]  %s3, 6144, %s280, [#allocation3], 128, 128, 8
        $region16: #{tpu_custom_call.1} parent=11 // pred_fallthru
          _
        // Predicated region
        $region17: #{tpu_custom_call.1} parent=11 // pred_check
          %p286 = pneg %p143
        $region18: #{tpu_custom_call.1} parent=11 // pred_check_branch
          %288 = sbr.rel (%p286) target = $region20
        $region19: #{tpu_custom_call.1} parent=11 // pred_region
          _
        $region20: #{tpu_custom_call.1} parent=11 // pred_fallthru
          _
        // Predicated region
        $region21: #{tpu_custom_call.1} parent=11 // pred_check
          %p289 = pneg %p164
        $region22: #{tpu_custom_call.1} parent=11 // pred_check_branch
          %291 = sbr.rel (%p289) target = $region24
        $region23: #{tpu_custom_call.1} parent=11 // pred_region
          _
        $region24: #{tpu_custom_call.1} parent=11 // pred_fallthru
          _
        // Predicated region
        $region25: #{tpu_custom_call.1} parent=11 // pred_check
          %p292 = pneg %p185
        $region26: #{tpu_custom_call.1} parent=11 // pred_check_branch
          %294 = sbr.rel (%p292) target = $region28
        $region27: #{tpu_custom_call.1} parent=11 // pred_region
          _
        $region28: #{tpu_custom_call.1} parent=11 // pred_fallthru
          _
        // Predicated region
        $region29: #{tpu_custom_call.1} parent=11 // pred_check
          %p295 = pneg %p206
        $region30: #{tpu_custom_call.1} parent=11 // pred_check_branch
          %297 = sbr.rel (%p295) target = $region32
        $region31: #{tpu_custom_call.1} parent=11 // pred_region
          _
        $region32: #{tpu_custom_call.1} parent=11 // pred_fallthru
          _
      $region12: #{tpu_custom_call.1} parent=5 // pred_fallthru
        _
      %p298 = scmp.lt.s32.totalorder %s23, 2
      // Predicated region
      $region33: #{tpu_custom_call.1} parent=5 // pred_check
        %p299 = pneg %p298
      $region34: #{tpu_custom_call.1} parent=5 // pred_check_branch
        %301 = sbr.rel (%p299) target = $region36
      $region35: #{tpu_custom_call.1} parent=5 // pred_region
        // Predicated region
        $region37: #{tpu_custom_call.1} parent=35 // pred_check
          %p302 = pneg %p43
        $region38: #{tpu_custom_call.1} parent=35 // pred_check_branch
          %304 = sbr.rel (%p302) target = $region40
        $region39: #{tpu_custom_call.1} parent=35 // pred_region
          %p305 = scmp.lt.s32.totalorder %s23, 1
          %s306 = scalar_select %p305, %s23, 1
          %s307 = smul.addr %s306, 2
          %s308 = smul.addr %s307, 8
          %s309 = scalar_lea.vmem %s0, %s308
        $region40: #{tpu_custom_call.1} parent=35 // pred_fallthru
          _
        // Predicated region
        $region41: #{tpu_custom_call.1} parent=35 // pred_check
          %p310 = pneg %p69
        $region42: #{tpu_custom_call.1} parent=35 // pred_check_branch
          %312 = sbr.rel (%p310) target = $region44
        $region43: #{tpu_custom_call.1} parent=35 // pred_region
          %p313 = scmp.lt.s32.totalorder %s23, 1
          %s314 = scalar_select %p313, %s23, 1
          %s315 = smul.addr %s314, 4
          %s316 = scalar_lea.vmem %s1, %s315
        $region44: #{tpu_custom_call.1} parent=35 // pred_fallthru
          _
        // Predicated region
        $region45: #{tpu_custom_call.1} parent=35 // pred_check
          %p317 = pneg %p95
        $region46: #{tpu_custom_call.1} parent=35 // pred_check_branch
          %319 = sbr.rel (%p317) target = $region48
        $region47: #{tpu_custom_call.1} parent=35 // pred_region
          %p320 = scmp.lt.s32.totalorder %s23, 1
          %s321 = scalar_select %p320, %s23, 1
          %s322 = smul.addr %s321, 4
          %s323 = scalar_lea.vmem %s2, %s322
        $region48: #{tpu_custom_call.1} parent=35 // pred_fallthru
          _
      $region36: #{tpu_custom_call.1} parent=5 // pred_fallthru
        _
      %p324 = scmp.le.s32.totalorder 1, %s23
      %p325 = scmp.lt.s32.totalorder %s23, 3
      %p326 = pnand %p324, %p325
      %p327 = pneg %p326
      // Predicated region
      $region49: #{tpu_custom_call.1} parent=5 // pred_check
        _
      $region50: #{tpu_custom_call.1} parent=5 // pred_check_branch
        %329 = sbr.rel (%p326) target = $region52
      $region51: #{tpu_custom_call.1} parent=5 // pred_region
        %s330 = ssub.s32 %s23, 1
        // Predicated region
        $region53: #{tpu_custom_call.1} parent=51 // pred_check
          %p331 = pneg %p122
        $region54: #{tpu_custom_call.1} parent=51 // pred_check_branch
          %333 = sbr.rel (%p331) target = $region56
        $region55: #{tpu_custom_call.1} parent=51 // pred_region
          %334 = dma.done [#allocation3], 6144
        $region56: #{tpu_custom_call.1} parent=51 // pred_fallthru
          _
        %p335 = scmp.lt.s32.totalorder %s28, 1
        %s336 = scalar_select %p335, %s28, 1
        %s337 = smul.addr %s336, 2
        %s338 = smul.addr %s337, 8
        %s339 = scalar_lea.vmem %s0, %s338
        %p340 = pneg %p49
        %p341 = pneg %p46
        %p342 = scmp.lt.s32.totalorder %s28, 1
        %s343 = scalar_select %p342, %s28, 1
        %s344 = smul.addr %s343, 4
        %s345 = scalar_lea.vmem %s1, %s344
        %p346 = pneg %p75
        %p347 = pneg %p72
        %p348 = scmp.lt.s32.totalorder %s28, 1
        %s349 = scalar_select %p348, %s28, 1
        %s350 = smul.addr %s349, 4
        %s351 = scalar_lea.vmem %s2, %s350
        %p352 = pneg %p101
        %p353 = pneg %p98
        %p354 = pneg %p122
        %p355 = pneg %p119
        %p356 = pneg %p143
        %p357 = pneg %p140
        %p358 = pneg %p164
        %p359 = pneg %p161
        %p360 = pneg %p185
        %p361 = pneg %p182
        %p362 = pneg %p206
        %p363 = pneg %p203
        %p364 = pneg %p232
        %p365 = pneg %p229
        %s366 = sand.u32 %s219, 1
        %s367 = scalar_lea.sflag [#allocation4], %s366
        %s368 = sand.u32 %s219, 1
        %s369 = smul.addr %s368, 4
        %s370 = scalar_lea.vmem [#allocation5], %s369
        %p371 = pneg %p258
        %p372 = pneg %p255
        %s373 = sand.u32 %s245, 1
        %s374 = scalar_lea.sflag [#allocation7], %s373
        %s375 = sand.u32 %s245, 1
        %s376 = smul.addr %s375, 4
        %s377 = scalar_lea.vmem [#allocation6], %s376
        %p378 = scmp.lt.s32.totalorder %s28, 1
        %s379 = scalar_select %p378, %s28, 1
        %s380 = smul.addr %s379, 2
        %s381 = smul.addr %s380, 8
        %s382 = scalar_lea.vmem %s0, %s381
        %p383 = scmp.lt.s32.totalorder %s28, 1
        %s384 = scalar_select %p383, %s28, 1
        %s385 = smul.addr %s384, 4
        %s386 = scalar_lea.vmem %s1, %s385
        %p387 = scmp.lt.s32.totalorder %s28, 1
        %s388 = scalar_select %p387, %s28, 1
        %s389 = smul.addr %s388, 4
        %s390 = scalar_lea.vmem %s2, %s389
        %v391 = vld [vmem:[%s6] sm:$0x1]
        %s392 = scalar_lea.vmem %s6, 1
        %v393 = vld [vmem:[%s392] sm:$0x1]
        %s394 = scalar_lea.vmem %s6, 2
        %v395 = vld [vmem:[%s394] sm:$0x1]
        %s396 = scalar_lea.vmem %s6, 3
        %v397 = vld [vmem:[%s396] sm:$0x1]
        %s398 = scalar_lea.vmem %s6, 4
        %v399 = vld [vmem:[%s398] sm:$0x1]
        %s400 = scalar_lea.vmem %s6, 5
        %v401 = vld [vmem:[%s400] sm:$0x1]
        %s402 = scalar_lea.vmem %s6, 6
        %v403 = vld [vmem:[%s402] sm:$0x1]
        %s404 = scalar_lea.vmem %s6, 7
        %v405 = vld [vmem:[%s404] sm:$0x1]
        %s406 = scalar_lea.vmem %s6, 8
        %v407 = vld [vmem:[%s406] sm:$0x1]
        %s408 = scalar_lea.vmem %s6, 9
        %v409 = vld [vmem:[%s408] sm:$0x1]
        %s410 = scalar_lea.vmem %s6, 10
        %v411 = vld [vmem:[%s410] sm:$0x1]
        %s412 = scalar_lea.vmem %s6, 11
        %v413 = vld [vmem:[%s412] sm:$0x1]
        %s414 = scalar_lea.vmem %s6, 12
        %v415 = vld [vmem:[%s414] sm:$0x1]
        %s416 = scalar_lea.vmem %s6, 13
        %v417 = vld [vmem:[%s416] sm:$0x1]
        %s418 = scalar_lea.vmem %s6, 14
        %v419 = vld [vmem:[%s418] sm:$0x1]
        %s420 = scalar_lea.vmem %s6, 15
        %v421 = vld [vmem:[%s420] sm:$0x1]
        %s422 = scalar_lea.vmem %s6, 16
        %v423 = vld [vmem:[%s422] sm:$0x1]
        %v424 = vld [vmem:[#allocation2] sm:$0xff]
        %v425 = vld [vmem:[#allocation2 + $0x8] sm:$0xff]
        %v426 = vld [vmem:[#allocation2 + $0x10] sm:$0xff]
        %v427 = vld [vmem:[#allocation2 + $0x18] sm:$0xff]
        %s428 = scalar_lea.vmem [#allocation2], 32
        %v429 = vld [vmem:[%s428] sm:$0xff]
        %v430 = vld [vmem:[%s428 + $0x8] sm:$0xff]
        %v431 = vld [vmem:[%s428 + $0x10] sm:$0xff]
        %v432 = vld [vmem:[%s428 + $0x18] sm:$0xff]
        %s433 = scalar_lea.vmem [#allocation2], 64
        %v434 = vld [vmem:[%s433] sm:$0xff]
        %v435 = vld [vmem:[%s433 + $0x8] sm:$0xff]
        %v436 = vld [vmem:[%s433 + $0x10] sm:$0xff]
        %v437 = vld [vmem:[%s433 + $0x18] sm:$0xff]
        %s438 = scalar_lea.vmem [#allocation2], 96
        %v439 = vld [vmem:[%s438] sm:$0xff]
        %v440 = vld [vmem:[%s438 + $0x8] sm:$0xff]
        %v441 = vld [vmem:[%s438 + $0x10] sm:$0xff]
        %v442 = vld [vmem:[%s438 + $0x18] sm:$0xff]
        %s443 = scalar_lea.vmem [#allocation2], 128
        %v444 = vld [vmem:[%s443] sm:$0xff]
        %v445 = vld [vmem:[%s443 + $0x8] sm:$0xff]
        %v446 = vld [vmem:[%s443 + $0x10] sm:$0xff]
        %v447 = vld [vmem:[%s443 + $0x18] sm:$0xff]
        %s448 = scalar_lea.vmem [#allocation2], 160
        %v449 = vld [vmem:[%s448] sm:$0xff]
        %v450 = vld [vmem:[%s448 + $0x8] sm:$0xff]
        %v451 = vld [vmem:[%s448 + $0x10] sm:$0xff]
        %v452 = vld [vmem:[%s448 + $0x18] sm:$0xff]
        %s453 = scalar_lea.vmem [#allocation2], 192
        %v454 = vld [vmem:[%s453] sm:$0xff]
        %v455 = vld [vmem:[%s453 + $0x8] sm:$0xff]
        %v456 = vld [vmem:[%s453 + $0x10] sm:$0xff]
        %v457 = vld [vmem:[%s453 + $0x18] sm:$0xff]
        %s458 = scalar_lea.vmem [#allocation2], 224
        %v459 = vld [vmem:[%s458] sm:$0xff]
        %v460 = vld [vmem:[%s458 + $0x8] sm:$0xff]
        %v461 = vld [vmem:[%s458 + $0x10] sm:$0xff]
        %v462 = vld [vmem:[%s458 + $0x18] sm:$0xff]
        %s463 = scalar_lea.vmem [#allocation2], 256
        %v464 = vld [vmem:[%s463] sm:$0xff]
        %v465 = vld [vmem:[%s463 + $0x8] sm:$0xff]
        %v466 = vld [vmem:[%s463 + $0x10] sm:$0xff]
        %v467 = vld [vmem:[%s463 + $0x18] sm:$0xff]
        %s468 = scalar_lea.vmem [#allocation2], 288
        %v469 = vld [vmem:[%s468] sm:$0xff]
        %v470 = vld [vmem:[%s468 + $0x8] sm:$0xff]
        %v471 = vld [vmem:[%s468 + $0x10] sm:$0xff]
        %v472 = vld [vmem:[%s468 + $0x18] sm:$0xff]
        %s473 = scalar_lea.vmem [#allocation2], 320
        %v474 = vld [vmem:[%s473] sm:$0xff]
        %v475 = vld [vmem:[%s473 + $0x8] sm:$0xff]
        %v476 = vld [vmem:[%s473 + $0x10] sm:$0xff]
        %v477 = vld [vmem:[%s473 + $0x18] sm:$0xff]
        %s478 = scalar_lea.vmem [#allocation2], 352
        %v479 = vld [vmem:[%s478] sm:$0xff]
        %v480 = vld [vmem:[%s478 + $0x8] sm:$0xff]
        %v481 = vld [vmem:[%s478 + $0x10] sm:$0xff]
        %v482 = vld [vmem:[%s478 + $0x18] sm:$0xff]
        %v483 = vld [vmem:[%s4] sm:$0xff]
        %v484 = vld [vmem:[%s4 + $0x8] sm:$0xff]
        %v485 = vld [vmem:[%s4 + $0x10] sm:$0xff]
        %v486 = vld [vmem:[%s4 + $0x18] sm:$0xff]
        %s487 = scalar_lea.vmem %s4, 32
        %v488 = vld [vmem:[%s487] sm:$0xff]
        %v489 = vld [vmem:[%s487 + $0x8] sm:$0xff]
        %v490 = vld [vmem:[%s487 + $0x10] sm:$0xff]
        %v491 = vld [vmem:[%s487 + $0x18] sm:$0xff]
        %s492 = scalar_lea.vmem %s4, 64
        %v493 = vld [vmem:[%s492] sm:$0xff]
        %v494 = vld [vmem:[%s492 + $0x8] sm:$0xff]
        %v495 = vld [vmem:[%s492 + $0x10] sm:$0xff]
        %v496 = vld [vmem:[%s492 + $0x18] sm:$0xff]
        %s497 = scalar_lea.vmem %s4, 96
        %v498 = vld [vmem:[%s497] sm:$0xff]
        %v499 = vld [vmem:[%s497 + $0x8] sm:$0xff]
        %v500 = vld [vmem:[%s497 + $0x10] sm:$0xff]
        %v501 = vld [vmem:[%s497 + $0x18] sm:$0xff]
        %v502 = vld [vmem:[%s5] sm:$0xff]
        %v503 = vld [vmem:[%s5 + $0x8] sm:$0xff]
        %v504 = vld [vmem:[%s5 + $0x10] sm:$0xff]
        %v505 = vld [vmem:[%s5 + $0x18] sm:$0xff]
        %v506 = vld [vmem:[%s5 + $0x20] sm:$0xff]
        %v507 = vld [vmem:[%s5 + $0x28] sm:$0xff]
        %v508 = vld [vmem:[%s5 + $0x30] sm:$0xff]
        %v509 = vld [vmem:[%s5 + $0x38] sm:$0xff]
        %s510 = scalar_lea.vmem %s5, 64
        %v511 = vld [vmem:[%s510] sm:$0xff]
        %v512 = vld [vmem:[%s510 + $0x8] sm:$0xff]
        %v513 = vld [vmem:[%s510 + $0x10] sm:$0xff]
        %v514 = vld [vmem:[%s510 + $0x18] sm:$0xff]
        %v515 = vld [vmem:[%s510 + $0x20] sm:$0xff]
        %v516 = vld [vmem:[%s510 + $0x28] sm:$0xff]
        %v517 = vld [vmem:[%s510 + $0x30] sm:$0xff]
        %v518 = vld [vmem:[%s510 + $0x38] sm:$0xff]
        %s519 = scalar_lea.vmem %s5, 128
        %v520 = vld [vmem:[%s519] sm:$0xff]
        %v521 = vld [vmem:[%s519 + $0x8] sm:$0xff]
        %v522 = vld [vmem:[%s519 + $0x10] sm:$0xff]
        %v523 = vld [vmem:[%s519 + $0x18] sm:$0xff]
        %v524 = vld [vmem:[%s519 + $0x20] sm:$0xff]
        %v525 = vld [vmem:[%s519 + $0x28] sm:$0xff]
        %v526 = vld [vmem:[%s519 + $0x30] sm:$0xff]
        %v527 = vld [vmem:[%s519 + $0x38] sm:$0xff]
        %v528 = vld [vmem:[%s7] sm:$0x1]
        %s529 = scalar_lea.vmem %s7, 1
        %v530 = vld [vmem:[%s529] sm:$0x1]
        %s531 = scalar_lea.vmem %s7, 2
        %v532 = vld [vmem:[%s531] sm:$0x1]
        %v533 = vld [vmem:[%s382] sm:$0xff]
        %v534 = vld [vmem:[%s382 + $0x8] sm:$0xff]
        %v535 = vld [vmem:[%s386] sm:$0xf]
        %v536 = vld [vmem:[%s390] sm:$0xf]
        %vm537 = vcmask 261120
        %v538 = vsel %vm537, %v533, 0.0
        %539 = vadd.xlane.f32.xlu0 %v538
        %v540 = vpop.xlane.xlu0 %539
        %v541 = vsel %vm537, %v534, 0.0
        %542 = vadd.xlane.f32.xlu0 %v541
        %v543 = vpop.xlane.xlu0 %542
        %v544 = vrcp.pop 32.0
        %v545 = vmul.f32 %v540, %v544
        %v546 = vmul.f32 %v543, %v544
        %v547 = vsub.f32 %v533, %v545
        %v548 = vsub.f32 %v534, %v546
        %v549 = vmul.f32 %v547, %v547
        %v550 = vmul.f32 %v548, %v548
        %v551 = vsel %vm537, %v549, 0.0
        %552 = vadd.xlane.f32.xlu0 %v551
        %v553 = vpop.xlane.xlu0 %552
        %v554 = vsel %vm537, %v550, 0.0
        %555 = vadd.xlane.f32.xlu0 %v554
        %v556 = vpop.xlane.xlu0 %555
        %v557 = vmul.f32 %v553, %v544
        %v558 = vmul.f32 %v556, %v544
        %v559 = vadd.f32 %v557, 1e-05
        %v560 = vadd.f32 %v558, 1e-05
        %v561 = vrsqrt.pop %v559
        %v562 = vrsqrt.pop %v560
        %v563 = vmul.f32 %v547, %v561
        %v564 = vmul.f32 %v548, %v562
        %v566 = vlaneseq
        %v567 = vshrl.u32 %v566, 7
        %v568 = vsub.s32 0, %v567
        %v569 = vrot.slane %v391, %v568
        %v571 = vmul.f32 %v563, %v569
        %v572 = vmul.f32 %v564, %v569
        %v574 = vlaneseq
        %v575 = vshrl.u32 %v574, 7
        %v576 = vsub.s32 0, %v575
        %v577 = vrot.slane %v393, %v576
        %v579 = vadd.f32 %v571, %v577
        %v580 = vadd.f32 %v572, %v577
        %vm581 = vcmask 257024
        %v582 = vsel %vm581, %v535, 0.0
        %583 = vadd.xlane.f32.xlu0 %v582
        %v584 = vpop.xlane.xlu0 %583
        %v585 = vmul.f32 %v584, %v544
        %v586 = vsub.f32 %v535, %v585
        %v587 = vmul.f32 %v586, %v586
        %v588 = vsel %vm581, %v587, 0.0
        %589 = vadd.xlane.f32.xlu0 %v588
        %v590 = vpop.xlane.xlu0 %589
        %v591 = vmul.f32 %v590, %v544
        %v592 = vadd.f32 %v591, 1e-05
        %v593 = vrsqrt.pop %v592
        %v594 = vmul.f32 %v586, %v593
        %v596 = vlaneseq
        %v597 = vshrl.u32 %v596, 7
        %v598 = vsub.s32 0, %v597
        %v599 = vrot.slane %v395, %v598
        %v601 = vmul.f32 %v594, %v599
        %v603 = vlaneseq
        %v604 = vshrl.u32 %v603, 7
        %v605 = vsub.s32 0, %v604
        %v606 = vrot.slane %v397, %v605
        %v608 = vadd.f32 %v601, %v606
        %v610 = vsel %vm537, %v579, 0
        %v613 = vsel %vm537, %v580, 0
        %615 = vmatprep.subr.mxu0 0.0
        %616 = vmatpush1.msra.mxu0 %v424
        %617 = vmatprep.subr.mxu0 0.0
        %618 = vmatpush1.msra.mxu0 %v425
        %619 = vmatprep.subr.mxu0 0.0
        %620 = vmatpush1.msra.mxu0 %v426
        %621 = vmatprep.subr.mxu0 0.0
        %622 = vmatpush1.msra.mxu0 %v427
        %623 = vmatprep.subr.mxu0 0.0
        %624 = vmatpush1.msra.mxu0 0.0
        %625 = vmatprep.subr.mxu0 0.0
        %626 = vmatpush1.msra.mxu0 0.0
        %627 = vmatprep.subr.mxu0 0.0
        %628 = vmatpush1.msra.mxu0 0.0
        %629 = vmatprep.subr.mxu0 0.0
        %630 = vmatpush1.msra.mxu0 0.0
        %631 = vmatprep.subr.mxu0 0.0
        %632 = vmatpush1.msra.mxu0 0.0
        %633 = vmatprep.subr.mxu0 0.0
        %634 = vmatpush1.msra.mxu0 0.0
        %635 = vmatprep.subr.mxu0 0.0
        %636 = vmatpush1.msra.mxu0 0.0
        %637 = vmatprep.subr.mxu0 0.0
        %638 = vmatpush1.msra.mxu0 0.0
        %639 = vmatprep.subr.mxu0 0.0
        %640 = vmatpush1.msra.mxu0 0.0
        %641 = vmatprep.subr.mxu0 0.0
        %642 = vmatpush1.msra.mxu0 0.0
        %643 = vmatprep.subr.mxu0 0.0
        %644 = vmatpush1.msra.mxu0 0.0
        %645 = vmatprep.subr.mxu0 0.0
        %646 = vmatpush1.msra.mxu0 0.0
        %647 = vmatprep.subr.mxu0 0.0
        %648 = vmatpush1.msra.mxu0 0.0
        %649 = vmatprep.subr.mxu0 0.0
        %650 = vmatpush1.msra.mxu0 0.0
        %651 = vmatprep.subr.mxu0 0.0
        %652 = vmatpush1.msra.mxu0 0.0
        %653 = vmatprep.subr.mxu0 0.0
        %654 = vmatpush1.msra.mxu0 0.0
        %655 = vmatprep.subr.mxu0 0.0
        %656 = vmatpush1.msra.mxu0 0.0
        %657 = vmatprep.subr.mxu0 0.0
        %658 = vmatpush1.msra.mxu0 0.0
        %659 = vmatprep.subr.mxu0 0.0
        %660 = vmatpush1.msra.mxu0 0.0
        %661 = vmatprep.subr.mxu0 0.0
        %662 = vmatpush1.msra.mxu0 0.0
        %663 = vmatprep.subr.mxu0 0.0
        %664 = vmatpush1.msra.mxu0 0.0
        %665 = vmatprep.subr.mxu0 0.0
        %666 = vmatpush1.msra.mxu0 0.0
        %667 = vmatprep.subr.mxu0 0.0
        %668 = vmatpush1.msra.mxu0 0.0
        %669 = vmatprep.subr.mxu0 0.0
        %670 = vmatpush1.msra.mxu0 0.0
        %671 = vmatprep.subr.mxu0 0.0
        %672 = vmatpush1.msra.mxu0 0.0
        %673 = vmatprep.subr.mxu0 0.0
        %674 = vmatpush1.msra.mxu0 0.0
        %675 = vmatprep.subr.mxu0 0.0
        %676 = vmatpush1.msra.mxu0 0.0
        %677 = vmatprep.subr.mxu0 0.0
        %678 = vmatpush1.msra.mxu0 0.0
        %679 = vmatprep.mubr.f32.mxu0 0.0
        %680 = vmatmul.mubr.f32.gmra.mrb[0].mxu0 %v610
        %v681 = vpop.f32.mrb[0].mxu0
        %v682 = vadd.f32 0.0, %v681
        %v683 = vpop.f32.mrb[0].mxu0
        %684 = vmatprep.mubr.f32.mxu0 0.0
        %685 = vmatmul.mubr.f32.gmra.mrb[0].mxu0 %v613
        %v686 = vpop.f32.mrb[0].mxu0
        %v687 = vadd.f32 0.0, %v686
        %v688 = vpop.f32.mrb[0].mxu0
        %689 = vdwg.mxu0
        %690 = vmatprep.subr.mxu0 0.0
        %691 = vmatpush1.msra.mxu0 %v429
        %692 = vmatprep.subr.mxu0 0.0
        %693 = vmatpush1.msra.mxu0 %v430
        %694 = vmatprep.subr.mxu0 0.0
        %695 = vmatpush1.msra.mxu0 %v431
        %696 = vmatprep.subr.mxu0 0.0
        %697 = vmatpush1.msra.mxu0 %v432
        %698 = vmatprep.subr.mxu0 0.0
        %699 = vmatpush1.msra.mxu0 0.0
        %700 = vmatprep.subr.mxu0 0.0
        %701 = vmatpush1.msra.mxu0 0.0
        %702 = vmatprep.subr.mxu0 0.0
        %703 = vmatpush1.msra.mxu0 0.0
        %704 = vmatprep.subr.mxu0 0.0
        %705 = vmatpush1.msra.mxu0 0.0
        %706 = vmatprep.subr.mxu0 0.0
        %707 = vmatpush1.msra.mxu0 0.0
        %708 = vmatprep.subr.mxu0 0.0
        %709 = vmatpush1.msra.mxu0 0.0
        %710 = vmatprep.subr.mxu0 0.0
        %711 = vmatpush1.msra.mxu0 0.0
        %712 = vmatprep.subr.mxu0 0.0
        %713 = vmatpush1.msra.mxu0 0.0
        %714 = vmatprep.subr.mxu0 0.0
        %715 = vmatpush1.msra.mxu0 0.0
        %716 = vmatprep.subr.mxu0 0.0
        %717 = vmatpush1.msra.mxu0 0.0
        %718 = vmatprep.subr.mxu0 0.0
        %719 = vmatpush1.msra.mxu0 0.0
        %720 = vmatprep.subr.mxu0 0.0
        %721 = vmatpush1.msra.mxu0 0.0
        %722 = vmatprep.subr.mxu0 0.0
        %723 = vmatpush1.msra.mxu0 0.0
        %724 = vmatprep.subr.mxu0 0.0
        %725 = vmatpush1.msra.mxu0 0.0
        %726 = vmatprep.subr.mxu0 0.0
        %727 = vmatpush1.msra.mxu0 0.0
        %728 = vmatprep.subr.mxu0 0.0
        %729 = vmatpush1.msra.mxu0 0.0
        %730 = vmatprep.subr.mxu0 0.0
        %731 = vmatpush1.msra.mxu0 0.0
        %732 = vmatprep.subr.mxu0 0.0
        %733 = vmatpush1.msra.mxu0 0.0
        %734 = vmatprep.subr.mxu0 0.0
        %735 = vmatpush1.msra.mxu0 0.0
        %736 = vmatprep.subr.mxu0 0.0
        %737 = vmatpush1.msra.mxu0 0.0
        %738 = vmatprep.subr.mxu0 0.0
        %739 = vmatpush1.msra.mxu0 0.0
        %740 = vmatprep.subr.mxu0 0.0
        %741 = vmatpush1.msra.mxu0 0.0
        %742 = vmatprep.subr.mxu0 0.0
        %743 = vmatpush1.msra.mxu0 0.0
        %744 = vmatprep.subr.mxu0 0.0
        %745 = vmatpush1.msra.mxu0 0.0
        %746 = vmatprep.subr.mxu0 0.0
        %747 = vmatpush1.msra.mxu0 0.0
        %748 = vmatprep.subr.mxu0 0.0
        %749 = vmatpush1.msra.mxu0 0.0
        %750 = vmatprep.subr.mxu0 0.0
        %751 = vmatpush1.msra.mxu0 0.0
        %752 = vmatprep.subr.mxu0 0.0
        %753 = vmatpush1.msra.mxu0 0.0
        %754 = vmatprep.mubr.f32.mxu0 0.0
        %755 = vmatmul.mubr.f32.gmra.mrb[0].mxu0 %v610
        %v756 = vpop.f32.mrb[0].mxu0
        %v757 = vadd.f32 0.0, %v756
        %v758 = vpop.f32.mrb[0].mxu0
        %759 = vmatprep.mubr.f32.mxu0 0.0
        %760 = vmatmul.mubr.f32.gmra.mrb[0].mxu0 %v613
        %v761 = vpop.f32.mrb[0].mxu0
        %v762 = vadd.f32 0.0, %v761
        %v763 = vpop.f32.mrb[0].mxu0
        %764 = vdwg.mxu0
        %v766 = vsel %vm537, %v608, 0
        %768 = vmatprep.subr.mxu0 0.0
        %769 = vmatpush1.msra.mxu0 %v434
        %770 = vmatprep.subr.mxu0 0.0
        %771 = vmatpush1.msra.mxu0 %v435
        %772 = vmatprep.subr.mxu0 0.0
        %773 = vmatpush1.msra.mxu0 %v436
        %774 = vmatprep.subr.mxu0 0.0
        %775 = vmatpush1.msra.mxu0 %v437
        %776 = vmatprep.subr.mxu0 0.0
        %777 = vmatpush1.msra.mxu0 0.0
        %778 = vmatprep.subr.mxu0 0.0
        %779 = vmatpush1.msra.mxu0 0.0
        %780 = vmatprep.subr.mxu0 0.0
        %781 = vmatpush1.msra.mxu0 0.0
        %782 = vmatprep.subr.mxu0 0.0
        %783 = vmatpush1.msra.mxu0 0.0
        %784 = vmatprep.subr.mxu0 0.0
        %785 = vmatpush1.msra.mxu0 0.0
        %786 = vmatprep.subr.mxu0 0.0
        %787 = vmatpush1.msra.mxu0 0.0
        %788 = vmatprep.subr.mxu0 0.0
        %789 = vmatpush1.msra.mxu0 0.0
        %790 = vmatprep.subr.mxu0 0.0
        %791 = vmatpush1.msra.mxu0 0.0
        %792 = vmatprep.subr.mxu0 0.0
        %793 = vmatpush1.msra.mxu0 0.0
        %794 = vmatprep.subr.mxu0 0.0
        %795 = vmatpush1.msra.mxu0 0.0
        %796 = vmatprep.subr.mxu0 0.0
        %797 = vmatpush1.msra.mxu0 0.0
        %798 = vmatprep.subr.mxu0 0.0
        %799 = vmatpush1.msra.mxu0 0.0
        %800 = vmatprep.subr.mxu0 0.0
        %801 = vmatpush1.msra.mxu0 0.0
        %802 = vmatprep.subr.mxu0 0.0
        %803 = vmatpush1.msra.mxu0 0.0
        %804 = vmatprep.subr.mxu0 0.0
        %805 = vmatpush1.msra.mxu0 0.0
        %806 = vmatprep.subr.mxu0 0.0
        %807 = vmatpush1.msra.mxu0 0.0
        %808 = vmatprep.subr.mxu0 0.0
        %809 = vmatpush1.msra.mxu0 0.0
        %810 = vmatprep.subr.mxu0 0.0
        %811 = vmatpush1.msra.mxu0 0.0
        %812 = vmatprep.subr.mxu0 0.0
        %813 = vmatpush1.msra.mxu0 0.0
        %814 = vmatprep.subr.mxu0 0.0
        %815 = vmatpush1.msra.mxu0 0.0
        %816 = vmatprep.subr.mxu0 0.0
        %817 = vmatpush1.msra.mxu0 0.0
        %818 = vmatprep.subr.mxu0 0.0
        %819 = vmatpush1.msra.mxu0 0.0
        %820 = vmatprep.subr.mxu0 0.0
        %821 = vmatpush1.msra.mxu0 0.0
        %822 = vmatprep.subr.mxu0 0.0
        %823 = vmatpush1.msra.mxu0 0.0
        %824 = vmatprep.subr.mxu0 0.0
        %825 = vmatpush1.msra.mxu0 0.0
        %826 = vmatprep.subr.mxu0 0.0
        %827 = vmatpush1.msra.mxu0 0.0
        %828 = vmatprep.subr.mxu0 0.0
        %829 = vmatpush1.msra.mxu0 0.0
        %830 = vmatprep.subr.mxu0 0.0
        %831 = vmatpush1.msra.mxu0 0.0
        %832 = vmatprep.mubr.f32.mxu0 0.0
        %833 = vmatmul.mubr.f32.gmra.mrb[0].mxu0 %v766
        %v834 = vpop.f32.mrb[0].mxu0
        %v835 = vadd.f32 0.0, %v834
        %v836 = vpop.f32.mrb[0].mxu0
        %837 = vdwg.mxu0
        %838 = vmatprep.subr.mxu0 0.0
        %839 = vmatpush1.msra.mxu0 %v439
        %840 = vmatprep.subr.mxu0 0.0
        %841 = vmatpush1.msra.mxu0 %v440
        %842 = vmatprep.subr.mxu0 0.0
        %843 = vmatpush1.msra.mxu0 %v441
        %844 = vmatprep.subr.mxu0 0.0
        %845 = vmatpush1.msra.mxu0 %v442
        %846 = vmatprep.subr.mxu0 0.0
        %847 = vmatpush1.msra.mxu0 0.0
        %848 = vmatprep.subr.mxu0 0.0
        %849 = vmatpush1.msra.mxu0 0.0
        %850 = vmatprep.subr.mxu0 0.0
        %851 = vmatpush1.msra.mxu0 0.0
        %852 = vmatprep.subr.mxu0 0.0
        %853 = vmatpush1.msra.mxu0 0.0
        %854 = vmatprep.subr.mxu0 0.0
        %855 = vmatpush1.msra.mxu0 0.0
        %856 = vmatprep.subr.mxu0 0.0
        %857 = vmatpush1.msra.mxu0 0.0
        %858 = vmatprep.subr.mxu0 0.0
        %859 = vmatpush1.msra.mxu0 0.0
        %860 = vmatprep.subr.mxu0 0.0
        %861 = vmatpush1.msra.mxu0 0.0
        %862 = vmatprep.subr.mxu0 0.0
        %863 = vmatpush1.msra.mxu0 0.0
        %864 = vmatprep.subr.mxu0 0.0
        %865 = vmatpush1.msra.mxu0 0.0
        %866 = vmatprep.subr.mxu0 0.0
        %867 = vmatpush1.msra.mxu0 0.0
        %868 = vmatprep.subr.mxu0 0.0
        %869 = vmatpush1.msra.mxu0 0.0
        %870 = vmatprep.subr.mxu0 0.0
        %871 = vmatpush1.msra.mxu0 0.0
        %872 = vmatprep.subr.mxu0 0.0
        %873 = vmatpush1.msra.mxu0 0.0
        %874 = vmatprep.subr.mxu0 0.0
        %875 = vmatpush1.msra.mxu0 0.0
        %876 = vmatprep.subr.mxu0 0.0
        %877 = vmatpush1.msra.mxu0 0.0
        %878 = vmatprep.subr.mxu0 0.0
        %879 = vmatpush1.msra.mxu0 0.0
        %880 = vmatprep.subr.mxu0 0.0
        %881 = vmatpush1.msra.mxu0 0.0
        %882 = vmatprep.subr.mxu0 0.0
        %883 = vmatpush1.msra.mxu0 0.0
        %884 = vmatprep.subr.mxu0 0.0
        %885 = vmatpush1.msra.mxu0 0.0
        %886 = vmatprep.subr.mxu0 0.0
        %887 = vmatpush1.msra.mxu0 0.0
        %888 = vmatprep.subr.mxu0 0.0
        %889 = vmatpush1.msra.mxu0 0.0
        %890 = vmatprep.subr.mxu0 0.0
        %891 = vmatpush1.msra.mxu0 0.0
        %892 = vmatprep.subr.mxu0 0.0
        %893 = vmatpush1.msra.mxu0 0.0
        %894 = vmatprep.subr.mxu0 0.0
        %895 = vmatpush1.msra.mxu0 0.0
        %896 = vmatprep.subr.mxu0 0.0
        %897 = vmatpush1.msra.mxu0 0.0
        %898 = vmatprep.subr.mxu0 0.0
        %899 = vmatpush1.msra.mxu0 0.0
        %900 = vmatprep.subr.mxu0 0.0
        %901 = vmatpush1.msra.mxu0 0.0
        %902 = vmatprep.mubr.f32.mxu0 0.0
        %903 = vmatmul.mubr.f32.gmra.mrb[0].mxu0 %v766
        %v904 = vpop.f32.mrb[0].mxu0
        %v905 = vadd.f32 0.0, %v904
        %v906 = vpop.f32.mrb[0].mxu0
        %907 = vdwg.mxu0
        %908 = vmatprep.subr.mxu0 0.0
        %909 = vmatpush1.msra.mxu0 %v444
        %910 = vmatprep.subr.mxu0 0.0
        %911 = vmatpush1.msra.mxu0 %v445
        %912 = vmatprep.subr.mxu0 0.0
        %913 = vmatpush1.msra.mxu0 %v446
        %914 = vmatprep.subr.mxu0 0.0
        %915 = vmatpush1.msra.mxu0 %v447
        %916 = vmatprep.subr.mxu0 0.0
        %917 = vmatpush1.msra.mxu0 0.0
        %918 = vmatprep.subr.mxu0 0.0
        %919 = vmatpush1.msra.mxu0 0.0
        %920 = vmatprep.subr.mxu0 0.0
        %921 = vmatpush1.msra.mxu0 0.0
        %922 = vmatprep.subr.mxu0 0.0
        %923 = vmatpush1.msra.mxu0 0.0
        %924 = vmatprep.subr.mxu0 0.0
        %925 = vmatpush1.msra.mxu0 0.0
        %926 = vmatprep.subr.mxu0 0.0
        %927 = vmatpush1.msra.mxu0 0.0
        %928 = vmatprep.subr.mxu0 0.0
        %929 = vmatpush1.msra.mxu0 0.0
        %930 = vmatprep.subr.mxu0 0.0
        %931 = vmatpush1.msra.mxu0 0.0
        %932 = vmatprep.subr.mxu0 0.0
        %933 = vmatpush1.msra.mxu0 0.0
        %934 = vmatprep.subr.mxu0 0.0
        %935 = vmatpush1.msra.mxu0 0.0
        %936 = vmatprep.subr.mxu0 0.0
        %937 = vmatpush1.msra.mxu0 0.0
        %938 = vmatprep.subr.mxu0 0.0
        %939 = vmatpush1.msra.mxu0 0.0
        %940 = vmatprep.subr.mxu0 0.0
        %941 = vmatpush1.msra.mxu0 0.0
        %942 = vmatprep.subr.mxu0 0.0
        %943 = vmatpush1.msra.mxu0 0.0
        %944 = vmatprep.subr.mxu0 0.0
        %945 = vmatpush1.msra.mxu0 0.0
        %946 = vmatprep.subr.mxu0 0.0
        %947 = vmatpush1.msra.mxu0 0.0
        %948 = vmatprep.subr.mxu0 0.0
        %949 = vmatpush1.msra.mxu0 0.0
        %950 = vmatprep.subr.mxu0 0.0
        %951 = vmatpush1.msra.mxu0 0.0
        %952 = vmatprep.subr.mxu0 0.0
        %953 = vmatpush1.msra.mxu0 0.0
        %954 = vmatprep.subr.mxu0 0.0
        %955 = vmatpush1.msra.mxu0 0.0
        %956 = vmatprep.subr.mxu0 0.0
        %957 = vmatpush1.msra.mxu0 0.0
        %958 = vmatprep.subr.mxu0 0.0
        %959 = vmatpush1.msra.mxu0 0.0
        %960 = vmatprep.subr.mxu0 0.0
        %961 = vmatpush1.msra.mxu0 0.0
        %962 = vmatprep.subr.mxu0 0.0
        %963 = vmatpush1.msra.mxu0 0.0
        %964 = vmatprep.subr.mxu0 0.0
        %965 = vmatpush1.msra.mxu0 0.0
        %966 = vmatprep.subr.mxu0 0.0
        %967 = vmatpush1.msra.mxu0 0.0
        %968 = vmatprep.subr.mxu0 0.0
        %969 = vmatpush1.msra.mxu0 0.0
        %970 = vmatprep.subr.mxu0 0.0
        %971 = vmatpush1.msra.mxu0 0.0
        %972 = vmatprep.mubr.f32.mxu0 0.0
        %973 = vmatmul.mubr.f32.gmra.mrb[0].mxu0 %v766
        %v974 = vpop.f32.mrb[0].mxu0
        %v975 = vadd.f32 0.0, %v974
        %v976 = vpop.f32.mrb[0].mxu0
        %977 = vdwg.mxu0
        %v978 = vsel %vm581, %v536, 0.0
        %979 = vadd.xlane.f32.xlu0 %v978
        %v980 = vpop.xlane.xlu0 %979
        %v981 = vmul.f32 %v980, %v544
        %v982 = vsub.f32 %v536, %v981
        %v983 = vmul.f32 %v982, %v982
        %v984 = vsel %vm581, %v983, 0.0
        %985 = vadd.xlane.f32.xlu0 %v984
        %v986 = vpop.xlane.xlu0 %985
        %v987 = vmul.f32 %v986, %v544
        %v988 = vadd.f32 %v987, 1e-05
        %v989 = vrsqrt.pop %v988
        %v990 = vmul.f32 %v982, %v989
        %v992 = vlaneseq
        %v993 = vshrl.u32 %v992, 7
        %v994 = vsub.s32 0, %v993
        %v995 = vrot.slane %v399, %v994
        %v997 = vmul.f32 %v990, %v995
        %v999 = vlaneseq
        %v1000 = vshrl.u32 %v999, 7
        %v1001 = vsub.s32 0, %v1000
        %v1002 = vrot.slane %v401, %v1001
        %v1004 = vadd.f32 %v997, %v1002
        %v1006 = vsel %vm537, %v1004, 0
        %v1009 = vsel %vm537, %v682, 0
        %v1012 = vsel %vm537, %v687, 0
        %1014 = vmatprep.subr.mxu0 0.0
        %1015 = vmatpush1.xpose.msra.mxu0 %v1009
        %1016 = vmatprep.subr.mxu0 0.0
        %1017 = vmatpush1.xpose.msra.mxu0 %v1012
        %1018 = vmatprep.subr.mxu0 0.0
        %1019 = vmatpush1.xpose.msra.mxu0 0.0
        %1020 = vmatprep.subr.mxu0 0.0
        %1021 = vmatpush1.xpose.msra.mxu0 0.0
        %1022 = vmatprep.subr.mxu0 0.0
        %1023 = vmatpush1.xpose.msra.mxu0 0.0
        %1024 = vmatprep.subr.mxu0 0.0
        %1025 = vmatpush1.xpose.msra.mxu0 0.0
        %1026 = vmatprep.subr.mxu0 0.0
        %1027 = vmatpush1.xpose.msra.mxu0 0.0
        %1028 = vmatprep.subr.mxu0 0.0
        %1029 = vmatpush1.xpose.msra.mxu0 0.0
        %1030 = vmatprep.subr.mxu0 0.0
        %1031 = vmatpush1.xpose.msra.mxu0 0.0
        %1032 = vmatprep.subr.mxu0 0.0
        %1033 = vmatpush1.xpose.msra.mxu0 0.0
        %1034 = vmatprep.subr.mxu0 0.0
        %1035 = vmatpush1.xpose.msra.mxu0 0.0
        %1036 = vmatprep.subr.mxu0 0.0
        %1037 = vmatpush1.xpose.msra.mxu0 0.0
        %1038 = vmatprep.subr.mxu0 0.0
        %1039 = vmatpush1.xpose.msra.mxu0 0.0
        %1040 = vmatprep.subr.mxu0 0.0
        %1041 = vmatpush1.xpose.msra.mxu0 0.0
        %1042 = vmatprep.subr.mxu0 0.0
        %1043 = vmatpush1.xpose.msra.mxu0 0.0
        %1044 = vmatprep.subr.mxu0 0.0
        %1045 = vmatpush1.xpose.msra.mxu0 0.0
        %1046 = vmatprep.subr.mxu0 0.0
        %1047 = vmatpush1.xpose.msra.mxu0 0.0
        %1048 = vmatprep.subr.mxu0 0.0
        %1049 = vmatpush1.xpose.msra.mxu0 0.0
        %1050 = vmatprep.subr.mxu0 0.0
        %1051 = vmatpush1.xpose.msra.mxu0 0.0
        %1052 = vmatprep.subr.mxu0 0.0
        %1053 = vmatpush1.xpose.msra.mxu0 0.0
        %1054 = vmatprep.subr.mxu0 0.0
        %1055 = vmatpush1.xpose.msra.mxu0 0.0
        %1056 = vmatprep.subr.mxu0 0.0
        %1057 = vmatpush1.xpose.msra.mxu0 0.0
        %1058 = vmatprep.subr.mxu0 0.0
        %1059 = vmatpush1.xpose.msra.mxu0 0.0
        %1060 = vmatprep.subr.mxu0 0.0
        %1061 = vmatpush1.xpose.msra.mxu0 0.0
        %1062 = vmatprep.subr.mxu0 0.0
        %1063 = vmatpush1.xpose.msra.mxu0 0.0
        %1064 = vmatprep.subr.mxu0 0.0
        %1065 = vmatpush1.xpose.msra.mxu0 0.0
        %1066 = vmatprep.subr.mxu0 0.0
        %1067 = vmatpush1.xpose.msra.mxu0 0.0
        %1068 = vmatprep.subr.mxu0 0.0
        %1069 = vmatpush1.xpose.msra.mxu0 0.0
        %1070 = vmatprep.subr.mxu0 0.0
        %1071 = vmatpush1.xpose.msra.mxu0 0.0
        %1072 = vmatprep.subr.mxu0 0.0
        %1073 = vmatpush1.xpose.msra.mxu0 0.0
        %1074 = vmatprep.subr.mxu0 0.0
        %1075 = vmatpush1.xpose.msra.mxu0 0.0
        %1076 = vmatprep.subr.mxu0 0.0
        %1077 = vmatpush1.xpose.msra.mxu0 0.0
        %1078 = vmatprep.mubr.f32.mxu0 0.0
        %1079 = vmatmul.mubr.f32.gmra.mrb[0].mxu0 %v1006
        %v1080 = vpop.f32.mrb[0].mxu0
        %v1081 = vadd.f32 0.0, %v1080
        %v1082 = vpop.f32.mrb[0].mxu0
        %1083 = vdwg.mxu0
        %vm1084 = vcmask 125952
        %v1085 = vsel %vm1084, %v1081, -inf
        %v1086 = vrot.slane %v1085, 4
        %v1087 = vmax.f32 %v1085, %v1086
        %v1088 = vrot.slane %v1087, 2
        %v1089 = vmax.f32 %v1087, %v1088
        %v1090 = vrot.slane %v1089, 1
        %v1091 = vmax.f32 %v1089, %v1090
        %v1092 = vsub.f32 %v1081, %v1091
        %v1093 = vmul.f32 %v1092, 1.442695
        %v1094 = vpow.pop %v1093
        %v1095 = vsel %vm1084, %v1094, 0.0
        %v1096 = vrot.slane %v1095, 4
        %v1097 = vadd.f32 %v1095, %v1096
        %v1098 = vrot.slane %v1097, 2
        %v1099 = vadd.f32 %v1097, %v1098
        %v1100 = vrot.slane %v1099, 1
        %v1101 = vadd.f32 %v1099, %v1100
        %v1102 = vrcp.pop %v1101
        %v1103 = vmul.f32 %v1094, %v1102
        %v1104 = vadd.f32 %v1103, 1e-08
        %v1105 = vsel %vm1084, %v1104, 0.0
        %1106 = vadd.xlane.f32.xlu0 %v1105
        %v1107 = vpop.xlane.xlu0 %1106
        %v1108 = vrcp.pop %v1107
        %v1109 = vmul.f32 %v1104, %v1108
        %vm1110 = vcmask 130048
        %v1112 = vsel %vm1110, %v1109, 0
        %1114 = vmatprep.subr.mxu0 0.0
        %1115 = vmatpush1.msra.mxu0 %v757
        %1116 = vmatprep.subr.mxu0 0.0
        %1117 = vmatpush1.msra.mxu0 %v762
        %1118 = vmatprep.subr.mxu0 0.0
        %1119 = vmatpush1.msra.mxu0 0.0
        %1120 = vmatprep.subr.mxu0 0.0
        %1121 = vmatpush1.msra.mxu0 0.0
        %1122 = vmatprep.subr.mxu0 0.0
        %1123 = vmatpush1.msra.mxu0 0.0
        %1124 = vmatprep.subr.mxu0 0.0
        %1125 = vmatpush1.msra.mxu0 0.0
        %1126 = vmatprep.subr.mxu0 0.0
        %1127 = vmatpush1.msra.mxu0 0.0
        %1128 = vmatprep.subr.mxu0 0.0
        %1129 = vmatpush1.msra.mxu0 0.0
        %1130 = vmatprep.subr.mxu0 0.0
        %1131 = vmatpush1.msra.mxu0 0.0
        %1132 = vmatprep.subr.mxu0 0.0
        %1133 = vmatpush1.msra.mxu0 0.0
        %1134 = vmatprep.subr.mxu0 0.0
        %1135 = vmatpush1.msra.mxu0 0.0
        %1136 = vmatprep.subr.mxu0 0.0
        %1137 = vmatpush1.msra.mxu0 0.0
        %1138 = vmatprep.subr.mxu0 0.0
        %1139 = vmatpush1.msra.mxu0 0.0
        %1140 = vmatprep.subr.mxu0 0.0
        %1141 = vmatpush1.msra.mxu0 0.0
        %1142 = vmatprep.subr.mxu0 0.0
        %1143 = vmatpush1.msra.mxu0 0.0
        %1144 = vmatprep.subr.mxu0 0.0
        %1145 = vmatpush1.msra.mxu0 0.0
        %1146 = vmatprep.subr.mxu0 0.0
        %1147 = vmatpush1.msra.mxu0 0.0
        %1148 = vmatprep.subr.mxu0 0.0
        %1149 = vmatpush1.msra.mxu0 0.0
        %1150 = vmatprep.subr.mxu0 0.0
        %1151 = vmatpush1.msra.mxu0 0.0
        %1152 = vmatprep.subr.mxu0 0.0
        %1153 = vmatpush1.msra.mxu0 0.0
        %1154 = vmatprep.subr.mxu0 0.0
        %1155 = vmatpush1.msra.mxu0 0.0
        %1156 = vmatprep.subr.mxu0 0.0
        %1157 = vmatpush1.msra.mxu0 0.0
        %1158 = vmatprep.subr.mxu0 0.0
        %1159 = vmatpush1.msra.mxu0 0.0
        %1160 = vmatprep.subr.mxu0 0.0
        %1161 = vmatpush1.msra.mxu0 0.0
        %1162 = vmatprep.subr.mxu0 0.0
        %1163 = vmatpush1.msra.mxu0 0.0
        %1164 = vmatprep.subr.mxu0 0.0
        %1165 = vmatpush1.msra.mxu0 0.0
        %1166 = vmatprep.subr.mxu0 0.0
        %1167 = vmatpush1.msra.mxu0 0.0
        %1168 = vmatprep.subr.mxu0 0.0
        %1169 = vmatpush1.msra.mxu0 0.0
        %1170 = vmatprep.subr.mxu0 0.0
        %1171 = vmatpush1.msra.mxu0 0.0
        %1172 = vmatprep.subr.mxu0 0.0
        %1173 = vmatpush1.msra.mxu0 0.0
        %1174 = vmatprep.subr.mxu0 0.0
        %1175 = vmatpush1.msra.mxu0 0.0
        %1176 = vmatprep.subr.mxu0 0.0
        %1177 = vmatpush1.msra.mxu0 0.0
        %1178 = vmatprep.mubr.f32.mxu0 0.0
        %1179 = vmatmul.mubr.f32.gmra.mrb[0].mxu0 %v1112
        %v1180 = vpop.f32.mrb[0].mxu0
        %v1181 = vadd.f32 0.0, %v1180
        %v1182 = vpop.f32.mrb[0].mxu0
        %1183 = vdwg.mxu0
        %v1185 = vsel %vm537, %v835, 0
        %1187 = vmatprep.subr.mxu0 0.0
        %1188 = vmatpush1.xpose.msra.mxu0 %v1185
        %1189 = vmatprep.subr.mxu0 0.0
        %1190 = vmatpush1.xpose.msra.mxu0 0.0
        %1191 = vmatprep.subr.mxu0 0.0
        %1192 = vmatpush1.xpose.msra.mxu0 0.0
        %1193 = vmatprep.subr.mxu0 0.0
        %1194 = vmatpush1.xpose.msra.mxu0 0.0
        %1195 = vmatprep.subr.mxu0 0.0
        %1196 = vmatpush1.xpose.msra.mxu0 0.0
        %1197 = vmatprep.subr.mxu0 0.0
        %1198 = vmatpush1.xpose.msra.mxu0 0.0
        %1199 = vmatprep.subr.mxu0 0.0
        %1200 = vmatpush1.xpose.msra.mxu0 0.0
        %1201 = vmatprep.subr.mxu0 0.0
        %1202 = vmatpush1.xpose.msra.mxu0 0.0
        %1203 = vmatprep.subr.mxu0 0.0
        %1204 = vmatpush1.xpose.msra.mxu0 0.0
        %1205 = vmatprep.subr.mxu0 0.0
        %1206 = vmatpush1.xpose.msra.mxu0 0.0
        %1207 = vmatprep.subr.mxu0 0.0
        %1208 = vmatpush1.xpose.msra.mxu0 0.0
        %1209 = vmatprep.subr.mxu0 0.0
        %1210 = vmatpush1.xpose.msra.mxu0 0.0
        %1211 = vmatprep.subr.mxu0 0.0
        %1212 = vmatpush1.xpose.msra.mxu0 0.0
        %1213 = vmatprep.subr.mxu0 0.0
        %1214 = vmatpush1.xpose.msra.mxu0 0.0
        %1215 = vmatprep.subr.mxu0 0.0
        %1216 = vmatpush1.xpose.msra.mxu0 0.0
        %1217 = vmatprep.subr.mxu0 0.0
        %1218 = vmatpush1.xpose.msra.mxu0 0.0
        %1219 = vmatprep.subr.mxu0 0.0
        %1220 = vmatpush1.xpose.msra.mxu0 0.0
        %1221 = vmatprep.subr.mxu0 0.0
        %1222 = vmatpush1.xpose.msra.mxu0 0.0
        %1223 = vmatprep.subr.mxu0 0.0
        %1224 = vmatpush1.xpose.msra.mxu0 0.0
        %1225 = vmatprep.subr.mxu0 0.0
        %1226 = vmatpush1.xpose.msra.mxu0 0.0
        %1227 = vmatprep.subr.mxu0 0.0
        %1228 = vmatpush1.xpose.msra.mxu0 0.0
        %1229 = vmatprep.subr.mxu0 0.0
        %1230 = vmatpush1.xpose.msra.mxu0 0.0
        %1231 = vmatprep.subr.mxu0 0.0
        %1232 = vmatpush1.xpose.msra.mxu0 0.0
        %1233 = vmatprep.subr.mxu0 0.0
        %1234 = vmatpush1.xpose.msra.mxu0 0.0
        %1235 = vmatprep.subr.mxu0 0.0
        %1236 = vmatpush1.xpose.msra.mxu0 0.0
        %1237 = vmatprep.subr.mxu0 0.0
        %1238 = vmatpush1.xpose.msra.mxu0 0.0
        %1239 = vmatprep.subr.mxu0 0.0
        %1240 = vmatpush1.xpose.msra.mxu0 0.0
        %1241 = vmatprep.subr.mxu0 0.0
        %1242 = vmatpush1.xpose.msra.mxu0 0.0
        %1243 = vmatprep.subr.mxu0 0.0
        %1244 = vmatpush1.xpose.msra.mxu0 0.0
        %1245 = vmatprep.subr.mxu0 0.0
        %1246 = vmatpush1.xpose.msra.mxu0 0.0
        %1247 = vmatprep.subr.mxu0 0.0
        %1248 = vmatpush1.xpose.msra.mxu0 0.0
        %1249 = vmatprep.subr.mxu0 0.0
        %1250 = vmatpush1.xpose.msra.mxu0 0.0
        %1251 = vmatprep.mubr.f32.mxu0 0.0
        %1252 = vmatmul.mubr.f32.gmra.mrb[0].mxu0 %v1006
        %v1253 = vpop.f32.mrb[0].mxu0
        %v1254 = vadd.f32 0.0, %v1253
        %v1255 = vpop.f32.mrb[0].mxu0
        %1256 = vdwg.mxu0
        %vm1257 = vcmask 27648
        %v1258 = vsel %vm1257, %v1254, -inf
        %v1259 = vrot.slane %v1258, 4
        %v1260 = vmax.f32 %v1258, %v1259
        %v1261 = vrot.slane %v1260, 2
        %v1262 = vmax.f32 %v1260, %v1261
        %v1263 = vrot.slane %v1262, 1
        %v1264 = vmax.f32 %v1262, %v1263
        %v1265 = vsub.f32 %v1254, %v1264
        %v1266 = vmul.f32 %v1265, 1.442695
        %v1267 = vpow.pop %v1266
        %v1268 = vsel %vm1257, %v1267, 0.0
        %v1269 = vrot.slane %v1268, 4
        %v1270 = vadd.f32 %v1268, %v1269
        %v1271 = vrot.slane %v1270, 2
        %v1272 = vadd.f32 %v1270, %v1271
        %v1273 = vrot.slane %v1272, 1
        %v1274 = vadd.f32 %v1272, %v1273
        %v1275 = vrcp.pop %v1274
        %v1276 = vmul.f32 %v1267, %v1275
        %v1277 = vadd.f32 %v1276, 1e-08
        %v1278 = vsel %vm1257, %v1277, 0.0
        %1279 = vadd.xlane.f32.xlu0 %v1278
        %v1280 = vpop.xlane.xlu0 %1279
        %v1281 = vrcp.pop %v1280
        %v1282 = vmul.f32 %v1277, %v1281
        %vm1283 = vcmask 31744
        %v1285 = vsel %vm1283, %v1282, 0
        %vm1287 = vcmask 1043456
        %v1289 = vsel %vm1287, %v905, 0
        %1291 = vmatprep.subr.mxu0 0.0
        %1292 = vmatpush1.msra.mxu0 %v1289
        %1293 = vmatprep.subr.mxu0 0.0
        %1294 = vmatpush1.msra.mxu0 0.0
        %1295 = vmatprep.subr.mxu0 0.0
        %1296 = vmatpush1.msra.mxu0 0.0
        %1297 = vmatprep.subr.mxu0 0.0
        %1298 = vmatpush1.msra.mxu0 0.0
        %1299 = vmatprep.subr.mxu0 0.0
        %1300 = vmatpush1.msra.mxu0 0.0
        %1301 = vmatprep.subr.mxu0 0.0
        %1302 = vmatpush1.msra.mxu0 0.0
        %1303 = vmatprep.subr.mxu0 0.0
        %1304 = vmatpush1.msra.mxu0 0.0
        %1305 = vmatprep.subr.mxu0 0.0
        %1306 = vmatpush1.msra.mxu0 0.0
        %1307 = vmatprep.subr.mxu0 0.0
        %1308 = vmatpush1.msra.mxu0 0.0
        %1309 = vmatprep.subr.mxu0 0.0
        %1310 = vmatpush1.msra.mxu0 0.0
        %1311 = vmatprep.subr.mxu0 0.0
        %1312 = vmatpush1.msra.mxu0 0.0
        %1313 = vmatprep.subr.mxu0 0.0
        %1314 = vmatpush1.msra.mxu0 0.0
        %1315 = vmatprep.subr.mxu0 0.0
        %1316 = vmatpush1.msra.mxu0 0.0
        %1317 = vmatprep.subr.mxu0 0.0
        %1318 = vmatpush1.msra.mxu0 0.0
        %1319 = vmatprep.subr.mxu0 0.0
        %1320 = vmatpush1.msra.mxu0 0.0
        %1321 = vmatprep.subr.mxu0 0.0
        %1322 = vmatpush1.msra.mxu0 0.0
        %1323 = vmatprep.subr.mxu0 0.0
        %1324 = vmatpush1.msra.mxu0 0.0
        %1325 = vmatprep.subr.mxu0 0.0
        %1326 = vmatpush1.msra.mxu0 0.0
        %1327 = vmatprep.subr.mxu0 0.0
        %1328 = vmatpush1.msra.mxu0 0.0
        %1329 = vmatprep.subr.mxu0 0.0
        %1330 = vmatpush1.msra.mxu0 0.0
        %1331 = vmatprep.subr.mxu0 0.0
        %1332 = vmatpush1.msra.mxu0 0.0
        %1333 = vmatprep.subr.mxu0 0.0
        %1334 = vmatpush1.msra.mxu0 0.0
        %1335 = vmatprep.subr.mxu0 0.0
        %1336 = vmatpush1.msra.mxu0 0.0
        %1337 = vmatprep.subr.mxu0 0.0
        %1338 = vmatpush1.msra.mxu0 0.0
        %1339 = vmatprep.subr.mxu0 0.0
        %1340 = vmatpush1.msra.mxu0 0.0
        %1341 = vmatprep.subr.mxu0 0.0
        %1342 = vmatpush1.msra.mxu0 0.0
        %1343 = vmatprep.subr.mxu0 0.0
        %1344 = vmatpush1.msra.mxu0 0.0
        %1345 = vmatprep.subr.mxu0 0.0
        %1346 = vmatpush1.msra.mxu0 0.0
        %1347 = vmatprep.subr.mxu0 0.0
        %1348 = vmatpush1.msra.mxu0 0.0
        %1349 = vmatprep.subr.mxu0 0.0
        %1350 = vmatpush1.msra.mxu0 0.0
        %1351 = vmatprep.subr.mxu0 0.0
        %1352 = vmatpush1.msra.mxu0 0.0
        %1353 = vmatprep.subr.mxu0 0.0
        %1354 = vmatpush1.msra.mxu0 0.0
        %1355 = vmatprep.mubr.f32.mxu0 0.0
        %1356 = vmatmul.mubr.f32.gmra.mrb[0].mxu0 %v1285
        %v1357 = vpop.f32.mrb[0].mxu0
        %v1358 = vadd.f32 0.0, %v1357
        %v1359 = vpop.f32.mrb[0].mxu0
        %1360 = vdwg.mxu0
        %v1362 = vsel %vm537, %v1358, 0
        %1364 = vmatprep.subr.mxu0 0.0
        %1365 = vmatpush1.msra.mxu0 %v488
        %1366 = vmatprep.subr.mxu0 0.0
        %1367 = vmatpush1.msra.mxu0 %v489
        %1368 = vmatprep.subr.mxu0 0.0
        %1369 = vmatpush1.msra.mxu0 %v490
        %1370 = vmatprep.subr.mxu0 0.0
        %1371 = vmatpush1.msra.mxu0 %v491
        %1372 = vmatprep.subr.mxu0 0.0
        %1373 = vmatpush1.msra.mxu0 0.0
        %1374 = vmatprep.subr.mxu0 0.0
        %1375 = vmatpush1.msra.mxu0 0.0
        %1376 = vmatprep.subr.mxu0 0.0
        %1377 = vmatpush1.msra.mxu0 0.0
        %1378 = vmatprep.subr.mxu0 0.0
        %1379 = vmatpush1.msra.mxu0 0.0
        %1380 = vmatprep.subr.mxu0 0.0
        %1381 = vmatpush1.msra.mxu0 0.0
        %1382 = vmatprep.subr.mxu0 0.0
        %1383 = vmatpush1.msra.mxu0 0.0
        %1384 = vmatprep.subr.mxu0 0.0
        %1385 = vmatpush1.msra.mxu0 0.0
        %1386 = vmatprep.subr.mxu0 0.0
        %1387 = vmatpush1.msra.mxu0 0.0
        %1388 = vmatprep.subr.mxu0 0.0
        %1389 = vmatpush1.msra.mxu0 0.0
        %1390 = vmatprep.subr.mxu0 0.0
        %1391 = vmatpush1.msra.mxu0 0.0
        %1392 = vmatprep.subr.mxu0 0.0
        %1393 = vmatpush1.msra.mxu0 0.0
        %1394 = vmatprep.subr.mxu0 0.0
        %1395 = vmatpush1.msra.mxu0 0.0
        %1396 = vmatprep.subr.mxu0 0.0
        %1397 = vmatpush1.msra.mxu0 0.0
        %1398 = vmatprep.subr.mxu0 0.0
        %1399 = vmatpush1.msra.mxu0 0.0
        %1400 = vmatprep.subr.mxu0 0.0
        %1401 = vmatpush1.msra.mxu0 0.0
        %1402 = vmatprep.subr.mxu0 0.0
        %1403 = vmatpush1.msra.mxu0 0.0
        %1404 = vmatprep.subr.mxu0 0.0
        %1405 = vmatpush1.msra.mxu0 0.0
        %1406 = vmatprep.subr.mxu0 0.0
        %1407 = vmatpush1.msra.mxu0 0.0
        %1408 = vmatprep.subr.mxu0 0.0
        %1409 = vmatpush1.msra.mxu0 0.0
        %1410 = vmatprep.subr.mxu0 0.0
        %1411 = vmatpush1.msra.mxu0 0.0
        %1412 = vmatprep.subr.mxu0 0.0
        %1413 = vmatpush1.msra.mxu0 0.0
        %1414 = vmatprep.subr.mxu0 0.0
        %1415 = vmatpush1.msra.mxu0 0.0
        %1416 = vmatprep.subr.mxu0 0.0
        %1417 = vmatpush1.msra.mxu0 0.0
        %1418 = vmatprep.subr.mxu0 0.0
        %1419 = vmatpush1.msra.mxu0 0.0
        %1420 = vmatprep.subr.mxu0 0.0
        %1421 = vmatpush1.msra.mxu0 0.0
        %1422 = vmatprep.subr.mxu0 0.0
        %1423 = vmatpush1.msra.mxu0 0.0
        %1424 = vmatprep.subr.mxu0 0.0
        %1425 = vmatpush1.msra.mxu0 0.0
        %1426 = vmatprep.subr.mxu0 0.0
        %1427 = vmatpush1.msra.mxu0 0.0
        %1428 = vmatprep.mubr.f32.mxu0 0.0
        %1429 = vmatmul.mubr.f32.gmra.mrb[0].mxu0 %v1362
        %v1430 = vpop.f32.mrb[0].mxu0
        %v1431 = vadd.f32 0.0, %v1430
        %v1432 = vpop.f32.mrb[0].mxu0
        %1433 = vdwg.mxu0
        %v1435 = vsel %vm537, %v1181, 0
        %1437 = vmatprep.subr.mxu0 0.0
        %1438 = vmatpush1.msra.mxu0 %v483
        %1439 = vmatprep.subr.mxu0 0.0
        %1440 = vmatpush1.msra.mxu0 %v484
        %1441 = vmatprep.subr.mxu0 0.0
        %1442 = vmatpush1.msra.mxu0 %v485
        %1443 = vmatprep.subr.mxu0 0.0
        %1444 = vmatpush1.msra.mxu0 %v486
        %1445 = vmatprep.subr.mxu0 0.0
        %1446 = vmatpush1.msra.mxu0 0.0
        %1447 = vmatprep.subr.mxu0 0.0
        %1448 = vmatpush1.msra.mxu0 0.0
        %1449 = vmatprep.subr.mxu0 0.0
        %1450 = vmatpush1.msra.mxu0 0.0
        %1451 = vmatprep.subr.mxu0 0.0
        %1452 = vmatpush1.msra.mxu0 0.0
        %1453 = vmatprep.subr.mxu0 0.0
        %1454 = vmatpush1.msra.mxu0 0.0
        %1455 = vmatprep.subr.mxu0 0.0
        %1456 = vmatpush1.msra.mxu0 0.0
        %1457 = vmatprep.subr.mxu0 0.0
        %1458 = vmatpush1.msra.mxu0 0.0
        %1459 = vmatprep.subr.mxu0 0.0
        %1460 = vmatpush1.msra.mxu0 0.0
        %1461 = vmatprep.subr.mxu0 0.0
        %1462 = vmatpush1.msra.mxu0 0.0
        %1463 = vmatprep.subr.mxu0 0.0
        %1464 = vmatpush1.msra.mxu0 0.0
        %1465 = vmatprep.subr.mxu0 0.0
        %1466 = vmatpush1.msra.mxu0 0.0
        %1467 = vmatprep.subr.mxu0 0.0
        %1468 = vmatpush1.msra.mxu0 0.0
        %1469 = vmatprep.subr.mxu0 0.0
        %1470 = vmatpush1.msra.mxu0 0.0
        %1471 = vmatprep.subr.mxu0 0.0
        %1472 = vmatpush1.msra.mxu0 0.0
        %1473 = vmatprep.subr.mxu0 0.0
        %1474 = vmatpush1.msra.mxu0 0.0
        %1475 = vmatprep.subr.mxu0 0.0
        %1476 = vmatpush1.msra.mxu0 0.0
        %1477 = vmatprep.subr.mxu0 0.0
        %1478 = vmatpush1.msra.mxu0 0.0
        %1479 = vmatprep.subr.mxu0 0.0
        %1480 = vmatpush1.msra.mxu0 0.0
        %1481 = vmatprep.subr.mxu0 0.0
        %1482 = vmatpush1.msra.mxu0 0.0
        %1483 = vmatprep.subr.mxu0 0.0
        %1484 = vmatpush1.msra.mxu0 0.0
        %1485 = vmatprep.subr.mxu0 0.0
        %1486 = vmatpush1.msra.mxu0 0.0
        %1487 = vmatprep.subr.mxu0 0.0
        %1488 = vmatpush1.msra.mxu0 0.0
        %1489 = vmatprep.subr.mxu0 0.0
        %1490 = vmatpush1.msra.mxu0 0.0
        %1491 = vmatprep.subr.mxu0 0.0
        %1492 = vmatpush1.msra.mxu0 0.0
        %1493 = vmatprep.subr.mxu0 0.0
        %1494 = vmatpush1.msra.mxu0 0.0
        %1495 = vmatprep.subr.mxu0 0.0
        %1496 = vmatpush1.msra.mxu0 0.0
        %1497 = vmatprep.subr.mxu0 0.0
        %1498 = vmatpush1.msra.mxu0 0.0
        %1499 = vmatprep.subr.mxu0 0.0
        %1500 = vmatpush1.msra.mxu0 0.0
        %1501 = vmatprep.mubr.f32.mxu0 0.0
        %1502 = vmatmul.mubr.f32.gmra.mrb[0].mxu0 %v1435
        %v1503 = vpop.f32.mrb[0].mxu0
        %v1504 = vadd.f32 %v1431, %v1503
        %v1505 = vpop.f32.mrb[0].mxu0
        %1506 = vdwg.mxu0
        %v1508 = vlaneseq
        %v1509 = vshrl.u32 %v1508, 7
        %v1510 = vsub.s32 0, %v1509
        %v1511 = vrot.slane %v528, %v1510
        %v1513 = vadd.f32 %v1504, %v1511
        %v1514 = vmax.f32 %v1513, 0.0
        %v1516 = vlaneseq
        %v1517 = vshrl.u32 %v1516, 7
        %v1518 = vsub.s32 0, %v1517
        %v1519 = vrot.slane %v419, %v1518
        %vm1521 = vcmask 523264
        %v1523 = vsel %vm1521, %v1514, 0
        %1525 = vmatprep.subr.mxu0 0.0
        %1526 = vmatpush1.msra.mxu0 %v502
        %1527 = vmatprep.subr.mxu0 0.0
        %1528 = vmatpush1.msra.mxu0 %v503
        %1529 = vmatprep.subr.mxu0 0.0
        %1530 = vmatpush1.msra.mxu0 %v504
        %1531 = vmatprep.subr.mxu0 0.0
        %1532 = vmatpush1.msra.mxu0 %v505
        %1533 = vmatprep.subr.mxu0 0.0
        %1534 = vmatpush1.msra.mxu0 %v506
        %1535 = vmatprep.subr.mxu0 0.0
        %1536 = vmatpush1.msra.mxu0 %v507
        %1537 = vmatprep.subr.mxu0 0.0
        %1538 = vmatpush1.msra.mxu0 %v508
        %1539 = vmatprep.subr.mxu0 0.0
        %1540 = vmatpush1.msra.mxu0 %v509
        %1541 = vmatprep.subr.mxu0 0.0
        %1542 = vmatpush1.msra.mxu0 0.0
        %1543 = vmatprep.subr.mxu0 0.0
        %1544 = vmatpush1.msra.mxu0 0.0
        %1545 = vmatprep.subr.mxu0 0.0
        %1546 = vmatpush1.msra.mxu0 0.0
        %1547 = vmatprep.subr.mxu0 0.0
        %1548 = vmatpush1.msra.mxu0 0.0
        %1549 = vmatprep.subr.mxu0 0.0
        %1550 = vmatpush1.msra.mxu0 0.0
        %1551 = vmatprep.subr.mxu0 0.0
        %1552 = vmatpush1.msra.mxu0 0.0
        %1553 = vmatprep.subr.mxu0 0.0
        %1554 = vmatpush1.msra.mxu0 0.0
        %1555 = vmatprep.subr.mxu0 0.0
        %1556 = vmatpush1.msra.mxu0 0.0
        %1557 = vmatprep.subr.mxu0 0.0
        %1558 = vmatpush1.msra.mxu0 0.0
        %1559 = vmatprep.subr.mxu0 0.0
        %1560 = vmatpush1.msra.mxu0 0.0
        %1561 = vmatprep.subr.mxu0 0.0
        %1562 = vmatpush1.msra.mxu0 0.0
        %1563 = vmatprep.subr.mxu0 0.0
        %1564 = vmatpush1.msra.mxu0 0.0
        %1565 = vmatprep.subr.mxu0 0.0
        %1566 = vmatpush1.msra.mxu0 0.0
        %1567 = vmatprep.subr.mxu0 0.0
        %1568 = vmatpush1.msra.mxu0 0.0
        %1569 = vmatprep.subr.mxu0 0.0
        %1570 = vmatpush1.msra.mxu0 0.0
        %1571 = vmatprep.subr.mxu0 0.0
        %1572 = vmatpush1.msra.mxu0 0.0
        %1573 = vmatprep.subr.mxu0 0.0
        %1574 = vmatpush1.msra.mxu0 0.0
        %1575 = vmatprep.subr.mxu0 0.0
        %1576 = vmatpush1.msra.mxu0 0.0
        %1577 = vmatprep.subr.mxu0 0.0
        %1578 = vmatpush1.msra.mxu0 0.0
        %1579 = vmatprep.subr.mxu0 0.0
        %1580 = vmatpush1.msra.mxu0 0.0
        %1581 = vmatprep.subr.mxu0 0.0
        %1582 = vmatpush1.msra.mxu0 0.0
        %1583 = vmatprep.subr.mxu0 0.0
        %1584 = vmatpush1.msra.mxu0 0.0
        %1585 = vmatprep.subr.mxu0 0.0
        %1586 = vmatpush1.msra.mxu0 0.0
        %1587 = vmatprep.subr.mxu0 0.0
        %1588 = vmatpush1.msra.mxu0 0.0
        %1589 = vmatprep.mubr.f32.mxu0 0.0
        %1590 = vmatmul.mubr.f32.gmra.mrb[0].mxu0 %v1523
        %v1591 = vpop.f32.mrb[0].mxu0
        %v1592 = vadd.f32 %v1519, %v1591
        %v1593 = vpop.f32.mrb[0].mxu0
        %1594 = vdwg.mxu0
        %v1596 = vlaneseq
        %v1597 = vshrl.u32 %v1596, 7
        %v1598 = vsub.s32 0, %v1597
        %v1599 = vrot.slane %v407, %v1598
        %v1602 = vsel %vm537, %v1592, 0
        %1604 = vmatprep.subr.mxu0 0.0
        %1605 = vmatpush1.msra.mxu0 %v454
        %1606 = vmatprep.subr.mxu0 0.0
        %1607 = vmatpush1.msra.mxu0 %v455
        %1608 = vmatprep.subr.mxu0 0.0
        %1609 = vmatpush1.msra.mxu0 %v456
        %1610 = vmatprep.subr.mxu0 0.0
        %1611 = vmatpush1.msra.mxu0 %v457
        %1612 = vmatprep.subr.mxu0 0.0
        %1613 = vmatpush1.msra.mxu0 0.0
        %1614 = vmatprep.subr.mxu0 0.0
        %1615 = vmatpush1.msra.mxu0 0.0
        %1616 = vmatprep.subr.mxu0 0.0
        %1617 = vmatpush1.msra.mxu0 0.0
        %1618 = vmatprep.subr.mxu0 0.0
        %1619 = vmatpush1.msra.mxu0 0.0
        %1620 = vmatprep.subr.mxu0 0.0
        %1621 = vmatpush1.msra.mxu0 0.0
        %1622 = vmatprep.subr.mxu0 0.0
        %1623 = vmatpush1.msra.mxu0 0.0
        %1624 = vmatprep.subr.mxu0 0.0
        %1625 = vmatpush1.msra.mxu0 0.0
        %1626 = vmatprep.subr.mxu0 0.0
        %1627 = vmatpush1.msra.mxu0 0.0
        %1628 = vmatprep.subr.mxu0 0.0
        %1629 = vmatpush1.msra.mxu0 0.0
        %1630 = vmatprep.subr.mxu0 0.0
        %1631 = vmatpush1.msra.mxu0 0.0
        %1632 = vmatprep.subr.mxu0 0.0
        %1633 = vmatpush1.msra.mxu0 0.0
        %1634 = vmatprep.subr.mxu0 0.0
        %1635 = vmatpush1.msra.mxu0 0.0
        %1636 = vmatprep.subr.mxu0 0.0
        %1637 = vmatpush1.msra.mxu0 0.0
        %1638 = vmatprep.subr.mxu0 0.0
        %1639 = vmatpush1.msra.mxu0 0.0
        %1640 = vmatprep.subr.mxu0 0.0
        %1641 = vmatpush1.msra.mxu0 0.0
        %1642 = vmatprep.subr.mxu0 0.0
        %1643 = vmatpush1.msra.mxu0 0.0
        %1644 = vmatprep.subr.mxu0 0.0
        %1645 = vmatpush1.msra.mxu0 0.0
        %1646 = vmatprep.subr.mxu0 0.0
        %1647 = vmatpush1.msra.mxu0 0.0
        %1648 = vmatprep.subr.mxu0 0.0
        %1649 = vmatpush1.msra.mxu0 0.0
        %1650 = vmatprep.subr.mxu0 0.0
        %1651 = vmatpush1.msra.mxu0 0.0
        %1652 = vmatprep.subr.mxu0 0.0
        %1653 = vmatpush1.msra.mxu0 0.0
        %1654 = vmatprep.subr.mxu0 0.0
        %1655 = vmatpush1.msra.mxu0 0.0
        %1656 = vmatprep.subr.mxu0 0.0
        %1657 = vmatpush1.msra.mxu0 0.0
        %1658 = vmatprep.subr.mxu0 0.0
        %1659 = vmatpush1.msra.mxu0 0.0
        %1660 = vmatprep.subr.mxu0 0.0
        %1661 = vmatpush1.msra.mxu0 0.0
        %1662 = vmatprep.subr.mxu0 0.0
        %1663 = vmatpush1.msra.mxu0 0.0
        %1664 = vmatprep.subr.mxu0 0.0
        %1665 = vmatpush1.msra.mxu0 0.0
        %1666 = vmatprep.subr.mxu0 0.0
        %1667 = vmatpush1.msra.mxu0 0.0
        %1668 = vmatprep.mubr.f32.mxu0 0.0
        %1669 = vmatmul.mubr.f32.gmra.mrb[0].mxu0 %v1602
        %v1670 = vpop.f32.mrb[0].mxu0
        %v1671 = vadd.f32 %v1599, %v1670
        %v1672 = vpop.f32.mrb[0].mxu0
        %1673 = vdwg.mxu0
        %v1675 = vsel %vm537, %v536, 0
        %1677 = vmatprep.subr.mxu0 0.0
        %1678 = vmatpush1.msra.mxu0 %v469
        %1679 = vmatprep.subr.mxu0 0.0
        %1680 = vmatpush1.msra.mxu0 %v470
        %1681 = vmatprep.subr.mxu0 0.0
        %1682 = vmatpush1.msra.mxu0 %v471
        %1683 = vmatprep.subr.mxu0 0.0
        %1684 = vmatpush1.msra.mxu0 %v472
        %1685 = vmatprep.subr.mxu0 0.0
        %1686 = vmatpush1.msra.mxu0 0.0
        %1687 = vmatprep.subr.mxu0 0.0
        %1688 = vmatpush1.msra.mxu0 0.0
        %1689 = vmatprep.subr.mxu0 0.0
        %1690 = vmatpush1.msra.mxu0 0.0
        %1691 = vmatprep.subr.mxu0 0.0
        %1692 = vmatpush1.msra.mxu0 0.0
        %1693 = vmatprep.subr.mxu0 0.0
        %1694 = vmatpush1.msra.mxu0 0.0
        %1695 = vmatprep.subr.mxu0 0.0
        %1696 = vmatpush1.msra.mxu0 0.0
        %1697 = vmatprep.subr.mxu0 0.0
        %1698 = vmatpush1.msra.mxu0 0.0
        %1699 = vmatprep.subr.mxu0 0.0
        %1700 = vmatpush1.msra.mxu0 0.0
        %1701 = vmatprep.subr.mxu0 0.0
        %1702 = vmatpush1.msra.mxu0 0.0
        %1703 = vmatprep.subr.mxu0 0.0
        %1704 = vmatpush1.msra.mxu0 0.0
        %1705 = vmatprep.subr.mxu0 0.0
        %1706 = vmatpush1.msra.mxu0 0.0
        %1707 = vmatprep.subr.mxu0 0.0
        %1708 = vmatpush1.msra.mxu0 0.0
        %1709 = vmatprep.subr.mxu0 0.0
        %1710 = vmatpush1.msra.mxu0 0.0
        %1711 = vmatprep.subr.mxu0 0.0
        %1712 = vmatpush1.msra.mxu0 0.0
        %1713 = vmatprep.subr.mxu0 0.0
        %1714 = vmatpush1.msra.mxu0 0.0
        %1715 = vmatprep.subr.mxu0 0.0
        %1716 = vmatpush1.msra.mxu0 0.0
        %1717 = vmatprep.subr.mxu0 0.0
        %1718 = vmatpush1.msra.mxu0 0.0
        %1719 = vmatprep.subr.mxu0 0.0
        %1720 = vmatpush1.msra.mxu0 0.0
        %1721 = vmatprep.subr.mxu0 0.0
        %1722 = vmatpush1.msra.mxu0 0.0
        %1723 = vmatprep.subr.mxu0 0.0
        %1724 = vmatpush1.msra.mxu0 0.0
        %1725 = vmatprep.subr.mxu0 0.0
        %1726 = vmatpush1.msra.mxu0 0.0
        %1727 = vmatprep.subr.mxu0 0.0
        %1728 = vmatpush1.msra.mxu0 0.0
        %1729 = vmatprep.subr.mxu0 0.0
        %1730 = vmatpush1.msra.mxu0 0.0
        %1731 = vmatprep.subr.mxu0 0.0
        %1732 = vmatpush1.msra.mxu0 0.0
        %1733 = vmatprep.subr.mxu0 0.0
        %1734 = vmatpush1.msra.mxu0 0.0
        %1735 = vmatprep.subr.mxu0 0.0
        %1736 = vmatpush1.msra.mxu0 0.0
        %1737 = vmatprep.subr.mxu0 0.0
        %1738 = vmatpush1.msra.mxu0 0.0
        %1739 = vmatprep.subr.mxu0 0.0
        %1740 = vmatpush1.msra.mxu0 0.0
        %1741 = vmatprep.mubr.f32.mxu0 0.0
        %1742 = vmatmul.mubr.f32.gmra.mrb[0].mxu0 %v1675
        %v1743 = vpop.f32.mrb[0].mxu0
        %v1744 = vadd.f32 0.0, %v1743
        %v1745 = vpop.f32.mrb[0].mxu0
        %1746 = vdwg.mxu0
        %v1747 = vadd.f32 %v1671, %v1744
        %v1749 = vlaneseq
        %v1750 = vshrl.u32 %v1749, 7
        %v1751 = vsub.s32 0, %v1750
        %v1752 = vrot.slane %v413, %v1751
        %v1754 = vadd.f32 %v1747, %v1752
        %v1755 = vxor.u32 %v1754, 2147483648
        %v1756 = vmul.f32 %v1755, 1.442695
        %v1757 = vpow.pop %v1756
        %v1758 = vadd.f32 %v1757, 1.0
        %v1759 = vrcp.pop %v1758
        %v1760 = vmul.f32 1.0, %v1759
        %v1762 = vlaneseq
        %v1763 = vshrl.u32 %v1762, 7
        %v1764 = vsub.s32 0, %v1763
        %v1765 = vrot.slane %v409, %v1764
        %1767 = vmatprep.subr.mxu0 0.0
        %1768 = vmatpush1.msra.mxu0 %v459
        %1769 = vmatprep.subr.mxu0 0.0
        %1770 = vmatpush1.msra.mxu0 %v460
        %1771 = vmatprep.subr.mxu0 0.0
        %1772 = vmatpush1.msra.mxu0 %v461
        %1773 = vmatprep.subr.mxu0 0.0
        %1774 = vmatpush1.msra.mxu0 %v462
        %1775 = vmatprep.subr.mxu0 0.0
        %1776 = vmatpush1.msra.mxu0 0.0
        %1777 = vmatprep.subr.mxu0 0.0
        %1778 = vmatpush1.msra.mxu0 0.0
        %1779 = vmatprep.subr.mxu0 0.0
        %1780 = vmatpush1.msra.mxu0 0.0
        %1781 = vmatprep.subr.mxu0 0.0
        %1782 = vmatpush1.msra.mxu0 0.0
        %1783 = vmatprep.subr.mxu0 0.0
        %1784 = vmatpush1.msra.mxu0 0.0
        %1785 = vmatprep.subr.mxu0 0.0
        %1786 = vmatpush1.msra.mxu0 0.0
        %1787 = vmatprep.subr.mxu0 0.0
        %1788 = vmatpush1.msra.mxu0 0.0
        %1789 = vmatprep.subr.mxu0 0.0
        %1790 = vmatpush1.msra.mxu0 0.0
        %1791 = vmatprep.subr.mxu0 0.0
        %1792 = vmatpush1.msra.mxu0 0.0
        %1793 = vmatprep.subr.mxu0 0.0
        %1794 = vmatpush1.msra.mxu0 0.0
        %1795 = vmatprep.subr.mxu0 0.0
        %1796 = vmatpush1.msra.mxu0 0.0
        %1797 = vmatprep.subr.mxu0 0.0
        %1798 = vmatpush1.msra.mxu0 0.0
        %1799 = vmatprep.subr.mxu0 0.0
        %1800 = vmatpush1.msra.mxu0 0.0
        %1801 = vmatprep.subr.mxu0 0.0
        %1802 = vmatpush1.msra.mxu0 0.0
        %1803 = vmatprep.subr.mxu0 0.0
        %1804 = vmatpush1.msra.mxu0 0.0
        %1805 = vmatprep.subr.mxu0 0.0
        %1806 = vmatpush1.msra.mxu0 0.0
        %1807 = vmatprep.subr.mxu0 0.0
        %1808 = vmatpush1.msra.mxu0 0.0
        %1809 = vmatprep.subr.mxu0 0.0
        %1810 = vmatpush1.msra.mxu0 0.0
        %1811 = vmatprep.subr.mxu0 0.0
        %1812 = vmatpush1.msra.mxu0 0.0
        %1813 = vmatprep.subr.mxu0 0.0
        %1814 = vmatpush1.msra.mxu0 0.0
        %1815 = vmatprep.subr.mxu0 0.0
        %1816 = vmatpush1.msra.mxu0 0.0
        %1817 = vmatprep.subr.mxu0 0.0
        %1818 = vmatpush1.msra.mxu0 0.0
        %1819 = vmatprep.subr.mxu0 0.0
        %1820 = vmatpush1.msra.mxu0 0.0
        %1821 = vmatprep.subr.mxu0 0.0
        %1822 = vmatpush1.msra.mxu0 0.0
        %1823 = vmatprep.subr.mxu0 0.0
        %1824 = vmatpush1.msra.mxu0 0.0
        %1825 = vmatprep.subr.mxu0 0.0
        %1826 = vmatpush1.msra.mxu0 0.0
        %1827 = vmatprep.subr.mxu0 0.0
        %1828 = vmatpush1.msra.mxu0 0.0
        %1829 = vmatprep.subr.mxu0 0.0
        %1830 = vmatpush1.msra.mxu0 0.0
        %1831 = vmatprep.mubr.f32.mxu0 0.0
        %1832 = vmatmul.mubr.f32.gmra.mrb[0].mxu0 %v1602
        %v1833 = vpop.f32.mrb[0].mxu0
        %v1834 = vadd.f32 %v1765, %v1833
        %v1835 = vpop.f32.mrb[0].mxu0
        %1836 = vdwg.mxu0
        %1837 = vmatprep.subr.mxu0 0.0
        %1838 = vmatpush1.msra.mxu0 %v474
        %1839 = vmatprep.subr.mxu0 0.0
        %1840 = vmatpush1.msra.mxu0 %v475
        %1841 = vmatprep.subr.mxu0 0.0
        %1842 = vmatpush1.msra.mxu0 %v476
        %1843 = vmatprep.subr.mxu0 0.0
        %1844 = vmatpush1.msra.mxu0 %v477
        %1845 = vmatprep.subr.mxu0 0.0
        %1846 = vmatpush1.msra.mxu0 0.0
        %1847 = vmatprep.subr.mxu0 0.0
        %1848 = vmatpush1.msra.mxu0 0.0
        %1849 = vmatprep.subr.mxu0 0.0
        %1850 = vmatpush1.msra.mxu0 0.0
        %1851 = vmatprep.subr.mxu0 0.0
        %1852 = vmatpush1.msra.mxu0 0.0
        %1853 = vmatprep.subr.mxu0 0.0
        %1854 = vmatpush1.msra.mxu0 0.0
        %1855 = vmatprep.subr.mxu0 0.0
        %1856 = vmatpush1.msra.mxu0 0.0
        %1857 = vmatprep.subr.mxu0 0.0
        %1858 = vmatpush1.msra.mxu0 0.0
        %1859 = vmatprep.subr.mxu0 0.0
        %1860 = vmatpush1.msra.mxu0 0.0
        %1861 = vmatprep.subr.mxu0 0.0
        %1862 = vmatpush1.msra.mxu0 0.0
        %1863 = vmatprep.subr.mxu0 0.0
        %1864 = vmatpush1.msra.mxu0 0.0
        %1865 = vmatprep.subr.mxu0 0.0
        %1866 = vmatpush1.msra.mxu0 0.0
        %1867 = vmatprep.subr.mxu0 0.0
        %1868 = vmatpush1.msra.mxu0 0.0
        %1869 = vmatprep.subr.mxu0 0.0
        %1870 = vmatpush1.msra.mxu0 0.0
        %1871 = vmatprep.subr.mxu0 0.0
        %1872 = vmatpush1.msra.mxu0 0.0
        %1873 = vmatprep.subr.mxu0 0.0
        %1874 = vmatpush1.msra.mxu0 0.0
        %1875 = vmatprep.subr.mxu0 0.0
        %1876 = vmatpush1.msra.mxu0 0.0
        %1877 = vmatprep.subr.mxu0 0.0
        %1878 = vmatpush1.msra.mxu0 0.0
        %1879 = vmatprep.subr.mxu0 0.0
        %1880 = vmatpush1.msra.mxu0 0.0
        %1881 = vmatprep.subr.mxu0 0.0
        %1882 = vmatpush1.msra.mxu0 0.0
        %1883 = vmatprep.subr.mxu0 0.0
        %1884 = vmatpush1.msra.mxu0 0.0
        %1885 = vmatprep.subr.mxu0 0.0
        %1886 = vmatpush1.msra.mxu0 0.0
        %1887 = vmatprep.subr.mxu0 0.0
        %1888 = vmatpush1.msra.mxu0 0.0
        %1889 = vmatprep.subr.mxu0 0.0
        %1890 = vmatpush1.msra.mxu0 0.0
        %1891 = vmatprep.subr.mxu0 0.0
        %1892 = vmatpush1.msra.mxu0 0.0
        %1893 = vmatprep.subr.mxu0 0.0
        %1894 = vmatpush1.msra.mxu0 0.0
        %1895 = vmatprep.subr.mxu0 0.0
        %1896 = vmatpush1.msra.mxu0 0.0
        %1897 = vmatprep.subr.mxu0 0.0
        %1898 = vmatpush1.msra.mxu0 0.0
        %1899 = vmatprep.subr.mxu0 0.0
        %1900 = vmatpush1.msra.mxu0 0.0
        %1901 = vmatprep.mubr.f32.mxu0 0.0
        %1902 = vmatmul.mubr.f32.gmra.mrb[0].mxu0 %v1675
        %v1903 = vpop.f32.mrb[0].mxu0
        %v1904 = vadd.f32 0.0, %v1903
        %v1905 = vpop.f32.mrb[0].mxu0
        %1906 = vdwg.mxu0
        %v1907 = vadd.f32 %v1834, %v1904
        %v1909 = vlaneseq
        %v1910 = vshrl.u32 %v1909, 7
        %v1911 = vsub.s32 0, %v1910
        %v1912 = vrot.slane %v415, %v1911
        %v1914 = vadd.f32 %v1907, %v1912
        %v1915 = vxor.u32 %v1914, 2147483648
        %v1916 = vmul.f32 %v1915, 1.442695
        %v1917 = vpow.pop %v1916
        %v1918 = vadd.f32 %v1917, 1.0
        %v1919 = vrcp.pop %v1918
        %v1920 = vmul.f32 1.0, %v1919
        %v1922 = vlaneseq
        %v1923 = vshrl.u32 %v1922, 7
        %v1924 = vsub.s32 0, %v1923
        %v1925 = vrot.slane %v411, %v1924
        %1927 = vmatprep.subr.mxu0 0.0
        %1928 = vmatpush1.msra.mxu0 %v464
        %1929 = vmatprep.subr.mxu0 0.0
        %1930 = vmatpush1.msra.mxu0 %v465
        %1931 = vmatprep.subr.mxu0 0.0
        %1932 = vmatpush1.msra.mxu0 %v466
        %1933 = vmatprep.subr.mxu0 0.0
        %1934 = vmatpush1.msra.mxu0 %v467
        %1935 = vmatprep.subr.mxu0 0.0
        %1936 = vmatpush1.msra.mxu0 0.0
        %1937 = vmatprep.subr.mxu0 0.0
        %1938 = vmatpush1.msra.mxu0 0.0
        %1939 = vmatprep.subr.mxu0 0.0
        %1940 = vmatpush1.msra.mxu0 0.0
        %1941 = vmatprep.subr.mxu0 0.0
        %1942 = vmatpush1.msra.mxu0 0.0
        %1943 = vmatprep.subr.mxu0 0.0
        %1944 = vmatpush1.msra.mxu0 0.0
        %1945 = vmatprep.subr.mxu0 0.0
        %1946 = vmatpush1.msra.mxu0 0.0
        %1947 = vmatprep.subr.mxu0 0.0
        %1948 = vmatpush1.msra.mxu0 0.0
        %1949 = vmatprep.subr.mxu0 0.0
        %1950 = vmatpush1.msra.mxu0 0.0
        %1951 = vmatprep.subr.mxu0 0.0
        %1952 = vmatpush1.msra.mxu0 0.0
        %1953 = vmatprep.subr.mxu0 0.0
        %1954 = vmatpush1.msra.mxu0 0.0
        %1955 = vmatprep.subr.mxu0 0.0
        %1956 = vmatpush1.msra.mxu0 0.0
        %1957 = vmatprep.subr.mxu0 0.0
        %1958 = vmatpush1.msra.mxu0 0.0
        %1959 = vmatprep.subr.mxu0 0.0
        %1960 = vmatpush1.msra.mxu0 0.0
        %1961 = vmatprep.subr.mxu0 0.0
        %1962 = vmatpush1.msra.mxu0 0.0
        %1963 = vmatprep.subr.mxu0 0.0
        %1964 = vmatpush1.msra.mxu0 0.0
        %1965 = vmatprep.subr.mxu0 0.0
        %1966 = vmatpush1.msra.mxu0 0.0
        %1967 = vmatprep.subr.mxu0 0.0
        %1968 = vmatpush1.msra.mxu0 0.0
        %1969 = vmatprep.subr.mxu0 0.0
        %1970 = vmatpush1.msra.mxu0 0.0
        %1971 = vmatprep.subr.mxu0 0.0
        %1972 = vmatpush1.msra.mxu0 0.0
        %1973 = vmatprep.subr.mxu0 0.0
        %1974 = vmatpush1.msra.mxu0 0.0
        %1975 = vmatprep.subr.mxu0 0.0
        %1976 = vmatpush1.msra.mxu0 0.0
        %1977 = vmatprep.subr.mxu0 0.0
        %1978 = vmatpush1.msra.mxu0 0.0
        %1979 = vmatprep.subr.mxu0 0.0
        %1980 = vmatpush1.msra.mxu0 0.0
        %1981 = vmatprep.subr.mxu0 0.0
        %1982 = vmatpush1.msra.mxu0 0.0
        %1983 = vmatprep.subr.mxu0 0.0
        %1984 = vmatpush1.msra.mxu0 0.0
        %1985 = vmatprep.subr.mxu0 0.0
        %1986 = vmatpush1.msra.mxu0 0.0
        %1987 = vmatprep.subr.mxu0 0.0
        %1988 = vmatpush1.msra.mxu0 0.0
        %1989 = vmatprep.subr.mxu0 0.0
        %1990 = vmatpush1.msra.mxu0 0.0
        %1991 = vmatprep.mubr.f32.mxu0 0.0
        %1992 = vmatmul.mubr.f32.gmra.mrb[0].mxu0 %v1602
        %v1993 = vpop.f32.mrb[0].mxu0
        %v1994 = vadd.f32 %v1925, %v1993
        %v1995 = vpop.f32.mrb[0].mxu0
        %1996 = vdwg.mxu0
        %v1998 = vlaneseq
        %v1999 = vshrl.u32 %v1998, 7
        %v2000 = vsub.s32 0, %v1999
        %v2001 = vrot.slane %v417, %v2000
        %2003 = vmatprep.subr.mxu0 0.0
        %2004 = vmatpush1.msra.mxu0 %v479
        %2005 = vmatprep.subr.mxu0 0.0
        %2006 = vmatpush1.msra.mxu0 %v480
        %2007 = vmatprep.subr.mxu0 0.0
        %2008 = vmatpush1.msra.mxu0 %v481
        %2009 = vmatprep.subr.mxu0 0.0
        %2010 = vmatpush1.msra.mxu0 %v482
        %2011 = vmatprep.subr.mxu0 0.0
        %2012 = vmatpush1.msra.mxu0 0.0
        %2013 = vmatprep.subr.mxu0 0.0
        %2014 = vmatpush1.msra.mxu0 0.0
        %2015 = vmatprep.subr.mxu0 0.0
        %2016 = vmatpush1.msra.mxu0 0.0
        %2017 = vmatprep.subr.mxu0 0.0
        %2018 = vmatpush1.msra.mxu0 0.0
        %2019 = vmatprep.subr.mxu0 0.0
        %2020 = vmatpush1.msra.mxu0 0.0
        %2021 = vmatprep.subr.mxu0 0.0
        %2022 = vmatpush1.msra.mxu0 0.0
        %2023 = vmatprep.subr.mxu0 0.0
        %2024 = vmatpush1.msra.mxu0 0.0
        %2025 = vmatprep.subr.mxu0 0.0
        %2026 = vmatpush1.msra.mxu0 0.0
        %2027 = vmatprep.subr.mxu0 0.0
        %2028 = vmatpush1.msra.mxu0 0.0
        %2029 = vmatprep.subr.mxu0 0.0
        %2030 = vmatpush1.msra.mxu0 0.0
        %2031 = vmatprep.subr.mxu0 0.0
        %2032 = vmatpush1.msra.mxu0 0.0
        %2033 = vmatprep.subr.mxu0 0.0
        %2034 = vmatpush1.msra.mxu0 0.0
        %2035 = vmatprep.subr.mxu0 0.0
        %2036 = vmatpush1.msra.mxu0 0.0
        %2037 = vmatprep.subr.mxu0 0.0
        %2038 = vmatpush1.msra.mxu0 0.0
        %2039 = vmatprep.subr.mxu0 0.0
        %2040 = vmatpush1.msra.mxu0 0.0
        %2041 = vmatprep.subr.mxu0 0.0
        %2042 = vmatpush1.msra.mxu0 0.0
        %2043 = vmatprep.subr.mxu0 0.0
        %2044 = vmatpush1.msra.mxu0 0.0
        %2045 = vmatprep.subr.mxu0 0.0
        %2046 = vmatpush1.msra.mxu0 0.0
        %2047 = vmatprep.subr.mxu0 0.0
        %2048 = vmatpush1.msra.mxu0 0.0
        %2049 = vmatprep.subr.mxu0 0.0
        %2050 = vmatpush1.msra.mxu0 0.0
        %2051 = vmatprep.subr.mxu0 0.0
        %2052 = vmatpush1.msra.mxu0 0.0
        %2053 = vmatprep.subr.mxu0 0.0
        %2054 = vmatpush1.msra.mxu0 0.0
        %2055 = vmatprep.subr.mxu0 0.0
        %2056 = vmatpush1.msra.mxu0 0.0
        %2057 = vmatprep.subr.mxu0 0.0
        %2058 = vmatpush1.msra.mxu0 0.0
        %2059 = vmatprep.subr.mxu0 0.0
        %2060 = vmatpush1.msra.mxu0 0.0
        %2061 = vmatprep.subr.mxu0 0.0
        %2062 = vmatpush1.msra.mxu0 0.0
        %2063 = vmatprep.subr.mxu0 0.0
        %2064 = vmatpush1.msra.mxu0 0.0
        %2065 = vmatprep.subr.mxu0 0.0
        %2066 = vmatpush1.msra.mxu0 0.0
        %2067 = vmatprep.mubr.f32.mxu0 0.0
        %2068 = vmatmul.mubr.f32.gmra.mrb[0].mxu0 %v1675
        %v2069 = vpop.f32.mrb[0].mxu0
        %v2070 = vadd.f32 %v2001, %v2069
        %v2071 = vpop.f32.mrb[0].mxu0
        %2072 = vdwg.mxu0
        %v2073 = vmul.f32 %v1760, %v2070
        %v2074 = vadd.f32 %v1994, %v2073
        %v2075 = vtanh.pop %v2074
        %v2076 = vsub.f32 1.0, %v1920
        %v2077 = vmul.f32 %v2076, %v2075
        %v2078 = vmul.f32 %v1920, %v536
        %v2079 = vadd.f32 %v2077, %v2078
        %v2080 = vsel %vm581, %v2079, 0.0
        %2081 = vadd.xlane.f32.xlu0 %v2080
        %v2082 = vpop.xlane.xlu0 %2081
        %v2083 = vmul.f32 %v2082, %v544
        %v2084 = vsub.f32 %v2079, %v2083
        %v2085 = vmul.f32 %v2084, %v2084
        %v2086 = vsel %vm581, %v2085, 0.0
        %2087 = vadd.xlane.f32.xlu0 %v2086
        %v2088 = vpop.xlane.xlu0 %2087
        %v2089 = vmul.f32 %v2088, %v544
        %v2090 = vadd.f32 %v2089, 1e-05
        %v2091 = vrsqrt.pop %v2090
        %v2092 = vmul.f32 %v2084, %v2091
        %v2094 = vlaneseq
        %v2095 = vshrl.u32 %v2094, 7
        %v2096 = vsub.s32 0, %v2095
        %v2097 = vrot.slane %v403, %v2096
        %v2099 = vmul.f32 %v2092, %v2097
        %v2101 = vlaneseq
        %v2102 = vshrl.u32 %v2101, 7
        %v2103 = vsub.s32 0, %v2102
        %v2104 = vrot.slane %v405, %v2103
        %v2106 = vadd.f32 %v2099, %v2104
        %v2108 = vlaneseq
        %v2109 = vshrl.u32 %v2108, 7
        %v2110 = vsub.s32 0, %v2109
        %v2111 = vrot.slane %v530, %v2110
        %v2114 = vsel %vm537, %v2106, 0
        %2116 = vmatprep.subr.mxu0 0.0
        %2117 = vmatpush1.msra.mxu0 %v493
        %2118 = vmatprep.subr.mxu0 0.0
        %2119 = vmatpush1.msra.mxu0 %v494
        %2120 = vmatprep.subr.mxu0 0.0
        %2121 = vmatpush1.msra.mxu0 %v495
        %2122 = vmatprep.subr.mxu0 0.0
        %2123 = vmatpush1.msra.mxu0 %v496
        %2124 = vmatprep.subr.mxu0 0.0
        %2125 = vmatpush1.msra.mxu0 0.0
        %2126 = vmatprep.subr.mxu0 0.0
        %2127 = vmatpush1.msra.mxu0 0.0
        %2128 = vmatprep.subr.mxu0 0.0
        %2129 = vmatpush1.msra.mxu0 0.0
        %2130 = vmatprep.subr.mxu0 0.0
        %2131 = vmatpush1.msra.mxu0 0.0
        %2132 = vmatprep.subr.mxu0 0.0
        %2133 = vmatpush1.msra.mxu0 0.0
        %2134 = vmatprep.subr.mxu0 0.0
        %2135 = vmatpush1.msra.mxu0 0.0
        %2136 = vmatprep.subr.mxu0 0.0
        %2137 = vmatpush1.msra.mxu0 0.0
        %2138 = vmatprep.subr.mxu0 0.0
        %2139 = vmatpush1.msra.mxu0 0.0
        %2140 = vmatprep.subr.mxu0 0.0
        %2141 = vmatpush1.msra.mxu0 0.0
        %2142 = vmatprep.subr.mxu0 0.0
        %2143 = vmatpush1.msra.mxu0 0.0
        %2144 = vmatprep.subr.mxu0 0.0
        %2145 = vmatpush1.msra.mxu0 0.0
        %2146 = vmatprep.subr.mxu0 0.0
        %2147 = vmatpush1.msra.mxu0 0.0
        %2148 = vmatprep.subr.mxu0 0.0
        %2149 = vmatpush1.msra.mxu0 0.0
        %2150 = vmatprep.subr.mxu0 0.0
        %2151 = vmatpush1.msra.mxu0 0.0
        %2152 = vmatprep.subr.mxu0 0.0
        %2153 = vmatpush1.msra.mxu0 0.0
        %2154 = vmatprep.subr.mxu0 0.0
        %2155 = vmatpush1.msra.mxu0 0.0
        %2156 = vmatprep.subr.mxu0 0.0
        %2157 = vmatpush1.msra.mxu0 0.0
        %2158 = vmatprep.subr.mxu0 0.0
        %2159 = vmatpush1.msra.mxu0 0.0
        %2160 = vmatprep.subr.mxu0 0.0
        %2161 = vmatpush1.msra.mxu0 0.0
        %2162 = vmatprep.subr.mxu0 0.0
        %2163 = vmatpush1.msra.mxu0 0.0
        %2164 = vmatprep.subr.mxu0 0.0
        %2165 = vmatpush1.msra.mxu0 0.0
        %2166 = vmatprep.subr.mxu0 0.0
        %2167 = vmatpush1.msra.mxu0 0.0
        %2168 = vmatprep.subr.mxu0 0.0
        %2169 = vmatpush1.msra.mxu0 0.0
        %2170 = vmatprep.subr.mxu0 0.0
        %2171 = vmatpush1.msra.mxu0 0.0
        %2172 = vmatprep.subr.mxu0 0.0
        %2173 = vmatpush1.msra.mxu0 0.0
        %2174 = vmatprep.subr.mxu0 0.0
        %2175 = vmatpush1.msra.mxu0 0.0
        %2176 = vmatprep.subr.mxu0 0.0
        %2177 = vmatpush1.msra.mxu0 0.0
        %2178 = vmatprep.subr.mxu0 0.0
        %2179 = vmatpush1.msra.mxu0 0.0
        %2180 = vmatprep.mubr.f32.mxu0 0.0
        %2181 = vmatmul.mubr.f32.gmra.mrb[0].mxu0 %v2114
        %v2182 = vpop.f32.mrb[0].mxu0
        %v2183 = vadd.f32 %v2111, %v2182
        %v2184 = vpop.f32.mrb[0].mxu0
        %2185 = vdwg.mxu0
        %v2186 = vmax.f32 %v2183, 0.0
        %v2188 = vsel %vm1521, %v2186, 0
        %2190 = vmatprep.subr.mxu0 0.0
        %2191 = vmatpush1.msra.mxu0 %v511
        %2192 = vmatprep.subr.mxu0 0.0
        %2193 = vmatpush1.msra.mxu0 %v512
        %2194 = vmatprep.subr.mxu0 0.0
        %2195 = vmatpush1.msra.mxu0 %v513
        %2196 = vmatprep.subr.mxu0 0.0
        %2197 = vmatpush1.msra.mxu0 %v514
        %2198 = vmatprep.subr.mxu0 0.0
        %2199 = vmatpush1.msra.mxu0 %v515
        %2200 = vmatprep.subr.mxu0 0.0
        %2201 = vmatpush1.msra.mxu0 %v516
        %2202 = vmatprep.subr.mxu0 0.0
        %2203 = vmatpush1.msra.mxu0 %v517
        %2204 = vmatprep.subr.mxu0 0.0
        %2205 = vmatpush1.msra.mxu0 %v518
        %2206 = vmatprep.subr.mxu0 0.0
        %2207 = vmatpush1.msra.mxu0 0.0
        %2208 = vmatprep.subr.mxu0 0.0
        %2209 = vmatpush1.msra.mxu0 0.0
        %2210 = vmatprep.subr.mxu0 0.0
        %2211 = vmatpush1.msra.mxu0 0.0
        %2212 = vmatprep.subr.mxu0 0.0
        %2213 = vmatpush1.msra.mxu0 0.0
        %2214 = vmatprep.subr.mxu0 0.0
        %2215 = vmatpush1.msra.mxu0 0.0
        %2216 = vmatprep.subr.mxu0 0.0
        %2217 = vmatpush1.msra.mxu0 0.0
        %2218 = vmatprep.subr.mxu0 0.0
        %2219 = vmatpush1.msra.mxu0 0.0
        %2220 = vmatprep.subr.mxu0 0.0
        %2221 = vmatpush1.msra.mxu0 0.0
        %2222 = vmatprep.subr.mxu0 0.0
        %2223 = vmatpush1.msra.mxu0 0.0
        %2224 = vmatprep.subr.mxu0 0.0
        %2225 = vmatpush1.msra.mxu0 0.0
        %2226 = vmatprep.subr.mxu0 0.0
        %2227 = vmatpush1.msra.mxu0 0.0
        %2228 = vmatprep.subr.mxu0 0.0
        %2229 = vmatpush1.msra.mxu0 0.0
        %2230 = vmatprep.subr.mxu0 0.0
        %2231 = vmatpush1.msra.mxu0 0.0
        %2232 = vmatprep.subr.mxu0 0.0
        %2233 = vmatpush1.msra.mxu0 0.0
        %2234 = vmatprep.subr.mxu0 0.0
        %2235 = vmatpush1.msra.mxu0 0.0
        %2236 = vmatprep.subr.mxu0 0.0
        %2237 = vmatpush1.msra.mxu0 0.0
        %2238 = vmatprep.subr.mxu0 0.0
        %2239 = vmatpush1.msra.mxu0 0.0
        %2240 = vmatprep.subr.mxu0 0.0
        %2241 = vmatpush1.msra.mxu0 0.0
        %2242 = vmatprep.subr.mxu0 0.0
        %2243 = vmatpush1.msra.mxu0 0.0
        %2244 = vmatprep.subr.mxu0 0.0
        %2245 = vmatpush1.msra.mxu0 0.0
        %2246 = vmatprep.subr.mxu0 0.0
        %2247 = vmatpush1.msra.mxu0 0.0
        %2248 = vmatprep.subr.mxu0 0.0
        %2249 = vmatpush1.msra.mxu0 0.0
        %2250 = vmatprep.subr.mxu0 0.0
        %2251 = vmatpush1.msra.mxu0 0.0
        %2252 = vmatprep.subr.mxu0 0.0
        %2253 = vmatpush1.msra.mxu0 0.0
        %2254 = vmatprep.mubr.f32.mxu0 0.0
        %2255 = vmatmul.mubr.f32.gmra.mrb[0].mxu0 %v2188
        %v2256 = vpop.f32.mrb[0].mxu0
        %v2257 = vadd.f32 0.0, %v2256
        %v2258 = vpop.f32.mrb[0].mxu0
        %2259 = vdwg.mxu0
        %v2260 = vadd.f32 %v2079, %v2257
        %v2262 = vlaneseq
        %v2263 = vshrl.u32 %v2262, 7
        %v2264 = vsub.s32 0, %v2263
        %v2265 = vrot.slane %v421, %v2264
        %v2267 = vadd.f32 %v2260, %v2265
        %v2268 = vsel %vm581, %v2267, 0.0
        %2269 = vadd.xlane.f32.xlu0 %v2268
        %v2270 = vpop.xlane.xlu0 %2269
        %v2271 = vmul.f32 %v2270, %v544
        %v2272 = vsub.f32 %v2267, %v2271
        %v2273 = vmul.f32 %v2272, %v2272
        %v2274 = vsel %vm581, %v2273, 0.0
        %2275 = vadd.xlane.f32.xlu0 %v2274
        %v2276 = vpop.xlane.xlu0 %2275
        %v2277 = vmul.f32 %v2276, %v544
        %v2278 = vadd.f32 %v2277, 1e-05
        %v2279 = vrsqrt.pop %v2278
        %v2280 = vmul.f32 %v2272, %v2279
        %v2281 = vmul.f32 %v2280, %v995
        %v2282 = vadd.f32 %v2281, %v1002
        %v2284 = vsel %vm537, %v2282, 0
        %2286 = vmatprep.subr.mxu0 0.0
        %2287 = vmatpush1.xpose.msra.mxu0 %v1009
        %2288 = vmatprep.subr.mxu0 0.0
        %2289 = vmatpush1.xpose.msra.mxu0 %v1012
        %2290 = vmatprep.subr.mxu0 0.0
        %2291 = vmatpush1.xpose.msra.mxu0 0.0
        %2292 = vmatprep.subr.mxu0 0.0
        %2293 = vmatpush1.xpose.msra.mxu0 0.0
        %2294 = vmatprep.subr.mxu0 0.0
        %2295 = vmatpush1.xpose.msra.mxu0 0.0
        %2296 = vmatprep.subr.mxu0 0.0
        %2297 = vmatpush1.xpose.msra.mxu0 0.0
        %2298 = vmatprep.subr.mxu0 0.0
        %2299 = vmatpush1.xpose.msra.mxu0 0.0
        %2300 = vmatprep.subr.mxu0 0.0
        %2301 = vmatpush1.xpose.msra.mxu0 0.0
        %2302 = vmatprep.subr.mxu0 0.0
        %2303 = vmatpush1.xpose.msra.mxu0 0.0
        %2304 = vmatprep.subr.mxu0 0.0
        %2305 = vmatpush1.xpose.msra.mxu0 0.0
        %2306 = vmatprep.subr.mxu0 0.0
        %2307 = vmatpush1.xpose.msra.mxu0 0.0
        %2308 = vmatprep.subr.mxu0 0.0
        %2309 = vmatpush1.xpose.msra.mxu0 0.0
        %2310 = vmatprep.subr.mxu0 0.0
        %2311 = vmatpush1.xpose.msra.mxu0 0.0
        %2312 = vmatprep.subr.mxu0 0.0
        %2313 = vmatpush1.xpose.msra.mxu0 0.0
        %2314 = vmatprep.subr.mxu0 0.0
        %2315 = vmatpush1.xpose.msra.mxu0 0.0
        %2316 = vmatprep.subr.mxu0 0.0
        %2317 = vmatpush1.xpose.msra.mxu0 0.0
        %2318 = vmatprep.subr.mxu0 0.0
        %2319 = vmatpush1.xpose.msra.mxu0 0.0
        %2320 = vmatprep.subr.mxu0 0.0
        %2321 = vmatpush1.xpose.msra.mxu0 0.0
        %2322 = vmatprep.subr.mxu0 0.0
        %2323 = vmatpush1.xpose.msra.mxu0 0.0
        %2324 = vmatprep.subr.mxu0 0.0
        %2325 = vmatpush1.xpose.msra.mxu0 0.0
        %2326 = vmatprep.subr.mxu0 0.0
        %2327 = vmatpush1.xpose.msra.mxu0 0.0
        %2328 = vmatprep.subr.mxu0 0.0
        %2329 = vmatpush1.xpose.msra.mxu0 0.0
        %2330 = vmatprep.subr.mxu0 0.0
        %2331 = vmatpush1.xpose.msra.mxu0 0.0
        %2332 = vmatprep.subr.mxu0 0.0
        %2333 = vmatpush1.xpose.msra.mxu0 0.0
        %2334 = vmatprep.subr.mxu0 0.0
        %2335 = vmatpush1.xpose.msra.mxu0 0.0
        %2336 = vmatprep.subr.mxu0 0.0
        %2337 = vmatpush1.xpose.msra.mxu0 0.0
        %2338 = vmatprep.subr.mxu0 0.0
        %2339 = vmatpush1.xpose.msra.mxu0 0.0
        %2340 = vmatprep.subr.mxu0 0.0
        %2341 = vmatpush1.xpose.msra.mxu0 0.0
        %2342 = vmatprep.subr.mxu0 0.0
        %2343 = vmatpush1.xpose.msra.mxu0 0.0
        %2344 = vmatprep.subr.mxu0 0.0
        %2345 = vmatpush1.xpose.msra.mxu0 0.0
        %2346 = vmatprep.subr.mxu0 0.0
        %2347 = vmatpush1.xpose.msra.mxu0 0.0
        %2348 = vmatprep.subr.mxu0 0.0
        %2349 = vmatpush1.xpose.msra.mxu0 0.0
        %2350 = vmatprep.mubr.f32.mxu0 0.0
        %2351 = vmatmul.mubr.f32.gmra.mrb[0].mxu0 %v2284
        %v2352 = vpop.f32.mrb[0].mxu0
        %v2353 = vadd.f32 0.0, %v2352
        %v2354 = vpop.f32.mrb[0].mxu0
        %2355 = vdwg.mxu0
        %v2356 = vsel %vm1084, %v2353, -inf
        %v2357 = vrot.slane %v2356, 4
        %v2358 = vmax.f32 %v2356, %v2357
        %v2359 = vrot.slane %v2358, 2
        %v2360 = vmax.f32 %v2358, %v2359
        %v2361 = vrot.slane %v2360, 1
        %v2362 = vmax.f32 %v2360, %v2361
        %v2363 = vsub.f32 %v2353, %v2362
        %v2364 = vmul.f32 %v2363, 1.442695
        %v2365 = vpow.pop %v2364
        %v2366 = vsel %vm1084, %v2365, 0.0
        %v2367 = vrot.slane %v2366, 4
        %v2368 = vadd.f32 %v2366, %v2367
        %v2369 = vrot.slane %v2368, 2
        %v2370 = vadd.f32 %v2368, %v2369
        %v2371 = vrot.slane %v2370, 1
        %v2372 = vadd.f32 %v2370, %v2371
        %v2373 = vrcp.pop %v2372
        %v2374 = vmul.f32 %v2365, %v2373
        %v2375 = vadd.f32 %v2374, 1e-08
        %v2376 = vsel %vm1084, %v2375, 0.0
        %2377 = vadd.xlane.f32.xlu0 %v2376
        %v2378 = vpop.xlane.xlu0 %2377
        %v2379 = vrcp.pop %v2378
        %v2380 = vmul.f32 %v2375, %v2379
        %v2382 = vsel %vm1110, %v2380, 0
        %2384 = vmatprep.subr.mxu0 0.0
        %2385 = vmatpush1.msra.mxu0 %v757
        %2386 = vmatprep.subr.mxu0 0.0
        %2387 = vmatpush1.msra.mxu0 %v762
        %2388 = vmatprep.subr.mxu0 0.0
        %2389 = vmatpush1.msra.mxu0 0.0
        %2390 = vmatprep.subr.mxu0 0.0
        %2391 = vmatpush1.msra.mxu0 0.0
        %2392 = vmatprep.subr.mxu0 0.0
        %2393 = vmatpush1.msra.mxu0 0.0
        %2394 = vmatprep.subr.mxu0 0.0
        %2395 = vmatpush1.msra.mxu0 0.0
        %2396 = vmatprep.subr.mxu0 0.0
        %2397 = vmatpush1.msra.mxu0 0.0
        %2398 = vmatprep.subr.mxu0 0.0
        %2399 = vmatpush1.msra.mxu0 0.0
        %2400 = vmatprep.subr.mxu0 0.0
        %2401 = vmatpush1.msra.mxu0 0.0
        %2402 = vmatprep.subr.mxu0 0.0
        %2403 = vmatpush1.msra.mxu0 0.0
        %2404 = vmatprep.subr.mxu0 0.0
        %2405 = vmatpush1.msra.mxu0 0.0
        %2406 = vmatprep.subr.mxu0 0.0
        %2407 = vmatpush1.msra.mxu0 0.0
        %2408 = vmatprep.subr.mxu0 0.0
        %2409 = vmatpush1.msra.mxu0 0.0
        %2410 = vmatprep.subr.mxu0 0.0
        %2411 = vmatpush1.msra.mxu0 0.0
        %2412 = vmatprep.subr.mxu0 0.0
        %2413 = vmatpush1.msra.mxu0 0.0
        %2414 = vmatprep.subr.mxu0 0.0
        %2415 = vmatpush1.msra.mxu0 0.0
        %2416 = vmatprep.subr.mxu0 0.0
        %2417 = vmatpush1.msra.mxu0 0.0
        %2418 = vmatprep.subr.mxu0 0.0
        %2419 = vmatpush1.msra.mxu0 0.0
        %2420 = vmatprep.subr.mxu0 0.0
        %2421 = vmatpush1.msra.mxu0 0.0
        %2422 = vmatprep.subr.mxu0 0.0
        %2423 = vmatpush1.msra.mxu0 0.0
        %2424 = vmatprep.subr.mxu0 0.0
        %2425 = vmatpush1.msra.mxu0 0.0
        %2426 = vmatprep.subr.mxu0 0.0
        %2427 = vmatpush1.msra.mxu0 0.0
        %2428 = vmatprep.subr.mxu0 0.0
        %2429 = vmatpush1.msra.mxu0 0.0
        %2430 = vmatprep.subr.mxu0 0.0
        %2431 = vmatpush1.msra.mxu0 0.0
        %2432 = vmatprep.subr.mxu0 0.0
        %2433 = vmatpush1.msra.mxu0 0.0
        %2434 = vmatprep.subr.mxu0 0.0
        %2435 = vmatpush1.msra.mxu0 0.0
        %2436 = vmatprep.subr.mxu0 0.0
        %2437 = vmatpush1.msra.mxu0 0.0
        %2438 = vmatprep.subr.mxu0 0.0
        %2439 = vmatpush1.msra.mxu0 0.0
        %2440 = vmatprep.subr.mxu0 0.0
        %2441 = vmatpush1.msra.mxu0 0.0
        %2442 = vmatprep.subr.mxu0 0.0
        %2443 = vmatpush1.msra.mxu0 0.0
        %2444 = vmatprep.subr.mxu0 0.0
        %2445 = vmatpush1.msra.mxu0 0.0
        %2446 = vmatprep.subr.mxu0 0.0
        %2447 = vmatpush1.msra.mxu0 0.0
        %2448 = vmatprep.mubr.f32.mxu0 0.0
        %2449 = vmatmul.mubr.f32.gmra.mrb[0].mxu0 %v2382
        %v2450 = vpop.f32.mrb[0].mxu0
        %v2451 = vadd.f32 0.0, %v2450
        %v2452 = vpop.f32.mrb[0].mxu0
        %2453 = vdwg.mxu0
        %2454 = vmatprep.subr.mxu0 0.0
        %2455 = vmatpush1.xpose.msra.mxu0 %v1185
        %2456 = vmatprep.subr.mxu0 0.0
        %2457 = vmatpush1.xpose.msra.mxu0 0.0
        %2458 = vmatprep.subr.mxu0 0.0
        %2459 = vmatpush1.xpose.msra.mxu0 0.0
        %2460 = vmatprep.subr.mxu0 0.0
        %2461 = vmatpush1.xpose.msra.mxu0 0.0
        %2462 = vmatprep.subr.mxu0 0.0
        %2463 = vmatpush1.xpose.msra.mxu0 0.0
        %2464 = vmatprep.subr.mxu0 0.0
        %2465 = vmatpush1.xpose.msra.mxu0 0.0
        %2466 = vmatprep.subr.mxu0 0.0
        %2467 = vmatpush1.xpose.msra.mxu0 0.0
        %2468 = vmatprep.subr.mxu0 0.0
        %2469 = vmatpush1.xpose.msra.mxu0 0.0
        %2470 = vmatprep.subr.mxu0 0.0
        %2471 = vmatpush1.xpose.msra.mxu0 0.0
        %2472 = vmatprep.subr.mxu0 0.0
        %2473 = vmatpush1.xpose.msra.mxu0 0.0
        %2474 = vmatprep.subr.mxu0 0.0
        %2475 = vmatpush1.xpose.msra.mxu0 0.0
        %2476 = vmatprep.subr.mxu0 0.0
        %2477 = vmatpush1.xpose.msra.mxu0 0.0
        %2478 = vmatprep.subr.mxu0 0.0
        %2479 = vmatpush1.xpose.msra.mxu0 0.0
        %2480 = vmatprep.subr.mxu0 0.0
        %2481 = vmatpush1.xpose.msra.mxu0 0.0
        %2482 = vmatprep.subr.mxu0 0.0
        %2483 = vmatpush1.xpose.msra.mxu0 0.0
        %2484 = vmatprep.subr.mxu0 0.0
        %2485 = vmatpush1.xpose.msra.mxu0 0.0
        %2486 = vmatprep.subr.mxu0 0.0
        %2487 = vmatpush1.xpose.msra.mxu0 0.0
        %2488 = vmatprep.subr.mxu0 0.0
        %2489 = vmatpush1.xpose.msra.mxu0 0.0
        %2490 = vmatprep.subr.mxu0 0.0
        %2491 = vmatpush1.xpose.msra.mxu0 0.0
        %2492 = vmatprep.subr.mxu0 0.0
        %2493 = vmatpush1.xpose.msra.mxu0 0.0
        %2494 = vmatprep.subr.mxu0 0.0
        %2495 = vmatpush1.xpose.msra.mxu0 0.0
        %2496 = vmatprep.subr.mxu0 0.0
        %2497 = vmatpush1.xpose.msra.mxu0 0.0
        %2498 = vmatprep.subr.mxu0 0.0
        %2499 = vmatpush1.xpose.msra.mxu0 0.0
        %2500 = vmatprep.subr.mxu0 0.0
        %2501 = vmatpush1.xpose.msra.mxu0 0.0
        %2502 = vmatprep.subr.mxu0 0.0
        %2503 = vmatpush1.xpose.msra.mxu0 0.0
        %2504 = vmatprep.subr.mxu0 0.0
        %2505 = vmatpush1.xpose.msra.mxu0 0.0
        %2506 = vmatprep.subr.mxu0 0.0
        %2507 = vmatpush1.xpose.msra.mxu0 0.0
        %2508 = vmatprep.subr.mxu0 0.0
        %2509 = vmatpush1.xpose.msra.mxu0 0.0
        %2510 = vmatprep.subr.mxu0 0.0
        %2511 = vmatpush1.xpose.msra.mxu0 0.0
        %2512 = vmatprep.subr.mxu0 0.0
        %2513 = vmatpush1.xpose.msra.mxu0 0.0
        %2514 = vmatprep.subr.mxu0 0.0
        %2515 = vmatpush1.xpose.msra.mxu0 0.0
        %2516 = vmatprep.subr.mxu0 0.0
        %2517 = vmatpush1.xpose.msra.mxu0 0.0
        %2518 = vmatprep.mubr.f32.mxu0 0.0
        %2519 = vmatmul.mubr.f32.gmra.mrb[0].mxu0 %v2284
        %v2520 = vpop.f32.mrb[0].mxu0
        %v2521 = vadd.f32 0.0, %v2520
        %v2522 = vpop.f32.mrb[0].mxu0
        %2523 = vdwg.mxu0
        %v2524 = vsel %vm1257, %v2521, -inf
        %v2525 = vrot.slane %v2524, 4
        %v2526 = vmax.f32 %v2524, %v2525
        %v2527 = vrot.slane %v2526, 2
        %v2528 = vmax.f32 %v2526, %v2527
        %v2529 = vrot.slane %v2528, 1
        %v2530 = vmax.f32 %v2528, %v2529
        %v2531 = vsub.f32 %v2521, %v2530
        %v2532 = vmul.f32 %v2531, 1.442695
        %v2533 = vpow.pop %v2532
        %v2534 = vsel %vm1257, %v2533, 0.0
        %v2535 = vrot.slane %v2534, 4
        %v2536 = vadd.f32 %v2534, %v2535
        %v2537 = vrot.slane %v2536, 2
        %v2538 = vadd.f32 %v2536, %v2537
        %v2539 = vrot.slane %v2538, 1
        %v2540 = vadd.f32 %v2538, %v2539
        %v2541 = vrcp.pop %v2540
        %v2542 = vmul.f32 %v2533, %v2541
        %v2543 = vadd.f32 %v2542, 1e-08
        %v2544 = vsel %vm1257, %v2543, 0.0
        %2545 = vadd.xlane.f32.xlu0 %v2544
        %v2546 = vpop.xlane.xlu0 %2545
        %v2547 = vrcp.pop %v2546
        %v2548 = vmul.f32 %v2543, %v2547
        %v2550 = vsel %vm1283, %v2548, 0
        %2552 = vmatprep.subr.mxu0 0.0
        %2553 = vmatpush1.msra.mxu0 %v1289
        %2554 = vmatprep.subr.mxu0 0.0
        %2555 = vmatpush1.msra.mxu0 0.0
        %2556 = vmatprep.subr.mxu0 0.0
        %2557 = vmatpush1.msra.mxu0 0.0
        %2558 = vmatprep.subr.mxu0 0.0
        %2559 = vmatpush1.msra.mxu0 0.0
        %2560 = vmatprep.subr.mxu0 0.0
        %2561 = vmatpush1.msra.mxu0 0.0
        %2562 = vmatprep.subr.mxu0 0.0
        %2563 = vmatpush1.msra.mxu0 0.0
        %2564 = vmatprep.subr.mxu0 0.0
        %2565 = vmatpush1.msra.mxu0 0.0
        %2566 = vmatprep.subr.mxu0 0.0
        %2567 = vmatpush1.msra.mxu0 0.0
        %2568 = vmatprep.subr.mxu0 0.0
        %2569 = vmatpush1.msra.mxu0 0.0
        %2570 = vmatprep.subr.mxu0 0.0
        %2571 = vmatpush1.msra.mxu0 0.0
        %2572 = vmatprep.subr.mxu0 0.0
        %2573 = vmatpush1.msra.mxu0 0.0
        %2574 = vmatprep.subr.mxu0 0.0
        %2575 = vmatpush1.msra.mxu0 0.0
        %2576 = vmatprep.subr.mxu0 0.0
        %2577 = vmatpush1.msra.mxu0 0.0
        %2578 = vmatprep.subr.mxu0 0.0
        %2579 = vmatpush1.msra.mxu0 0.0
        %2580 = vmatprep.subr.mxu0 0.0
        %2581 = vmatpush1.msra.mxu0 0.0
        %2582 = vmatprep.subr.mxu0 0.0
        %2583 = vmatpush1.msra.mxu0 0.0
        %2584 = vmatprep.subr.mxu0 0.0
        %2585 = vmatpush1.msra.mxu0 0.0
        %2586 = vmatprep.subr.mxu0 0.0
        %2587 = vmatpush1.msra.mxu0 0.0
        %2588 = vmatprep.subr.mxu0 0.0
        %2589 = vmatpush1.msra.mxu0 0.0
        %2590 = vmatprep.subr.mxu0 0.0
        %2591 = vmatpush1.msra.mxu0 0.0
        %2592 = vmatprep.subr.mxu0 0.0
        %2593 = vmatpush1.msra.mxu0 0.0
        %2594 = vmatprep.subr.mxu0 0.0
        %2595 = vmatpush1.msra.mxu0 0.0
        %2596 = vmatprep.subr.mxu0 0.0
        %2597 = vmatpush1.msra.mxu0 0.0
        %2598 = vmatprep.subr.mxu0 0.0
        %2599 = vmatpush1.msra.mxu0 0.0
        %2600 = vmatprep.subr.mxu0 0.0
        %2601 = vmatpush1.msra.mxu0 0.0
        %2602 = vmatprep.subr.mxu0 0.0
        %2603 = vmatpush1.msra.mxu0 0.0
        %2604 = vmatprep.subr.mxu0 0.0
        %2605 = vmatpush1.msra.mxu0 0.0
        %2606 = vmatprep.subr.mxu0 0.0
        %2607 = vmatpush1.msra.mxu0 0.0
        %2608 = vmatprep.subr.mxu0 0.0
        %2609 = vmatpush1.msra.mxu0 0.0
        %2610 = vmatprep.subr.mxu0 0.0
        %2611 = vmatpush1.msra.mxu0 0.0
        %2612 = vmatprep.subr.mxu0 0.0
        %2613 = vmatpush1.msra.mxu0 0.0
        %2614 = vmatprep.subr.mxu0 0.0
        %2615 = vmatpush1.msra.mxu0 0.0
        %2616 = vmatprep.mubr.f32.mxu0 0.0
        %2617 = vmatmul.mubr.f32.gmra.mrb[0].mxu0 %v2550
        %v2618 = vpop.f32.mrb[0].mxu0
        %v2619 = vadd.f32 0.0, %v2618
        %v2620 = vpop.f32.mrb[0].mxu0
        %2621 = vdwg.mxu0
        %v2623 = vsel %vm537, %v2619, 0
        %2625 = vmatprep.subr.mxu0 0.0
        %2626 = vmatpush1.msra.mxu0 %v488
        %2627 = vmatprep.subr.mxu0 0.0
        %2628 = vmatpush1.msra.mxu0 %v489
        %2629 = vmatprep.subr.mxu0 0.0
        %2630 = vmatpush1.msra.mxu0 %v490
        %2631 = vmatprep.subr.mxu0 0.0
        %2632 = vmatpush1.msra.mxu0 %v491
        %2633 = vmatprep.subr.mxu0 0.0
        %2634 = vmatpush1.msra.mxu0 0.0
        %2635 = vmatprep.subr.mxu0 0.0
        %2636 = vmatpush1.msra.mxu0 0.0
        %2637 = vmatprep.subr.mxu0 0.0
        %2638 = vmatpush1.msra.mxu0 0.0
        %2639 = vmatprep.subr.mxu0 0.0
        %2640 = vmatpush1.msra.mxu0 0.0
        %2641 = vmatprep.subr.mxu0 0.0
        %2642 = vmatpush1.msra.mxu0 0.0
        %2643 = vmatprep.subr.mxu0 0.0
        %2644 = vmatpush1.msra.mxu0 0.0
        %2645 = vmatprep.subr.mxu0 0.0
        %2646 = vmatpush1.msra.mxu0 0.0
        %2647 = vmatprep.subr.mxu0 0.0
        %2648 = vmatpush1.msra.mxu0 0.0
        %2649 = vmatprep.subr.mxu0 0.0
        %2650 = vmatpush1.msra.mxu0 0.0
        %2651 = vmatprep.subr.mxu0 0.0
        %2652 = vmatpush1.msra.mxu0 0.0
        %2653 = vmatprep.subr.mxu0 0.0
        %2654 = vmatpush1.msra.mxu0 0.0
        %2655 = vmatprep.subr.mxu0 0.0
        %2656 = vmatpush1.msra.mxu0 0.0
        %2657 = vmatprep.subr.mxu0 0.0
        %2658 = vmatpush1.msra.mxu0 0.0
        %2659 = vmatprep.subr.mxu0 0.0
        %2660 = vmatpush1.msra.mxu0 0.0
        %2661 = vmatprep.subr.mxu0 0.0
        %2662 = vmatpush1.msra.mxu0 0.0
        %2663 = vmatprep.subr.mxu0 0.0
        %2664 = vmatpush1.msra.mxu0 0.0
        %2665 = vmatprep.subr.mxu0 0.0
        %2666 = vmatpush1.msra.mxu0 0.0
        %2667 = vmatprep.subr.mxu0 0.0
        %2668 = vmatpush1.msra.mxu0 0.0
        %2669 = vmatprep.subr.mxu0 0.0
        %2670 = vmatpush1.msra.mxu0 0.0
        %2671 = vmatprep.subr.mxu0 0.0
        %2672 = vmatpush1.msra.mxu0 0.0
        %2673 = vmatprep.subr.mxu0 0.0
        %2674 = vmatpush1.msra.mxu0 0.0
        %2675 = vmatprep.subr.mxu0 0.0
        %2676 = vmatpush1.msra.mxu0 0.0
        %2677 = vmatprep.subr.mxu0 0.0
        %2678 = vmatpush1.msra.mxu0 0.0
        %2679 = vmatprep.subr.mxu0 0.0
        %2680 = vmatpush1.msra.mxu0 0.0
        %2681 = vmatprep.subr.mxu0 0.0
        %2682 = vmatpush1.msra.mxu0 0.0
        %2683 = vmatprep.subr.mxu0 0.0
        %2684 = vmatpush1.msra.mxu0 0.0
        %2685 = vmatprep.subr.mxu0 0.0
        %2686 = vmatpush1.msra.mxu0 0.0
        %2687 = vmatprep.subr.mxu0 0.0
        %2688 = vmatpush1.msra.mxu0 0.0
        %2689 = vmatprep.mubr.f32.mxu0 0.0
        %2690 = vmatmul.mubr.f32.gmra.mrb[0].mxu0 %v2623
        %v2691 = vpop.f32.mrb[0].mxu0
        %v2692 = vadd.f32 0.0, %v2691
        %v2693 = vpop.f32.mrb[0].mxu0
        %2694 = vdwg.mxu0
        %v2696 = vsel %vm537, %v2451, 0
        %2698 = vmatprep.subr.mxu0 0.0
        %2699 = vmatpush1.msra.mxu0 %v483
        %2700 = vmatprep.subr.mxu0 0.0
        %2701 = vmatpush1.msra.mxu0 %v484
        %2702 = vmatprep.subr.mxu0 0.0
        %2703 = vmatpush1.msra.mxu0 %v485
        %2704 = vmatprep.subr.mxu0 0.0
        %2705 = vmatpush1.msra.mxu0 %v486
        %2706 = vmatprep.subr.mxu0 0.0
        %2707 = vmatpush1.msra.mxu0 0.0
        %2708 = vmatprep.subr.mxu0 0.0
        %2709 = vmatpush1.msra.mxu0 0.0
        %2710 = vmatprep.subr.mxu0 0.0
        %2711 = vmatpush1.msra.mxu0 0.0
        %2712 = vmatprep.subr.mxu0 0.0
        %2713 = vmatpush1.msra.mxu0 0.0
        %2714 = vmatprep.subr.mxu0 0.0
        %2715 = vmatpush1.msra.mxu0 0.0
        %2716 = vmatprep.subr.mxu0 0.0
        %2717 = vmatpush1.msra.mxu0 0.0
        %2718 = vmatprep.subr.mxu0 0.0
        %2719 = vmatpush1.msra.mxu0 0.0
        %2720 = vmatprep.subr.mxu0 0.0
        %2721 = vmatpush1.msra.mxu0 0.0
        %2722 = vmatprep.subr.mxu0 0.0
        %2723 = vmatpush1.msra.mxu0 0.0
        %2724 = vmatprep.subr.mxu0 0.0
        %2725 = vmatpush1.msra.mxu0 0.0
        %2726 = vmatprep.subr.mxu0 0.0
        %2727 = vmatpush1.msra.mxu0 0.0
        %2728 = vmatprep.subr.mxu0 0.0
        %2729 = vmatpush1.msra.mxu0 0.0
        %2730 = vmatprep.subr.mxu0 0.0
        %2731 = vmatpush1.msra.mxu0 0.0
        %2732 = vmatprep.subr.mxu0 0.0
        %2733 = vmatpush1.msra.mxu0 0.0
        %2734 = vmatprep.subr.mxu0 0.0
        %2735 = vmatpush1.msra.mxu0 0.0
        %2736 = vmatprep.subr.mxu0 0.0
        %2737 = vmatpush1.msra.mxu0 0.0
        %2738 = vmatprep.subr.mxu0 0.0
        %2739 = vmatpush1.msra.mxu0 0.0
        %2740 = vmatprep.subr.mxu0 0.0
        %2741 = vmatpush1.msra.mxu0 0.0
        %2742 = vmatprep.subr.mxu0 0.0
        %2743 = vmatpush1.msra.mxu0 0.0
        %2744 = vmatprep.subr.mxu0 0.0
        %2745 = vmatpush1.msra.mxu0 0.0
        %2746 = vmatprep.subr.mxu0 0.0
        %2747 = vmatpush1.msra.mxu0 0.0
        %2748 = vmatprep.subr.mxu0 0.0
        %2749 = vmatpush1.msra.mxu0 0.0
        %2750 = vmatprep.subr.mxu0 0.0
        %2751 = vmatpush1.msra.mxu0 0.0
        %2752 = vmatprep.subr.mxu0 0.0
        %2753 = vmatpush1.msra.mxu0 0.0
        %2754 = vmatprep.subr.mxu0 0.0
        %2755 = vmatpush1.msra.mxu0 0.0
        %2756 = vmatprep.subr.mxu0 0.0
        %2757 = vmatpush1.msra.mxu0 0.0
        %2758 = vmatprep.subr.mxu0 0.0
        %2759 = vmatpush1.msra.mxu0 0.0
        %2760 = vmatprep.subr.mxu0 0.0
        %2761 = vmatpush1.msra.mxu0 0.0
        %2762 = vmatprep.mubr.f32.mxu0 0.0
        %2763 = vmatmul.mubr.f32.gmra.mrb[0].mxu0 %v2696
        %v2764 = vpop.f32.mrb[0].mxu0
        %v2765 = vadd.f32 %v2692, %v2764
        %v2766 = vpop.f32.mrb[0].mxu0
        %2767 = vdwg.mxu0
        %v2768 = vadd.f32 %v2765, %v1511
        %v2769 = vmax.f32 %v2768, 0.0
        %v2771 = vsel %vm1521, %v2769, 0
        %2773 = vmatprep.subr.mxu0 0.0
        %2774 = vmatpush1.msra.mxu0 %v502
        %2775 = vmatprep.subr.mxu0 0.0
        %2776 = vmatpush1.msra.mxu0 %v503
        %2777 = vmatprep.subr.mxu0 0.0
        %2778 = vmatpush1.msra.mxu0 %v504
        %2779 = vmatprep.subr.mxu0 0.0
        %2780 = vmatpush1.msra.mxu0 %v505
        %2781 = vmatprep.subr.mxu0 0.0
        %2782 = vmatpush1.msra.mxu0 %v506
        %2783 = vmatprep.subr.mxu0 0.0
        %2784 = vmatpush1.msra.mxu0 %v507
        %2785 = vmatprep.subr.mxu0 0.0
        %2786 = vmatpush1.msra.mxu0 %v508
        %2787 = vmatprep.subr.mxu0 0.0
        %2788 = vmatpush1.msra.mxu0 %v509
        %2789 = vmatprep.subr.mxu0 0.0
        %2790 = vmatpush1.msra.mxu0 0.0
        %2791 = vmatprep.subr.mxu0 0.0
        %2792 = vmatpush1.msra.mxu0 0.0
        %2793 = vmatprep.subr.mxu0 0.0
        %2794 = vmatpush1.msra.mxu0 0.0
        %2795 = vmatprep.subr.mxu0 0.0
        %2796 = vmatpush1.msra.mxu0 0.0
        %2797 = vmatprep.subr.mxu0 0.0
        %2798 = vmatpush1.msra.mxu0 0.0
        %2799 = vmatprep.subr.mxu0 0.0
        %2800 = vmatpush1.msra.mxu0 0.0
        %2801 = vmatprep.subr.mxu0 0.0
        %2802 = vmatpush1.msra.mxu0 0.0
        %2803 = vmatprep.subr.mxu0 0.0
        %2804 = vmatpush1.msra.mxu0 0.0
        %2805 = vmatprep.subr.mxu0 0.0
        %2806 = vmatpush1.msra.mxu0 0.0
        %2807 = vmatprep.subr.mxu0 0.0
        %2808 = vmatpush1.msra.mxu0 0.0
        %2809 = vmatprep.subr.mxu0 0.0
        %2810 = vmatpush1.msra.mxu0 0.0
        %2811 = vmatprep.subr.mxu0 0.0
        %2812 = vmatpush1.msra.mxu0 0.0
        %2813 = vmatprep.subr.mxu0 0.0
        %2814 = vmatpush1.msra.mxu0 0.0
        %2815 = vmatprep.subr.mxu0 0.0
        %2816 = vmatpush1.msra.mxu0 0.0
        %2817 = vmatprep.subr.mxu0 0.0
        %2818 = vmatpush1.msra.mxu0 0.0
        %2819 = vmatprep.subr.mxu0 0.0
        %2820 = vmatpush1.msra.mxu0 0.0
        %2821 = vmatprep.subr.mxu0 0.0
        %2822 = vmatpush1.msra.mxu0 0.0
        %2823 = vmatprep.subr.mxu0 0.0
        %2824 = vmatpush1.msra.mxu0 0.0
        %2825 = vmatprep.subr.mxu0 0.0
        %2826 = vmatpush1.msra.mxu0 0.0
        %2827 = vmatprep.subr.mxu0 0.0
        %2828 = vmatpush1.msra.mxu0 0.0
        %2829 = vmatprep.subr.mxu0 0.0
        %2830 = vmatpush1.msra.mxu0 0.0
        %2831 = vmatprep.subr.mxu0 0.0
        %2832 = vmatpush1.msra.mxu0 0.0
        %2833 = vmatprep.subr.mxu0 0.0
        %2834 = vmatpush1.msra.mxu0 0.0
        %2835 = vmatprep.subr.mxu0 0.0
        %2836 = vmatpush1.msra.mxu0 0.0
        %2837 = vmatprep.mubr.f32.mxu0 0.0
        %2838 = vmatmul.mubr.f32.gmra.mrb[0].mxu0 %v2771
        %v2839 = vpop.f32.mrb[0].mxu0
        %v2840 = vadd.f32 %v1519, %v2839
        %v2841 = vpop.f32.mrb[0].mxu0
        %2842 = vdwg.mxu0
        %v2844 = vsel %vm537, %v2840, 0
        %2846 = vmatprep.subr.mxu0 0.0
        %2847 = vmatpush1.msra.mxu0 %v454
        %2848 = vmatprep.subr.mxu0 0.0
        %2849 = vmatpush1.msra.mxu0 %v455
        %2850 = vmatprep.subr.mxu0 0.0
        %2851 = vmatpush1.msra.mxu0 %v456
        %2852 = vmatprep.subr.mxu0 0.0
        %2853 = vmatpush1.msra.mxu0 %v457
        %2854 = vmatprep.subr.mxu0 0.0
        %2855 = vmatpush1.msra.mxu0 0.0
        %2856 = vmatprep.subr.mxu0 0.0
        %2857 = vmatpush1.msra.mxu0 0.0
        %2858 = vmatprep.subr.mxu0 0.0
        %2859 = vmatpush1.msra.mxu0 0.0
        %2860 = vmatprep.subr.mxu0 0.0
        %2861 = vmatpush1.msra.mxu0 0.0
        %2862 = vmatprep.subr.mxu0 0.0
        %2863 = vmatpush1.msra.mxu0 0.0
        %2864 = vmatprep.subr.mxu0 0.0
        %2865 = vmatpush1.msra.mxu0 0.0
        %2866 = vmatprep.subr.mxu0 0.0
        %2867 = vmatpush1.msra.mxu0 0.0
        %2868 = vmatprep.subr.mxu0 0.0
        %2869 = vmatpush1.msra.mxu0 0.0
        %2870 = vmatprep.subr.mxu0 0.0
        %2871 = vmatpush1.msra.mxu0 0.0
        %2872 = vmatprep.subr.mxu0 0.0
        %2873 = vmatpush1.msra.mxu0 0.0
        %2874 = vmatprep.subr.mxu0 0.0
        %2875 = vmatpush1.msra.mxu0 0.0
        %2876 = vmatprep.subr.mxu0 0.0
        %2877 = vmatpush1.msra.mxu0 0.0
        %2878 = vmatprep.subr.mxu0 0.0
        %2879 = vmatpush1.msra.mxu0 0.0
        %2880 = vmatprep.subr.mxu0 0.0
        %2881 = vmatpush1.msra.mxu0 0.0
        %2882 = vmatprep.subr.mxu0 0.0
        %2883 = vmatpush1.msra.mxu0 0.0
        %2884 = vmatprep.subr.mxu0 0.0
        %2885 = vmatpush1.msra.mxu0 0.0
        %2886 = vmatprep.subr.mxu0 0.0
        %2887 = vmatpush1.msra.mxu0 0.0
        %2888 = vmatprep.subr.mxu0 0.0
        %2889 = vmatpush1.msra.mxu0 0.0
        %2890 = vmatprep.subr.mxu0 0.0
        %2891 = vmatpush1.msra.mxu0 0.0
        %2892 = vmatprep.subr.mxu0 0.0
        %2893 = vmatpush1.msra.mxu0 0.0
        %2894 = vmatprep.subr.mxu0 0.0
        %2895 = vmatpush1.msra.mxu0 0.0
        %2896 = vmatprep.subr.mxu0 0.0
        %2897 = vmatpush1.msra.mxu0 0.0
        %2898 = vmatprep.subr.mxu0 0.0
        %2899 = vmatpush1.msra.mxu0 0.0
        %2900 = vmatprep.subr.mxu0 0.0
        %2901 = vmatpush1.msra.mxu0 0.0
        %2902 = vmatprep.subr.mxu0 0.0
        %2903 = vmatpush1.msra.mxu0 0.0
        %2904 = vmatprep.subr.mxu0 0.0
        %2905 = vmatpush1.msra.mxu0 0.0
        %2906 = vmatprep.subr.mxu0 0.0
        %2907 = vmatpush1.msra.mxu0 0.0
        %2908 = vmatprep.subr.mxu0 0.0
        %2909 = vmatpush1.msra.mxu0 0.0
        %2910 = vmatprep.mubr.f32.mxu0 0.0
        %2911 = vmatmul.mubr.f32.gmra.mrb[0].mxu0 %v2844
        %v2912 = vpop.f32.mrb[0].mxu0
        %v2913 = vadd.f32 %v1599, %v2912
        %v2914 = vpop.f32.mrb[0].mxu0
        %2915 = vdwg.mxu0
        %v2917 = vsel %vm537, %v2267, 0
        %2919 = vmatprep.subr.mxu0 0.0
        %2920 = vmatpush1.msra.mxu0 %v469
        %2921 = vmatprep.subr.mxu0 0.0
        %2922 = vmatpush1.msra.mxu0 %v470
        %2923 = vmatprep.subr.mxu0 0.0
        %2924 = vmatpush1.msra.mxu0 %v471
        %2925 = vmatprep.subr.mxu0 0.0
        %2926 = vmatpush1.msra.mxu0 %v472
        %2927 = vmatprep.subr.mxu0 0.0
        %2928 = vmatpush1.msra.mxu0 0.0
        %2929 = vmatprep.subr.mxu0 0.0
        %2930 = vmatpush1.msra.mxu0 0.0
        %2931 = vmatprep.subr.mxu0 0.0
        %2932 = vmatpush1.msra.mxu0 0.0
        %2933 = vmatprep.subr.mxu0 0.0
        %2934 = vmatpush1.msra.mxu0 0.0
        %2935 = vmatprep.subr.mxu0 0.0
        %2936 = vmatpush1.msra.mxu0 0.0
        %2937 = vmatprep.subr.mxu0 0.0
        %2938 = vmatpush1.msra.mxu0 0.0
        %2939 = vmatprep.subr.mxu0 0.0
        %2940 = vmatpush1.msra.mxu0 0.0
        %2941 = vmatprep.subr.mxu0 0.0
        %2942 = vmatpush1.msra.mxu0 0.0
        %2943 = vmatprep.subr.mxu0 0.0
        %2944 = vmatpush1.msra.mxu0 0.0
        %2945 = vmatprep.subr.mxu0 0.0
        %2946 = vmatpush1.msra.mxu0 0.0
        %2947 = vmatprep.subr.mxu0 0.0
        %2948 = vmatpush1.msra.mxu0 0.0
        %2949 = vmatprep.subr.mxu0 0.0
        %2950 = vmatpush1.msra.mxu0 0.0
        %2951 = vmatprep.subr.mxu0 0.0
        %2952 = vmatpush1.msra.mxu0 0.0
        %2953 = vmatprep.subr.mxu0 0.0
        %2954 = vmatpush1.msra.mxu0 0.0
        %2955 = vmatprep.subr.mxu0 0.0
        %2956 = vmatpush1.msra.mxu0 0.0
        %2957 = vmatprep.subr.mxu0 0.0
        %2958 = vmatpush1.msra.mxu0 0.0
        %2959 = vmatprep.subr.mxu0 0.0
        %2960 = vmatpush1.msra.mxu0 0.0
        %2961 = vmatprep.subr.mxu0 0.0
        %2962 = vmatpush1.msra.mxu0 0.0
        %2963 = vmatprep.subr.mxu0 0.0
        %2964 = vmatpush1.msra.mxu0 0.0
        %2965 = vmatprep.subr.mxu0 0.0
        %2966 = vmatpush1.msra.mxu0 0.0
        %2967 = vmatprep.subr.mxu0 0.0
        %2968 = vmatpush1.msra.mxu0 0.0
        %2969 = vmatprep.subr.mxu0 0.0
        %2970 = vmatpush1.msra.mxu0 0.0
        %2971 = vmatprep.subr.mxu0 0.0
        %2972 = vmatpush1.msra.mxu0 0.0
        %2973 = vmatprep.subr.mxu0 0.0
        %2974 = vmatpush1.msra.mxu0 0.0
        %2975 = vmatprep.subr.mxu0 0.0
        %2976 = vmatpush1.msra.mxu0 0.0
        %2977 = vmatprep.subr.mxu0 0.0
        %2978 = vmatpush1.msra.mxu0 0.0
        %2979 = vmatprep.subr.mxu0 0.0
        %2980 = vmatpush1.msra.mxu0 0.0
        %2981 = vmatprep.subr.mxu0 0.0
        %2982 = vmatpush1.msra.mxu0 0.0
        %2983 = vmatprep.mubr.f32.mxu0 0.0
        %2984 = vmatmul.mubr.f32.gmra.mrb[0].mxu0 %v2917
        %v2985 = vpop.f32.mrb[0].mxu0
        %v2986 = vadd.f32 0.0, %v2985
        %v2987 = vpop.f32.mrb[0].mxu0
        %2988 = vdwg.mxu0
        %v2989 = vadd.f32 %v2913, %v2986
        %v2990 = vadd.f32 %v2989, %v1752
        %v2991 = vxor.u32 %v2990, 2147483648
        %v2992 = vmul.f32 %v2991, 1.442695
        %v2993 = vpow.pop %v2992
        %v2994 = vadd.f32 %v2993, 1.0
        %v2995 = vrcp.pop %v2994
        %v2996 = vmul.f32 1.0, %v2995
        %2997 = vmatprep.subr.mxu0 0.0
        %2998 = vmatpush1.msra.mxu0 %v459
        %2999 = vmatprep.subr.mxu0 0.0
        %3000 = vmatpush1.msra.mxu0 %v460
        %3001 = vmatprep.subr.mxu0 0.0
        %3002 = vmatpush1.msra.mxu0 %v461
        %3003 = vmatprep.subr.mxu0 0.0
        %3004 = vmatpush1.msra.mxu0 %v462
        %3005 = vmatprep.subr.mxu0 0.0
        %3006 = vmatpush1.msra.mxu0 0.0
        %3007 = vmatprep.subr.mxu0 0.0
        %3008 = vmatpush1.msra.mxu0 0.0
        %3009 = vmatprep.subr.mxu0 0.0
        %3010 = vmatpush1.msra.mxu0 0.0
        %3011 = vmatprep.subr.mxu0 0.0
        %3012 = vmatpush1.msra.mxu0 0.0
        %3013 = vmatprep.subr.mxu0 0.0
        %3014 = vmatpush1.msra.mxu0 0.0
        %3015 = vmatprep.subr.mxu0 0.0
        %3016 = vmatpush1.msra.mxu0 0.0
        %3017 = vmatprep.subr.mxu0 0.0
        %3018 = vmatpush1.msra.mxu0 0.0
        %3019 = vmatprep.subr.mxu0 0.0
        %3020 = vmatpush1.msra.mxu0 0.0
        %3021 = vmatprep.subr.mxu0 0.0
        %3022 = vmatpush1.msra.mxu0 0.0
        %3023 = vmatprep.subr.mxu0 0.0
        %3024 = vmatpush1.msra.mxu0 0.0
        %3025 = vmatprep.subr.mxu0 0.0
        %3026 = vmatpush1.msra.mxu0 0.0
        %3027 = vmatprep.subr.mxu0 0.0
        %3028 = vmatpush1.msra.mxu0 0.0
        %3029 = vmatprep.subr.mxu0 0.0
        %3030 = vmatpush1.msra.mxu0 0.0
        %3031 = vmatprep.subr.mxu0 0.0
        %3032 = vmatpush1.msra.mxu0 0.0
        %3033 = vmatprep.subr.mxu0 0.0
        %3034 = vmatpush1.msra.mxu0 0.0
        %3035 = vmatprep.subr.mxu0 0.0
        %3036 = vmatpush1.msra.mxu0 0.0
        %3037 = vmatprep.subr.mxu0 0.0
        %3038 = vmatpush1.msra.mxu0 0.0
        %3039 = vmatprep.subr.mxu0 0.0
        %3040 = vmatpush1.msra.mxu0 0.0
        %3041 = vmatprep.subr.mxu0 0.0
        %3042 = vmatpush1.msra.mxu0 0.0
        %3043 = vmatprep.subr.mxu0 0.0
        %3044 = vmatpush1.msra.mxu0 0.0
        %3045 = vmatprep.subr.mxu0 0.0
        %3046 = vmatpush1.msra.mxu0 0.0
        %3047 = vmatprep.subr.mxu0 0.0
        %3048 = vmatpush1.msra.mxu0 0.0
        %3049 = vmatprep.subr.mxu0 0.0
        %3050 = vmatpush1.msra.mxu0 0.0
        %3051 = vmatprep.subr.mxu0 0.0
        %3052 = vmatpush1.msra.mxu0 0.0
        %3053 = vmatprep.subr.mxu0 0.0
        %3054 = vmatpush1.msra.mxu0 0.0
        %3055 = vmatprep.subr.mxu0 0.0
        %3056 = vmatpush1.msra.mxu0 0.0
        %3057 = vmatprep.subr.mxu0 0.0
        %3058 = vmatpush1.msra.mxu0 0.0
        %3059 = vmatprep.subr.mxu0 0.0
        %3060 = vmatpush1.msra.mxu0 0.0
        %3061 = vmatprep.mubr.f32.mxu0 0.0
        %3062 = vmatmul.mubr.f32.gmra.mrb[0].mxu0 %v2844
        %v3063 = vpop.f32.mrb[0].mxu0
        %v3064 = vadd.f32 %v1765, %v3063
        %v3065 = vpop.f32.mrb[0].mxu0
        %3066 = vdwg.mxu0
        %3067 = vmatprep.subr.mxu0 0.0
        %3068 = vmatpush1.msra.mxu0 %v474
        %3069 = vmatprep.subr.mxu0 0.0
        %3070 = vmatpush1.msra.mxu0 %v475
        %3071 = vmatprep.subr.mxu0 0.0
        %3072 = vmatpush1.msra.mxu0 %v476
        %3073 = vmatprep.subr.mxu0 0.0
        %3074 = vmatpush1.msra.mxu0 %v477
        %3075 = vmatprep.subr.mxu0 0.0
        %3076 = vmatpush1.msra.mxu0 0.0
        %3077 = vmatprep.subr.mxu0 0.0
        %3078 = vmatpush1.msra.mxu0 0.0
        %3079 = vmatprep.subr.mxu0 0.0
        %3080 = vmatpush1.msra.mxu0 0.0
        %3081 = vmatprep.subr.mxu0 0.0
        %3082 = vmatpush1.msra.mxu0 0.0
        %3083 = vmatprep.subr.mxu0 0.0
        %3084 = vmatpush1.msra.mxu0 0.0
        %3085 = vmatprep.subr.mxu0 0.0
        %3086 = vmatpush1.msra.mxu0 0.0
        %3087 = vmatprep.subr.mxu0 0.0
        %3088 = vmatpush1.msra.mxu0 0.0
        %3089 = vmatprep.subr.mxu0 0.0
        %3090 = vmatpush1.msra.mxu0 0.0
        %3091 = vmatprep.subr.mxu0 0.0
        %3092 = vmatpush1.msra.mxu0 0.0
        %3093 = vmatprep.subr.mxu0 0.0
        %3094 = vmatpush1.msra.mxu0 0.0
        %3095 = vmatprep.subr.mxu0 0.0
        %3096 = vmatpush1.msra.mxu0 0.0
        %3097 = vmatprep.subr.mxu0 0.0
        %3098 = vmatpush1.msra.mxu0 0.0
        %3099 = vmatprep.subr.mxu0 0.0
        %3100 = vmatpush1.msra.mxu0 0.0
        %3101 = vmatprep.subr.mxu0 0.0
        %3102 = vmatpush1.msra.mxu0 0.0
        %3103 = vmatprep.subr.mxu0 0.0
        %3104 = vmatpush1.msra.mxu0 0.0
        %3105 = vmatprep.subr.mxu0 0.0
        %3106 = vmatpush1.msra.mxu0 0.0
        %3107 = vmatprep.subr.mxu0 0.0
        %3108 = vmatpush1.msra.mxu0 0.0
        %3109 = vmatprep.subr.mxu0 0.0
        %3110 = vmatpush1.msra.mxu0 0.0
        %3111 = vmatprep.subr.mxu0 0.0
        %3112 = vmatpush1.msra.mxu0 0.0
        %3113 = vmatprep.subr.mxu0 0.0
        %3114 = vmatpush1.msra.mxu0 0.0
        %3115 = vmatprep.subr.mxu0 0.0
        %3116 = vmatpush1.msra.mxu0 0.0
        %3117 = vmatprep.subr.mxu0 0.0
        %3118 = vmatpush1.msra.mxu0 0.0
        %3119 = vmatprep.subr.mxu0 0.0
        %3120 = vmatpush1.msra.mxu0 0.0
        %3121 = vmatprep.subr.mxu0 0.0
        %3122 = vmatpush1.msra.mxu0 0.0
        %3123 = vmatprep.subr.mxu0 0.0
        %3124 = vmatpush1.msra.mxu0 0.0
        %3125 = vmatprep.subr.mxu0 0.0
        %3126 = vmatpush1.msra.mxu0 0.0
        %3127 = vmatprep.subr.mxu0 0.0
        %3128 = vmatpush1.msra.mxu0 0.0
        %3129 = vmatprep.subr.mxu0 0.0
        %3130 = vmatpush1.msra.mxu0 0.0
        %3131 = vmatprep.mubr.f32.mxu0 0.0
        %3132 = vmatmul.mubr.f32.gmra.mrb[0].mxu0 %v2917
        %v3133 = vpop.f32.mrb[0].mxu0
        %v3134 = vadd.f32 0.0, %v3133
        %v3135 = vpop.f32.mrb[0].mxu0
        %3136 = vdwg.mxu0
        %v3137 = vadd.f32 %v3064, %v3134
        %v3138 = vadd.f32 %v3137, %v1912
        %v3139 = vxor.u32 %v3138, 2147483648
        %v3140 = vmul.f32 %v3139, 1.442695
        %v3141 = vpow.pop %v3140
        %v3142 = vadd.f32 %v3141, 1.0
        %v3143 = vrcp.pop %v3142
        %v3144 = vmul.f32 1.0, %v3143
        %3145 = vmatprep.subr.mxu0 0.0
        %3146 = vmatpush1.msra.mxu0 %v464
        %3147 = vmatprep.subr.mxu0 0.0
        %3148 = vmatpush1.msra.mxu0 %v465
        %3149 = vmatprep.subr.mxu0 0.0
        %3150 = vmatpush1.msra.mxu0 %v466
        %3151 = vmatprep.subr.mxu0 0.0
        %3152 = vmatpush1.msra.mxu0 %v467
        %3153 = vmatprep.subr.mxu0 0.0
        %3154 = vmatpush1.msra.mxu0 0.0
        %3155 = vmatprep.subr.mxu0 0.0
        %3156 = vmatpush1.msra.mxu0 0.0
        %3157 = vmatprep.subr.mxu0 0.0
        %3158 = vmatpush1.msra.mxu0 0.0
        %3159 = vmatprep.subr.mxu0 0.0
        %3160 = vmatpush1.msra.mxu0 0.0
        %3161 = vmatprep.subr.mxu0 0.0
        %3162 = vmatpush1.msra.mxu0 0.0
        %3163 = vmatprep.subr.mxu0 0.0
        %3164 = vmatpush1.msra.mxu0 0.0
        %3165 = vmatprep.subr.mxu0 0.0
        %3166 = vmatpush1.msra.mxu0 0.0
        %3167 = vmatprep.subr.mxu0 0.0
        %3168 = vmatpush1.msra.mxu0 0.0
        %3169 = vmatprep.subr.mxu0 0.0
        %3170 = vmatpush1.msra.mxu0 0.0
        %3171 = vmatprep.subr.mxu0 0.0
        %3172 = vmatpush1.msra.mxu0 0.0
        %3173 = vmatprep.subr.mxu0 0.0
        %3174 = vmatpush1.msra.mxu0 0.0
        %3175 = vmatprep.subr.mxu0 0.0
        %3176 = vmatpush1.msra.mxu0 0.0
        %3177 = vmatprep.subr.mxu0 0.0
        %3178 = vmatpush1.msra.mxu0 0.0
        %3179 = vmatprep.subr.mxu0 0.0
        %3180 = vmatpush1.msra.mxu0 0.0
        %3181 = vmatprep.subr.mxu0 0.0
        %3182 = vmatpush1.msra.mxu0 0.0
        %3183 = vmatprep.subr.mxu0 0.0
        %3184 = vmatpush1.msra.mxu0 0.0
        %3185 = vmatprep.subr.mxu0 0.0
        %3186 = vmatpush1.msra.mxu0 0.0
        %3187 = vmatprep.subr.mxu0 0.0
        %3188 = vmatpush1.msra.mxu0 0.0
        %3189 = vmatprep.subr.mxu0 0.0
        %3190 = vmatpush1.msra.mxu0 0.0
        %3191 = vmatprep.subr.mxu0 0.0
        %3192 = vmatpush1.msra.mxu0 0.0
        %3193 = vmatprep.subr.mxu0 0.0
        %3194 = vmatpush1.msra.mxu0 0.0
        %3195 = vmatprep.subr.mxu0 0.0
        %3196 = vmatpush1.msra.mxu0 0.0
        %3197 = vmatprep.subr.mxu0 0.0
        %3198 = vmatpush1.msra.mxu0 0.0
        %3199 = vmatprep.subr.mxu0 0.0
        %3200 = vmatpush1.msra.mxu0 0.0
        %3201 = vmatprep.subr.mxu0 0.0
        %3202 = vmatpush1.msra.mxu0 0.0
        %3203 = vmatprep.subr.mxu0 0.0
        %3204 = vmatpush1.msra.mxu0 0.0
        %3205 = vmatprep.subr.mxu0 0.0
        %3206 = vmatpush1.msra.mxu0 0.0
        %3207 = vmatprep.subr.mxu0 0.0
        %3208 = vmatpush1.msra.mxu0 0.0
        %3209 = vmatprep.mubr.f32.mxu0 0.0
        %3210 = vmatmul.mubr.f32.gmra.mrb[0].mxu0 %v2844
        %v3211 = vpop.f32.mrb[0].mxu0
        %v3212 = vadd.f32 %v1925, %v3211
        %v3213 = vpop.f32.mrb[0].mxu0
        %3214 = vdwg.mxu0
        %3215 = vmatprep.subr.mxu0 0.0
        %3216 = vmatpush1.msra.mxu0 %v479
        %3217 = vmatprep.subr.mxu0 0.0
        %3218 = vmatpush1.msra.mxu0 %v480
        %3219 = vmatprep.subr.mxu0 0.0
        %3220 = vmatpush1.msra.mxu0 %v481
        %3221 = vmatprep.subr.mxu0 0.0
        %3222 = vmatpush1.msra.mxu0 %v482
        %3223 = vmatprep.subr.mxu0 0.0
        %3224 = vmatpush1.msra.mxu0 0.0
        %3225 = vmatprep.subr.mxu0 0.0
        %3226 = vmatpush1.msra.mxu0 0.0
        %3227 = vmatprep.subr.mxu0 0.0
        %3228 = vmatpush1.msra.mxu0 0.0
        %3229 = vmatprep.subr.mxu0 0.0
        %3230 = vmatpush1.msra.mxu0 0.0
        %3231 = vmatprep.subr.mxu0 0.0
        %3232 = vmatpush1.msra.mxu0 0.0
        %3233 = vmatprep.subr.mxu0 0.0
        %3234 = vmatpush1.msra.mxu0 0.0
        %3235 = vmatprep.subr.mxu0 0.0
        %3236 = vmatpush1.msra.mxu0 0.0
        %3237 = vmatprep.subr.mxu0 0.0
        %3238 = vmatpush1.msra.mxu0 0.0
        %3239 = vmatprep.subr.mxu0 0.0
        %3240 = vmatpush1.msra.mxu0 0.0
        %3241 = vmatprep.subr.mxu0 0.0
        %3242 = vmatpush1.msra.mxu0 0.0
        %3243 = vmatprep.subr.mxu0 0.0
        %3244 = vmatpush1.msra.mxu0 0.0
        %3245 = vmatprep.subr.mxu0 0.0
        %3246 = vmatpush1.msra.mxu0 0.0
        %3247 = vmatprep.subr.mxu0 0.0
        %3248 = vmatpush1.msra.mxu0 0.0
        %3249 = vmatprep.subr.mxu0 0.0
        %3250 = vmatpush1.msra.mxu0 0.0
        %3251 = vmatprep.subr.mxu0 0.0
        %3252 = vmatpush1.msra.mxu0 0.0
        %3253 = vmatprep.subr.mxu0 0.0
        %3254 = vmatpush1.msra.mxu0 0.0
        %3255 = vmatprep.subr.mxu0 0.0
        %3256 = vmatpush1.msra.mxu0 0.0
        %3257 = vmatprep.subr.mxu0 0.0
        %3258 = vmatpush1.msra.mxu0 0.0
        %3259 = vmatprep.subr.mxu0 0.0
        %3260 = vmatpush1.msra.mxu0 0.0
        %3261 = vmatprep.subr.mxu0 0.0
        %3262 = vmatpush1.msra.mxu0 0.0
        %3263 = vmatprep.subr.mxu0 0.0
        %3264 = vmatpush1.msra.mxu0 0.0
        %3265 = vmatprep.subr.mxu0 0.0
        %3266 = vmatpush1.msra.mxu0 0.0
        %3267 = vmatprep.subr.mxu0 0.0
        %3268 = vmatpush1.msra.mxu0 0.0
        %3269 = vmatprep.subr.mxu0 0.0
        %3270 = vmatpush1.msra.mxu0 0.0
        %3271 = vmatprep.subr.mxu0 0.0
        %3272 = vmatpush1.msra.mxu0 0.0
        %3273 = vmatprep.subr.mxu0 0.0
        %3274 = vmatpush1.msra.mxu0 0.0
        %3275 = vmatprep.subr.mxu0 0.0
        %3276 = vmatpush1.msra.mxu0 0.0
        %3277 = vmatprep.subr.mxu0 0.0
        %3278 = vmatpush1.msra.mxu0 0.0
        %3279 = vmatprep.mubr.f32.mxu0 0.0
        %3280 = vmatmul.mubr.f32.gmra.mrb[0].mxu0 %v2917
        %v3281 = vpop.f32.mrb[0].mxu0
        %v3282 = vadd.f32 %v2001, %v3281
        %v3283 = vpop.f32.mrb[0].mxu0
        %3284 = vdwg.mxu0
        %v3285 = vmul.f32 %v2996, %v3282
        %v3286 = vadd.f32 %v3212, %v3285
        %v3287 = vtanh.pop %v3286
        %v3288 = vsub.f32 1.0, %v3144
        %v3289 = vmul.f32 %v3288, %v3287
        %v3290 = vmul.f32 %v3144, %v2267
        %v3291 = vadd.f32 %v3289, %v3290
        %v3292 = vsel %vm581, %v3291, 0.0
        %3293 = vadd.xlane.f32.xlu0 %v3292
        %v3294 = vpop.xlane.xlu0 %3293
        %v3295 = vmul.f32 %v3294, %v544
        %v3296 = vsub.f32 %v3291, %v3295
        %v3297 = vmul.f32 %v3296, %v3296
        %v3298 = vsel %vm581, %v3297, 0.0
        %3299 = vadd.xlane.f32.xlu0 %v3298
        %v3300 = vpop.xlane.xlu0 %3299
        %v3301 = vmul.f32 %v3300, %v544
        %v3302 = vadd.f32 %v3301, 1e-05
        %v3303 = vrsqrt.pop %v3302
        %v3304 = vmul.f32 %v3296, %v3303
        %v3305 = vmul.f32 %v3304, %v2097
        %v3306 = vadd.f32 %v3305, %v2104
        %v3308 = vsel %vm537, %v3306, 0
        %3310 = vmatprep.subr.mxu0 0.0
        %3311 = vmatpush1.msra.mxu0 %v493
        %3312 = vmatprep.subr.mxu0 0.0
        %3313 = vmatpush1.msra.mxu0 %v494
        %3314 = vmatprep.subr.mxu0 0.0
        %3315 = vmatpush1.msra.mxu0 %v495
        %3316 = vmatprep.subr.mxu0 0.0
        %3317 = vmatpush1.msra.mxu0 %v496
        %3318 = vmatprep.subr.mxu0 0.0
        %3319 = vmatpush1.msra.mxu0 0.0
        %3320 = vmatprep.subr.mxu0 0.0
        %3321 = vmatpush1.msra.mxu0 0.0
        %3322 = vmatprep.subr.mxu0 0.0
        %3323 = vmatpush1.msra.mxu0 0.0
        %3324 = vmatprep.subr.mxu0 0.0
        %3325 = vmatpush1.msra.mxu0 0.0
        %3326 = vmatprep.subr.mxu0 0.0
        %3327 = vmatpush1.msra.mxu0 0.0
        %3328 = vmatprep.subr.mxu0 0.0
        %3329 = vmatpush1.msra.mxu0 0.0
        %3330 = vmatprep.subr.mxu0 0.0
        %3331 = vmatpush1.msra.mxu0 0.0
        %3332 = vmatprep.subr.mxu0 0.0
        %3333 = vmatpush1.msra.mxu0 0.0
        %3334 = vmatprep.subr.mxu0 0.0
        %3335 = vmatpush1.msra.mxu0 0.0
        %3336 = vmatprep.subr.mxu0 0.0
        %3337 = vmatpush1.msra.mxu0 0.0
        %3338 = vmatprep.subr.mxu0 0.0
        %3339 = vmatpush1.msra.mxu0 0.0
        %3340 = vmatprep.subr.mxu0 0.0
        %3341 = vmatpush1.msra.mxu0 0.0
        %3342 = vmatprep.subr.mxu0 0.0
        %3343 = vmatpush1.msra.mxu0 0.0
        %3344 = vmatprep.subr.mxu0 0.0
        %3345 = vmatpush1.msra.mxu0 0.0
        %3346 = vmatprep.subr.mxu0 0.0
        %3347 = vmatpush1.msra.mxu0 0.0
        %3348 = vmatprep.subr.mxu0 0.0
        %3349 = vmatpush1.msra.mxu0 0.0
        %3350 = vmatprep.subr.mxu0 0.0
        %3351 = vmatpush1.msra.mxu0 0.0
        %3352 = vmatprep.subr.mxu0 0.0
        %3353 = vmatpush1.msra.mxu0 0.0
        %3354 = vmatprep.subr.mxu0 0.0
        %3355 = vmatpush1.msra.mxu0 0.0
        %3356 = vmatprep.subr.mxu0 0.0
        %3357 = vmatpush1.msra.mxu0 0.0
        %3358 = vmatprep.subr.mxu0 0.0
        %3359 = vmatpush1.msra.mxu0 0.0
        %3360 = vmatprep.subr.mxu0 0.0
        %3361 = vmatpush1.msra.mxu0 0.0
        %3362 = vmatprep.subr.mxu0 0.0
        %3363 = vmatpush1.msra.mxu0 0.0
        %3364 = vmatprep.subr.mxu0 0.0
        %3365 = vmatpush1.msra.mxu0 0.0
        %3366 = vmatprep.subr.mxu0 0.0
        %3367 = vmatpush1.msra.mxu0 0.0
        %3368 = vmatprep.subr.mxu0 0.0
        %3369 = vmatpush1.msra.mxu0 0.0
        %3370 = vmatprep.subr.mxu0 0.0
        %3371 = vmatpush1.msra.mxu0 0.0
        %3372 = vmatprep.subr.mxu0 0.0
        %3373 = vmatpush1.msra.mxu0 0.0
        %3374 = vmatprep.mubr.f32.mxu0 0.0
        %3375 = vmatmul.mubr.f32.gmra.mrb[0].mxu0 %v3308
        %v3376 = vpop.f32.mrb[0].mxu0
        %v3377 = vadd.f32 %v2111, %v3376
        %v3378 = vpop.f32.mrb[0].mxu0
        %3379 = vdwg.mxu0
        %v3380 = vmax.f32 %v3377, 0.0
        %v3382 = vsel %vm1521, %v3380, 0
        %3384 = vmatprep.subr.mxu0 0.0
        %3385 = vmatpush1.msra.mxu0 %v511
        %3386 = vmatprep.subr.mxu0 0.0
        %3387 = vmatpush1.msra.mxu0 %v512
        %3388 = vmatprep.subr.mxu0 0.0
        %3389 = vmatpush1.msra.mxu0 %v513
        %3390 = vmatprep.subr.mxu0 0.0
        %3391 = vmatpush1.msra.mxu0 %v514
        %3392 = vmatprep.subr.mxu0 0.0
        %3393 = vmatpush1.msra.mxu0 %v515
        %3394 = vmatprep.subr.mxu0 0.0
        %3395 = vmatpush1.msra.mxu0 %v516
        %3396 = vmatprep.subr.mxu0 0.0
        %3397 = vmatpush1.msra.mxu0 %v517
        %3398 = vmatprep.subr.mxu0 0.0
        %3399 = vmatpush1.msra.mxu0 %v518
        %3400 = vmatprep.subr.mxu0 0.0
        %3401 = vmatpush1.msra.mxu0 0.0
        %3402 = vmatprep.subr.mxu0 0.0
        %3403 = vmatpush1.msra.mxu0 0.0
        %3404 = vmatprep.subr.mxu0 0.0
        %3405 = vmatpush1.msra.mxu0 0.0
        %3406 = vmatprep.subr.mxu0 0.0
        %3407 = vmatpush1.msra.mxu0 0.0
        %3408 = vmatprep.subr.mxu0 0.0
        %3409 = vmatpush1.msra.mxu0 0.0
        %3410 = vmatprep.subr.mxu0 0.0
        %3411 = vmatpush1.msra.mxu0 0.0
        %3412 = vmatprep.subr.mxu0 0.0
        %3413 = vmatpush1.msra.mxu0 0.0
        %3414 = vmatprep.subr.mxu0 0.0
        %3415 = vmatpush1.msra.mxu0 0.0
        %3416 = vmatprep.subr.mxu0 0.0
        %3417 = vmatpush1.msra.mxu0 0.0
        %3418 = vmatprep.subr.mxu0 0.0
        %3419 = vmatpush1.msra.mxu0 0.0
        %3420 = vmatprep.subr.mxu0 0.0
        %3421 = vmatpush1.msra.mxu0 0.0
        %3422 = vmatprep.subr.mxu0 0.0
        %3423 = vmatpush1.msra.mxu0 0.0
        %3424 = vmatprep.subr.mxu0 0.0
        %3425 = vmatpush1.msra.mxu0 0.0
        %3426 = vmatprep.subr.mxu0 0.0
        %3427 = vmatpush1.msra.mxu0 0.0
        %3428 = vmatprep.subr.mxu0 0.0
        %3429 = vmatpush1.msra.mxu0 0.0
        %3430 = vmatprep.subr.mxu0 0.0
        %3431 = vmatpush1.msra.mxu0 0.0
        %3432 = vmatprep.subr.mxu0 0.0
        %3433 = vmatpush1.msra.mxu0 0.0
        %3434 = vmatprep.subr.mxu0 0.0
        %3435 = vmatpush1.msra.mxu0 0.0
        %3436 = vmatprep.subr.mxu0 0.0
        %3437 = vmatpush1.msra.mxu0 0.0
        %3438 = vmatprep.subr.mxu0 0.0
        %3439 = vmatpush1.msra.mxu0 0.0
        %3440 = vmatprep.subr.mxu0 0.0
        %3441 = vmatpush1.msra.mxu0 0.0
        %3442 = vmatprep.subr.mxu0 0.0
        %3443 = vmatpush1.msra.mxu0 0.0
        %3444 = vmatprep.subr.mxu0 0.0
        %3445 = vmatpush1.msra.mxu0 0.0
        %3446 = vmatprep.subr.mxu0 0.0
        %3447 = vmatpush1.msra.mxu0 0.0
        %3448 = vmatprep.mubr.f32.mxu0 0.0
        %3449 = vmatmul.mubr.f32.gmra.mrb[0].mxu0 %v3382
        %v3450 = vpop.f32.mrb[0].mxu0
        %v3451 = vadd.f32 0.0, %v3450
        %v3452 = vpop.f32.mrb[0].mxu0
        %3453 = vdwg.mxu0
        %v3454 = vadd.f32 %v3291, %v3451
        %v3455 = vadd.f32 %v3454, %v2265
        %v3456 = vsel %vm581, %v3455, 0.0
        %3457 = vadd.xlane.f32.xlu0 %v3456
        %v3458 = vpop.xlane.xlu0 %3457
        %v3459 = vmul.f32 %v3458, %v544
        %v3460 = vsub.f32 %v3455, %v3459
        %v3461 = vmul.f32 %v3460, %v3460
        %v3462 = vsel %vm581, %v3461, 0.0
        %3463 = vadd.xlane.f32.xlu0 %v3462
        %v3464 = vpop.xlane.xlu0 %3463
        %v3465 = vmul.f32 %v3464, %v544
        %v3466 = vadd.f32 %v3465, 1e-05
        %v3467 = vrsqrt.pop %v3466
        %v3468 = vmul.f32 %v3460, %v3467
        %v3469 = vmul.f32 %v3468, %v995
        %v3470 = vadd.f32 %v3469, %v1002
        %v3472 = vsel %vm537, %v3470, 0
        %3474 = vmatprep.subr.mxu0 0.0
        %3475 = vmatpush1.xpose.msra.mxu0 %v1009
        %3476 = vmatprep.subr.mxu0 0.0
        %3477 = vmatpush1.xpose.msra.mxu0 %v1012
        %3478 = vmatprep.subr.mxu0 0.0
        %3479 = vmatpush1.xpose.msra.mxu0 0.0
        %3480 = vmatprep.subr.mxu0 0.0
        %3481 = vmatpush1.xpose.msra.mxu0 0.0
        %3482 = vmatprep.subr.mxu0 0.0
        %3483 = vmatpush1.xpose.msra.mxu0 0.0
        %3484 = vmatprep.subr.mxu0 0.0
        %3485 = vmatpush1.xpose.msra.mxu0 0.0
        %3486 = vmatprep.subr.mxu0 0.0
        %3487 = vmatpush1.xpose.msra.mxu0 0.0
        %3488 = vmatprep.subr.mxu0 0.0
        %3489 = vmatpush1.xpose.msra.mxu0 0.0
        %3490 = vmatprep.subr.mxu0 0.0
        %3491 = vmatpush1.xpose.msra.mxu0 0.0
        %3492 = vmatprep.subr.mxu0 0.0
        %3493 = vmatpush1.xpose.msra.mxu0 0.0
        %3494 = vmatprep.subr.mxu0 0.0
        %3495 = vmatpush1.xpose.msra.mxu0 0.0
        %3496 = vmatprep.subr.mxu0 0.0
        %3497 = vmatpush1.xpose.msra.mxu0 0.0
        %3498 = vmatprep.subr.mxu0 0.0
        %3499 = vmatpush1.xpose.msra.mxu0 0.0
        %3500 = vmatprep.subr.mxu0 0.0
        %3501 = vmatpush1.xpose.msra.mxu0 0.0
        %3502 = vmatprep.subr.mxu0 0.0
        %3503 = vmatpush1.xpose.msra.mxu0 0.0
        %3504 = vmatprep.subr.mxu0 0.0
        %3505 = vmatpush1.xpose.msra.mxu0 0.0
        %3506 = vmatprep.subr.mxu0 0.0
        %3507 = vmatpush1.xpose.msra.mxu0 0.0
        %3508 = vmatprep.subr.mxu0 0.0
        %3509 = vmatpush1.xpose.msra.mxu0 0.0
        %3510 = vmatprep.subr.mxu0 0.0
        %3511 = vmatpush1.xpose.msra.mxu0 0.0
        %3512 = vmatprep.subr.mxu0 0.0
        %3513 = vmatpush1.xpose.msra.mxu0 0.0
        %3514 = vmatprep.subr.mxu0 0.0
        %3515 = vmatpush1.xpose.msra.mxu0 0.0
        %3516 = vmatprep.subr.mxu0 0.0
        %3517 = vmatpush1.xpose.msra.mxu0 0.0
        %3518 = vmatprep.subr.mxu0 0.0
        %3519 = vmatpush1.xpose.msra.mxu0 0.0
        %3520 = vmatprep.subr.mxu0 0.0
        %3521 = vmatpush1.xpose.msra.mxu0 0.0
        %3522 = vmatprep.subr.mxu0 0.0
        %3523 = vmatpush1.xpose.msra.mxu0 0.0
        %3524 = vmatprep.subr.mxu0 0.0
        %3525 = vmatpush1.xpose.msra.mxu0 0.0
        %3526 = vmatprep.subr.mxu0 0.0
        %3527 = vmatpush1.xpose.msra.mxu0 0.0
        %3528 = vmatprep.subr.mxu0 0.0
        %3529 = vmatpush1.xpose.msra.mxu0 0.0
        %3530 = vmatprep.subr.mxu0 0.0
        %3531 = vmatpush1.xpose.msra.mxu0 0.0
        %3532 = vmatprep.subr.mxu0 0.0
        %3533 = vmatpush1.xpose.msra.mxu0 0.0
        %3534 = vmatprep.subr.mxu0 0.0
        %3535 = vmatpush1.xpose.msra.mxu0 0.0
        %3536 = vmatprep.subr.mxu0 0.0
        %3537 = vmatpush1.xpose.msra.mxu0 0.0
        %3538 = vmatprep.mubr.f32.mxu0 0.0
        %3539 = vmatmul.mubr.f32.gmra.mrb[0].mxu0 %v3472
        %v3540 = vpop.f32.mrb[0].mxu0
        %v3541 = vadd.f32 0.0, %v3540
        %v3542 = vpop.f32.mrb[0].mxu0
        %3543 = vdwg.mxu0
        %v3544 = vsel %vm1084, %v3541, -inf
        %v3545 = vrot.slane %v3544, 4
        %v3546 = vmax.f32 %v3544, %v3545
        %v3547 = vrot.slane %v3546, 2
        %v3548 = vmax.f32 %v3546, %v3547
        %v3549 = vrot.slane %v3548, 1
        %v3550 = vmax.f32 %v3548, %v3549
        %v3551 = vsub.f32 %v3541, %v3550
        %v3552 = vmul.f32 %v3551, 1.442695
        %v3553 = vpow.pop %v3552
        %v3554 = vsel %vm1084, %v3553, 0.0
        %v3555 = vrot.slane %v3554, 4
        %v3556 = vadd.f32 %v3554, %v3555
        %v3557 = vrot.slane %v3556, 2
        %v3558 = vadd.f32 %v3556, %v3557
        %v3559 = vrot.slane %v3558, 1
        %v3560 = vadd.f32 %v3558, %v3559
        %v3561 = vrcp.pop %v3560
        %v3562 = vmul.f32 %v3553, %v3561
        %v3563 = vadd.f32 %v3562, 1e-08
        %v3564 = vsel %vm1084, %v3563, 0.0
        %3565 = vadd.xlane.f32.xlu0 %v3564
        %v3566 = vpop.xlane.xlu0 %3565
        %v3567 = vrcp.pop %v3566
        %v3568 = vmul.f32 %v3563, %v3567
        %v3570 = vsel %vm1110, %v3568, 0
        %3572 = vmatprep.subr.mxu0 0.0
        %3573 = vmatpush1.msra.mxu0 %v757
        %3574 = vmatprep.subr.mxu0 0.0
        %3575 = vmatpush1.msra.mxu0 %v762
        %3576 = vmatprep.subr.mxu0 0.0
        %3577 = vmatpush1.msra.mxu0 0.0
        %3578 = vmatprep.subr.mxu0 0.0
        %3579 = vmatpush1.msra.mxu0 0.0
        %3580 = vmatprep.subr.mxu0 0.0
        %3581 = vmatpush1.msra.mxu0 0.0
        %3582 = vmatprep.subr.mxu0 0.0
        %3583 = vmatpush1.msra.mxu0 0.0
        %3584 = vmatprep.subr.mxu0 0.0
        %3585 = vmatpush1.msra.mxu0 0.0
        %3586 = vmatprep.subr.mxu0 0.0
        %3587 = vmatpush1.msra.mxu0 0.0
        %3588 = vmatprep.subr.mxu0 0.0
        %3589 = vmatpush1.msra.mxu0 0.0
        %3590 = vmatprep.subr.mxu0 0.0
        %3591 = vmatpush1.msra.mxu0 0.0
        %3592 = vmatprep.subr.mxu0 0.0
        %3593 = vmatpush1.msra.mxu0 0.0
        %3594 = vmatprep.subr.mxu0 0.0
        %3595 = vmatpush1.msra.mxu0 0.0
        %3596 = vmatprep.subr.mxu0 0.0
        %3597 = vmatpush1.msra.mxu0 0.0
        %3598 = vmatprep.subr.mxu0 0.0
        %3599 = vmatpush1.msra.mxu0 0.0
        %3600 = vmatprep.subr.mxu0 0.0
        %3601 = vmatpush1.msra.mxu0 0.0
        %3602 = vmatprep.subr.mxu0 0.0
        %3603 = vmatpush1.msra.mxu0 0.0
        %3604 = vmatprep.subr.mxu0 0.0
        %3605 = vmatpush1.msra.mxu0 0.0
        %3606 = vmatprep.subr.mxu0 0.0
        %3607 = vmatpush1.msra.mxu0 0.0
        %3608 = vmatprep.subr.mxu0 0.0
        %3609 = vmatpush1.msra.mxu0 0.0
        %3610 = vmatprep.subr.mxu0 0.0
        %3611 = vmatpush1.msra.mxu0 0.0
        %3612 = vmatprep.subr.mxu0 0.0
        %3613 = vmatpush1.msra.mxu0 0.0
        %3614 = vmatprep.subr.mxu0 0.0
        %3615 = vmatpush1.msra.mxu0 0.0
        %3616 = vmatprep.subr.mxu0 0.0
        %3617 = vmatpush1.msra.mxu0 0.0
        %3618 = vmatprep.subr.mxu0 0.0
        %3619 = vmatpush1.msra.mxu0 0.0
        %3620 = vmatprep.subr.mxu0 0.0
        %3621 = vmatpush1.msra.mxu0 0.0
        %3622 = vmatprep.subr.mxu0 0.0
        %3623 = vmatpush1.msra.mxu0 0.0
        %3624 = vmatprep.subr.mxu0 0.0
        %3625 = vmatpush1.msra.mxu0 0.0
        %3626 = vmatprep.subr.mxu0 0.0
        %3627 = vmatpush1.msra.mxu0 0.0
        %3628 = vmatprep.subr.mxu0 0.0
        %3629 = vmatpush1.msra.mxu0 0.0
        %3630 = vmatprep.subr.mxu0 0.0
        %3631 = vmatpush1.msra.mxu0 0.0
        %3632 = vmatprep.subr.mxu0 0.0
        %3633 = vmatpush1.msra.mxu0 0.0
        %3634 = vmatprep.subr.mxu0 0.0
        %3635 = vmatpush1.msra.mxu0 0.0
        %3636 = vmatprep.mubr.f32.mxu0 0.0
        %3637 = vmatmul.mubr.f32.gmra.mrb[0].mxu0 %v3570
        %v3638 = vpop.f32.mrb[0].mxu0
        %v3639 = vadd.f32 0.0, %v3638
        %v3640 = vpop.f32.mrb[0].mxu0
        %3641 = vdwg.mxu0
        %3642 = vmatprep.subr.mxu0 0.0
        %3643 = vmatpush1.xpose.msra.mxu0 %v1185
        %3644 = vmatprep.subr.mxu0 0.0
        %3645 = vmatpush1.xpose.msra.mxu0 0.0
        %3646 = vmatprep.subr.mxu0 0.0
        %3647 = vmatpush1.xpose.msra.mxu0 0.0
        %3648 = vmatprep.subr.mxu0 0.0
        %3649 = vmatpush1.xpose.msra.mxu0 0.0
        %3650 = vmatprep.subr.mxu0 0.0
        %3651 = vmatpush1.xpose.msra.mxu0 0.0
        %3652 = vmatprep.subr.mxu0 0.0
        %3653 = vmatpush1.xpose.msra.mxu0 0.0
        %3654 = vmatprep.subr.mxu0 0.0
        %3655 = vmatpush1.xpose.msra.mxu0 0.0
        %3656 = vmatprep.subr.mxu0 0.0
        %3657 = vmatpush1.xpose.msra.mxu0 0.0
        %3658 = vmatprep.subr.mxu0 0.0
        %3659 = vmatpush1.xpose.msra.mxu0 0.0
        %3660 = vmatprep.subr.mxu0 0.0
        %3661 = vmatpush1.xpose.msra.mxu0 0.0
        %3662 = vmatprep.subr.mxu0 0.0
        %3663 = vmatpush1.xpose.msra.mxu0 0.0
        %3664 = vmatprep.subr.mxu0 0.0
        %3665 = vmatpush1.xpose.msra.mxu0 0.0
        %3666 = vmatprep.subr.mxu0 0.0
        %3667 = vmatpush1.xpose.msra.mxu0 0.0
        %3668 = vmatprep.subr.mxu0 0.0
        %3669 = vmatpush1.xpose.msra.mxu0 0.0
        %3670 = vmatprep.subr.mxu0 0.0
        %3671 = vmatpush1.xpose.msra.mxu0 0.0
        %3672 = vmatprep.subr.mxu0 0.0
        %3673 = vmatpush1.xpose.msra.mxu0 0.0
        %3674 = vmatprep.subr.mxu0 0.0
        %3675 = vmatpush1.xpose.msra.mxu0 0.0
        %3676 = vmatprep.subr.mxu0 0.0
        %3677 = vmatpush1.xpose.msra.mxu0 0.0
        %3678 = vmatprep.subr.mxu0 0.0
        %3679 = vmatpush1.xpose.msra.mxu0 0.0
        %3680 = vmatprep.subr.mxu0 0.0
        %3681 = vmatpush1.xpose.msra.mxu0 0.0
        %3682 = vmatprep.subr.mxu0 0.0
        %3683 = vmatpush1.xpose.msra.mxu0 0.0
        %3684 = vmatprep.subr.mxu0 0.0
        %3685 = vmatpush1.xpose.msra.mxu0 0.0
        %3686 = vmatprep.subr.mxu0 0.0
        %3687 = vmatpush1.xpose.msra.mxu0 0.0
        %3688 = vmatprep.subr.mxu0 0.0
        %3689 = vmatpush1.xpose.msra.mxu0 0.0
        %3690 = vmatprep.subr.mxu0 0.0
        %3691 = vmatpush1.xpose.msra.mxu0 0.0
        %3692 = vmatprep.subr.mxu0 0.0
        %3693 = vmatpush1.xpose.msra.mxu0 0.0
        %3694 = vmatprep.subr.mxu0 0.0
        %3695 = vmatpush1.xpose.msra.mxu0 0.0
        %3696 = vmatprep.subr.mxu0 0.0
        %3697 = vmatpush1.xpose.msra.mxu0 0.0
        %3698 = vmatprep.subr.mxu0 0.0
        %3699 = vmatpush1.xpose.msra.mxu0 0.0
        %3700 = vmatprep.subr.mxu0 0.0
        %3701 = vmatpush1.xpose.msra.mxu0 0.0
        %3702 = vmatprep.subr.mxu0 0.0
        %3703 = vmatpush1.xpose.msra.mxu0 0.0
        %3704 = vmatprep.subr.mxu0 0.0
        %3705 = vmatpush1.xpose.msra.mxu0 0.0
        %3706 = vmatprep.mubr.f32.mxu0 0.0
        %3707 = vmatmul.mubr.f32.gmra.mrb[0].mxu0 %v3472
        %v3708 = vpop.f32.mrb[0].mxu0
        %v3709 = vadd.f32 0.0, %v3708
        %v3710 = vpop.f32.mrb[0].mxu0
        %3711 = vdwg.mxu0
        %v3712 = vsel %vm1257, %v3709, -inf
        %v3713 = vrot.slane %v3712, 4
        %v3714 = vmax.f32 %v3712, %v3713
        %v3715 = vrot.slane %v3714, 2
        %v3716 = vmax.f32 %v3714, %v3715
        %v3717 = vrot.slane %v3716, 1
        %v3718 = vmax.f32 %v3716, %v3717
        %v3719 = vsub.f32 %v3709, %v3718
        %v3720 = vmul.f32 %v3719, 1.442695
        %v3721 = vpow.pop %v3720
        %v3722 = vsel %vm1257, %v3721, 0.0
        %v3723 = vrot.slane %v3722, 4
        %v3724 = vadd.f32 %v3722, %v3723
        %v3725 = vrot.slane %v3724, 2
        %v3726 = vadd.f32 %v3724, %v3725
        %v3727 = vrot.slane %v3726, 1
        %v3728 = vadd.f32 %v3726, %v3727
        %v3729 = vrcp.pop %v3728
        %v3730 = vmul.f32 %v3721, %v3729
        %v3731 = vadd.f32 %v3730, 1e-08
        %v3732 = vsel %vm1257, %v3731, 0.0
        %3733 = vadd.xlane.f32.xlu0 %v3732
        %v3734 = vpop.xlane.xlu0 %3733
        %v3735 = vrcp.pop %v3734
        %v3736 = vmul.f32 %v3731, %v3735
        %v3738 = vsel %vm1283, %v3736, 0
        %3740 = vmatprep.subr.mxu0 0.0
        %3741 = vmatpush1.msra.mxu0 %v1289
        %3742 = vmatprep.subr.mxu0 0.0
        %3743 = vmatpush1.msra.mxu0 0.0
        %3744 = vmatprep.subr.mxu0 0.0
        %3745 = vmatpush1.msra.mxu0 0.0
        %3746 = vmatprep.subr.mxu0 0.0
        %3747 = vmatpush1.msra.mxu0 0.0
        %3748 = vmatprep.subr.mxu0 0.0
        %3749 = vmatpush1.msra.mxu0 0.0
        %3750 = vmatprep.subr.mxu0 0.0
        %3751 = vmatpush1.msra.mxu0 0.0
        %3752 = vmatprep.subr.mxu0 0.0
        %3753 = vmatpush1.msra.mxu0 0.0
        %3754 = vmatprep.subr.mxu0 0.0
        %3755 = vmatpush1.msra.mxu0 0.0
        %3756 = vmatprep.subr.mxu0 0.0
        %3757 = vmatpush1.msra.mxu0 0.0
        %3758 = vmatprep.subr.mxu0 0.0
        %3759 = vmatpush1.msra.mxu0 0.0
        %3760 = vmatprep.subr.mxu0 0.0
        %3761 = vmatpush1.msra.mxu0 0.0
        %3762 = vmatprep.subr.mxu0 0.0
        %3763 = vmatpush1.msra.mxu0 0.0
        %3764 = vmatprep.subr.mxu0 0.0
        %3765 = vmatpush1.msra.mxu0 0.0
        %3766 = vmatprep.subr.mxu0 0.0
        %3767 = vmatpush1.msra.mxu0 0.0
        %3768 = vmatprep.subr.mxu0 0.0
        %3769 = vmatpush1.msra.mxu0 0.0
        %3770 = vmatprep.subr.mxu0 0.0
        %3771 = vmatpush1.msra.mxu0 0.0
        %3772 = vmatprep.subr.mxu0 0.0
        %3773 = vmatpush1.msra.mxu0 0.0
        %3774 = vmatprep.subr.mxu0 0.0
        %3775 = vmatpush1.msra.mxu0 0.0
        %3776 = vmatprep.subr.mxu0 0.0
        %3777 = vmatpush1.msra.mxu0 0.0
        %3778 = vmatprep.subr.mxu0 0.0
        %3779 = vmatpush1.msra.mxu0 0.0
        %3780 = vmatprep.subr.mxu0 0.0
        %3781 = vmatpush1.msra.mxu0 0.0
        %3782 = vmatprep.subr.mxu0 0.0
        %3783 = vmatpush1.msra.mxu0 0.0
        %3784 = vmatprep.subr.mxu0 0.0
        %3785 = vmatpush1.msra.mxu0 0.0
        %3786 = vmatprep.subr.mxu0 0.0
        %3787 = vmatpush1.msra.mxu0 0.0
        %3788 = vmatprep.subr.mxu0 0.0
        %3789 = vmatpush1.msra.mxu0 0.0
        %3790 = vmatprep.subr.mxu0 0.0
        %3791 = vmatpush1.msra.mxu0 0.0
        %3792 = vmatprep.subr.mxu0 0.0
        %3793 = vmatpush1.msra.mxu0 0.0
        %3794 = vmatprep.subr.mxu0 0.0
        %3795 = vmatpush1.msra.mxu0 0.0
        %3796 = vmatprep.subr.mxu0 0.0
        %3797 = vmatpush1.msra.mxu0 0.0
        %3798 = vmatprep.subr.mxu0 0.0
        %3799 = vmatpush1.msra.mxu0 0.0
        %3800 = vmatprep.subr.mxu0 0.0
        %3801 = vmatpush1.msra.mxu0 0.0
        %3802 = vmatprep.subr.mxu0 0.0
        %3803 = vmatpush1.msra.mxu0 0.0
        %3804 = vmatprep.mubr.f32.mxu0 0.0
        %3805 = vmatmul.mubr.f32.gmra.mrb[0].mxu0 %v3738
        %v3806 = vpop.f32.mrb[0].mxu0
        %v3807 = vadd.f32 0.0, %v3806
        %v3808 = vpop.f32.mrb[0].mxu0
        %3809 = vdwg.mxu0
        %v3811 = vsel %vm537, %v3807, 0
        %3813 = vmatprep.subr.mxu0 0.0
        %3814 = vmatpush1.msra.mxu0 %v488
        %3815 = vmatprep.subr.mxu0 0.0
        %3816 = vmatpush1.msra.mxu0 %v489
        %3817 = vmatprep.subr.mxu0 0.0
        %3818 = vmatpush1.msra.mxu0 %v490
        %3819 = vmatprep.subr.mxu0 0.0
        %3820 = vmatpush1.msra.mxu0 %v491
        %3821 = vmatprep.subr.mxu0 0.0
        %3822 = vmatpush1.msra.mxu0 0.0
        %3823 = vmatprep.subr.mxu0 0.0
        %3824 = vmatpush1.msra.mxu0 0.0
        %3825 = vmatprep.subr.mxu0 0.0
        %3826 = vmatpush1.msra.mxu0 0.0
        %3827 = vmatprep.subr.mxu0 0.0
        %3828 = vmatpush1.msra.mxu0 0.0
        %3829 = vmatprep.subr.mxu0 0.0
        %3830 = vmatpush1.msra.mxu0 0.0
        %3831 = vmatprep.subr.mxu0 0.0
        %3832 = vmatpush1.msra.mxu0 0.0
        %3833 = vmatprep.subr.mxu0 0.0
        %3834 = vmatpush1.msra.mxu0 0.0
        %3835 = vmatprep.subr.mxu0 0.0
        %3836 = vmatpush1.msra.mxu0 0.0
        %3837 = vmatprep.subr.mxu0 0.0
        %3838 = vmatpush1.msra.mxu0 0.0
        %3839 = vmatprep.subr.mxu0 0.0
        %3840 = vmatpush1.msra.mxu0 0.0
        %3841 = vmatprep.subr.mxu0 0.0
        %3842 = vmatpush1.msra.mxu0 0.0
        %3843 = vmatprep.subr.mxu0 0.0
        %3844 = vmatpush1.msra.mxu0 0.0
        %3845 = vmatprep.subr.mxu0 0.0
        %3846 = vmatpush1.msra.mxu0 0.0
        %3847 = vmatprep.subr.mxu0 0.0
        %3848 = vmatpush1.msra.mxu0 0.0
        %3849 = vmatprep.subr.mxu0 0.0
        %3850 = vmatpush1.msra.mxu0 0.0
        %3851 = vmatprep.subr.mxu0 0.0
        %3852 = vmatpush1.msra.mxu0 0.0
        %3853 = vmatprep.subr.mxu0 0.0
        %3854 = vmatpush1.msra.mxu0 0.0
        %3855 = vmatprep.subr.mxu0 0.0
        %3856 = vmatpush1.msra.mxu0 0.0
        %3857 = vmatprep.subr.mxu0 0.0
        %3858 = vmatpush1.msra.mxu0 0.0
        %3859 = vmatprep.subr.mxu0 0.0
        %3860 = vmatpush1.msra.mxu0 0.0
        %3861 = vmatprep.subr.mxu0 0.0
        %3862 = vmatpush1.msra.mxu0 0.0
        %3863 = vmatprep.subr.mxu0 0.0
        %3864 = vmatpush1.msra.mxu0 0.0
        %3865 = vmatprep.subr.mxu0 0.0
        %3866 = vmatpush1.msra.mxu0 0.0
        %3867 = vmatprep.subr.mxu0 0.0
        %3868 = vmatpush1.msra.mxu0 0.0
        %3869 = vmatprep.subr.mxu0 0.0
        %3870 = vmatpush1.msra.mxu0 0.0
        %3871 = vmatprep.subr.mxu0 0.0
        %3872 = vmatpush1.msra.mxu0 0.0
        %3873 = vmatprep.subr.mxu0 0.0
        %3874 = vmatpush1.msra.mxu0 0.0
        %3875 = vmatprep.subr.mxu0 0.0
        %3876 = vmatpush1.msra.mxu0 0.0
        %3877 = vmatprep.mubr.f32.mxu0 0.0
        %3878 = vmatmul.mubr.f32.gmra.mrb[0].mxu0 %v3811
        %v3879 = vpop.f32.mrb[0].mxu0
        %v3880 = vadd.f32 0.0, %v3879
        %v3881 = vpop.f32.mrb[0].mxu0
        %3882 = vdwg.mxu0
        %v3884 = vsel %vm537, %v3639, 0
        %3886 = vmatprep.subr.mxu0 0.0
        %3887 = vmatpush1.msra.mxu0 %v483
        %3888 = vmatprep.subr.mxu0 0.0
        %3889 = vmatpush1.msra.mxu0 %v484
        %3890 = vmatprep.subr.mxu0 0.0
        %3891 = vmatpush1.msra.mxu0 %v485
        %3892 = vmatprep.subr.mxu0 0.0
        %3893 = vmatpush1.msra.mxu0 %v486
        %3894 = vmatprep.subr.mxu0 0.0
        %3895 = vmatpush1.msra.mxu0 0.0
        %3896 = vmatprep.subr.mxu0 0.0
        %3897 = vmatpush1.msra.mxu0 0.0
        %3898 = vmatprep.subr.mxu0 0.0
        %3899 = vmatpush1.msra.mxu0 0.0
        %3900 = vmatprep.subr.mxu0 0.0
        %3901 = vmatpush1.msra.mxu0 0.0
        %3902 = vmatprep.subr.mxu0 0.0
        %3903 = vmatpush1.msra.mxu0 0.0
        %3904 = vmatprep.subr.mxu0 0.0
        %3905 = vmatpush1.msra.mxu0 0.0
        %3906 = vmatprep.subr.mxu0 0.0
        %3907 = vmatpush1.msra.mxu0 0.0
        %3908 = vmatprep.subr.mxu0 0.0
        %3909 = vmatpush1.msra.mxu0 0.0
        %3910 = vmatprep.subr.mxu0 0.0
        %3911 = vmatpush1.msra.mxu0 0.0
        %3912 = vmatprep.subr.mxu0 0.0
        %3913 = vmatpush1.msra.mxu0 0.0
        %3914 = vmatprep.subr.mxu0 0.0
        %3915 = vmatpush1.msra.mxu0 0.0
        %3916 = vmatprep.subr.mxu0 0.0
        %3917 = vmatpush1.msra.mxu0 0.0
        %3918 = vmatprep.subr.mxu0 0.0
        %3919 = vmatpush1.msra.mxu0 0.0
        %3920 = vmatprep.subr.mxu0 0.0
        %3921 = vmatpush1.msra.mxu0 0.0
        %3922 = vmatprep.subr.mxu0 0.0
        %3923 = vmatpush1.msra.mxu0 0.0
        %3924 = vmatprep.subr.mxu0 0.0
        %3925 = vmatpush1.msra.mxu0 0.0
        %3926 = vmatprep.subr.mxu0 0.0
        %3927 = vmatpush1.msra.mxu0 0.0
        %3928 = vmatprep.subr.mxu0 0.0
        %3929 = vmatpush1.msra.mxu0 0.0
        %3930 = vmatprep.subr.mxu0 0.0
        %3931 = vmatpush1.msra.mxu0 0.0
        %3932 = vmatprep.subr.mxu0 0.0
        %3933 = vmatpush1.msra.mxu0 0.0
        %3934 = vmatprep.subr.mxu0 0.0
        %3935 = vmatpush1.msra.mxu0 0.0
        %3936 = vmatprep.subr.mxu0 0.0
        %3937 = vmatpush1.msra.mxu0 0.0
        %3938 = vmatprep.subr.mxu0 0.0
        %3939 = vmatpush1.msra.mxu0 0.0
        %3940 = vmatprep.subr.mxu0 0.0
        %3941 = vmatpush1.msra.mxu0 0.0
        %3942 = vmatprep.subr.mxu0 0.0
        %3943 = vmatpush1.msra.mxu0 0.0
        %3944 = vmatprep.subr.mxu0 0.0
        %3945 = vmatpush1.msra.mxu0 0.0
        %3946 = vmatprep.subr.mxu0 0.0
        %3947 = vmatpush1.msra.mxu0 0.0
        %3948 = vmatprep.subr.mxu0 0.0
        %3949 = vmatpush1.msra.mxu0 0.0
        %3950 = vmatprep.mubr.f32.mxu0 0.0
        %3951 = vmatmul.mubr.f32.gmra.mrb[0].mxu0 %v3884
        %v3952 = vpop.f32.mrb[0].mxu0
        %v3953 = vadd.f32 %v3880, %v3952
        %v3954 = vpop.f32.mrb[0].mxu0
        %3955 = vdwg.mxu0
        %v3956 = vadd.f32 %v3953, %v1511
        %v3957 = vmax.f32 %v3956, 0.0
        %v3959 = vsel %vm1521, %v3957, 0
        %3961 = vmatprep.subr.mxu0 0.0
        %3962 = vmatpush1.msra.mxu0 %v502
        %3963 = vmatprep.subr.mxu0 0.0
        %3964 = vmatpush1.msra.mxu0 %v503
        %3965 = vmatprep.subr.mxu0 0.0
        %3966 = vmatpush1.msra.mxu0 %v504
        %3967 = vmatprep.subr.mxu0 0.0
        %3968 = vmatpush1.msra.mxu0 %v505
        %3969 = vmatprep.subr.mxu0 0.0
        %3970 = vmatpush1.msra.mxu0 %v506
        %3971 = vmatprep.subr.mxu0 0.0
        %3972 = vmatpush1.msra.mxu0 %v507
        %3973 = vmatprep.subr.mxu0 0.0
        %3974 = vmatpush1.msra.mxu0 %v508
        %3975 = vmatprep.subr.mxu0 0.0
        %3976 = vmatpush1.msra.mxu0 %v509
        %3977 = vmatprep.subr.mxu0 0.0
        %3978 = vmatpush1.msra.mxu0 0.0
        %3979 = vmatprep.subr.mxu0 0.0
        %3980 = vmatpush1.msra.mxu0 0.0
        %3981 = vmatprep.subr.mxu0 0.0
        %3982 = vmatpush1.msra.mxu0 0.0
        %3983 = vmatprep.subr.mxu0 0.0
        %3984 = vmatpush1.msra.mxu0 0.0
        %3985 = vmatprep.subr.mxu0 0.0
        %3986 = vmatpush1.msra.mxu0 0.0
        %3987 = vmatprep.subr.mxu0 0.0
        %3988 = vmatpush1.msra.mxu0 0.0
        %3989 = vmatprep.subr.mxu0 0.0
        %3990 = vmatpush1.msra.mxu0 0.0
        %3991 = vmatprep.subr.mxu0 0.0
        %3992 = vmatpush1.msra.mxu0 0.0
        %3993 = vmatprep.subr.mxu0 0.0
        %3994 = vmatpush1.msra.mxu0 0.0
        %3995 = vmatprep.subr.mxu0 0.0
        %3996 = vmatpush1.msra.mxu0 0.0
        %3997 = vmatprep.subr.mxu0 0.0
        %3998 = vmatpush1.msra.mxu0 0.0
        %3999 = vmatprep.subr.mxu0 0.0
        %4000 = vmatpush1.msra.mxu0 0.0
        %4001 = vmatprep.subr.mxu0 0.0
        %4002 = vmatpush1.msra.mxu0 0.0
        %4003 = vmatprep.subr.mxu0 0.0
        %4004 = vmatpush1.msra.mxu0 0.0
        %4005 = vmatprep.subr.mxu0 0.0
        %4006 = vmatpush1.msra.mxu0 0.0
        %4007 = vmatprep.subr.mxu0 0.0
        %4008 = vmatpush1.msra.mxu0 0.0
        %4009 = vmatprep.subr.mxu0 0.0
        %4010 = vmatpush1.msra.mxu0 0.0
        %4011 = vmatprep.subr.mxu0 0.0
        %4012 = vmatpush1.msra.mxu0 0.0
        %4013 = vmatprep.subr.mxu0 0.0
        %4014 = vmatpush1.msra.mxu0 0.0
        %4015 = vmatprep.subr.mxu0 0.0
        %4016 = vmatpush1.msra.mxu0 0.0
        %4017 = vmatprep.subr.mxu0 0.0
        %4018 = vmatpush1.msra.mxu0 0.0
        %4019 = vmatprep.subr.mxu0 0.0
        %4020 = vmatpush1.msra.mxu0 0.0
        %4021 = vmatprep.subr.mxu0 0.0
        %4022 = vmatpush1.msra.mxu0 0.0
        %4023 = vmatprep.subr.mxu0 0.0
        %4024 = vmatpush1.msra.mxu0 0.0
        %4025 = vmatprep.mubr.f32.mxu0 0.0
        %4026 = vmatmul.mubr.f32.gmra.mrb[0].mxu0 %v3959
        %v4027 = vpop.f32.mrb[0].mxu0
        %v4028 = vadd.f32 %v1519, %v4027
        %v4029 = vpop.f32.mrb[0].mxu0
        %4030 = vdwg.mxu0
        %v4032 = vsel %vm537, %v4028, 0
        %4034 = vmatprep.subr.mxu0 0.0
        %4035 = vmatpush1.msra.mxu0 %v454
        %4036 = vmatprep.subr.mxu0 0.0
        %4037 = vmatpush1.msra.mxu0 %v455
        %4038 = vmatprep.subr.mxu0 0.0
        %4039 = vmatpush1.msra.mxu0 %v456
        %4040 = vmatprep.subr.mxu0 0.0
        %4041 = vmatpush1.msra.mxu0 %v457
        %4042 = vmatprep.subr.mxu0 0.0
        %4043 = vmatpush1.msra.mxu0 0.0
        %4044 = vmatprep.subr.mxu0 0.0
        %4045 = vmatpush1.msra.mxu0 0.0
        %4046 = vmatprep.subr.mxu0 0.0
        %4047 = vmatpush1.msra.mxu0 0.0
        %4048 = vmatprep.subr.mxu0 0.0
        %4049 = vmatpush1.msra.mxu0 0.0
        %4050 = vmatprep.subr.mxu0 0.0
        %4051 = vmatpush1.msra.mxu0 0.0
        %4052 = vmatprep.subr.mxu0 0.0
        %4053 = vmatpush1.msra.mxu0 0.0
        %4054 = vmatprep.subr.mxu0 0.0
        %4055 = vmatpush1.msra.mxu0 0.0
        %4056 = vmatprep.subr.mxu0 0.0
        %4057 = vmatpush1.msra.mxu0 0.0
        %4058 = vmatprep.subr.mxu0 0.0
        %4059 = vmatpush1.msra.mxu0 0.0
        %4060 = vmatprep.subr.mxu0 0.0
        %4061 = vmatpush1.msra.mxu0 0.0
        %4062 = vmatprep.subr.mxu0 0.0
        %4063 = vmatpush1.msra.mxu0 0.0
        %4064 = vmatprep.subr.mxu0 0.0
        %4065 = vmatpush1.msra.mxu0 0.0
        %4066 = vmatprep.subr.mxu0 0.0
        %4067 = vmatpush1.msra.mxu0 0.0
        %4068 = vmatprep.subr.mxu0 0.0
        %4069 = vmatpush1.msra.mxu0 0.0
        %4070 = vmatprep.subr.mxu0 0.0
        %4071 = vmatpush1.msra.mxu0 0.0
        %4072 = vmatprep.subr.mxu0 0.0
        %4073 = vmatpush1.msra.mxu0 0.0
        %4074 = vmatprep.subr.mxu0 0.0
        %4075 = vmatpush1.msra.mxu0 0.0
        %4076 = vmatprep.subr.mxu0 0.0
        %4077 = vmatpush1.msra.mxu0 0.0
        %4078 = vmatprep.subr.mxu0 0.0
        %4079 = vmatpush1.msra.mxu0 0.0
        %4080 = vmatprep.subr.mxu0 0.0
        %4081 = vmatpush1.msra.mxu0 0.0
        %4082 = vmatprep.subr.mxu0 0.0
        %4083 = vmatpush1.msra.mxu0 0.0
        %4084 = vmatprep.subr.mxu0 0.0
        %4085 = vmatpush1.msra.mxu0 0.0
        %4086 = vmatprep.subr.mxu0 0.0
        %4087 = vmatpush1.msra.mxu0 0.0
        %4088 = vmatprep.subr.mxu0 0.0
        %4089 = vmatpush1.msra.mxu0 0.0
        %4090 = vmatprep.subr.mxu0 0.0
        %4091 = vmatpush1.msra.mxu0 0.0
        %4092 = vmatprep.subr.mxu0 0.0
        %4093 = vmatpush1.msra.mxu0 0.0
        %4094 = vmatprep.subr.mxu0 0.0
        %4095 = vmatpush1.msra.mxu0 0.0
        %4096 = vmatprep.subr.mxu0 0.0
        %4097 = vmatpush1.msra.mxu0 0.0
        %4098 = vmatprep.mubr.f32.mxu0 0.0
        %4099 = vmatmul.mubr.f32.gmra.mrb[0].mxu0 %v4032
        %v4100 = vpop.f32.mrb[0].mxu0
        %v4101 = vadd.f32 %v1599, %v4100
        %v4102 = vpop.f32.mrb[0].mxu0
        %4103 = vdwg.mxu0
        %v4105 = vsel %vm537, %v3455, 0
        %4107 = vmatprep.subr.mxu0 0.0
        %4108 = vmatpush1.msra.mxu0 %v469
        %4109 = vmatprep.subr.mxu0 0.0
        %4110 = vmatpush1.msra.mxu0 %v470
        %4111 = vmatprep.subr.mxu0 0.0
        %4112 = vmatpush1.msra.mxu0 %v471
        %4113 = vmatprep.subr.mxu0 0.0
        %4114 = vmatpush1.msra.mxu0 %v472
        %4115 = vmatprep.subr.mxu0 0.0
        %4116 = vmatpush1.msra.mxu0 0.0
        %4117 = vmatprep.subr.mxu0 0.0
        %4118 = vmatpush1.msra.mxu0 0.0
        %4119 = vmatprep.subr.mxu0 0.0
        %4120 = vmatpush1.msra.mxu0 0.0
        %4121 = vmatprep.subr.mxu0 0.0
        %4122 = vmatpush1.msra.mxu0 0.0
        %4123 = vmatprep.subr.mxu0 0.0
        %4124 = vmatpush1.msra.mxu0 0.0
        %4125 = vmatprep.subr.mxu0 0.0
        %4126 = vmatpush1.msra.mxu0 0.0
        %4127 = vmatprep.subr.mxu0 0.0
        %4128 = vmatpush1.msra.mxu0 0.0
        %4129 = vmatprep.subr.mxu0 0.0
        %4130 = vmatpush1.msra.mxu0 0.0
        %4131 = vmatprep.subr.mxu0 0.0
        %4132 = vmatpush1.msra.mxu0 0.0
        %4133 = vmatprep.subr.mxu0 0.0
        %4134 = vmatpush1.msra.mxu0 0.0
        %4135 = vmatprep.subr.mxu0 0.0
        %4136 = vmatpush1.msra.mxu0 0.0
        %4137 = vmatprep.subr.mxu0 0.0
        %4138 = vmatpush1.msra.mxu0 0.0
        %4139 = vmatprep.subr.mxu0 0.0
        %4140 = vmatpush1.msra.mxu0 0.0
        %4141 = vmatprep.subr.mxu0 0.0
        %4142 = vmatpush1.msra.mxu0 0.0
        %4143 = vmatprep.subr.mxu0 0.0
        %4144 = vmatpush1.msra.mxu0 0.0
        %4145 = vmatprep.subr.mxu0 0.0
        %4146 = vmatpush1.msra.mxu0 0.0
        %4147 = vmatprep.subr.mxu0 0.0
        %4148 = vmatpush1.msra.mxu0 0.0
        %4149 = vmatprep.subr.mxu0 0.0
        %4150 = vmatpush1.msra.mxu0 0.0
        %4151 = vmatprep.subr.mxu0 0.0
        %4152 = vmatpush1.msra.mxu0 0.0
        %4153 = vmatprep.subr.mxu0 0.0
        %4154 = vmatpush1.msra.mxu0 0.0
        %4155 = vmatprep.subr.mxu0 0.0
        %4156 = vmatpush1.msra.mxu0 0.0
        %4157 = vmatprep.subr.mxu0 0.0
        %4158 = vmatpush1.msra.mxu0 0.0
        %4159 = vmatprep.subr.mxu0 0.0
        %4160 = vmatpush1.msra.mxu0 0.0
        %4161 = vmatprep.subr.mxu0 0.0
        %4162 = vmatpush1.msra.mxu0 0.0
        %4163 = vmatprep.subr.mxu0 0.0
        %4164 = vmatpush1.msra.mxu0 0.0
        %4165 = vmatprep.subr.mxu0 0.0
        %4166 = vmatpush1.msra.mxu0 0.0
        %4167 = vmatprep.subr.mxu0 0.0
        %4168 = vmatpush1.msra.mxu0 0.0
        %4169 = vmatprep.subr.mxu0 0.0
        %4170 = vmatpush1.msra.mxu0 0.0
        %4171 = vmatprep.mubr.f32.mxu0 0.0
        %4172 = vmatmul.mubr.f32.gmra.mrb[0].mxu0 %v4105
        %v4173 = vpop.f32.mrb[0].mxu0
        %v4174 = vadd.f32 0.0, %v4173
        %v4175 = vpop.f32.mrb[0].mxu0
        %4176 = vdwg.mxu0
        %v4177 = vadd.f32 %v4101, %v4174
        %v4178 = vadd.f32 %v4177, %v1752
        %v4179 = vxor.u32 %v4178, 2147483648
        %v4180 = vmul.f32 %v4179, 1.442695
        %v4181 = vpow.pop %v4180
        %v4182 = vadd.f32 %v4181, 1.0
        %v4183 = vrcp.pop %v4182
        %v4184 = vmul.f32 1.0, %v4183
        %4185 = vmatprep.subr.mxu0 0.0
        %4186 = vmatpush1.msra.mxu0 %v459
        %4187 = vmatprep.subr.mxu0 0.0
        %4188 = vmatpush1.msra.mxu0 %v460
        %4189 = vmatprep.subr.mxu0 0.0
        %4190 = vmatpush1.msra.mxu0 %v461
        %4191 = vmatprep.subr.mxu0 0.0
        %4192 = vmatpush1.msra.mxu0 %v462
        %4193 = vmatprep.subr.mxu0 0.0
        %4194 = vmatpush1.msra.mxu0 0.0
        %4195 = vmatprep.subr.mxu0 0.0
        %4196 = vmatpush1.msra.mxu0 0.0
        %4197 = vmatprep.subr.mxu0 0.0
        %4198 = vmatpush1.msra.mxu0 0.0
        %4199 = vmatprep.subr.mxu0 0.0
        %4200 = vmatpush1.msra.mxu0 0.0
        %4201 = vmatprep.subr.mxu0 0.0
        %4202 = vmatpush1.msra.mxu0 0.0
        %4203 = vmatprep.subr.mxu0 0.0
        %4204 = vmatpush1.msra.mxu0 0.0
        %4205 = vmatprep.subr.mxu0 0.0
        %4206 = vmatpush1.msra.mxu0 0.0
        %4207 = vmatprep.subr.mxu0 0.0
        %4208 = vmatpush1.msra.mxu0 0.0
        %4209 = vmatprep.subr.mxu0 0.0
        %4210 = vmatpush1.msra.mxu0 0.0
        %4211 = vmatprep.subr.mxu0 0.0
        %4212 = vmatpush1.msra.mxu0 0.0
        %4213 = vmatprep.subr.mxu0 0.0
        %4214 = vmatpush1.msra.mxu0 0.0
        %4215 = vmatprep.subr.mxu0 0.0
        %4216 = vmatpush1.msra.mxu0 0.0
        %4217 = vmatprep.subr.mxu0 0.0
        %4218 = vmatpush1.msra.mxu0 0.0
        %4219 = vmatprep.subr.mxu0 0.0
        %4220 = vmatpush1.msra.mxu0 0.0
        %4221 = vmatprep.subr.mxu0 0.0
        %4222 = vmatpush1.msra.mxu0 0.0
        %4223 = vmatprep.subr.mxu0 0.0
        %4224 = vmatpush1.msra.mxu0 0.0
        %4225 = vmatprep.subr.mxu0 0.0
        %4226 = vmatpush1.msra.mxu0 0.0
        %4227 = vmatprep.subr.mxu0 0.0
        %4228 = vmatpush1.msra.mxu0 0.0
        %4229 = vmatprep.subr.mxu0 0.0
        %4230 = vmatpush1.msra.mxu0 0.0
        %4231 = vmatprep.subr.mxu0 0.0
        %4232 = vmatpush1.msra.mxu0 0.0
        %4233 = vmatprep.subr.mxu0 0.0
        %4234 = vmatpush1.msra.mxu0 0.0
        %4235 = vmatprep.subr.mxu0 0.0
        %4236 = vmatpush1.msra.mxu0 0.0
        %4237 = vmatprep.subr.mxu0 0.0
        %4238 = vmatpush1.msra.mxu0 0.0
        %4239 = vmatprep.subr.mxu0 0.0
        %4240 = vmatpush1.msra.mxu0 0.0
        %4241 = vmatprep.subr.mxu0 0.0
        %4242 = vmatpush1.msra.mxu0 0.0
        %4243 = vmatprep.subr.mxu0 0.0
        %4244 = vmatpush1.msra.mxu0 0.0
        %4245 = vmatprep.subr.mxu0 0.0
        %4246 = vmatpush1.msra.mxu0 0.0
        %4247 = vmatprep.subr.mxu0 0.0
        %4248 = vmatpush1.msra.mxu0 0.0
        %4249 = vmatprep.mubr.f32.mxu0 0.0
        %4250 = vmatmul.mubr.f32.gmra.mrb[0].mxu0 %v4032
        %v4251 = vpop.f32.mrb[0].mxu0
        %v4252 = vadd.f32 %v1765, %v4251
        %v4253 = vpop.f32.mrb[0].mxu0
        %4254 = vdwg.mxu0
        %4255 = vmatprep.subr.mxu0 0.0
        %4256 = vmatpush1.msra.mxu0 %v474
        %4257 = vmatprep.subr.mxu0 0.0
        %4258 = vmatpush1.msra.mxu0 %v475
        %4259 = vmatprep.subr.mxu0 0.0
        %4260 = vmatpush1.msra.mxu0 %v476
        %4261 = vmatprep.subr.mxu0 0.0
        %4262 = vmatpush1.msra.mxu0 %v477
        %4263 = vmatprep.subr.mxu0 0.0
        %4264 = vmatpush1.msra.mxu0 0.0
        %4265 = vmatprep.subr.mxu0 0.0
        %4266 = vmatpush1.msra.mxu0 0.0
        %4267 = vmatprep.subr.mxu0 0.0
        %4268 = vmatpush1.msra.mxu0 0.0
        %4269 = vmatprep.subr.mxu0 0.0
        %4270 = vmatpush1.msra.mxu0 0.0
        %4271 = vmatprep.subr.mxu0 0.0
        %4272 = vmatpush1.msra.mxu0 0.0
        %4273 = vmatprep.subr.mxu0 0.0
        %4274 = vmatpush1.msra.mxu0 0.0
        %4275 = vmatprep.subr.mxu0 0.0
        %4276 = vmatpush1.msra.mxu0 0.0
        %4277 = vmatprep.subr.mxu0 0.0
        %4278 = vmatpush1.msra.mxu0 0.0
        %4279 = vmatprep.subr.mxu0 0.0
        %4280 = vmatpush1.msra.mxu0 0.0
        %4281 = vmatprep.subr.mxu0 0.0
        %4282 = vmatpush1.msra.mxu0 0.0
        %4283 = vmatprep.subr.mxu0 0.0
        %4284 = vmatpush1.msra.mxu0 0.0
        %4285 = vmatprep.subr.mxu0 0.0
        %4286 = vmatpush1.msra.mxu0 0.0
        %4287 = vmatprep.subr.mxu0 0.0
        %4288 = vmatpush1.msra.mxu0 0.0
        %4289 = vmatprep.subr.mxu0 0.0
        %4290 = vmatpush1.msra.mxu0 0.0
        %4291 = vmatprep.subr.mxu0 0.0
        %4292 = vmatpush1.msra.mxu0 0.0
        %4293 = vmatprep.subr.mxu0 0.0
        %4294 = vmatpush1.msra.mxu0 0.0
        %4295 = vmatprep.subr.mxu0 0.0
        %4296 = vmatpush1.msra.mxu0 0.0
        %4297 = vmatprep.subr.mxu0 0.0
        %4298 = vmatpush1.msra.mxu0 0.0
        %4299 = vmatprep.subr.mxu0 0.0
        %4300 = vmatpush1.msra.mxu0 0.0
        %4301 = vmatprep.subr.mxu0 0.0
        %4302 = vmatpush1.msra.mxu0 0.0
        %4303 = vmatprep.subr.mxu0 0.0
        %4304 = vmatpush1.msra.mxu0 0.0
        %4305 = vmatprep.subr.mxu0 0.0
        %4306 = vmatpush1.msra.mxu0 0.0
        %4307 = vmatprep.subr.mxu0 0.0
        %4308 = vmatpush1.msra.mxu0 0.0
        %4309 = vmatprep.subr.mxu0 0.0
        %4310 = vmatpush1.msra.mxu0 0.0
        %4311 = vmatprep.subr.mxu0 0.0
        %4312 = vmatpush1.msra.mxu0 0.0
        %4313 = vmatprep.subr.mxu0 0.0
        %4314 = vmatpush1.msra.mxu0 0.0
        %4315 = vmatprep.subr.mxu0 0.0
        %4316 = vmatpush1.msra.mxu0 0.0
        %4317 = vmatprep.subr.mxu0 0.0
        %4318 = vmatpush1.msra.mxu0 0.0
        %4319 = vmatprep.mubr.f32.mxu0 0.0
        %4320 = vmatmul.mubr.f32.gmra.mrb[0].mxu0 %v4105
        %v4321 = vpop.f32.mrb[0].mxu0
        %v4322 = vadd.f32 0.0, %v4321
        %v4323 = vpop.f32.mrb[0].mxu0
        %4324 = vdwg.mxu0
        %v4325 = vadd.f32 %v4252, %v4322
        %v4326 = vadd.f32 %v4325, %v1912
        %v4327 = vxor.u32 %v4326, 2147483648
        %v4328 = vmul.f32 %v4327, 1.442695
        %v4329 = vpow.pop %v4328
        %v4330 = vadd.f32 %v4329, 1.0
        %v4331 = vrcp.pop %v4330
        %v4332 = vmul.f32 1.0, %v4331
        %4333 = vmatprep.subr.mxu0 0.0
        %4334 = vmatpush1.msra.mxu0 %v464
        %4335 = vmatprep.subr.mxu0 0.0
        %4336 = vmatpush1.msra.mxu0 %v465
        %4337 = vmatprep.subr.mxu0 0.0
        %4338 = vmatpush1.msra.mxu0 %v466
        %4339 = vmatprep.subr.mxu0 0.0
        %4340 = vmatpush1.msra.mxu0 %v467
        %4341 = vmatprep.subr.mxu0 0.0
        %4342 = vmatpush1.msra.mxu0 0.0
        %4343 = vmatprep.subr.mxu0 0.0
        %4344 = vmatpush1.msra.mxu0 0.0
        %4345 = vmatprep.subr.mxu0 0.0
        %4346 = vmatpush1.msra.mxu0 0.0
        %4347 = vmatprep.subr.mxu0 0.0
        %4348 = vmatpush1.msra.mxu0 0.0
        %4349 = vmatprep.subr.mxu0 0.0
        %4350 = vmatpush1.msra.mxu0 0.0
        %4351 = vmatprep.subr.mxu0 0.0
        %4352 = vmatpush1.msra.mxu0 0.0
        %4353 = vmatprep.subr.mxu0 0.0
        %4354 = vmatpush1.msra.mxu0 0.0
        %4355 = vmatprep.subr.mxu0 0.0
        %4356 = vmatpush1.msra.mxu0 0.0
        %4357 = vmatprep.subr.mxu0 0.0
        %4358 = vmatpush1.msra.mxu0 0.0
        %4359 = vmatprep.subr.mxu0 0.0
        %4360 = vmatpush1.msra.mxu0 0.0
        %4361 = vmatprep.subr.mxu0 0.0
        %4362 = vmatpush1.msra.mxu0 0.0
        %4363 = vmatprep.subr.mxu0 0.0
        %4364 = vmatpush1.msra.mxu0 0.0
        %4365 = vmatprep.subr.mxu0 0.0
        %4366 = vmatpush1.msra.mxu0 0.0
        %4367 = vmatprep.subr.mxu0 0.0
        %4368 = vmatpush1.msra.mxu0 0.0
        %4369 = vmatprep.subr.mxu0 0.0
        %4370 = vmatpush1.msra.mxu0 0.0
        %4371 = vmatprep.subr.mxu0 0.0
        %4372 = vmatpush1.msra.mxu0 0.0
        %4373 = vmatprep.subr.mxu0 0.0
        %4374 = vmatpush1.msra.mxu0 0.0
        %4375 = vmatprep.subr.mxu0 0.0
        %4376 = vmatpush1.msra.mxu0 0.0
        %4377 = vmatprep.subr.mxu0 0.0
        %4378 = vmatpush1.msra.mxu0 0.0
        %4379 = vmatprep.subr.mxu0 0.0
        %4380 = vmatpush1.msra.mxu0 0.0
        %4381 = vmatprep.subr.mxu0 0.0
        %4382 = vmatpush1.msra.mxu0 0.0
        %4383 = vmatprep.subr.mxu0 0.0
        %4384 = vmatpush1.msra.mxu0 0.0
        %4385 = vmatprep.subr.mxu0 0.0
        %4386 = vmatpush1.msra.mxu0 0.0
        %4387 = vmatprep.subr.mxu0 0.0
        %4388 = vmatpush1.msra.mxu0 0.0
        %4389 = vmatprep.subr.mxu0 0.0
        %4390 = vmatpush1.msra.mxu0 0.0
        %4391 = vmatprep.subr.mxu0 0.0
        %4392 = vmatpush1.msra.mxu0 0.0
        %4393 = vmatprep.subr.mxu0 0.0
        %4394 = vmatpush1.msra.mxu0 0.0
        %4395 = vmatprep.subr.mxu0 0.0
        %4396 = vmatpush1.msra.mxu0 0.0
        %4397 = vmatprep.mubr.f32.mxu0 0.0
        %4398 = vmatmul.mubr.f32.gmra.mrb[0].mxu0 %v4032
        %v4399 = vpop.f32.mrb[0].mxu0
        %v4400 = vadd.f32 %v1925, %v4399
        %v4401 = vpop.f32.mrb[0].mxu0
        %4402 = vdwg.mxu0
        %4403 = vmatprep.subr.mxu0 0.0
        %4404 = vmatpush1.msra.mxu0 %v479
        %4405 = vmatprep.subr.mxu0 0.0
        %4406 = vmatpush1.msra.mxu0 %v480
        %4407 = vmatprep.subr.mxu0 0.0
        %4408 = vmatpush1.msra.mxu0 %v481
        %4409 = vmatprep.subr.mxu0 0.0
        %4410 = vmatpush1.msra.mxu0 %v482
        %4411 = vmatprep.subr.mxu0 0.0
        %4412 = vmatpush1.msra.mxu0 0.0
        %4413 = vmatprep.subr.mxu0 0.0
        %4414 = vmatpush1.msra.mxu0 0.0
        %4415 = vmatprep.subr.mxu0 0.0
        %4416 = vmatpush1.msra.mxu0 0.0
        %4417 = vmatprep.subr.mxu0 0.0
        %4418 = vmatpush1.msra.mxu0 0.0
        %4419 = vmatprep.subr.mxu0 0.0
        %4420 = vmatpush1.msra.mxu0 0.0
        %4421 = vmatprep.subr.mxu0 0.0
        %4422 = vmatpush1.msra.mxu0 0.0
        %4423 = vmatprep.subr.mxu0 0.0
        %4424 = vmatpush1.msra.mxu0 0.0
        %4425 = vmatprep.subr.mxu0 0.0
        %4426 = vmatpush1.msra.mxu0 0.0
        %4427 = vmatprep.subr.mxu0 0.0
        %4428 = vmatpush1.msra.mxu0 0.0
        %4429 = vmatprep.subr.mxu0 0.0
        %4430 = vmatpush1.msra.mxu0 0.0
        %4431 = vmatprep.subr.mxu0 0.0
        %4432 = vmatpush1.msra.mxu0 0.0
        %4433 = vmatprep.subr.mxu0 0.0
        %4434 = vmatpush1.msra.mxu0 0.0
        %4435 = vmatprep.subr.mxu0 0.0
        %4436 = vmatpush1.msra.mxu0 0.0
        %4437 = vmatprep.subr.mxu0 0.0
        %4438 = vmatpush1.msra.mxu0 0.0
        %4439 = vmatprep.subr.mxu0 0.0
        %4440 = vmatpush1.msra.mxu0 0.0
        %4441 = vmatprep.subr.mxu0 0.0
        %4442 = vmatpush1.msra.mxu0 0.0
        %4443 = vmatprep.subr.mxu0 0.0
        %4444 = vmatpush1.msra.mxu0 0.0
        %4445 = vmatprep.subr.mxu0 0.0
        %4446 = vmatpush1.msra.mxu0 0.0
        %4447 = vmatprep.subr.mxu0 0.0
        %4448 = vmatpush1.msra.mxu0 0.0
        %4449 = vmatprep.subr.mxu0 0.0
        %4450 = vmatpush1.msra.mxu0 0.0
        %4451 = vmatprep.subr.mxu0 0.0
        %4452 = vmatpush1.msra.mxu0 0.0
        %4453 = vmatprep.subr.mxu0 0.0
        %4454 = vmatpush1.msra.mxu0 0.0
        %4455 = vmatprep.subr.mxu0 0.0
        %4456 = vmatpush1.msra.mxu0 0.0
        %4457 = vmatprep.subr.mxu0 0.0
        %4458 = vmatpush1.msra.mxu0 0.0
        %4459 = vmatprep.subr.mxu0 0.0
        %4460 = vmatpush1.msra.mxu0 0.0
        %4461 = vmatprep.subr.mxu0 0.0
        %4462 = vmatpush1.msra.mxu0 0.0
        %4463 = vmatprep.subr.mxu0 0.0
        %4464 = vmatpush1.msra.mxu0 0.0
        %4465 = vmatprep.subr.mxu0 0.0
        %4466 = vmatpush1.msra.mxu0 0.0
        %4467 = vmatprep.mubr.f32.mxu0 0.0
        %4468 = vmatmul.mubr.f32.gmra.mrb[0].mxu0 %v4105
        %v4469 = vpop.f32.mrb[0].mxu0
        %v4470 = vadd.f32 %v2001, %v4469
        %v4471 = vpop.f32.mrb[0].mxu0
        %4472 = vdwg.mxu0
        %v4473 = vmul.f32 %v4184, %v4470
        %v4474 = vadd.f32 %v4400, %v4473
        %v4475 = vtanh.pop %v4474
        %v4476 = vsub.f32 1.0, %v4332
        %v4477 = vmul.f32 %v4476, %v4475
        %v4478 = vmul.f32 %v4332, %v3455
        %v4479 = vadd.f32 %v4477, %v4478
        %v4480 = vsel %vm581, %v4479, 0.0
        %4481 = vadd.xlane.f32.xlu0 %v4480
        %v4482 = vpop.xlane.xlu0 %4481
        %v4483 = vmul.f32 %v4482, %v544
        %v4484 = vsub.f32 %v4479, %v4483
        %v4485 = vmul.f32 %v4484, %v4484
        %v4486 = vsel %vm581, %v4485, 0.0
        %4487 = vadd.xlane.f32.xlu0 %v4486
        %v4488 = vpop.xlane.xlu0 %4487
        %v4489 = vmul.f32 %v4488, %v544
        %v4490 = vadd.f32 %v4489, 1e-05
        %v4491 = vrsqrt.pop %v4490
        %v4492 = vmul.f32 %v4484, %v4491
        %v4493 = vmul.f32 %v4492, %v2097
        %v4494 = vadd.f32 %v4493, %v2104
        %v4496 = vsel %vm537, %v4494, 0
        %4498 = vmatprep.subr.mxu0 0.0
        %4499 = vmatpush1.msra.mxu0 %v493
        %4500 = vmatprep.subr.mxu0 0.0
        %4501 = vmatpush1.msra.mxu0 %v494
        %4502 = vmatprep.subr.mxu0 0.0
        %4503 = vmatpush1.msra.mxu0 %v495
        %4504 = vmatprep.subr.mxu0 0.0
        %4505 = vmatpush1.msra.mxu0 %v496
        %4506 = vmatprep.subr.mxu0 0.0
        %4507 = vmatpush1.msra.mxu0 0.0
        %4508 = vmatprep.subr.mxu0 0.0
        %4509 = vmatpush1.msra.mxu0 0.0
        %4510 = vmatprep.subr.mxu0 0.0
        %4511 = vmatpush1.msra.mxu0 0.0
        %4512 = vmatprep.subr.mxu0 0.0
        %4513 = vmatpush1.msra.mxu0 0.0
        %4514 = vmatprep.subr.mxu0 0.0
        %4515 = vmatpush1.msra.mxu0 0.0
        %4516 = vmatprep.subr.mxu0 0.0
        %4517 = vmatpush1.msra.mxu0 0.0
        %4518 = vmatprep.subr.mxu0 0.0
        %4519 = vmatpush1.msra.mxu0 0.0
        %4520 = vmatprep.subr.mxu0 0.0
        %4521 = vmatpush1.msra.mxu0 0.0
        %4522 = vmatprep.subr.mxu0 0.0
        %4523 = vmatpush1.msra.mxu0 0.0
        %4524 = vmatprep.subr.mxu0 0.0
        %4525 = vmatpush1.msra.mxu0 0.0
        %4526 = vmatprep.subr.mxu0 0.0
        %4527 = vmatpush1.msra.mxu0 0.0
        %4528 = vmatprep.subr.mxu0 0.0
        %4529 = vmatpush1.msra.mxu0 0.0
        %4530 = vmatprep.subr.mxu0 0.0
        %4531 = vmatpush1.msra.mxu0 0.0
        %4532 = vmatprep.subr.mxu0 0.0
        %4533 = vmatpush1.msra.mxu0 0.0
        %4534 = vmatprep.subr.mxu0 0.0
        %4535 = vmatpush1.msra.mxu0 0.0
        %4536 = vmatprep.subr.mxu0 0.0
        %4537 = vmatpush1.msra.mxu0 0.0
        %4538 = vmatprep.subr.mxu0 0.0
        %4539 = vmatpush1.msra.mxu0 0.0
        %4540 = vmatprep.subr.mxu0 0.0
        %4541 = vmatpush1.msra.mxu0 0.0
        %4542 = vmatprep.subr.mxu0 0.0
        %4543 = vmatpush1.msra.mxu0 0.0
        %4544 = vmatprep.subr.mxu0 0.0
        %4545 = vmatpush1.msra.mxu0 0.0
        %4546 = vmatprep.subr.mxu0 0.0
        %4547 = vmatpush1.msra.mxu0 0.0
        %4548 = vmatprep.subr.mxu0 0.0
        %4549 = vmatpush1.msra.mxu0 0.0
        %4550 = vmatprep.subr.mxu0 0.0
        %4551 = vmatpush1.msra.mxu0 0.0
        %4552 = vmatprep.subr.mxu0 0.0
        %4553 = vmatpush1.msra.mxu0 0.0
        %4554 = vmatprep.subr.mxu0 0.0
        %4555 = vmatpush1.msra.mxu0 0.0
        %4556 = vmatprep.subr.mxu0 0.0
        %4557 = vmatpush1.msra.mxu0 0.0
        %4558 = vmatprep.subr.mxu0 0.0
        %4559 = vmatpush1.msra.mxu0 0.0
        %4560 = vmatprep.subr.mxu0 0.0
        %4561 = vmatpush1.msra.mxu0 0.0
        %4562 = vmatprep.mubr.f32.mxu0 0.0
        %4563 = vmatmul.mubr.f32.gmra.mrb[0].mxu0 %v4496
        %v4564 = vpop.f32.mrb[0].mxu0
        %v4565 = vadd.f32 %v2111, %v4564
        %v4566 = vpop.f32.mrb[0].mxu0
        %4567 = vdwg.mxu0
        %v4568 = vmax.f32 %v4565, 0.0
        %v4570 = vsel %vm1521, %v4568, 0
        %4572 = vmatprep.subr.mxu0 0.0
        %4573 = vmatpush1.msra.mxu0 %v511
        %4574 = vmatprep.subr.mxu0 0.0
        %4575 = vmatpush1.msra.mxu0 %v512
        %4576 = vmatprep.subr.mxu0 0.0
        %4577 = vmatpush1.msra.mxu0 %v513
        %4578 = vmatprep.subr.mxu0 0.0
        %4579 = vmatpush1.msra.mxu0 %v514
        %4580 = vmatprep.subr.mxu0 0.0
        %4581 = vmatpush1.msra.mxu0 %v515
        %4582 = vmatprep.subr.mxu0 0.0
        %4583 = vmatpush1.msra.mxu0 %v516
        %4584 = vmatprep.subr.mxu0 0.0
        %4585 = vmatpush1.msra.mxu0 %v517
        %4586 = vmatprep.subr.mxu0 0.0
        %4587 = vmatpush1.msra.mxu0 %v518
        %4588 = vmatprep.subr.mxu0 0.0
        %4589 = vmatpush1.msra.mxu0 0.0
        %4590 = vmatprep.subr.mxu0 0.0
        %4591 = vmatpush1.msra.mxu0 0.0
        %4592 = vmatprep.subr.mxu0 0.0
        %4593 = vmatpush1.msra.mxu0 0.0
        %4594 = vmatprep.subr.mxu0 0.0
        %4595 = vmatpush1.msra.mxu0 0.0
        %4596 = vmatprep.subr.mxu0 0.0
        %4597 = vmatpush1.msra.mxu0 0.0
        %4598 = vmatprep.subr.mxu0 0.0
        %4599 = vmatpush1.msra.mxu0 0.0
        %4600 = vmatprep.subr.mxu0 0.0
        %4601 = vmatpush1.msra.mxu0 0.0
        %4602 = vmatprep.subr.mxu0 0.0
        %4603 = vmatpush1.msra.mxu0 0.0
        %4604 = vmatprep.subr.mxu0 0.0
        %4605 = vmatpush1.msra.mxu0 0.0
        %4606 = vmatprep.subr.mxu0 0.0
        %4607 = vmatpush1.msra.mxu0 0.0
        %4608 = vmatprep.subr.mxu0 0.0
        %4609 = vmatpush1.msra.mxu0 0.0
        %4610 = vmatprep.subr.mxu0 0.0
        %4611 = vmatpush1.msra.mxu0 0.0
        %4612 = vmatprep.subr.mxu0 0.0
        %4613 = vmatpush1.msra.mxu0 0.0
        %4614 = vmatprep.subr.mxu0 0.0
        %4615 = vmatpush1.msra.mxu0 0.0
        %4616 = vmatprep.subr.mxu0 0.0
        %4617 = vmatpush1.msra.mxu0 0.0
        %4618 = vmatprep.subr.mxu0 0.0
        %4619 = vmatpush1.msra.mxu0 0.0
        %4620 = vmatprep.subr.mxu0 0.0
        %4621 = vmatpush1.msra.mxu0 0.0
        %4622 = vmatprep.subr.mxu0 0.0
        %4623 = vmatpush1.msra.mxu0 0.0
        %4624 = vmatprep.subr.mxu0 0.0
        %4625 = vmatpush1.msra.mxu0 0.0
        %4626 = vmatprep.subr.mxu0 0.0
        %4627 = vmatpush1.msra.mxu0 0.0
        %4628 = vmatprep.subr.mxu0 0.0
        %4629 = vmatpush1.msra.mxu0 0.0
        %4630 = vmatprep.subr.mxu0 0.0
        %4631 = vmatpush1.msra.mxu0 0.0
        %4632 = vmatprep.subr.mxu0 0.0
        %4633 = vmatpush1.msra.mxu0 0.0
        %4634 = vmatprep.subr.mxu0 0.0
        %4635 = vmatpush1.msra.mxu0 0.0
        %4636 = vmatprep.mubr.f32.mxu0 0.0
        %4637 = vmatmul.mubr.f32.gmra.mrb[0].mxu0 %v4570
        %v4638 = vpop.f32.mrb[0].mxu0
        %v4639 = vadd.f32 0.0, %v4638
        %v4640 = vpop.f32.mrb[0].mxu0
        %4641 = vdwg.mxu0
        %v4642 = vadd.f32 %v4479, %v4639
        %v4643 = vadd.f32 %v4642, %v2265
        %v4645 = vsel %vm537, %v4643, 0
        %4647 = vmatprep.subr.mxu0 0.0
        %4648 = vmatpush1.msra.mxu0 %v449
        %4649 = vmatprep.subr.mxu0 0.0
        %4650 = vmatpush1.msra.mxu0 %v450
        %4651 = vmatprep.subr.mxu0 0.0
        %4652 = vmatpush1.msra.mxu0 %v451
        %4653 = vmatprep.subr.mxu0 0.0
        %4654 = vmatpush1.msra.mxu0 %v452
        %4655 = vmatprep.subr.mxu0 0.0
        %4656 = vmatpush1.msra.mxu0 0.0
        %4657 = vmatprep.subr.mxu0 0.0
        %4658 = vmatpush1.msra.mxu0 0.0
        %4659 = vmatprep.subr.mxu0 0.0
        %4660 = vmatpush1.msra.mxu0 0.0
        %4661 = vmatprep.subr.mxu0 0.0
        %4662 = vmatpush1.msra.mxu0 0.0
        %4663 = vmatprep.subr.mxu0 0.0
        %4664 = vmatpush1.msra.mxu0 0.0
        %4665 = vmatprep.subr.mxu0 0.0
        %4666 = vmatpush1.msra.mxu0 0.0
        %4667 = vmatprep.subr.mxu0 0.0
        %4668 = vmatpush1.msra.mxu0 0.0
        %4669 = vmatprep.subr.mxu0 0.0
        %4670 = vmatpush1.msra.mxu0 0.0
        %4671 = vmatprep.subr.mxu0 0.0
        %4672 = vmatpush1.msra.mxu0 0.0
        %4673 = vmatprep.subr.mxu0 0.0
        %4674 = vmatpush1.msra.mxu0 0.0
        %4675 = vmatprep.subr.mxu0 0.0
        %4676 = vmatpush1.msra.mxu0 0.0
        %4677 = vmatprep.subr.mxu0 0.0
        %4678 = vmatpush1.msra.mxu0 0.0
        %4679 = vmatprep.subr.mxu0 0.0
        %4680 = vmatpush1.msra.mxu0 0.0
        %4681 = vmatprep.subr.mxu0 0.0
        %4682 = vmatpush1.msra.mxu0 0.0
        %4683 = vmatprep.subr.mxu0 0.0
        %4684 = vmatpush1.msra.mxu0 0.0
        %4685 = vmatprep.subr.mxu0 0.0
        %4686 = vmatpush1.msra.mxu0 0.0
        %4687 = vmatprep.subr.mxu0 0.0
        %4688 = vmatpush1.msra.mxu0 0.0
        %4689 = vmatprep.subr.mxu0 0.0
        %4690 = vmatpush1.msra.mxu0 0.0
        %4691 = vmatprep.subr.mxu0 0.0
        %4692 = vmatpush1.msra.mxu0 0.0
        %4693 = vmatprep.subr.mxu0 0.0
        %4694 = vmatpush1.msra.mxu0 0.0
        %4695 = vmatprep.subr.mxu0 0.0
        %4696 = vmatpush1.msra.mxu0 0.0
        %4697 = vmatprep.subr.mxu0 0.0
        %4698 = vmatpush1.msra.mxu0 0.0
        %4699 = vmatprep.subr.mxu0 0.0
        %4700 = vmatpush1.msra.mxu0 0.0
        %4701 = vmatprep.subr.mxu0 0.0
        %4702 = vmatpush1.msra.mxu0 0.0
        %4703 = vmatprep.subr.mxu0 0.0
        %4704 = vmatpush1.msra.mxu0 0.0
        %4705 = vmatprep.subr.mxu0 0.0
        %4706 = vmatpush1.msra.mxu0 0.0
        %4707 = vmatprep.subr.mxu0 0.0
        %4708 = vmatpush1.msra.mxu0 0.0
        %4709 = vmatprep.subr.mxu0 0.0
        %4710 = vmatpush1.msra.mxu0 0.0
        %4711 = vmatprep.mubr.f32.mxu0 0.0
        %4712 = vmatmul.mubr.f32.gmra.mrb[0].mxu0 %v4645
        %v4713 = vpop.f32.mrb[0].mxu0
        %v4714 = vadd.f32 0.0, %v4713
        %v4715 = vpop.f32.mrb[0].mxu0
        %4716 = vdwg.mxu0
        %v4718 = vsel %vm537, %v975, 0
        %4720 = vmatprep.subr.mxu0 0.0
        %4721 = vmatpush1.xpose.msra.mxu0 %v4645
        %4722 = vmatprep.subr.mxu0 0.0
        %4723 = vmatpush1.xpose.msra.mxu0 0.0
        %4724 = vmatprep.subr.mxu0 0.0
        %4725 = vmatpush1.xpose.msra.mxu0 0.0
        %4726 = vmatprep.subr.mxu0 0.0
        %4727 = vmatpush1.xpose.msra.mxu0 0.0
        %4728 = vmatprep.subr.mxu0 0.0
        %4729 = vmatpush1.xpose.msra.mxu0 0.0
        %4730 = vmatprep.subr.mxu0 0.0
        %4731 = vmatpush1.xpose.msra.mxu0 0.0
        %4732 = vmatprep.subr.mxu0 0.0
        %4733 = vmatpush1.xpose.msra.mxu0 0.0
        %4734 = vmatprep.subr.mxu0 0.0
        %4735 = vmatpush1.xpose.msra.mxu0 0.0
        %4736 = vmatprep.subr.mxu0 0.0
        %4737 = vmatpush1.xpose.msra.mxu0 0.0
        %4738 = vmatprep.subr.mxu0 0.0
        %4739 = vmatpush1.xpose.msra.mxu0 0.0
        %4740 = vmatprep.subr.mxu0 0.0
        %4741 = vmatpush1.xpose.msra.mxu0 0.0
        %4742 = vmatprep.subr.mxu0 0.0
        %4743 = vmatpush1.xpose.msra.mxu0 0.0
        %4744 = vmatprep.subr.mxu0 0.0
        %4745 = vmatpush1.xpose.msra.mxu0 0.0
        %4746 = vmatprep.subr.mxu0 0.0
        %4747 = vmatpush1.xpose.msra.mxu0 0.0
        %4748 = vmatprep.subr.mxu0 0.0
        %4749 = vmatpush1.xpose.msra.mxu0 0.0
        %4750 = vmatprep.subr.mxu0 0.0
        %4751 = vmatpush1.xpose.msra.mxu0 0.0
        %4752 = vmatprep.subr.mxu0 0.0
        %4753 = vmatpush1.xpose.msra.mxu0 0.0
        %4754 = vmatprep.subr.mxu0 0.0
        %4755 = vmatpush1.xpose.msra.mxu0 0.0
        %4756 = vmatprep.subr.mxu0 0.0
        %4757 = vmatpush1.xpose.msra.mxu0 0.0
        %4758 = vmatprep.subr.mxu0 0.0
        %4759 = vmatpush1.xpose.msra.mxu0 0.0
        %4760 = vmatprep.subr.mxu0 0.0
        %4761 = vmatpush1.xpose.msra.mxu0 0.0
        %4762 = vmatprep.subr.mxu0 0.0
        %4763 = vmatpush1.xpose.msra.mxu0 0.0
        %4764 = vmatprep.subr.mxu0 0.0
        %4765 = vmatpush1.xpose.msra.mxu0 0.0
        %4766 = vmatprep.subr.mxu0 0.0
        %4767 = vmatpush1.xpose.msra.mxu0 0.0
        %4768 = vmatprep.subr.mxu0 0.0
        %4769 = vmatpush1.xpose.msra.mxu0 0.0
        %4770 = vmatprep.subr.mxu0 0.0
        %4771 = vmatpush1.xpose.msra.mxu0 0.0
        %4772 = vmatprep.subr.mxu0 0.0
        %4773 = vmatpush1.xpose.msra.mxu0 0.0
        %4774 = vmatprep.subr.mxu0 0.0
        %4775 = vmatpush1.xpose.msra.mxu0 0.0
        %4776 = vmatprep.subr.mxu0 0.0
        %4777 = vmatpush1.xpose.msra.mxu0 0.0
        %4778 = vmatprep.subr.mxu0 0.0
        %4779 = vmatpush1.xpose.msra.mxu0 0.0
        %4780 = vmatprep.subr.mxu0 0.0
        %4781 = vmatpush1.xpose.msra.mxu0 0.0
        %4782 = vmatprep.subr.mxu0 0.0
        %4783 = vmatpush1.xpose.msra.mxu0 0.0
        %4784 = vmatprep.mubr.f32.mxu0 0.0
        %4785 = vmatmul.mubr.f32.gmra.mrb[0].mxu0 %v4718
        %v4786 = vpop.f32.mrb[0].mxu0
        %v4787 = vadd.f32 0.0, %v4786
        %v4788 = vpop.f32.mrb[0].mxu0
        %4789 = vdwg.mxu0
        %v4790 = vsel %vm1257, %v4787, -inf
        %4791 = vmax.xlane.f32.xlu0 %v4790
        %v4792 = vpop.xlane.xlu0 %4791
        %v4793 = vsub.f32 %v4787, %v4792
        %v4794 = vmul.f32 %v4793, 1.442695
        %v4795 = vpow.pop %v4794
        %v4796 = vsel %vm1257, %v4795, 0.0
        %4797 = vadd.xlane.f32.xlu0 %v4796
        %v4798 = vpop.xlane.xlu0 %4797
        %v4799 = vrcp.pop %v4798
        %v4800 = vmul.f32 %v4795, %v4799
        %v4801 = vadd.f32 %v4800, 1e-08
        %v4802 = vsel %vm1257, %v4801, 0.0
        %v4803 = vrot.slane %v4802, 4
        %v4804 = vadd.f32 %v4802, %v4803
        %v4805 = vrot.slane %v4804, 2
        %v4806 = vadd.f32 %v4804, %v4805
        %v4807 = vrot.slane %v4806, 1
        %v4808 = vadd.f32 %v4806, %v4807
        %v4809 = vrcp.pop %v4808
        %v4810 = vmul.f32 %v4801, %v4809
        %v4812 = vsel %vm1283, %v4810, 0
        %v4815 = vsel %vm1287, %v4714, 0
        %4817 = vmatprep.subr.mxu0 0.0
        %4818 = vmatpush1.msra.mxu0 %v4815
        %4819 = vmatprep.subr.mxu0 0.0
        %4820 = vmatpush1.msra.mxu0 0.0
        %4821 = vmatprep.subr.mxu0 0.0
        %4822 = vmatpush1.msra.mxu0 0.0
        %4823 = vmatprep.subr.mxu0 0.0
        %4824 = vmatpush1.msra.mxu0 0.0
        %4825 = vmatprep.subr.mxu0 0.0
        %4826 = vmatpush1.msra.mxu0 0.0
        %4827 = vmatprep.subr.mxu0 0.0
        %4828 = vmatpush1.msra.mxu0 0.0
        %4829 = vmatprep.subr.mxu0 0.0
        %4830 = vmatpush1.msra.mxu0 0.0
        %4831 = vmatprep.subr.mxu0 0.0
        %4832 = vmatpush1.msra.mxu0 0.0
        %4833 = vmatprep.subr.mxu0 0.0
        %4834 = vmatpush1.msra.mxu0 0.0
        %4835 = vmatprep.subr.mxu0 0.0
        %4836 = vmatpush1.msra.mxu0 0.0
        %4837 = vmatprep.subr.mxu0 0.0
        %4838 = vmatpush1.msra.mxu0 0.0
        %4839 = vmatprep.subr.mxu0 0.0
        %4840 = vmatpush1.msra.mxu0 0.0
        %4841 = vmatprep.subr.mxu0 0.0
        %4842 = vmatpush1.msra.mxu0 0.0
        %4843 = vmatprep.subr.mxu0 0.0
        %4844 = vmatpush1.msra.mxu0 0.0
        %4845 = vmatprep.subr.mxu0 0.0
        %4846 = vmatpush1.msra.mxu0 0.0
        %4847 = vmatprep.subr.mxu0 0.0
        %4848 = vmatpush1.msra.mxu0 0.0
        %4849 = vmatprep.subr.mxu0 0.0
        %4850 = vmatpush1.msra.mxu0 0.0
        %4851 = vmatprep.subr.mxu0 0.0
        %4852 = vmatpush1.msra.mxu0 0.0
        %4853 = vmatprep.subr.mxu0 0.0
        %4854 = vmatpush1.msra.mxu0 0.0
        %4855 = vmatprep.subr.mxu0 0.0
        %4856 = vmatpush1.msra.mxu0 0.0
        %4857 = vmatprep.subr.mxu0 0.0
        %4858 = vmatpush1.msra.mxu0 0.0
        %4859 = vmatprep.subr.mxu0 0.0
        %4860 = vmatpush1.msra.mxu0 0.0
        %4861 = vmatprep.subr.mxu0 0.0
        %4862 = vmatpush1.msra.mxu0 0.0
        %4863 = vmatprep.subr.mxu0 0.0
        %4864 = vmatpush1.msra.mxu0 0.0
        %4865 = vmatprep.subr.mxu0 0.0
        %4866 = vmatpush1.msra.mxu0 0.0
        %4867 = vmatprep.subr.mxu0 0.0
        %4868 = vmatpush1.msra.mxu0 0.0
        %4869 = vmatprep.subr.mxu0 0.0
        %4870 = vmatpush1.msra.mxu0 0.0
        %4871 = vmatprep.subr.mxu0 0.0
        %4872 = vmatpush1.msra.mxu0 0.0
        %4873 = vmatprep.subr.mxu0 0.0
        %4874 = vmatpush1.msra.mxu0 0.0
        %4875 = vmatprep.subr.mxu0 0.0
        %4876 = vmatpush1.msra.mxu0 0.0
        %4877 = vmatprep.subr.mxu0 0.0
        %4878 = vmatpush1.msra.mxu0 0.0
        %4879 = vmatprep.subr.mxu0 0.0
        %4880 = vmatpush1.msra.mxu0 0.0
        %4881 = vmatprep.mubr.f32.mxu0 0.0
        %4882 = vmatmul.mubr.f32.gmra.mrb[0].mxu0 %v4812
        %v4883 = vpop.f32.mrb[0].mxu0
        %v4884 = vadd.f32 0.0, %v4883
        %v4885 = vpop.f32.mrb[0].mxu0
        %4886 = vdwg.mxu0
        %v4888 = vlaneseq
        %v4889 = vshrl.u32 %v4888, 7
        %v4890 = vsub.s32 0, %v4889
        %v4891 = vrot.slane %v532, %v4890
        %v4894 = vsel %vm537, %v4884, 0
        %4896 = vmatprep.subr.mxu0 0.0
        %4897 = vmatpush1.msra.mxu0 %v498
        %4898 = vmatprep.subr.mxu0 0.0
        %4899 = vmatpush1.msra.mxu0 %v499
        %4900 = vmatprep.subr.mxu0 0.0
        %4901 = vmatpush1.msra.mxu0 %v500
        %4902 = vmatprep.subr.mxu0 0.0
        %4903 = vmatpush1.msra.mxu0 %v501
        %4904 = vmatprep.subr.mxu0 0.0
        %4905 = vmatpush1.msra.mxu0 0.0
        %4906 = vmatprep.subr.mxu0 0.0
        %4907 = vmatpush1.msra.mxu0 0.0
        %4908 = vmatprep.subr.mxu0 0.0
        %4909 = vmatpush1.msra.mxu0 0.0
        %4910 = vmatprep.subr.mxu0 0.0
        %4911 = vmatpush1.msra.mxu0 0.0
        %4912 = vmatprep.subr.mxu0 0.0
        %4913 = vmatpush1.msra.mxu0 0.0
        %4914 = vmatprep.subr.mxu0 0.0
        %4915 = vmatpush1.msra.mxu0 0.0
        %4916 = vmatprep.subr.mxu0 0.0
        %4917 = vmatpush1.msra.mxu0 0.0
        %4918 = vmatprep.subr.mxu0 0.0
        %4919 = vmatpush1.msra.mxu0 0.0
        %4920 = vmatprep.subr.mxu0 0.0
        %4921 = vmatpush1.msra.mxu0 0.0
        %4922 = vmatprep.subr.mxu0 0.0
        %4923 = vmatpush1.msra.mxu0 0.0
        %4924 = vmatprep.subr.mxu0 0.0
        %4925 = vmatpush1.msra.mxu0 0.0
        %4926 = vmatprep.subr.mxu0 0.0
        %4927 = vmatpush1.msra.mxu0 0.0
        %4928 = vmatprep.subr.mxu0 0.0
        %4929 = vmatpush1.msra.mxu0 0.0
        %4930 = vmatprep.subr.mxu0 0.0
        %4931 = vmatpush1.msra.mxu0 0.0
        %4932 = vmatprep.subr.mxu0 0.0
        %4933 = vmatpush1.msra.mxu0 0.0
        %4934 = vmatprep.subr.mxu0 0.0
        %4935 = vmatpush1.msra.mxu0 0.0
        %4936 = vmatprep.subr.mxu0 0.0
        %4937 = vmatpush1.msra.mxu0 0.0
        %4938 = vmatprep.subr.mxu0 0.0
        %4939 = vmatpush1.msra.mxu0 0.0
        %4940 = vmatprep.subr.mxu0 0.0
        %4941 = vmatpush1.msra.mxu0 0.0
        %4942 = vmatprep.subr.mxu0 0.0
        %4943 = vmatpush1.msra.mxu0 0.0
        %4944 = vmatprep.subr.mxu0 0.0
        %4945 = vmatpush1.msra.mxu0 0.0
        %4946 = vmatprep.subr.mxu0 0.0
        %4947 = vmatpush1.msra.mxu0 0.0
        %4948 = vmatprep.subr.mxu0 0.0
        %4949 = vmatpush1.msra.mxu0 0.0
        %4950 = vmatprep.subr.mxu0 0.0
        %4951 = vmatpush1.msra.mxu0 0.0
        %4952 = vmatprep.subr.mxu0 0.0
        %4953 = vmatpush1.msra.mxu0 0.0
        %4954 = vmatprep.subr.mxu0 0.0
        %4955 = vmatpush1.msra.mxu0 0.0
        %4956 = vmatprep.subr.mxu0 0.0
        %4957 = vmatpush1.msra.mxu0 0.0
        %4958 = vmatprep.subr.mxu0 0.0
        %4959 = vmatpush1.msra.mxu0 0.0
        %4960 = vmatprep.mubr.f32.mxu0 0.0
        %4961 = vmatmul.mubr.f32.gmra.mrb[0].mxu0 %v4894
        %v4962 = vpop.f32.mrb[0].mxu0
        %v4963 = vadd.f32 %v4891, %v4962
        %v4964 = vpop.f32.mrb[0].mxu0
        %4965 = vdwg.mxu0
        %v4966 = vmax.f32 %v4963, 0.0
        %v4968 = vsel %vm1521, %v4966, 0
        %4970 = vmatprep.subr.mxu0 0.0
        %4971 = vmatpush1.msra.mxu0 %v520
        %4972 = vmatprep.subr.mxu0 0.0
        %4973 = vmatpush1.msra.mxu0 %v521
        %4974 = vmatprep.subr.mxu0 0.0
        %4975 = vmatpush1.msra.mxu0 %v522
        %4976 = vmatprep.subr.mxu0 0.0
        %4977 = vmatpush1.msra.mxu0 %v523
        %4978 = vmatprep.subr.mxu0 0.0
        %4979 = vmatpush1.msra.mxu0 %v524
        %4980 = vmatprep.subr.mxu0 0.0
        %4981 = vmatpush1.msra.mxu0 %v525
        %4982 = vmatprep.subr.mxu0 0.0
        %4983 = vmatpush1.msra.mxu0 %v526
        %4984 = vmatprep.subr.mxu0 0.0
        %4985 = vmatpush1.msra.mxu0 %v527
        %4986 = vmatprep.subr.mxu0 0.0
        %4987 = vmatpush1.msra.mxu0 0.0
        %4988 = vmatprep.subr.mxu0 0.0
        %4989 = vmatpush1.msra.mxu0 0.0
        %4990 = vmatprep.subr.mxu0 0.0
        %4991 = vmatpush1.msra.mxu0 0.0
        %4992 = vmatprep.subr.mxu0 0.0
        %4993 = vmatpush1.msra.mxu0 0.0
        %4994 = vmatprep.subr.mxu0 0.0
        %4995 = vmatpush1.msra.mxu0 0.0
        %4996 = vmatprep.subr.mxu0 0.0
        %4997 = vmatpush1.msra.mxu0 0.0
        %4998 = vmatprep.subr.mxu0 0.0
        %4999 = vmatpush1.msra.mxu0 0.0
        %5000 = vmatprep.subr.mxu0 0.0
        %5001 = vmatpush1.msra.mxu0 0.0
        %5002 = vmatprep.subr.mxu0 0.0
        %5003 = vmatpush1.msra.mxu0 0.0
        %5004 = vmatprep.subr.mxu0 0.0
        %5005 = vmatpush1.msra.mxu0 0.0
        %5006 = vmatprep.subr.mxu0 0.0
        %5007 = vmatpush1.msra.mxu0 0.0
        %5008 = vmatprep.subr.mxu0 0.0
        %5009 = vmatpush1.msra.mxu0 0.0
        %5010 = vmatprep.subr.mxu0 0.0
        %5011 = vmatpush1.msra.mxu0 0.0
        %5012 = vmatprep.subr.mxu0 0.0
        %5013 = vmatpush1.msra.mxu0 0.0
        %5014 = vmatprep.subr.mxu0 0.0
        %5015 = vmatpush1.msra.mxu0 0.0
        %5016 = vmatprep.subr.mxu0 0.0
        %5017 = vmatpush1.msra.mxu0 0.0
        %5018 = vmatprep.subr.mxu0 0.0
        %5019 = vmatpush1.msra.mxu0 0.0
        %5020 = vmatprep.subr.mxu0 0.0
        %5021 = vmatpush1.msra.mxu0 0.0
        %5022 = vmatprep.subr.mxu0 0.0
        %5023 = vmatpush1.msra.mxu0 0.0
        %5024 = vmatprep.subr.mxu0 0.0
        %5025 = vmatpush1.msra.mxu0 0.0
        %5026 = vmatprep.subr.mxu0 0.0
        %5027 = vmatpush1.msra.mxu0 0.0
        %5028 = vmatprep.subr.mxu0 0.0
        %5029 = vmatpush1.msra.mxu0 0.0
        %5030 = vmatprep.subr.mxu0 0.0
        %5031 = vmatpush1.msra.mxu0 0.0
        %5032 = vmatprep.subr.mxu0 0.0
        %5033 = vmatpush1.msra.mxu0 0.0
        %5034 = vmatprep.mubr.f32.mxu0 0.0
        %5035 = vmatmul.mubr.f32.gmra.mrb[0].mxu0 %v4968
        %v5036 = vpop.f32.mrb[0].mxu0
        %v5037 = vadd.f32 0.0, %v5036
        %v5038 = vpop.f32.mrb[0].mxu0
        %5039 = vdwg.mxu0
        %v5040 = vadd.f32 %v608, %v5037
        %v5042 = vlaneseq
        %v5043 = vshrl.u32 %v5042, 7
        %v5044 = vsub.s32 0, %v5043
        %v5045 = vrot.slane %v423, %v5044
        %v5047 = vadd.f32 %v5040, %v5045
        %5048 = vst.msk [vmem:[%s370] sm:$0xf] %vm581, %v5047
        %5049 = vst.msk [vmem:[%s377] sm:$0xf] %vm581, %v4643
        %s5050 = sand.u32 %s219, 1
        %s5051 = scalar_lea.sflag [#allocation4], %s5050
        %s5052 = sand.u32 %s219, 1
        %s5053 = smul.addr %s5052, 4
        %s5054 = scalar_lea.vmem [#allocation5], %s5053
        %s5055 = sand.u32 %s245, 1
        %s5056 = scalar_lea.sflag [#allocation7], %s5055
        %s5057 = sand.u32 %s245, 1
        %s5058 = smul.addr %s5057, 4
        %s5059 = scalar_lea.vmem [#allocation6], %s5058
        // Predicated region
        $region57: #{tpu_custom_call.1} parent=51 // pred_check
          %p5060 = pneg %p229
        $region58: #{tpu_custom_call.1} parent=51 // pred_check_branch
          %5062 = sbr.rel (%p5060) target = $region60
        $region59: #{tpu_custom_call.1} parent=51 // pred_region
          %s5064 = ssub.s32 64, 64
          %5065 = vsyncadd %s5051, %s5064
          %s5066 = smul.addr %s28, 64
          %s5067 = scalar_lea.hbm %s8, %s5066
          %s5069 = sshll.u32 %s5054, 4
          %s5070 = int_to_ptr.vmem [resolvable:$true] %s5069
          %5072 = dma.vmem_to_hbm [thread:$0]  %s5070, 64, %s5067, %s5051
        $region60: #{tpu_custom_call.1} parent=51 // pred_fallthru
          _
        // Predicated region
        $region61: #{tpu_custom_call.1} parent=51 // pred_check
          %p5073 = pneg %p255
        $region62: #{tpu_custom_call.1} parent=51 // pred_check_branch
          %5075 = sbr.rel (%p5073) target = $region64
        $region63: #{tpu_custom_call.1} parent=51 // pred_region
          %s5077 = ssub.s32 64, 64
          %5078 = vsyncadd %s5056, %s5077
          %s5079 = smul.addr %s28, 64
          %s5080 = scalar_lea.hbm %s9, %s5079
          %s5082 = sshll.u32 %s5059, 4
          %s5083 = int_to_ptr.vmem [resolvable:$true] %s5082
          %5085 = dma.vmem_to_hbm [thread:$0]  %s5083, 64, %s5080, %s5056
        $region64: #{tpu_custom_call.1} parent=51 // pred_fallthru
          _
      $region52: #{tpu_custom_call.1} parent=5 // pred_fallthru
        _
      %p5086 = scmp.le.s32.totalorder 2, %s23
      // Predicated region
      $region65: #{tpu_custom_call.1} parent=5 // pred_check
        %p5087 = pneg %p5086
      $region66: #{tpu_custom_call.1} parent=5 // pred_check_branch
        %5089 = sbr.rel (%p5087) target = $region68
      $region67: #{tpu_custom_call.1} parent=5 // pred_region
        %s5090 = ssub.s32 %s23, 2
        // Predicated region
        $region69: #{tpu_custom_call.1} parent=67 // pred_check
          %p5091 = pneg %p235
        $region70: #{tpu_custom_call.1} parent=67 // pred_check_branch
          %5093 = sbr.rel (%p5091) target = $region72
        $region71: #{tpu_custom_call.1} parent=67 // pred_region
          %s5094 = sand.u32 %s220, 1
          %s5095 = scalar_lea.sflag [#allocation4], %s5094
          %s5096 = sand.u32 %s220, 1
          %s5097 = smul.addr %s5096, 4
          %s5098 = scalar_lea.vmem [#allocation5], %s5097
          %5099 = dma.done %s5095, 64
        $region72: #{tpu_custom_call.1} parent=67 // pred_fallthru
          _
        // Predicated region
        $region73: #{tpu_custom_call.1} parent=67 // pred_check
          %p5100 = pneg %p261
        $region74: #{tpu_custom_call.1} parent=67 // pred_check_branch
          %5102 = sbr.rel (%p5100) target = $region76
        $region75: #{tpu_custom_call.1} parent=67 // pred_region
          %s5103 = sand.u32 %s246, 1
          %s5104 = scalar_lea.sflag [#allocation7], %s5103
          %s5105 = sand.u32 %s246, 1
          %s5106 = smul.addr %s5105, 4
          %s5107 = scalar_lea.vmem [#allocation6], %s5106
          %5108 = dma.done %s5104, 64
        $region76: #{tpu_custom_call.1} parent=67 // pred_fallthru
          _
      $region68: #{tpu_custom_call.1} parent=5 // pred_fallthru
        _
    $region6: #{tpu_custom_call.1} parent=1 // loop_footer
      %s27 = sadd.s32 1, %s23
    $region7: #{tpu_custom_call.1} parent=1 // loop_footer_branch
      %22 = sbr.rel target = $region3
    $region8: #{tpu_custom_call.1} parent=1 // loop_exit
      _
    %5109 = vsyncpa [#allocation3], 1
    %s5110 = scalar_lea.sflag [#allocation3], 1
    %5111 = vsyncpa %s5110, 1
    %5112 = vsyncpa [#allocation4], 1
    %s5113 = scalar_lea.sflag [#allocation4], 1
    %5114 = vsyncpa %s5113, 1
    %5115 = vsyncpa [#allocation7], 1
    %s5116 = scalar_lea.sflag [#allocation7], 1
    %5117 = vsyncpa %s5116, 1

</llo_original>
